<compile_context>
chip_gen: v7x
topology: tpu7x:2x2x1
jax: 0.10.0
libtpu: 0.0.40
codegen_flags: <defaults>
</compile_context>

<pallas_src>
import functools
import jax
import jax.numpy as jnp
from jax.experimental import pallas as pl
from jax.experimental.pallas import tpu as pltpu


# ----------------------------- VMEM / tiling config -----------------------------

def _default_vmem_limit():
    cap = 128 * 1024 * 1024
    try:
        info = pltpu.get_tpu_info()
        cap = int(getattr(info, "vmem_capacity_bytes", cap)) or cap
    except Exception:
        pass
    # leave headroom for compiler-internal scratch, cap well below physical
    return int(min(max(cap - 16 * 1024 * 1024, 32 * 1024 * 1024),
                   112 * 1024 * 1024))


_VMEM_LIMIT = _default_vmem_limit()
_BIG_VMEM = _VMEM_LIMIT >= 96 * 1024 * 1024          # v5e / v6e (128 MiB phys)

_TM = 256                                            # row (M) tile target
_TN = 1024 if _BIG_VMEM else 512                     # output-column tile target
_TK = 1024 if _BIG_VMEM else 512                     # contraction tile target
_TH = 1024 if _BIG_VMEM else 512                     # FFN hidden tile target


def _pick_tile(n, target, aligns=(256, 128)):
    """Largest tile <= target dividing n, preferring 256- then 128-alignment.

    Falls back to the full dimension (a full-dim block always satisfies the
    (8, 128) layout constraint).
    """
    if n <= target:
        return n
    for a in aligns:
        t = (target // a) * a
        while t >= a:
            if n % t == 0:
                return t
            t -= a
    return n


def _pick_row_tile(m, target=_TM):
    """Row tile; tries to leave >= 2 blocks so a 'parallel' axis can span 2 TCs."""
    t = _pick_tile(m, target, aligns=(8,))
    if m // t < 2 and m >= 16:
        t2 = _pick_tile(m, max(8, t // 2), aligns=(8,))
        if t2 >= 8 and m % t2 == 0:
            t = t2
    return t


# ----------------------------- Pallas kernels -----------------------------

def _norm_linear_kernel(x_ref, nw_ref, w_ref, o_ref, xn_ref, *, eps):
    # rmsnorm(x) @ w, output-dim tiled; the norm is computed once per row tile
    # (at j == 0) into a bf16 VMEM scratch and reused for every weight tile.
    j = pl.program_id(1)

    @pl.when(j == 0)
    def _():
        x = x_ref[...].astype(jnp.float32)                 # (tm, K)
        ms = jnp.mean(x * x, axis=-1, keepdims=True)
        xn_ref[...] = (x * jax.lax.rsqrt(ms + eps)
                       * nw_ref[...]).astype(xn_ref.dtype)

    o_ref[...] = jnp.dot(xn_ref[...], w_ref[...],
                         preferred_element_type=jnp.float32).astype(o_ref.dtype)


def _matmul_res_kernel(x_ref, w_ref, r_ref, o_ref, acc_ref):
    # x @ w + residual, K-tiled with an f32 VMEM accumulator, bf16 writeback.
    kk = pl.program_id(2)

    @pl.when(kk == 0)
    def _():
        acc_ref[...] = jnp.zeros_like(acc_ref)

    acc_ref[...] += jnp.dot(x_ref[...], w_ref[...],
                            preferred_element_type=jnp.float32)

    @pl.when(kk == pl.num_programs(2) - 1)
    def _():
        o_ref[...] = (acc_ref[...] + r_ref[...].astype(jnp.float32)
                      ).astype(o_ref.dtype)


def _norm_ffn_kernel(x_ref, nw_ref, w1_ref, w3_ref, w2_ref,
                     o_ref, acc_ref, xn_ref, *, eps):
    # x + w2( silu(rmsnorm(x) @ w1) * (rmsnorm(x) @ w3) ), hidden-tiled.
    # RMSNorm + bf16 cast hoisted to j == 0; x_ref doubles as the residual.
    j = pl.program_id(1)

    @pl.when(j == 0)
    def _():
        acc_ref[...] = jnp.zeros_like(acc_ref)
        x = x_ref[...].astype(jnp.float32)                 # (tm, D)
        ms = jnp.mean(x * x, axis=-1, keepdims=True)
        xn_ref[...] = (x * jax.lax.rsqrt(ms + eps)
                       * nw_ref[...]).astype(xn_ref.dtype)

    xn = xn_ref[...]                                       # (tm, D) bf16
    h1 = jnp.dot(xn, w1_ref[...], preferred_element_type=jnp.float32)
    h3 = jnp.dot(xn, w3_ref[...], preferred_element_type=jnp.float32)
    g = (h1 * jax.nn.sigmoid(h1)) * h3                     # SwiGLU, f32
    acc_ref[...] += jnp.dot(g.astype(w2_ref.dtype), w2_ref[...],
                            preferred_element_type=jnp.float32)

    @pl.when(j == pl.num_programs(1) - 1)
    def _():
        o_ref[...] = (acc_ref[...] + x_ref[...].astype(jnp.float32)
                      ).astype(o_ref.dtype)


def _attention_kernel(qkv_ref, cos_ref, sin_ref, o_ref,
                      *, n_heads, head_dim, dim, scale):
    # One batch per grid step; all heads processed in-kernel; in-kernel rotary
    # (rotate-half layout via pltpu.roll) + causal softmax; single lane-dense
    # (1, S, D) bf16 store.
    qkv = qkv_ref[0]                                       # (S, 3D) bf16
    cos = cos_ref[...]                                     # (S, Dh) f32
    sin = sin_ref[...]                                     # (S, Dh) f32: [-sin|+sin]
    S = qkv.shape[0]
    row = jax.lax.broadcasted_iota(jnp.int32, (S, S), 0)
    col = jax.lax.broadcasted_iota(jnp.int32, (S, S), 1)
    causal = col <= row

    outs = []
    for h in range(n_heads):                               # small static unroll
        a = h * head_dim
        q = qkv[:, a:a + head_dim].astype(jnp.float32)
        k = qkv[:, dim + a:dim + a + head_dim].astype(jnp.float32)
        v = qkv[:, 2 * dim + a:2 * dim + a + head_dim]     # bf16
        # rotary (wq/wk columns pre-permuted to per-head rotate-half layout)
        q = (q * cos + pltpu.roll(q, head_dim // 2, 1) * sin).astype(jnp.bfloat16)
        k = (k * cos + pltpu.roll(k, head_dim // 2, 1) * sin).astype(jnp.bfloat16)
        # scores without an explicit k.T (MXU consumes the transposed operand)
        s = jax.lax.dot_general(q, k, (((1,), (1,)), ((), ())),
                                preferred_element_type=jnp.float32) * scale
        s = jnp.where(causal, s, -1e30)                    # in-kernel causal mask
        m = jnp.max(s, axis=-1, keepdims=True)
        p = jnp.exp(s - m)
        l = jnp.sum(p, axis=-1, keepdims=True)
        o = jnp.dot(p.astype(jnp.bfloat16), v,
                    preferred_element_type=jnp.float32)
        outs.append(o * pl.reciprocal(l, approx=True))
    o_ref[0] = jnp.concatenate(outs, axis=-1).astype(o_ref.dtype)


# ----------------------------- Pallas wrappers -----------------------------

def fused_norm_linear(x, nw, w, eps, out_dtype=jnp.bfloat16):
    # rmsnorm(x) @ w; x: (M, K) bf16; nw: (K,) f32; w: (K, Dout) bf16.
    M, K = x.shape
    Dout = w.shape[1]
    tm = _pick_row_tile(M)
    tn = _pick_tile(Dout, _TN)
    return pl.pallas_call(
        functools.partial(_norm_linear_kernel, eps=eps),
        out_shape=jax.ShapeDtypeStruct((M, Dout), out_dtype),
        grid=(M // tm, Dout // tn),
        in_specs=[pl.BlockSpec((tm, K), lambda i, j: (i, 0)),
                  pl.BlockSpec((1, K), lambda i, j: (0, 0)),
                  pl.BlockSpec((K, tn), lambda i, j: (0, j))],
        out_specs=pl.BlockSpec((tm, tn), lambda i, j: (i, j)),
        scratch_shapes=[pltpu.VMEM((tm, K), jnp.bfloat16)],
        compiler_params=pltpu.CompilerParams(
            # j must be 'arbitrary': the cached norm is computed at j == 0
            dimension_semantics=("parallel", "arbitrary"),
            vmem_limit_bytes=_VMEM_LIMIT),
    )(x, nw.reshape(1, K), w)


def matmul_residual(x, w, res):
    # x @ w + res, K-tiled with f32 VMEM accumulator, bf16 output.
    M, K = x.shape
    Dout = w.shape[1]
    tm = _pick_row_tile(M)
    tn = _pick_tile(Dout, _TN)
    tk = _pick_tile(K, _TK)
    return pl.pallas_call(
        _matmul_res_kernel,
        out_shape=jax.ShapeDtypeStruct((M, Dout), jnp.bfloat16),
        grid=(M // tm, Dout // tn, K // tk),
        in_specs=[pl.BlockSpec((tm, tk), lambda i, j, k: (i, k)),
                  pl.BlockSpec((tk, tn), lambda i, j, k: (k, j)),
                  pl.BlockSpec((tm, tn), lambda i, j, k: (i, j))],
        out_specs=pl.BlockSpec((tm, tn), lambda i, j, k: (i, j)),
        scratch_shapes=[pltpu.VMEM((tm, tn), jnp.float32)],
        compiler_params=pltpu.CompilerParams(
            dimension_semantics=("parallel", "parallel", "arbitrary"),
            vmem_limit_bytes=_VMEM_LIMIT),
    )(x, w, res)


def fused_norm_ffn(x, nw, w1, w3, w2, eps):
    # x + w2( silu(w1 @ rmsnorm(x)) * (w3 @ rmsnorm(x)) ), hidden-tiled.
    M, D = x.shape
    Hd = w1.shape[1]
    tm = _pick_row_tile(M)
    th = _pick_tile(Hd, _TH)
    return pl.pallas_call(
        functools.partial(_norm_ffn_kernel, eps=eps),
        out_shape=jax.ShapeDtypeStruct((M, D), jnp.bfloat16),
        grid=(M // tm, Hd // th),
        in_specs=[pl.BlockSpec((tm, D), lambda i, j: (i, 0)),
                  pl.BlockSpec((1, D), lambda i, j: (0, 0)),
                  pl.BlockSpec((D, th), lambda i, j: (0, j)),
                  pl.BlockSpec((D, th), lambda i, j: (0, j)),
                  pl.BlockSpec((th, D), lambda i, j: (j, 0))],
        out_specs=pl.BlockSpec((tm, D), lambda i, j: (i, 0)),
        scratch_shapes=[pltpu.VMEM((tm, D), jnp.float32),
                        pltpu.VMEM((tm, D), jnp.bfloat16)],
        compiler_params=pltpu.CompilerParams(
            dimension_semantics=("parallel", "arbitrary"),
            vmem_limit_bytes=_VMEM_LIMIT),
    )(x, nw.reshape(1, D), w1, w3, w2)


def attention(qkv, cos_tab, sin_tab, n_heads):
    # qkv: (B, S, 3D) bf16 in the natural layout; grid over batch only so the
    # output store is a lane-dense (1, S, D) slab.
    B, S, threeD = qkv.shape
    D = threeD // 3
    Dh = D // n_heads
    scale = float(Dh) ** -0.5
    return pl.pallas_call(
        functools.partial(_attention_kernel, n_heads=n_heads,
                          head_dim=Dh, dim=D, scale=scale),
        out_shape=jax.ShapeDtypeStruct((B, S, D), jnp.bfloat16),
        grid=(B,),
        in_specs=[pl.BlockSpec((1, S, threeD), lambda b: (b, 0, 0)),
                  pl.BlockSpec((S, Dh), lambda b: (0, 0)),
                  pl.BlockSpec((S, Dh), lambda b: (0, 0))],
        out_specs=pl.BlockSpec((1, S, D), lambda b: (b, 0, 0)),
        compiler_params=pltpu.CompilerParams(
            dimension_semantics=("parallel",),
            vmem_limit_bytes=_VMEM_LIMIT),
    )(qkv, cos_tab, sin_tab)


# ----------------------------- model (JAX glue) -----------------------------

def _rotate_half_perm(dim, n_heads):
    """Per-head column permutation: [even pairs | odd pairs] within each head."""
    Dh = dim // n_heads
    perm = []
    for h in range(n_heads):
        base = h * Dh
        perm += [base + 2 * i for i in range(Dh // 2)]
        perm += [base + 2 * i + 1 for i in range(Dh // 2)]
    return jnp.asarray(perm, dtype=jnp.int32)


def init_params(key, V, dim, n_layers, n_heads, multiple_of):
    hidden = 4 * dim
    hidden = 2 * hidden // 3
    hidden = multiple_of * ((hidden + multiple_of - 1) // multiple_of)
    perm = _rotate_half_perm(dim, n_heads)

    def normal(k, shape, dtype=jnp.bfloat16):
        # weights at rest in bf16 (halves HBM/VMEM traffic; f32 accumulation).
        return (0.02 * jax.random.normal(k, shape, dtype=jnp.float32)).astype(dtype)

    keys = jax.random.split(key, 2 + 7 * n_layers)
    embed = 0.02 * jax.random.normal(keys[0], (V, dim), dtype=jnp.float32)
    embed = embed.at[-1].set(0.0)          # torch Embedding padding_idx=-1 row
    embed = embed.astype(jnp.bfloat16)
    output_w = normal(keys[1], (dim, V))

    layers = []
    for l in range(n_layers):
        k = keys[2 + 7 * l: 2 + 7 * (l + 1)]
        wq = normal(k[0], (dim, dim))[:, perm]   # rotate-half column layout
        wk = normal(k[1], (dim, dim))[:, perm]
        wv = normal(k[2], (dim, dim))
        layers.append(dict(
            wqkv=jnp.concatenate([wq, wk, wv], axis=1),    # (D, 3D) bf16
            wo=normal(k[3], (dim, dim)),
            w1=normal(k[4], (dim, hidden)),
            w3=normal(k[5], (dim, hidden)),
            w2=normal(k[6], (hidden, dim)),
            atn_norm=jnp.ones((dim,), jnp.float32),
            ffn_norm=jnp.ones((dim,), jnp.float32),
        ))
    return dict(embed=embed, output=output_w,
                norm=jnp.ones((dim,), jnp.float32), layers=layers), hidden


def transformer_forward(tokens, params, *, dim, n_heads, norm_eps):
    B, S = tokens.shape
    head_dim = dim // n_heads
    N = B * S

    # embedding lookup (glue); residual stream carried in bf16
    # TODO(synk): token-embedding gather stays in plain JAX glue.
    h = params["embed"][tokens]                            # (B, S, D) bf16

    # rotary tables for the rotate-half layout: (S, Dh) cos / signed-sin
    _f = jnp.float32(10000.0) ** (
        -jnp.arange(0, head_dim, 2, dtype=jnp.float32)[: head_dim // 2] / head_dim)
    t = jnp.arange(S, dtype=jnp.float32)[:, None] * _f[None, :]   # (S, Dh//2)
    cos_tab = jnp.concatenate([jnp.cos(t), jnp.cos(t)], axis=1)   # (S, Dh)
    sin_tab = jnp.concatenate([-jnp.sin(t), jnp.sin(t)], axis=1)  # (S, Dh)

    for lp in params["layers"]:
        x2 = h.reshape(N, dim)
        # fused RMSNorm + concatenated QKV projection (N-tiled weight)
        qkv = fused_norm_linear(x2, lp["atn_norm"], lp["wqkv"], norm_eps)
        # attention core: in-kernel rotary + causal softmax, all heads per batch
        attn = attention(qkv.reshape(B, S, 3 * dim), cos_tab, sin_tab, n_heads)
        # wo projection + residual add (dropout = identity, eval)
        h2 = matmul_residual(attn.reshape(N, dim), lp["wo"], x2)
        # fused RMSNorm + SwiGLU FFN + residual add
        h2 = fused_norm_ffn(h2, lp["ffn_norm"],
                            lp["w1"], lp["w3"], lp["w2"], norm_eps)
        h = h2.reshape(B, S, dim)

    # final RMSNorm fused into the output projection (logits kept f32)
    logits = fused_norm_linear(h.reshape(N, dim), params["norm"],
                               params["output"], norm_eps,
                               out_dtype=jnp.float32)
    return logits.reshape(B, S, -1)


# ----------------------------- main -----------------------------

if __name__ == "__main__":
    # small, TPU-friendly config (all dims multiples of 128, head_dim = 128)
    V = 256
    dim = 256
    n_heads = 2
    n_layers = 2
    multiple_of = 256
    norm_eps = 1e-5
    B, S = 2, 128

    key = jax.random.PRNGKey(0)
    kp, kt = jax.random.split(key)
    params, hidden = init_params(kp, V, dim, n_layers, n_heads, multiple_of)
    tokens = jax.random.randint(kt, (B, S), 0, V - 1, dtype=jnp.int32)

    fwd = jax.jit(functools.partial(transformer_forward,
                                    dim=dim, n_heads=n_heads,
                                    norm_eps=norm_eps))
    logits = fwd(tokens, params)
    jax.block_until_ready(logits)
    assert logits.shape == (B, S, V)
    assert bool(jnp.all(jnp.isfinite(logits)))
    print("KERNEL_OK")
</pallas_src>

<mosaic_0001>
module attributes {stable_mosaic.version = 11 : i64} {
  func.func @_norm_linear_kernel(%arg0: i32, %arg1: i32, %arg2: memref<128x256xbf16, #tpu.memory_space<vmem>>, %arg3: memref<1x256xf32, #tpu.memory_space<vmem>>, %arg4: memref<256x768xbf16, #tpu.memory_space<vmem>>, %arg5: memref<128x768xbf16, #tpu.memory_space<vmem>>, %arg6: memref<128x256xbf16, #tpu.memory_space<vmem>>) attributes {dimension_semantics = [#tpu.dimension_semantics<parallel>, #tpu.dimension_semantics<arbitrary>], iteration_bounds = array<i64: 2, 1>, scalar_prefetch = 0 : i64, scratch_operands = 1 : i64, tpu.core_type = #tpu.core_type<tc>, window_params = [{transform_indices = @transform_0, window_bounds = array<i64: 128, 256>}, {pipeline_mode = #tpu.pipeline_mode<synchronous>, transform_indices = @transform_1, window_bounds = array<i64: 1, 256>}, {transform_indices = @transform_2, window_bounds = array<i64: 256, 768>}, {transform_indices = @transform_3, window_bounds = array<i64: 128, 768>}]} {
    %c0_i32 = arith.constant 0 : i32
    %0 = arith.cmpi eq, %arg1, %c0_i32 : i32
    %1 = arith.extui %0 : i1 to i32
    %c0_i32_0 = arith.constant 0 : i32
    %2 = arith.cmpi ne, %1, %c0_i32_0 : i32
    scf.if %2 {
      %c0_6 = arith.constant 0 : index
      %c0_7 = arith.constant 0 : index
      %8 = vector.load %arg2[%c0_6, %c0_7] : memref<128x256xbf16, #tpu.memory_space<vmem>>, vector<128x256xbf16>
      %9 = arith.extf %8 : vector<128x256xbf16> to vector<128x256xf32>
      %10 = arith.mulf %9, %9 : vector<128x256xf32>
      %cst_8 = arith.constant dense<0.000000e+00> : vector<128xf32>
      %11 = vector.multi_reduction <add>, %10, %cst_8 [1] : vector<128x256xf32> to vector<128xf32>
      %12 = vector.shape_cast %11 : vector<128xf32> to vector<128x1xf32>
      %cst_9 = arith.constant 2.560000e+02 : f32
      %13 = vector.broadcast %cst_9 : f32 to vector<128x1xf32>
      %14 = arith.divf %12, %13 : vector<128x1xf32>
      %cst_10 = arith.constant 9.99999974E-6 : f32
      %15 = vector.broadcast %cst_10 : f32 to vector<128x1xf32>
      %16 = arith.addf %14, %15 : vector<128x1xf32>
      %17 = math.rsqrt %16 : vector<128x1xf32>
      %18 = vector.broadcast %17 : vector<128x1xf32> to vector<128x256xf32>
      %19 = arith.mulf %9, %18 : vector<128x256xf32>
      %c0_11 = arith.constant 0 : index
      %c0_12 = arith.constant 0 : index
      %20 = vector.load %arg3[%c0_11, %c0_12] : memref<1x256xf32, #tpu.memory_space<vmem>>, vector<1x256xf32>
      %21 = vector.broadcast %20 : vector<1x256xf32> to vector<128x256xf32>
      %22 = arith.mulf %19, %21 : vector<128x256xf32>
      %23 = arith.truncf %22 : vector<128x256xf32> to vector<128x256xbf16>
      %c0_13 = arith.constant 0 : index
      %c0_14 = arith.constant 0 : index
      %24 = vector.load %arg6[%c0_13, %c0_14] : memref<128x256xbf16, #tpu.memory_space<vmem>>, vector<128x256xbf16>
      tpu.vector_store %arg6[%c0_13, %c0_14], %23 {strides = array<i32>} : memref<128x256xbf16, #tpu.memory_space<vmem>>, vector<128x256xbf16>,
    } else {
    }
    %c0 = arith.constant 0 : index
    %c0_1 = arith.constant 0 : index
    %3 = vector.load %arg6[%c0, %c0_1] : memref<128x256xbf16, #tpu.memory_space<vmem>>, vector<128x256xbf16>
    %c0_2 = arith.constant 0 : index
    %c0_3 = arith.constant 0 : index
    %4 = vector.load %arg4[%c0_2, %c0_3] : memref<256x768xbf16, #tpu.memory_space<vmem>>, vector<256x768xbf16>
    %cst = arith.constant dense<0.000000e+00> : vector<128x768xf32>
    %5 = tpu.matmul %3, %4, %cst {dimension_numbers = #tpu.dot_dimension_numbers<[1], [0], [0], [1], [0, 0, 1, 1], [], []>} : vector<128x256xbf16>, vector<256x768xbf16>, vector<128x768xf32> -> vector<128x768xf32>
    %6 = arith.truncf %5 : vector<128x768xf32> to vector<128x768xbf16>
    %c0_4 = arith.constant 0 : index
    %c0_5 = arith.constant 0 : index
    %7 = vector.load %arg5[%c0_4, %c0_5] : memref<128x768xbf16, #tpu.memory_space<vmem>>, vector<128x768xbf16>
    tpu.vector_store %arg5[%c0_4, %c0_5], %6 {strides = array<i32>} : memref<128x768xbf16, #tpu.memory_space<vmem>>, vector<128x768xbf16>,
    return
  }
  func.func @transform_0(%arg0: i32, %arg1: i32) -> (i32, i32) {
    %c0_i32 = arith.constant 0 : i32
    %c0_i32_0 = arith.constant 0 : i32
    return %arg0, %c0_i32 : i32, i32
  }
  func.func @transform_1(%arg0: i32, %arg1: i32) -> (i32, i32) {
    %c0_i32 = arith.constant 0 : i32
    %c0_i32_0 = arith.constant 0 : i32
    %c0_i32_1 = arith.constant 0 : i32
    return %c0_i32, %c0_i32_0 : i32, i32
  }
  func.func @transform_2(%arg0: i32, %arg1: i32) -> (i32, i32) {
    %c0_i32 = arith.constant 0 : i32
    %c0_i32_0 = arith.constant 0 : i32
    return %c0_i32, %arg1 : i32, i32
  }
  func.func @transform_3(%arg0: i32, %arg1: i32) -> (i32, i32) {
    %c0_i32 = arith.constant 0 : i32
    return %arg0, %arg1 : i32, i32
  }
}

module attributes {stable_mosaic.version = 11 : i64} {
  func.func @_attention_kernel(%arg0: i32, %arg1: memref<1x128x768xbf16, #tpu.memory_space<vmem>>, %arg2: memref<128x128xf32, #tpu.memory_space<vmem>>, %arg3: memref<128x128xf32, #tpu.memory_space<vmem>>, %arg4: memref<1x128x256xbf16, #tpu.memory_space<vmem>>) attributes {dimension_semantics = [#tpu.dimension_semantics<parallel>], iteration_bounds = array<i64: 2>, scalar_prefetch = 0 : i64, scratch_operands = 0 : i64, tpu.core_type = #tpu.core_type<tc>, window_params = [{transform_indices = @transform_0, window_bounds = array<i64: 1, 128, 768>}, {pipeline_mode = #tpu.pipeline_mode<synchronous>, transform_indices = @transform_1, window_bounds = array<i64: 128, 128>}, {pipeline_mode = #tpu.pipeline_mode<synchronous>, transform_indices = @transform_2, window_bounds = array<i64: 128, 128>}, {transform_indices = @transform_3, window_bounds = array<i64: 1, 128, 256>}]} {
    %c0 = arith.constant 0 : index
    %c0_0 = arith.constant 0 : index
    %c0_1 = arith.constant 0 : index
    %0 = vector.load %arg1[%c0, %c0_0, %c0_1] : memref<1x128x768xbf16, #tpu.memory_space<vmem>>, vector<1x128x768xbf16>
    %1 = vector.shape_cast %0 : vector<1x128x768xbf16> to vector<128x768xbf16>
    %c0_2 = arith.constant 0 : index
    %c0_3 = arith.constant 0 : index
    %2 = vector.load %arg2[%c0_2, %c0_3] : memref<128x128xf32, #tpu.memory_space<vmem>>, vector<128x128xf32>
    %c0_4 = arith.constant 0 : index
    %c0_5 = arith.constant 0 : index
    %3 = vector.load %arg3[%c0_4, %c0_5] : memref<128x128xf32, #tpu.memory_space<vmem>>, vector<128x128xf32>
    %4 = tpu.iota {dimensions = array<i32: 0>} : vector<128x128xi32>
    %5 = tpu.iota {dimensions = array<i32: 1>} : vector<128x128xi32>
    %6 = arith.cmpi sle, %5, %4 : vector<128x128xi32>
    %7 = vector.extract_strided_slice %1 {offsets = [0, 0], sizes = [128, 128], strides = [1, 1]} : vector<128x768xbf16> to vector<128x128xbf16>
    %8 = arith.extf %7 : vector<128x128xbf16> to vector<128x128xf32>
    %9 = vector.extract_strided_slice %1 {offsets = [0, 256], sizes = [128, 128], strides = [1, 1]} : vector<128x768xbf16> to vector<128x128xbf16>
    %10 = arith.extf %9 : vector<128x128xbf16> to vector<128x128xf32>
    %11 = vector.extract_strided_slice %1 {offsets = [0, 512], sizes = [128, 128], strides = [1, 1]} : vector<128x768xbf16> to vector<128x128xbf16>
    %12 = arith.mulf %8, %2 : vector<128x128xf32>
    %c64_i32 = arith.constant 64 : i32
    %13 = tpu.dynamic_rotate %8 by %c64_i32 dim 1 : vector<128x128xf32>, i32 -> vector<128x128xf32>
    %14 = arith.mulf %13, %3 : vector<128x128xf32>
    %15 = arith.addf %12, %14 : vector<128x128xf32>
    %16 = arith.truncf %15 : vector<128x128xf32> to vector<128x128xbf16>
    %17 = arith.mulf %10, %2 : vector<128x128xf32>
    %c64_i32_6 = arith.constant 64 : i32
    %18 = tpu.dynamic_rotate %10 by %c64_i32_6 dim 1 : vector<128x128xf32>, i32 -> vector<128x128xf32>
    %19 = arith.mulf %18, %3 : vector<128x128xf32>
    %20 = arith.addf %17, %19 : vector<128x128xf32>
    %21 = arith.truncf %20 : vector<128x128xf32> to vector<128x128xbf16>
    %cst = arith.constant dense<0.000000e+00> : vector<128x128xf32>
    %22 = tpu.matmul %16, %21, %cst {dimension_numbers = #tpu.dot_dimension_numbers<[1], [1], [0], [0], [0, 0, 1, 0], [], []>} : vector<128x128xbf16>, vector<128x128xbf16>, vector<128x128xf32> -> vector<128x128xf32>
    %cst_7 = arith.constant 0.0883883461 : f32
    %23 = vector.broadcast %cst_7 : f32 to vector<128x128xf32>
    %24 = arith.mulf %22, %23 : vector<128x128xf32>
    %cst_8 = arith.constant -1.000000e+30 : f32
    %25 = vector.broadcast %cst_8 : f32 to vector<128x128xf32>
    %26 = arith.select %6, %24, %25 : vector<128x128xi1>, vector<128x128xf32>
    %cst_9 = arith.constant dense<0xFF800000> : vector<128xf32>
    %27 = vector.multi_reduction <maximumf>, %26, %cst_9 [1] : vector<128x128xf32> to vector<128xf32>
    %28 = vector.shape_cast %27 : vector<128xf32> to vector<128x1xf32>
    %29 = vector.broadcast %28 : vector<128x1xf32> to vector<128x128xf32>
    %30 = arith.subf %26, %29 : vector<128x128xf32>
    %31 = math.exp %30 : vector<128x128xf32>
    %cst_10 = arith.constant dense<0.000000e+00> : vector<128xf32>
    %32 = vector.multi_reduction <add>, %31, %cst_10 [1] : vector<128x128xf32> to vector<128xf32>
    %33 = vector.shape_cast %32 : vector<128xf32> to vector<128x1xf32>
    %34 = arith.truncf %31 : vector<128x128xf32> to vector<128x128xbf16>
    %cst_11 = arith.constant dense<0.000000e+00> : vector<128x128xf32>
    %35 = tpu.matmul %34, %11, %cst_11 {dimension_numbers = #tpu.dot_dimension_numbers<[1], [0], [0], [1], [0, 0, 1, 1], [], []>} : vector<128x128xbf16>, vector<128x128xbf16>, vector<128x128xf32> -> vector<128x128xf32>
    %36 = tpu.reciprocal %33 {approx = true} : vector<128x1xf32> -> vector<128x1xf32>
    %37 = vector.broadcast %36 : vector<128x1xf32> to vector<128x128xf32>
    %38 = arith.mulf %35, %37 : vector<128x128xf32>
    %39 = vector.extract_strided_slice %1 {offsets = [0, 128], sizes = [128, 128], strides = [1, 1]} : vector<128x768xbf16> to vector<128x128xbf16>
    %40 = arith.extf %39 : vector<128x128xbf16> to vector<128x128xf32>
    %41 = vector.extract_strided_slice %1 {offsets = [0, 384], sizes = [128, 128], strides = [1, 1]} : vector<128x768xbf16> to vector<128x128xbf16>
    %42 = arith.extf %41 : vector<128x128xbf16> to vector<128x128xf32>
    %43 = vector.extract_strided_slice %1 {offsets = [0, 640], sizes = [128, 128], strides = [1, 1]} : vector<128x768xbf16> to vector<128x128xbf16>
    %44 = arith.mulf %40, %2 : vector<128x128xf32>
    %c64_i32_12 = arith.constant 64 : i32
    %45 = tpu.dynamic_rotate %40 by %c64_i32_12 dim 1 : vector<128x128xf32>, i32 -> vector<128x128xf32>
    %46 = arith.mulf %45, %3 : vector<128x128xf32>
    %47 = arith.addf %44, %46 : vector<128x128xf32>
    %48 = arith.truncf %47 : vector<128x128xf32> to vector<128x128xbf16>
    %49 = arith.mulf %42, %2 : vector<128x128xf32>
    %c64_i32_13 = arith.constant 64 : i32
    %50 = tpu.dynamic_rotate %42 by %c64_i32_13 dim 1 : vector<128x128xf32>, i32 -> vector<128x128xf32>
    %51 = arith.mulf %50, %3 : vector<128x128xf32>
    %52 = arith.addf %49, %51 : vector<128x128xf32>
    %53 = arith.truncf %52 : vector<128x128xf32> to vector<128x128xbf16>
    %cst_14 = arith.constant dense<0.000000e+00> : vector<128x128xf32>
    %54 = tpu.matmul %48, %53, %cst_14 {dimension_numbers = #tpu.dot_dimension_numbers<[1], [1], [0], [0], [0, 0, 1, 0], [], []>} : vector<128x128xbf16>, vector<128x128xbf16>, vector<128x128xf32> -> vector<128x128xf32>
    %cst_15 = arith.constant 0.0883883461 : f32
    %55 = vector.broadcast %cst_15 : f32 to vector<128x128xf32>
    %56 = arith.mulf %54, %55 : vector<128x128xf32>
    %cst_16 = arith.constant -1.000000e+30 : f32
    %57 = vector.broadcast %cst_16 : f32 to vector<128x128xf32>
    %58 = arith.select %6, %56, %57 : vector<128x128xi1>, vector<128x128xf32>
    %cst_17 = arith.constant dense<0xFF800000> : vector<128xf32>
    %59 = vector.multi_reduction <maximumf>, %58, %cst_17 [1] : vector<128x128xf32> to vector<128xf32>
    %60 = vector.shape_cast %59 : vector<128xf32> to vector<128x1xf32>
    %61 = vector.broadcast %60 : vector<128x1xf32> to vector<128x128xf32>
    %62 = arith.subf %58, %61 : vector<128x128xf32>
    %63 = math.exp %62 : vector<128x128xf32>
    %cst_18 = arith.constant dense<0.000000e+00> : vector<128xf32>
    %64 = vector.multi_reduction <add>, %63, %cst_18 [1] : vector<128x128xf32> to vector<128xf32>
    %65 = vector.shape_cast %64 : vector<128xf32> to vector<128x1xf32>
    %66 = arith.truncf %63 : vector<128x128xf32> to vector<128x128xbf16>
    %cst_19 = arith.constant dense<0.000000e+00> : vector<128x128xf32>
    %67 = tpu.matmul %66, %43, %cst_19 {dimension_numbers = #tpu.dot_dimension_numbers<[1], [0], [0], [1], [0, 0, 1, 1], [], []>} : vector<128x128xbf16>, vector<128x128xbf16>, vector<128x128xf32> -> vector<128x128xf32>
    %68 = tpu.reciprocal %65 {approx = true} : vector<128x1xf32> -> vector<128x1xf32>
    %69 = vector.broadcast %68 : vector<128x1xf32> to vector<128x128xf32>
    %70 = arith.mulf %67, %69 : vector<128x128xf32>
    %71 = tpu.concatenate %38, %70 in 1 : vector<128x128xf32>, vector<128x128xf32> -> vector<128x256xf32>
    %72 = arith.truncf %71 : vector<128x256xf32> to vector<128x256xbf16>
    %c0_20 = arith.constant 0 : index
    %c0_21 = arith.constant 0 : index
    %c0_22 = arith.constant 0 : index
    %73 = vector.load %arg4[%c0_20, %c0_21, %c0_22] : memref<1x128x256xbf16, #tpu.memory_space<vmem>>, vector<1x128x256xbf16>
    %74 = vector.shape_cast %73 : vector<1x128x256xbf16> to vector<128x256xbf16>
    %75 = vector.shape_cast %72 : vector<128x256xbf16> to vector<1x128x256xbf16>
    tpu.vector_store %arg4[%c0_20, %c0_21, %c0_22], %75 {strides = array<i32>} : memref<1x128x256xbf16, #tpu.memory_space<vmem>>, vector<1x128x256xbf16>,
    return
  }
  func.func @transform_0(%arg0: i32) -> (i32, i32, i32) {
    %c0_i32 = arith.constant 0 : i32
    %c0_i32_0 = arith.constant 0 : i32
    %c0_i32_1 = arith.constant 0 : i32
    return %arg0, %c0_i32, %c0_i32_0 : i32, i32, i32
  }
  func.func @transform_1(%arg0: i32) -> (i32, i32) {
    %c0_i32 = arith.constant 0 : i32
    %c0_i32_0 = arith.constant 0 : i32
    %c0_i32_1 = arith.constant 0 : i32
    return %c0_i32, %c0_i32_0 : i32, i32
  }
  func.func @transform_2(%arg0: i32) -> (i32, i32) {
    %c0_i32 = arith.constant 0 : i32
    %c0_i32_0 = arith.constant 0 : i32
    %c0_i32_1 = arith.constant 0 : i32
    return %c0_i32, %c0_i32_0 : i32, i32
  }
  func.func @transform_3(%arg0: i32) -> (i32, i32, i32) {
    %c0_i32 = arith.constant 0 : i32
    %c0_i32_0 = arith.constant 0 : i32
    %c0_i32_1 = arith.constant 0 : i32
    return %arg0, %c0_i32, %c0_i32_0 : i32, i32, i32
  }
}

module attributes {stable_mosaic.version = 11 : i64} {
  func.func @_matmul_res_kernel(%arg0: i32, %arg1: i32, %arg2: i32, %arg3: memref<128x256xbf16, #tpu.memory_space<vmem>>, %arg4: memref<256x256xbf16, #tpu.memory_space<vmem>>, %arg5: memref<128x256xbf16, #tpu.memory_space<vmem>>, %arg6: memref<128x256xbf16, #tpu.memory_space<vmem>>, %arg7: memref<128x256xf32, #tpu.memory_space<vmem>>) attributes {dimension_semantics = [#tpu.dimension_semantics<parallel>, #tpu.dimension_semantics<parallel>, #tpu.dimension_semantics<arbitrary>], iteration_bounds = array<i64: 2, 1, 1>, scalar_prefetch = 0 : i64, scratch_operands = 1 : i64, tpu.core_type = #tpu.core_type<tc>, window_params = [{transform_indices = @transform_0, window_bounds = array<i64: 128, 256>}, {transform_indices = @transform_1, window_bounds = array<i64: 256, 256>}, {transform_indices = @transform_2, window_bounds = array<i64: 128, 256>}, {transform_indices = @transform_3, window_bounds = array<i64: 128, 256>}]} {
    %c0_i32 = arith.constant 0 : i32
    %0 = arith.cmpi eq, %arg2, %c0_i32 : i32
    %1 = arith.extui %0 : i1 to i32
    %c0_i32_0 = arith.constant 0 : i32
    %2 = arith.cmpi ne, %1, %c0_i32_0 : i32
    scf.if %2 {
      %cst_10 = arith.constant 0.000000e+00 : f32
      %12 = vector.broadcast %cst_10 : f32 to vector<128x256xf32>
      %c0_11 = arith.constant 0 : index
      %c0_12 = arith.constant 0 : index
      %13 = vector.load %arg7[%c0_11, %c0_12] : memref<128x256xf32, #tpu.memory_space<vmem>>, vector<128x256xf32>
      tpu.vector_store %arg7[%c0_11, %c0_12], %12 {strides = array<i32>} : memref<128x256xf32, #tpu.memory_space<vmem>>, vector<128x256xf32>,
    } else {
    }
    %c0 = arith.constant 0 : index
    %c0_1 = arith.constant 0 : index
    %3 = vector.load %arg7[%c0, %c0_1] : memref<128x256xf32, #tpu.memory_space<vmem>>, vector<128x256xf32>
    %c0_2 = arith.constant 0 : index
    %c0_3 = arith.constant 0 : index
    %4 = vector.load %arg3[%c0_2, %c0_3] : memref<128x256xbf16, #tpu.memory_space<vmem>>, vector<128x256xbf16>
    %c0_4 = arith.constant 0 : index
    %c0_5 = arith.constant 0 : index
    %5 = vector.load %arg4[%c0_4, %c0_5] : memref<256x256xbf16, #tpu.memory_space<vmem>>, vector<256x256xbf16>
    %cst = arith.constant dense<0.000000e+00> : vector<128x256xf32>
    %6 = tpu.matmul %4, %5, %cst {dimension_numbers = #tpu.dot_dimension_numbers<[1], [0], [0], [1], [0, 0, 1, 1], [], []>} : vector<128x256xbf16>, vector<256x256xbf16>, vector<128x256xf32> -> vector<128x256xf32>
    %7 = arith.addf %3, %6 : vector<128x256xf32>
    %c0_6 = arith.constant 0 : index
    %c0_7 = arith.constant 0 : index
    %8 = vector.load %arg7[%c0_6, %c0_7] : memref<128x256xf32, #tpu.memory_space<vmem>>, vector<128x256xf32>
    tpu.vector_store %arg7[%c0_6, %c0_7], %7 {strides = array<i32>} : memref<128x256xf32, #tpu.memory_space<vmem>>, vector<128x256xf32>,
    %c0_i32_8 = arith.constant 0 : i32
    %9 = arith.cmpi eq, %arg2, %c0_i32_8 : i32
    %10 = arith.extui %9 : i1 to i32
    %c0_i32_9 = arith.constant 0 : i32
    %11 = arith.cmpi ne, %10, %c0_i32_9 : i32
    scf.if %11 {
      %c0_10 = arith.constant 0 : index
      %c0_11 = arith.constant 0 : index
      %12 = vector.load %arg7[%c0_10, %c0_11] : memref<128x256xf32, #tpu.memory_space<vmem>>, vector<128x256xf32>
      %c0_12 = arith.constant 0 : index
      %c0_13 = arith.constant 0 : index
      %13 = vector.load %arg5[%c0_12, %c0_13] : memref<128x256xbf16, #tpu.memory_space<vmem>>, vector<128x256xbf16>
      %14 = arith.extf %13 : vector<128x256xbf16> to vector<128x256xf32>
      %15 = arith.addf %12, %14 : vector<128x256xf32>
      %16 = arith.truncf %15 : vector<128x256xf32> to vector<128x256xbf16>
      %c0_14 = arith.constant 0 : index
      %c0_15 = arith.constant 0 : index
      %17 = vector.load %arg6[%c0_14, %c0_15] : memref<128x256xbf16, #tpu.memory_space<vmem>>, vector<128x256xbf16>
      tpu.vector_store %arg6[%c0_14, %c0_15], %16 {strides = array<i32>} : memref<128x256xbf16, #tpu.memory_space<vmem>>, vector<128x256xbf16>,
    } else {
    }
    return
  }
  func.func @transform_0(%arg0: i32, %arg1: i32, %arg2: i32) -> (i32, i32) {
    %c0_i32 = arith.constant 0 : i32
    return %arg0, %arg2 : i32, i32
  }
  func.func @transform_1(%arg0: i32, %arg1: i32, %arg2: i32) -> (i32, i32) {
    %c0_i32 = arith.constant 0 : i32
    return %arg2, %arg1 : i32, i32
  }
  func.func @transform_2(%arg0: i32, %arg1: i32, %arg2: i32) -> (i32, i32) {
    %c0_i32 = arith.constant 0 : i32
    return %arg0, %arg1 : i32, i32
  }
  func.func @transform_3(%arg0: i32, %arg1: i32, %arg2: i32) -> (i32, i32) {
    %c0_i32 = arith.constant 0 : i32
    return %arg0, %arg1 : i32, i32
  }
}

module attributes {stable_mosaic.version = 11 : i64} {
  func.func @_norm_ffn_kernel(%arg0: i32, %arg1: i32, %arg2: memref<128x256xbf16, #tpu.memory_space<vmem>>, %arg3: memref<1x256xf32, #tpu.memory_space<vmem>>, %arg4: memref<256x768xbf16, #tpu.memory_space<vmem>>, %arg5: memref<256x768xbf16, #tpu.memory_space<vmem>>, %arg6: memref<768x256xbf16, #tpu.memory_space<vmem>>, %arg7: memref<128x256xbf16, #tpu.memory_space<vmem>>, %arg8: memref<128x256xf32, #tpu.memory_space<vmem>>, %arg9: memref<128x256xbf16, #tpu.memory_space<vmem>>) attributes {dimension_semantics = [#tpu.dimension_semantics<parallel>, #tpu.dimension_semantics<arbitrary>], iteration_bounds = array<i64: 2, 1>, scalar_prefetch = 0 : i64, scratch_operands = 2 : i64, tpu.core_type = #tpu.core_type<tc>, window_params = [{transform_indices = @transform_0, window_bounds = array<i64: 128, 256>}, {pipeline_mode = #tpu.pipeline_mode<synchronous>, transform_indices = @transform_1, window_bounds = array<i64: 1, 256>}, {transform_indices = @transform_2, window_bounds = array<i64: 256, 768>}, {transform_indices = @transform_3, window_bounds = array<i64: 256, 768>}, {transform_indices = @transform_4, window_bounds = array<i64: 768, 256>}, {transform_indices = @transform_5, window_bounds = array<i64: 128, 256>}]} {
    %c0_i32 = arith.constant 0 : i32
    %0 = arith.cmpi eq, %arg1, %c0_i32 : i32
    %1 = arith.extui %0 : i1 to i32
    %c0_i32_0 = arith.constant 0 : i32
    %2 = arith.cmpi ne, %1, %c0_i32_0 : i32
    scf.if %2 {
      %cst_17 = arith.constant 0.000000e+00 : f32
      %24 = vector.broadcast %cst_17 : f32 to vector<128x256xf32>
      %c0_18 = arith.constant 0 : index
      %c0_19 = arith.constant 0 : index
      %25 = vector.load %arg8[%c0_18, %c0_19] : memref<128x256xf32, #tpu.memory_space<vmem>>, vector<128x256xf32>
      tpu.vector_store %arg8[%c0_18, %c0_19], %24 {strides = array<i32>} : memref<128x256xf32, #tpu.memory_space<vmem>>, vector<128x256xf32>,
      %c0_20 = arith.constant 0 : index
      %c0_21 = arith.constant 0 : index
      %26 = vector.load %arg2[%c0_20, %c0_21] : memref<128x256xbf16, #tpu.memory_space<vmem>>, vector<128x256xbf16>
      %27 = arith.extf %26 : vector<128x256xbf16> to vector<128x256xf32>
      %28 = arith.mulf %27, %27 : vector<128x256xf32>
      %cst_22 = arith.constant dense<0.000000e+00> : vector<128xf32>
      %29 = vector.multi_reduction <add>, %28, %cst_22 [1] : vector<128x256xf32> to vector<128xf32>
      %30 = vector.shape_cast %29 : vector<128xf32> to vector<128x1xf32>
      %cst_23 = arith.constant 2.560000e+02 : f32
      %31 = vector.broadcast %cst_23 : f32 to vector<128x1xf32>
      %32 = arith.divf %30, %31 : vector<128x1xf32>
      %cst_24 = arith.constant 9.99999974E-6 : f32
      %33 = vector.broadcast %cst_24 : f32 to vector<128x1xf32>
      %34 = arith.addf %32, %33 : vector<128x1xf32>
      %35 = math.rsqrt %34 : vector<128x1xf32>
      %36 = vector.broadcast %35 : vector<128x1xf32> to vector<128x256xf32>
      %37 = arith.mulf %27, %36 : vector<128x256xf32>
      %c0_25 = arith.constant 0 : index
      %c0_26 = arith.constant 0 : index
      %38 = vector.load %arg3[%c0_25, %c0_26] : memref<1x256xf32, #tpu.memory_space<vmem>>, vector<1x256xf32>
      %39 = vector.broadcast %38 : vector<1x256xf32> to vector<128x256xf32>
      %40 = arith.mulf %37, %39 : vector<128x256xf32>
      %41 = arith.truncf %40 : vector<128x256xf32> to vector<128x256xbf16>
      %c0_27 = arith.constant 0 : index
      %c0_28 = arith.constant 0 : index
      %42 = vector.load %arg9[%c0_27, %c0_28] : memref<128x256xbf16, #tpu.memory_space<vmem>>, vector<128x256xbf16>
      tpu.vector_store %arg9[%c0_27, %c0_28], %41 {strides = array<i32>} : memref<128x256xbf16, #tpu.memory_space<vmem>>, vector<128x256xbf16>,
    } else {
    }
    %c0 = arith.constant 0 : index
    %c0_1 = arith.constant 0 : index
    %3 = vector.load %arg9[%c0, %c0_1] : memref<128x256xbf16, #tpu.memory_space<vmem>>, vector<128x256xbf16>
    %c0_2 = arith.constant 0 : index
    %c0_3 = arith.constant 0 : index
    %4 = vector.load %arg4[%c0_2, %c0_3] : memref<256x768xbf16, #tpu.memory_space<vmem>>, vector<256x768xbf16>
    %cst = arith.constant dense<0.000000e+00> : vector<128x768xf32>
    %5 = tpu.matmul %3, %4, %cst {dimension_numbers = #tpu.dot_dimension_numbers<[1], [0], [0], [1], [0, 0, 1, 1], [], []>} : vector<128x256xbf16>, vector<256x768xbf16>, vector<128x768xf32> -> vector<128x768xf32>
    %c0_4 = arith.constant 0 : index
    %c0_5 = arith.constant 0 : index
    %6 = vector.load %arg5[%c0_4, %c0_5] : memref<256x768xbf16, #tpu.memory_space<vmem>>, vector<256x768xbf16>
    %cst_6 = arith.constant dense<0.000000e+00> : vector<128x768xf32>
    %7 = tpu.matmul %3, %6, %cst_6 {dimension_numbers = #tpu.dot_dimension_numbers<[1], [0], [0], [1], [0, 0, 1, 1], [], []>} : vector<128x256xbf16>, vector<256x768xbf16>, vector<128x768xf32> -> vector<128x768xf32>
    %8 = arith.negf %5 : vector<128x768xf32>
    %9 = math.exp %8 : vector<128x768xf32>
    %cst_7 = arith.constant 1.000000e+00 : f32
    %10 = vector.broadcast %cst_7 : f32 to vector<128x768xf32>
    %11 = arith.addf %10, %9 : vector<128x768xf32>
    %12 = arith.divf %10, %11 : vector<128x768xf32>
    %13 = arith.mulf %5, %12 : vector<128x768xf32>
    %14 = arith.mulf %13, %7 : vector<128x768xf32>
    %c0_8 = arith.constant 0 : index
    %c0_9 = arith.constant 0 : index
    %15 = vector.load %arg8[%c0_8, %c0_9] : memref<128x256xf32, #tpu.memory_space<vmem>>, vector<128x256xf32>
    %16 = arith.truncf %14 : vector<128x768xf32> to vector<128x768xbf16>
    %c0_10 = arith.constant 0 : index
    %c0_11 = arith.constant 0 : index
    %17 = vector.load %arg6[%c0_10, %c0_11] : memref<768x256xbf16, #tpu.memory_space<vmem>>, vector<768x256xbf16>
    %cst_12 = arith.constant dense<0.000000e+00> : vector<128x256xf32>
    %18 = tpu.matmul %16, %17, %cst_12 {dimension_numbers = #tpu.dot_dimension_numbers<[1], [0], [0], [1], [0, 0, 1, 1], [], []>} : vector<128x768xbf16>, vector<768x256xbf16>, vector<128x256xf32> -> vector<128x256xf32>
    %19 = arith.addf %15, %18 : vector<128x256xf32>
    %c0_13 = arith.constant 0 : index
    %c0_14 = arith.constant 0 : index
    %20 = vector.load %arg8[%c0_13, %c0_14] : memref<128x256xf32, #tpu.memory_space<vmem>>, vector<128x256xf32>
    tpu.vector_store %arg8[%c0_13, %c0_14], %19 {strides = array<i32>} : memref<128x256xf32, #tpu.memory_space<vmem>>, vector<128x256xf32>,
    %c0_i32_15 = arith.constant 0 : i32
    %21 = arith.cmpi eq, %arg1, %c0_i32_15 : i32
    %22 = arith.extui %21 : i1 to i32
    %c0_i32_16 = arith.constant 0 : i32
    %23 = arith.cmpi ne, %22, %c0_i32_16 : i32
    scf.if %23 {
      %c0_17 = arith.constant 0 : index
      %c0_18 = arith.constant 0 : index
      %24 = vector.load %arg8[%c0_17, %c0_18] : memref<128x256xf32, #tpu.memory_space<vmem>>, vector<128x256xf32>
      %c0_19 = arith.constant 0 : index
      %c0_20 = arith.constant 0 : index
      %25 = vector.load %arg2[%c0_19, %c0_20] : memref<128x256xbf16, #tpu.memory_space<vmem>>, vector<128x256xbf16>
      %26 = arith.extf %25 : vector<128x256xbf16> to vector<128x256xf32>
      %27 = arith.addf %24, %26 : vector<128x256xf32>
      %28 = arith.truncf %27 : vector<128x256xf32> to vector<128x256xbf16>
      %c0_21 = arith.constant 0 : index
      %c0_22 = arith.constant 0 : index
      %29 = vector.load %arg7[%c0_21, %c0_22] : memref<128x256xbf16, #tpu.memory_space<vmem>>, vector<128x256xbf16>
      tpu.vector_store %arg7[%c0_21, %c0_22], %28 {strides = array<i32>} : memref<128x256xbf16, #tpu.memory_space<vmem>>, vector<128x256xbf16>,
    } else {
    }
    return
  }
  func.func @transform_0(%arg0: i32, %arg1: i32) -> (i32, i32) {
    %c0_i32 = arith.constant 0 : i32
    %c0_i32_0 = arith.constant 0 : i32
    return %arg0, %c0_i32 : i32, i32
  }
  func.func @transform_1(%arg0: i32, %arg1: i32) -> (i32, i32) {
    %c0_i32 = arith.constant 0 : i32
    %c0_i32_0 = arith.constant 0 : i32
    %c0_i32_1 = arith.constant 0 : i32
    return %c0_i32, %c0_i32_0 : i32, i32
  }
  func.func @transform_2(%arg0: i32, %arg1: i32) -> (i32, i32) {
    %c0_i32 = arith.constant 0 : i32
    %c0_i32_0 = arith.constant 0 : i32
    return %c0_i32, %arg1 : i32, i32
  }
  func.func @transform_3(%arg0: i32, %arg1: i32) -> (i32, i32) {
    %c0_i32 = arith.constant 0 : i32
    %c0_i32_0 = arith.constant 0 : i32
    return %c0_i32, %arg1 : i32, i32
  }
  func.func @transform_4(%arg0: i32, %arg1: i32) -> (i32, i32) {
    %c0_i32 = arith.constant 0 : i32
    %c0_i32_0 = arith.constant 0 : i32
    return %arg1, %c0_i32 : i32, i32
  }
  func.func @transform_5(%arg0: i32, %arg1: i32) -> (i32, i32) {
    %c0_i32 = arith.constant 0 : i32
    %c0_i32_0 = arith.constant 0 : i32
    return %arg0, %c0_i32 : i32, i32
  }
}

module attributes {stable_mosaic.version = 11 : i64} {
  func.func @_norm_linear_kernel(%arg0: i32, %arg1: i32, %arg2: memref<128x256xbf16, #tpu.memory_space<vmem>>, %arg3: memref<1x256xf32, #tpu.memory_space<vmem>>, %arg4: memref<256x256xbf16, #tpu.memory_space<vmem>>, %arg5: memref<128x256xf32, #tpu.memory_space<vmem>>, %arg6: memref<128x256xbf16, #tpu.memory_space<vmem>>) attributes {dimension_semantics = [#tpu.dimension_semantics<parallel>, #tpu.dimension_semantics<arbitrary>], iteration_bounds = array<i64: 2, 1>, scalar_prefetch = 0 : i64, scratch_operands = 1 : i64, tpu.core_type = #tpu.core_type<tc>, window_params = [{transform_indices = @transform_0, window_bounds = array<i64: 128, 256>}, {pipeline_mode = #tpu.pipeline_mode<synchronous>, transform_indices = @transform_1, window_bounds = array<i64: 1, 256>}, {transform_indices = @transform_2, window_bounds = array<i64: 256, 256>}, {transform_indices = @transform_3, window_bounds = array<i64: 128, 256>}]} {
    %c0_i32 = arith.constant 0 : i32
    %0 = arith.cmpi eq, %arg1, %c0_i32 : i32
    %1 = arith.extui %0 : i1 to i32
    %c0_i32_0 = arith.constant 0 : i32
    %2 = arith.cmpi ne, %1, %c0_i32_0 : i32
    scf.if %2 {
      %c0_6 = arith.constant 0 : index
      %c0_7 = arith.constant 0 : index
      %7 = vector.load %arg2[%c0_6, %c0_7] : memref<128x256xbf16, #tpu.memory_space<vmem>>, vector<128x256xbf16>
      %8 = arith.extf %7 : vector<128x256xbf16> to vector<128x256xf32>
      %9 = arith.mulf %8, %8 : vector<128x256xf32>
      %cst_8 = arith.constant dense<0.000000e+00> : vector<128xf32>
      %10 = vector.multi_reduction <add>, %9, %cst_8 [1] : vector<128x256xf32> to vector<128xf32>
      %11 = vector.shape_cast %10 : vector<128xf32> to vector<128x1xf32>
      %cst_9 = arith.constant 2.560000e+02 : f32
      %12 = vector.broadcast %cst_9 : f32 to vector<128x1xf32>
      %13 = arith.divf %11, %12 : vector<128x1xf32>
      %cst_10 = arith.constant 9.99999974E-6 : f32
      %14 = vector.broadcast %cst_10 : f32 to vector<128x1xf32>
      %15 = arith.addf %13, %14 : vector<128x1xf32>
      %16 = math.rsqrt %15 : vector<128x1xf32>
      %17 = vector.broadcast %16 : vector<128x1xf32> to vector<128x256xf32>
      %18 = arith.mulf %8, %17 : vector<128x256xf32>
      %c0_11 = arith.constant 0 : index
      %c0_12 = arith.constant 0 : index
      %19 = vector.load %arg3[%c0_11, %c0_12] : memref<1x256xf32, #tpu.memory_space<vmem>>, vector<1x256xf32>
      %20 = vector.broadcast %19 : vector<1x256xf32> to vector<128x256xf32>
      %21 = arith.mulf %18, %20 : vector<128x256xf32>
      %22 = arith.truncf %21 : vector<128x256xf32> to vector<128x256xbf16>
      %c0_13 = arith.constant 0 : index
      %c0_14 = arith.constant 0 : index
      %23 = vector.load %arg6[%c0_13, %c0_14] : memref<128x256xbf16, #tpu.memory_space<vmem>>, vector<128x256xbf16>
      tpu.vector_store %arg6[%c0_13, %c0_14], %22 {strides = array<i32>} : memref<128x256xbf16, #tpu.memory_space<vmem>>, vector<128x256xbf16>,
    } else {
    }
    %c0 = arith.constant 0 : index
    %c0_1 = arith.constant 0 : index
    %3 = vector.load %arg6[%c0, %c0_1] : memref<128x256xbf16, #tpu.memory_space<vmem>>, vector<128x256xbf16>
    %c0_2 = arith.constant 0 : index
    %c0_3 = arith.constant 0 : index
    %4 = vector.load %arg4[%c0_2, %c0_3] : memref<256x256xbf16, #tpu.memory_space<vmem>>, vector<256x256xbf16>
    %cst = arith.constant dense<0.000000e+00> : vector<128x256xf32>
    %5 = tpu.matmul %3, %4, %cst {dimension_numbers = #tpu.dot_dimension_numbers<[1], [0], [0], [1], [0, 0, 1, 1], [], []>} : vector<128x256xbf16>, vector<256x256xbf16>, vector<128x256xf32> -> vector<128x256xf32>
    %c0_4 = arith.constant 0 : index
    %c0_5 = arith.constant 0 : index
    %6 = vector.load %arg5[%c0_4, %c0_5] : memref<128x256xf32, #tpu.memory_space<vmem>>, vector<128x256xf32>
    tpu.vector_store %arg5[%c0_4, %c0_5], %5 {strides = array<i32>} : memref<128x256xf32, #tpu.memory_space<vmem>>, vector<128x256xf32>,
    return
  }
  func.func @transform_0(%arg0: i32, %arg1: i32) -> (i32, i32) {
    %c0_i32 = arith.constant 0 : i32
    %c0_i32_0 = arith.constant 0 : i32
    return %arg0, %c0_i32 : i32, i32
  }
  func.func @transform_1(%arg0: i32, %arg1: i32) -> (i32, i32) {
    %c0_i32 = arith.constant 0 : i32
    %c0_i32_0 = arith.constant 0 : i32
    %c0_i32_1 = arith.constant 0 : i32
    return %c0_i32, %c0_i32_0 : i32, i32
  }
  func.func @transform_2(%arg0: i32, %arg1: i32) -> (i32, i32) {
    %c0_i32 = arith.constant 0 : i32
    %c0_i32_0 = arith.constant 0 : i32
    return %c0_i32, %arg1 : i32, i32
  }
  func.func @transform_3(%arg0: i32, %arg1: i32) -> (i32, i32) {
    %c0_i32 = arith.constant 0 : i32
    return %arg0, %arg1 : i32, i32
  }
}

</mosaic_0001>

<llo_original>
// kernel: transformer_forward.10
$region0: #{transformer_forward.10}
  #allocation0 [shape = 'u32[]', space=smem, size = 0x4, offset = 0x4, fixed_abs, tag = 'smem constant byte address 0x4 - core index']
  #allocation1 [shape = 'u32[144,128]{1,0:T(1,128)}', space=vmem, size = 0x12000, scoped, tag = 'internal scratch']
  %s0 = inlined_call_operand.hbm [shape: bf16[2,128,768], index: 0, kind: input, shape index: {}]
  %s1 = inlined_call_operand.hbm [shape: f32[128,128], index: 1, kind: input, shape index: {}]
  %s2 = inlined_call_operand.hbm [shape: f32[128,128], index: 2, kind: input, shape index: {}]
  %s3 = inlined_call_operand.hbm [shape: bf16[2,128,256], index: 3, kind: output, shape index: {}]
  %s4 = sld [smem:[#allocation0]]
  $region57: #{transformer_forward.10} parent=0
    _
  %s6 = ssub.s32 1, %s4
  %s7 = scalar_select 0, %s6, %s4
  $region1: #{transformer_forward.10} parent=0
    #allocation2 [shape = 'u8[393216]{0}', space=vmem, size = 0x60000, scoped, tag = 'input window, operand 0']
    #allocation3 [shape = 's32[2]{0}', space=sflag, size = 0x8, scoped, tag = 'scoped memory for transformer_forward.10']
    #allocation4 [shape = 's32[2]{0}', space=sflag, size = 0x8, scoped, tag = 'scoped memory for transformer_forward.10']
    #allocation5 [shape = 'u8[65536]{0}', space=vmem, size = 0x10000, scoped, tag = 'input window, operand 1, single buffered']
    #allocation6 [shape = 's32[1]{0}', space=sflag, size = 0x4, scoped, tag = 'scoped memory for transformer_forward.10']
    #allocation7 [shape = 'u8[65536]{0}', space=vmem, size = 0x10000, scoped, tag = 'input window, operand 2, single buffered']
    #allocation8 [shape = 'u8[131072]{0}', space=vmem, size = 0x20000, scoped, tag = 'output window, operand 0']
    %8 = vsyncpa [#allocation3], 0
    %s9 = scalar_lea.sflag [#allocation3], 1
    %10 = vsyncpa %s9, 0
    %11 = vsyncpa [#allocation6], 0
    %12 = vsyncpa [#allocation4], 0
    %s13 = scalar_lea.sflag [#allocation4], 1
    %14 = vsyncpa %s13, 0
    loop: start=0, step=1, limit=4
    $region2: #{transformer_forward.10} parent=1 // loop_pre_header
      _
    $region3: #{transformer_forward.10} parent=1 // loop_header
      %s16 = sphi 0, %s20
      %p17 = scmp.ge.s32.totalorder %s16, 4
      %s26 = sphi 0, %s28
      %s29 = sphi 0, %s26
      %s30 = sphi 0, %s29
      %s46 = sphi 0, %s30
      %s50 = sphi 0, %s50
      %s52 = sphi 0, %s50
      %s53 = sphi 0, %s52
      %s67 = sphi 0, %s53
      %s71 = sphi 0, %s71
      %s73 = sphi 0, %s71
      %s74 = sphi 0, %s73
      %s88 = sphi 0, %s74
      %s94 = sphi 0, %s96
      %s97 = sphi 0, %s94
      %s98 = sphi 0, %s97
      %s114 = sphi 0, %s98
    $region4: #{transformer_forward.10} parent=1 // loop_header_branch
      %19 = sbr.rel (%p17) target = $region8
    $region5: #{transformer_forward.10} parent=1 // loop_body
      %s21 = ssub.s32 %s16, 1
      %s22 = ssub.s32 %s16, 2
      %s23 = sadd.s32 %s16, 1
      %s24 = ssub.s32 %s16, %s23
      %p25 = scmp.eq.s32.totalorder %s24, 0
      %s27 = sadd.s32 %s26, 1
      %s28 = scalar_select %p25, %s26, %s27
      %p31 = pneg %p25
      %p32 = scmp.eq.s32.totalorder %s16, 1
      %p33 = por %p31, %p32
      %p34 = scmp.ne.s32.totalorder %s26, %s29
      %p35 = scmp.eq.s32.totalorder %s16, 0
      %p36 = por %p34, %p35
      %p37 = scmp.ne.s32.totalorder %s26, %s29
      %p38 = scmp.eq.s32.totalorder %s21, 1
      %p39 = por %p37, %p38
      %p40 = scmp.ne.s32.totalorder %s29, %s30
      %p41 = scmp.eq.s32.totalorder %s21, 0
      %p42 = por %p40, %p41
      %p43 = scmp.ne.s32.totalorder %s29, %s30
      %p44 = scmp.eq.s32.totalorder %s22, 1
      %p45 = por %p43, %p44
      %p47 = scmp.ne.s32.totalorder %s30, %s46
      %p48 = scmp.eq.s32.totalorder %s22, 0
      %p49 = por %p47, %p48
      %s51 = sadd.s32 %s50, 1
      %p54 = scmp.eq.s32.totalorder %s16, 1
      %p55 = scmp.ne.s32.totalorder %s50, %s52
      %p56 = scmp.eq.s32.totalorder %s16, 0
      %p57 = por %p55, %p56
      %p58 = scmp.ne.s32.totalorder %s50, %s52
      %p59 = scmp.eq.s32.totalorder %s21, 1
      %p60 = por %p58, %p59
      %p61 = scmp.ne.s32.totalorder %s52, %s53
      %p62 = scmp.eq.s32.totalorder %s21, 0
      %p63 = por %p61, %p62
      %p64 = scmp.ne.s32.totalorder %s52, %s53
      %p65 = scmp.eq.s32.totalorder %s22, 1
      %p66 = por %p64, %p65
      %p68 = scmp.ne.s32.totalorder %s53, %s67
      %p69 = scmp.eq.s32.totalorder %s22, 0
      %p70 = por %p68, %p69
      %s72 = sadd.s32 %s71, 1
      %p75 = scmp.eq.s32.totalorder %s16, 1
      %p76 = scmp.ne.s32.totalorder %s71, %s73
      %p77 = scmp.eq.s32.totalorder %s16, 0
      %p78 = por %p76, %p77
      %p79 = scmp.ne.s32.totalorder %s71, %s73
      %p80 = scmp.eq.s32.totalorder %s21, 1
      %p81 = por %p79, %p80
      %p82 = scmp.ne.s32.totalorder %s73, %s74
      %p83 = scmp.eq.s32.totalorder %s21, 0
      %p84 = por %p82, %p83
      %p85 = scmp.ne.s32.totalorder %s73, %s74
      %p86 = scmp.eq.s32.totalorder %s22, 1
      %p87 = por %p85, %p86
      %p89 = scmp.ne.s32.totalorder %s74, %s88
      %p90 = scmp.eq.s32.totalorder %s22, 0
      %p91 = por %p89, %p90
      %s92 = ssub.s32 %s16, %s23
      %p93 = scmp.eq.s32.totalorder %s92, 0
      %s95 = sadd.s32 %s94, 1
      %s96 = scalar_select %p93, %s94, %s95
      %p99 = pneg %p93
      %p100 = scmp.eq.s32.totalorder %s16, 1
      %p101 = por %p99, %p100
      %p102 = scmp.ne.s32.totalorder %s94, %s97
      %p103 = scmp.eq.s32.totalorder %s16, 0
      %p104 = por %p102, %p103
      %p105 = scmp.ne.s32.totalorder %s94, %s97
      %p106 = scmp.eq.s32.totalorder %s21, 1
      %p107 = por %p105, %p106
      %p108 = scmp.ne.s32.totalorder %s97, %s98
      %p109 = scmp.eq.s32.totalorder %s21, 0
      %p110 = por %p108, %p109
      %p111 = scmp.ne.s32.totalorder %s97, %s98
      %p112 = scmp.eq.s32.totalorder %s22, 1
      %p113 = por %p111, %p112
      %p115 = scmp.ne.s32.totalorder %s98, %s114
      %p116 = scmp.eq.s32.totalorder %s22, 0
      %p117 = por %p115, %p116
      %p118 = scmp.le.s32.totalorder 1, %s16
      %p119 = scmp.lt.s32.totalorder %s16, 3
      %p120 = pnand %p118, %p119
      %p121 = pneg %p120
      // Predicated region
      $region9: #{transformer_forward.10} parent=5 // pred_check
        _
      $region10: #{transformer_forward.10} parent=5 // pred_check_branch
        %123 = sbr.rel (%p120) target = $region12
      $region11: #{transformer_forward.10} parent=5 // pred_region
        %s124 = ssub.s32 %s16, 1
        // Predicated region
        $region13: #{transformer_forward.10} parent=11 // pred_check
          %p125 = pneg %p63
        $region14: #{transformer_forward.10} parent=11 // pred_check_branch
          %127 = sbr.rel (%p125) target = $region16
        $region15: #{transformer_forward.10} parent=11 // pred_region
          %s129 = ssub.s32 2048, 2048
          %130 = vsyncadd [#allocation6], %s129
          %s131 = sshll.u32 [#allocation5], 4
          %s132 = int_to_ptr.vmem [resolvable:$true] %s131
          %137 = dma.hbm_to_vmem [thread:$0]  %s1, 2048, %s132, [#allocation6], 128, 128, 8
        $region16: #{transformer_forward.10} parent=11 // pred_fallthru
          _
        // Predicated region
        $region17: #{transformer_forward.10} parent=11 // pred_check
          %p138 = pneg %p84
        $region18: #{transformer_forward.10} parent=11 // pred_check_branch
          %140 = sbr.rel (%p138) target = $region20
        $region19: #{transformer_forward.10} parent=11 // pred_region
          %s142 = ssub.s32 2048, 2048
          %143 = vsyncadd [#allocation6], %s142
          %s144 = sshll.u32 [#allocation7], 4
          %s145 = int_to_ptr.vmem [resolvable:$true] %s144
          %150 = dma.hbm_to_vmem [thread:$0]  %s2, 2048, %s145, [#allocation6], 128, 128, 8
        $region20: #{transformer_forward.10} parent=11 // pred_fallthru
          _
      $region12: #{transformer_forward.10} parent=5 // pred_fallthru
        _
      %p151 = scmp.lt.s32.totalorder %s16, 2
      // Predicated region
      $region21: #{transformer_forward.10} parent=5 // pred_check
        %p152 = pneg %p151
      $region22: #{transformer_forward.10} parent=5 // pred_check_branch
        %154 = sbr.rel (%p152) target = $region24
      $region23: #{transformer_forward.10} parent=5 // pred_region
        // Predicated region
        $region25: #{transformer_forward.10} parent=23 // pred_check
          %p155 = pneg %p36
        $region26: #{transformer_forward.10} parent=23 // pred_check_branch
          %157 = sbr.rel (%p155) target = $region28
        $region27: #{transformer_forward.10} parent=23 // pred_region
          %s158 = sand.u32 %s26, 1
          %s159 = scalar_lea.sflag [#allocation3], %s158
          %s160 = sand.u32 %s26, 1
          %s161 = smul.addr %s160, 384
          %s162 = scalar_lea.vmem [#allocation2], %s161
          %s164 = ssub.s32 6144, 6144
          %165 = vsyncadd %s159, %s164
          %s166 = smul.addr %s16, 96
          %s167 = smul.addr %s166, 64
          %s168 = scalar_lea.hbm %s0, %s167
          %s169 = sshll.u32 %s162, 4
          %s170 = int_to_ptr.vmem [resolvable:$true] %s169
          %175 = dma.hbm_to_vmem [thread:$0]  %s168, 6144, %s170, %s159, 384, 384, 24
        $region28: #{transformer_forward.10} parent=23 // pred_fallthru
          _
      $region24: #{transformer_forward.10} parent=5 // pred_fallthru
        _
      %p176 = scmp.le.s32.totalorder 1, %s16
      %p177 = scmp.lt.s32.totalorder %s16, 3
      %p178 = pnand %p176, %p177
      %p179 = pneg %p178
      // Predicated region
      $region29: #{transformer_forward.10} parent=5 // pred_check
        _
      $region30: #{transformer_forward.10} parent=5 // pred_check_branch
        %181 = sbr.rel (%p178) target = $region32
      $region31: #{transformer_forward.10} parent=5 // pred_region
        %s182 = ssub.s32 %s16, 1
        %s183 = sand.u32 %s29, 1
        %s184 = scalar_lea.sflag [#allocation3], %s183
        %s185 = sand.u32 %s29, 1
        %s186 = smul.addr %s185, 384
        %s187 = scalar_lea.vmem [#allocation2], %s186
        // Predicated region
        $region33: #{transformer_forward.10} parent=31 // pred_check
          %p188 = pneg %p42
        $region34: #{transformer_forward.10} parent=31 // pred_check_branch
          %190 = sbr.rel (%p188) target = $region36
        $region35: #{transformer_forward.10} parent=31 // pred_region
          %191 = dma.done %s184, 6144
        $region36: #{transformer_forward.10} parent=31 // pred_fallthru
          _
        // Predicated region
        $region37: #{transformer_forward.10} parent=31 // pred_check
          %p192 = pneg %p63
        $region38: #{transformer_forward.10} parent=31 // pred_check_branch
          %194 = sbr.rel (%p192) target = $region40
        $region39: #{transformer_forward.10} parent=31 // pred_region
          %195 = dma.done [#allocation6], 2048
        $region40: #{transformer_forward.10} parent=31 // pred_fallthru
          _
        // Predicated region
        $region41: #{transformer_forward.10} parent=31 // pred_check
          %p196 = pneg %p84
        $region42: #{transformer_forward.10} parent=31 // pred_check_branch
          %198 = sbr.rel (%p196) target = $region44
        $region43: #{transformer_forward.10} parent=31 // pred_region
          %199 = dma.done [#allocation6], 2048
        $region44: #{transformer_forward.10} parent=31 // pred_fallthru
          _
        %s200 = sand.u32 %s29, 1
        %s201 = scalar_lea.sflag [#allocation3], %s200
        %s202 = sand.u32 %s29, 1
        %s203 = smul.addr %s202, 384
        %s204 = scalar_lea.vmem [#allocation2], %s203
        %p205 = pneg %p42
        %p206 = pneg %p39
        %p207 = pneg %p63
        %p208 = pneg %p60
        %p209 = pneg %p84
        %p210 = pneg %p81
        %p211 = pneg %p110
        %p212 = pneg %p107
        %s213 = sand.u32 %s97, 1
        %s214 = scalar_lea.sflag [#allocation4], %s213
        %s215 = sand.u32 %s97, 1
        %s216 = smul.addr %s215, 128
        %s217 = scalar_lea.vmem [#allocation8], %s216
        %v219 = vld [vmem:[%s187] sm:$0xff]
        %v220 = vld [vmem:[%s187 + $0x8] sm:$0xff]
        %v221 = vld [vmem:[%s187 + $0x10] sm:$0xff]
        %v222 = vld [vmem:[%s187 + $0x18] sm:$0xff]
        %v223 = vld [vmem:[%s187 + $0x20] sm:$0xff]
        %v224 = vld [vmem:[%s187 + $0x28] sm:$0xff]
        %v225 = vld [vmem:[%s187 + $0x30] sm:$0xff]
        %v226 = vld [vmem:[%s187 + $0x38] sm:$0xff]
        %v227 = vld [vmem:[%s187 + $0x40] sm:$0xff]
        %v228 = vld [vmem:[%s187 + $0x48] sm:$0xff]
        %v229 = vld [vmem:[%s187 + $0x50] sm:$0xff]
        %v230 = vld [vmem:[%s187 + $0x58] sm:$0xff]
        %v231 = vld [vmem:[%s187 + $0x60] sm:$0xff]
        %v232 = vld [vmem:[%s187 + $0x68] sm:$0xff]
        %v233 = vld [vmem:[%s187 + $0x70] sm:$0xff]
        %v234 = vld [vmem:[%s187 + $0x78] sm:$0xff]
        %v235 = vld [vmem:[%s187 + $0x80] sm:$0xff]
        %v236 = vld [vmem:[%s187 + $0x88] sm:$0xff]
        %v237 = vld [vmem:[%s187 + $0x90] sm:$0xff]
        %v238 = vld [vmem:[%s187 + $0x98] sm:$0xff]
        %v239 = vld [vmem:[%s187 + $0xa0] sm:$0xff]
        %v240 = vld [vmem:[%s187 + $0xa8] sm:$0xff]
        %v241 = vld [vmem:[%s187 + $0xb0] sm:$0xff]
        %v242 = vld [vmem:[%s187 + $0xb8] sm:$0xff]
        %v243 = vld [vmem:[%s187 + $0xc0] sm:$0xff]
        %v244 = vld [vmem:[%s187 + $0xc8] sm:$0xff]
        %v245 = vld [vmem:[%s187 + $0xd0] sm:$0xff]
        %v246 = vld [vmem:[%s187 + $0xd8] sm:$0xff]
        %v247 = vld [vmem:[%s187 + $0xe0] sm:$0xff]
        %v248 = vld [vmem:[%s187 + $0xe8] sm:$0xff]
        %v249 = vld [vmem:[%s187 + $0xf0] sm:$0xff]
        %v250 = vld [vmem:[%s187 + $0xf8] sm:$0xff]
        %v251 = vld [vmem:[%s187 + $0x100] sm:$0xff]
        %v252 = vld [vmem:[%s187 + $0x108] sm:$0xff]
        %v253 = vld [vmem:[%s187 + $0x110] sm:$0xff]
        %v254 = vld [vmem:[%s187 + $0x118] sm:$0xff]
        %v255 = vld [vmem:[%s187 + $0x120] sm:$0xff]
        %v256 = vld [vmem:[%s187 + $0x128] sm:$0xff]
        %v257 = vld [vmem:[%s187 + $0x130] sm:$0xff]
        %v258 = vld [vmem:[%s187 + $0x138] sm:$0xff]
        %v259 = vld [vmem:[%s187 + $0x140] sm:$0xff]
        %v260 = vld [vmem:[%s187 + $0x148] sm:$0xff]
        %v261 = vld [vmem:[%s187 + $0x150] sm:$0xff]
        %v262 = vld [vmem:[%s187 + $0x158] sm:$0xff]
        %v263 = vld [vmem:[%s187 + $0x160] sm:$0xff]
        %v264 = vld [vmem:[%s187 + $0x168] sm:$0xff]
        %v265 = vld [vmem:[%s187 + $0x170] sm:$0xff]
        %v266 = vld [vmem:[%s187 + $0x178] sm:$0xff]
        %v267 = vld [vmem:[#allocation5] sm:$0xff]
        %v268 = vld [vmem:[#allocation5 + $0x8] sm:$0xff]
        %v269 = vld [vmem:[#allocation5 + $0x10] sm:$0xff]
        %v270 = vld [vmem:[#allocation5 + $0x18] sm:$0xff]
        %v271 = vld [vmem:[#allocation5 + $0x20] sm:$0xff]
        %v272 = vld [vmem:[#allocation5 + $0x28] sm:$0xff]
        %v273 = vld [vmem:[#allocation5 + $0x30] sm:$0xff]
        %v274 = vld [vmem:[#allocation5 + $0x38] sm:$0xff]
        %v275 = vld [vmem:[#allocation5 + $0x40] sm:$0xff]
        %v276 = vld [vmem:[#allocation5 + $0x48] sm:$0xff]
        %v277 = vld [vmem:[#allocation5 + $0x50] sm:$0xff]
        %v278 = vld [vmem:[#allocation5 + $0x58] sm:$0xff]
        %v279 = vld [vmem:[#allocation5 + $0x60] sm:$0xff]
        %v280 = vld [vmem:[#allocation5 + $0x68] sm:$0xff]
        %v281 = vld [vmem:[#allocation5 + $0x70] sm:$0xff]
        %v282 = vld [vmem:[#allocation5 + $0x78] sm:$0xff]
        %v283 = vld [vmem:[#allocation7] sm:$0xff]
        %v284 = vld [vmem:[#allocation7 + $0x8] sm:$0xff]
        %v285 = vld [vmem:[#allocation7 + $0x10] sm:$0xff]
        %v286 = vld [vmem:[#allocation7 + $0x18] sm:$0xff]
        %v287 = vld [vmem:[#allocation7 + $0x20] sm:$0xff]
        %v288 = vld [vmem:[#allocation7 + $0x28] sm:$0xff]
        %v289 = vld [vmem:[#allocation7 + $0x30] sm:$0xff]
        %v290 = vld [vmem:[#allocation7 + $0x38] sm:$0xff]
        %v291 = vld [vmem:[#allocation7 + $0x40] sm:$0xff]
        %v292 = vld [vmem:[#allocation7 + $0x48] sm:$0xff]
        %v293 = vld [vmem:[#allocation7 + $0x50] sm:$0xff]
        %v294 = vld [vmem:[#allocation7 + $0x58] sm:$0xff]
        %v295 = vld [vmem:[#allocation7 + $0x60] sm:$0xff]
        %v296 = vld [vmem:[#allocation7 + $0x68] sm:$0xff]
        %v297 = vld [vmem:[#allocation7 + $0x70] sm:$0xff]
        %v298 = vld [vmem:[#allocation7 + $0x78] sm:$0xff]
        %v299 = vlaneseq
        %v300 = vshrl.u32 %v299, 7
        %v301 = vadd.s32 %v300, 8
        %v302 = vadd.s32 %v300, 16
        %v303 = vadd.s32 %v300, 24
        %v304 = vadd.s32 %v300, 32
        %v305 = vadd.s32 %v300, 40
        %v306 = vadd.s32 %v300, 48
        %v307 = vadd.s32 %v300, 56
        %v308 = vadd.s32 %v300, 64
        %v309 = vadd.s32 %v300, 72
        %v310 = vadd.s32 %v300, 80
        %v311 = vadd.s32 %v300, 88
        %v312 = vadd.s32 %v300, 96
        %v313 = vadd.s32 %v300, 104
        %v314 = vadd.s32 %v300, 112
        %v315 = vadd.s32 %v300, 120
        %v316 = vlaneseq
        %v317 = vand.u32 %v316, 127
        %vm318 = vcmp.le.s32.totalorder %v317, %v300
        %vm319 = vcmp.le.s32.totalorder %v317, %v301
        %vm320 = vcmp.le.s32.totalorder %v317, %v302
        %vm321 = vcmp.le.s32.totalorder %v317, %v303
        %vm322 = vcmp.le.s32.totalorder %v317, %v304
        %vm323 = vcmp.le.s32.totalorder %v317, %v305
        %vm324 = vcmp.le.s32.totalorder %v317, %v306
        %vm325 = vcmp.le.s32.totalorder %v317, %v307
        %vm326 = vcmp.le.s32.totalorder %v317, %v308
        %vm327 = vcmp.le.s32.totalorder %v317, %v309
        %vm328 = vcmp.le.s32.totalorder %v317, %v310
        %vm329 = vcmp.le.s32.totalorder %v317, %v311
        %vm330 = vcmp.le.s32.totalorder %v317, %v312
        %vm331 = vcmp.le.s32.totalorder %v317, %v313
        %vm332 = vcmp.le.s32.totalorder %v317, %v314
        %vm333 = vcmp.le.s32.totalorder %v317, %v315
        %v334 = vunpack.c.l.bf16 %v219
        %v335 = vunpack.c.l.bf16 %v222
        %v336 = vunpack.c.l.bf16 %v225
        %v337 = vunpack.c.l.bf16 %v228
        %v338 = vunpack.c.l.bf16 %v231
        %v339 = vunpack.c.l.bf16 %v234
        %v340 = vunpack.c.l.bf16 %v237
        %v341 = vunpack.c.l.bf16 %v240
        %v342 = vunpack.c.l.bf16 %v243
        %v343 = vunpack.c.l.bf16 %v246
        %v344 = vunpack.c.l.bf16 %v249
        %v345 = vunpack.c.l.bf16 %v252
        %v346 = vunpack.c.l.bf16 %v255
        %v347 = vunpack.c.l.bf16 %v258
        %v348 = vunpack.c.l.bf16 %v261
        %v349 = vunpack.c.l.bf16 %v264
        %v350 = vunpack.c.l.bf16 %v220
        %v351 = vunpack.c.l.bf16 %v223
        %v352 = vunpack.c.l.bf16 %v226
        %v353 = vunpack.c.l.bf16 %v229
        %v354 = vunpack.c.l.bf16 %v232
        %v355 = vunpack.c.l.bf16 %v235
        %v356 = vunpack.c.l.bf16 %v238
        %v357 = vunpack.c.l.bf16 %v241
        %v358 = vunpack.c.l.bf16 %v244
        %v359 = vunpack.c.l.bf16 %v247
        %v360 = vunpack.c.l.bf16 %v250
        %v361 = vunpack.c.l.bf16 %v253
        %v362 = vunpack.c.l.bf16 %v256
        %v363 = vunpack.c.l.bf16 %v259
        %v364 = vunpack.c.l.bf16 %v262
        %v365 = vunpack.c.l.bf16 %v265
        %v366 = vmul.f32 %v334, %v267
        %v367 = vmul.f32 %v335, %v268
        %v368 = vmul.f32 %v336, %v269
        %v369 = vmul.f32 %v337, %v270
        %v370 = vmul.f32 %v338, %v271
        %v371 = vmul.f32 %v339, %v272
        %v372 = vmul.f32 %v340, %v273
        %v373 = vmul.f32 %v341, %v274
        %v374 = vmul.f32 %v342, %v275
        %v375 = vmul.f32 %v343, %v276
        %v376 = vmul.f32 %v344, %v277
        %v377 = vmul.f32 %v345, %v278
        %v378 = vmul.f32 %v346, %v279
        %v379 = vmul.f32 %v347, %v280
        %v380 = vmul.f32 %v348, %v281
        %v381 = vmul.f32 %v349, %v282
        %382 = vrot.lane.b32.xlu0 %v334, 64
        %v383 = vpop.permute.xlu0 %382
        %384 = vrot.lane.b32.xlu0 %v335, 64
        %v385 = vpop.permute.xlu0 %384
        %386 = vrot.lane.b32.xlu0 %v336, 64
        %v387 = vpop.permute.xlu0 %386
        %388 = vrot.lane.b32.xlu0 %v337, 64
        %v389 = vpop.permute.xlu0 %388
        %390 = vrot.lane.b32.xlu0 %v338, 64
        %v391 = vpop.permute.xlu0 %390
        %392 = vrot.lane.b32.xlu0 %v339, 64
        %v393 = vpop.permute.xlu0 %392
        %394 = vrot.lane.b32.xlu0 %v340, 64
        %v395 = vpop.permute.xlu0 %394
        %396 = vrot.lane.b32.xlu0 %v341, 64
        %v397 = vpop.permute.xlu0 %396
        %398 = vrot.lane.b32.xlu0 %v342, 64
        %v399 = vpop.permute.xlu0 %398
        %400 = vrot.lane.b32.xlu0 %v343, 64
        %v401 = vpop.permute.xlu0 %400
        %402 = vrot.lane.b32.xlu0 %v344, 64
        %v403 = vpop.permute.xlu0 %402
        %404 = vrot.lane.b32.xlu0 %v345, 64
        %v405 = vpop.permute.xlu0 %404
        %406 = vrot.lane.b32.xlu0 %v346, 64
        %v407 = vpop.permute.xlu0 %406
        %408 = vrot.lane.b32.xlu0 %v347, 64
        %v409 = vpop.permute.xlu0 %408
        %410 = vrot.lane.b32.xlu0 %v348, 64
        %v411 = vpop.permute.xlu0 %410
        %412 = vrot.lane.b32.xlu0 %v349, 64
        %v413 = vpop.permute.xlu0 %412
        %v414 = vmul.f32 %v383, %v283
        %v415 = vmul.f32 %v385, %v284
        %v416 = vmul.f32 %v387, %v285
        %v417 = vmul.f32 %v389, %v286
        %v418 = vmul.f32 %v391, %v287
        %v419 = vmul.f32 %v393, %v288
        %v420 = vmul.f32 %v395, %v289
        %v421 = vmul.f32 %v397, %v290
        %v422 = vmul.f32 %v399, %v291
        %v423 = vmul.f32 %v401, %v292
        %v424 = vmul.f32 %v403, %v293
        %v425 = vmul.f32 %v405, %v294
        %v426 = vmul.f32 %v407, %v295
        %v427 = vmul.f32 %v409, %v296
        %v428 = vmul.f32 %v411, %v297
        %v429 = vmul.f32 %v413, %v298
        %v430 = vadd.f32 %v366, %v414
        %v431 = vadd.f32 %v367, %v415
        %v432 = vadd.f32 %v368, %v416
        %v433 = vadd.f32 %v369, %v417
        %v434 = vadd.f32 %v370, %v418
        %v435 = vadd.f32 %v371, %v419
        %v436 = vadd.f32 %v372, %v420
        %v437 = vadd.f32 %v373, %v421
        %v438 = vadd.f32 %v374, %v422
        %v439 = vadd.f32 %v375, %v423
        %v440 = vadd.f32 %v376, %v424
        %v441 = vadd.f32 %v377, %v425
        %v442 = vadd.f32 %v378, %v426
        %v443 = vadd.f32 %v379, %v427
        %v444 = vadd.f32 %v380, %v428
        %v445 = vadd.f32 %v381, %v429
        %v446 = vpack.c.bf16 %v431, %v430
        %v447 = vpack.c.bf16 %v433, %v432
        %v448 = vpack.c.bf16 %v435, %v434
        %v449 = vpack.c.bf16 %v437, %v436
        %v450 = vpack.c.bf16 %v439, %v438
        %v451 = vpack.c.bf16 %v441, %v440
        %v452 = vpack.c.bf16 %v443, %v442
        %v453 = vpack.c.bf16 %v445, %v444
        %v454 = vmul.f32 %v350, %v267
        %v455 = vmul.f32 %v351, %v268
        %v456 = vmul.f32 %v352, %v269
        %v457 = vmul.f32 %v353, %v270
        %v458 = vmul.f32 %v354, %v271
        %v459 = vmul.f32 %v355, %v272
        %v460 = vmul.f32 %v356, %v273
        %v461 = vmul.f32 %v357, %v274
        %v462 = vmul.f32 %v358, %v275
        %v463 = vmul.f32 %v359, %v276
        %v464 = vmul.f32 %v360, %v277
        %v465 = vmul.f32 %v361, %v278
        %v466 = vmul.f32 %v362, %v279
        %v467 = vmul.f32 %v363, %v280
        %v468 = vmul.f32 %v364, %v281
        %v469 = vmul.f32 %v365, %v282
        %470 = vrot.lane.b32.xlu0 %v350, 64
        %v471 = vpop.permute.xlu0 %470
        %472 = vrot.lane.b32.xlu0 %v351, 64
        %v473 = vpop.permute.xlu0 %472
        %474 = vrot.lane.b32.xlu0 %v352, 64
        %v475 = vpop.permute.xlu0 %474
        %476 = vrot.lane.b32.xlu0 %v353, 64
        %v477 = vpop.permute.xlu0 %476
        %478 = vrot.lane.b32.xlu0 %v354, 64
        %v479 = vpop.permute.xlu0 %478
        %480 = vrot.lane.b32.xlu0 %v355, 64
        %v481 = vpop.permute.xlu0 %480
        %482 = vrot.lane.b32.xlu0 %v356, 64
        %v483 = vpop.permute.xlu0 %482
        %484 = vrot.lane.b32.xlu0 %v357, 64
        %v485 = vpop.permute.xlu0 %484
        %486 = vrot.lane.b32.xlu0 %v358, 64
        %v487 = vpop.permute.xlu0 %486
        %488 = vrot.lane.b32.xlu0 %v359, 64
        %v489 = vpop.permute.xlu0 %488
        %490 = vrot.lane.b32.xlu0 %v360, 64
        %v491 = vpop.permute.xlu0 %490
        %492 = vrot.lane.b32.xlu0 %v361, 64
        %v493 = vpop.permute.xlu0 %492
        %494 = vrot.lane.b32.xlu0 %v362, 64
        %v495 = vpop.permute.xlu0 %494
        %496 = vrot.lane.b32.xlu0 %v363, 64
        %v497 = vpop.permute.xlu0 %496
        %498 = vrot.lane.b32.xlu0 %v364, 64
        %v499 = vpop.permute.xlu0 %498
        %500 = vrot.lane.b32.xlu0 %v365, 64
        %v501 = vpop.permute.xlu0 %500
        %v502 = vmul.f32 %v471, %v283
        %v503 = vmul.f32 %v473, %v284
        %v504 = vmul.f32 %v475, %v285
        %v505 = vmul.f32 %v477, %v286
        %v506 = vmul.f32 %v479, %v287
        %v507 = vmul.f32 %v481, %v288
        %v508 = vmul.f32 %v483, %v289
        %v509 = vmul.f32 %v485, %v290
        %v510 = vmul.f32 %v487, %v291
        %v511 = vmul.f32 %v489, %v292
        %v512 = vmul.f32 %v491, %v293
        %v513 = vmul.f32 %v493, %v294
        %v514 = vmul.f32 %v495, %v295
        %v515 = vmul.f32 %v497, %v296
        %v516 = vmul.f32 %v499, %v297
        %v517 = vmul.f32 %v501, %v298
        %v518 = vadd.f32 %v454, %v502
        %v519 = vadd.f32 %v455, %v503
        %v520 = vadd.f32 %v456, %v504
        %v521 = vadd.f32 %v457, %v505
        %v522 = vadd.f32 %v458, %v506
        %v523 = vadd.f32 %v459, %v507
        %v524 = vadd.f32 %v460, %v508
        %v525 = vadd.f32 %v461, %v509
        %v526 = vadd.f32 %v462, %v510
        %v527 = vadd.f32 %v463, %v511
        %v528 = vadd.f32 %v464, %v512
        %v529 = vadd.f32 %v465, %v513
        %v530 = vadd.f32 %v466, %v514
        %v531 = vadd.f32 %v467, %v515
        %v532 = vadd.f32 %v468, %v516
        %v533 = vadd.f32 %v469, %v517
        %v534 = vpack.c.bf16 %v519, %v518
        %v535 = vpack.c.bf16 %v521, %v520
        %v536 = vpack.c.bf16 %v523, %v522
        %v537 = vpack.c.bf16 %v525, %v524
        %v538 = vpack.c.bf16 %v527, %v526
        %v539 = vpack.c.bf16 %v529, %v528
        %v540 = vpack.c.bf16 %v531, %v530
        %v541 = vpack.c.bf16 %v533, %v532
        %542 = vmatprep.subr.bf16.mxu0 0
        %543 = vmatpush1.bf16.xpose.msra.mxu0 %v534
        %544 = vmatprep.subr.bf16.mxu0 0
        %545 = vmatpush1.bf16.xpose.msra.mxu0 %v535
        %546 = vmatprep.subr.bf16.mxu0 0
        %547 = vmatpush1.bf16.xpose.msra.mxu0 %v536
        %548 = vmatprep.subr.bf16.mxu0 0
        %549 = vmatpush1.bf16.xpose.msra.mxu0 %v537
        %550 = vmatprep.subr.bf16.mxu0 0
        %551 = vmatpush1.bf16.xpose.msra.mxu0 %v538
        %552 = vmatprep.subr.bf16.mxu0 0
        %553 = vmatpush1.bf16.xpose.msra.mxu0 %v539
        %554 = vmatprep.subr.bf16.mxu0 0
        %555 = vmatpush1.bf16.xpose.msra.mxu0 %v540
        %556 = vmatprep.subr.bf16.mxu0 0
        %557 = vmatpush1.bf16.xpose.msra.mxu0 %v541
        %558 = vmatprep.subr.bf16.mxu0 0
        %559 = vmatpush1.bf16.xpose.msra.mxu0 0
        %560 = vmatprep.subr.bf16.mxu0 0
        %561 = vmatpush1.bf16.xpose.msra.mxu0 0
        %562 = vmatprep.subr.bf16.mxu0 0
        %563 = vmatpush1.bf16.xpose.msra.mxu0 0
        %564 = vmatprep.subr.bf16.mxu0 0
        %565 = vmatpush1.bf16.xpose.msra.mxu0 0
        %566 = vmatprep.subr.bf16.mxu0 0
        %567 = vmatpush1.bf16.xpose.msra.mxu0 0
        %568 = vmatprep.subr.bf16.mxu0 0
        %569 = vmatpush1.bf16.xpose.msra.mxu0 0
        %570 = vmatprep.subr.bf16.mxu0 0
        %571 = vmatpush1.bf16.xpose.msra.mxu0 0
        %572 = vmatprep.subr.bf16.mxu0 0
        %573 = vmatpush1.bf16.xpose.msra.mxu0 0
        %574 = vmatprep.mubr.bf16.mxu0 0
        %575 = vmatmul.mubr.bf16.gmra.mrb[0].mxu0 %v446
        %v576 = vpop.f32.mrb[0].mxu0
        %v577 = vadd.f32 0.0, %v576
        %v578 = vpop.f32.mrb[0].mxu0
        %v579 = vpop.f32.mrb[0].mxu0
        %v580 = vadd.f32 0.0, %v579
        %v581 = vpop.f32.mrb[0].mxu0
        %582 = vmatprep.mubr.bf16.mxu0 0
        %583 = vmatmul.mubr.bf16.gmra.mrb[0].mxu0 %v447
        %v584 = vpop.f32.mrb[0].mxu0
        %v585 = vadd.f32 0.0, %v584
        %v586 = vpop.f32.mrb[0].mxu0
        %v587 = vpop.f32.mrb[0].mxu0
        %v588 = vadd.f32 0.0, %v587
        %v589 = vpop.f32.mrb[0].mxu0
        %590 = vmatprep.mubr.bf16.mxu0 0
        %591 = vmatmul.mubr.bf16.gmra.mrb[0].mxu0 %v448
        %v592 = vpop.f32.mrb[0].mxu0
        %v593 = vadd.f32 0.0, %v592
        %v594 = vpop.f32.mrb[0].mxu0
        %v595 = vpop.f32.mrb[0].mxu0
        %v596 = vadd.f32 0.0, %v595
        %v597 = vpop.f32.mrb[0].mxu0
        %598 = vmatprep.mubr.bf16.mxu0 0
        %599 = vmatmul.mubr.bf16.gmra.mrb[0].mxu0 %v449
        %v600 = vpop.f32.mrb[0].mxu0
        %v601 = vadd.f32 0.0, %v600
        %v602 = vpop.f32.mrb[0].mxu0
        %v603 = vpop.f32.mrb[0].mxu0
        %v604 = vadd.f32 0.0, %v603
        %v605 = vpop.f32.mrb[0].mxu0
        %606 = vmatprep.mubr.bf16.mxu0 0
        %607 = vmatmul.mubr.bf16.gmra.mrb[0].mxu0 %v450
        %v608 = vpop.f32.mrb[0].mxu0
        %v609 = vadd.f32 0.0, %v608
        %v610 = vpop.f32.mrb[0].mxu0
        %v611 = vpop.f32.mrb[0].mxu0
        %v612 = vadd.f32 0.0, %v611
        %v613 = vpop.f32.mrb[0].mxu0
        %614 = vmatprep.mubr.bf16.mxu0 0
        %615 = vmatmul.mubr.bf16.gmra.mrb[0].mxu0 %v451
        %v616 = vpop.f32.mrb[0].mxu0
        %v617 = vadd.f32 0.0, %v616
        %v618 = vpop.f32.mrb[0].mxu0
        %v619 = vpop.f32.mrb[0].mxu0
        %v620 = vadd.f32 0.0, %v619
        %v621 = vpop.f32.mrb[0].mxu0
        %622 = vmatprep.mubr.bf16.mxu0 0
        %623 = vmatmul.mubr.bf16.gmra.mrb[0].mxu0 %v452
        %v624 = vpop.f32.mrb[0].mxu0
        %v625 = vadd.f32 0.0, %v624
        %v626 = vpop.f32.mrb[0].mxu0
        %v627 = vpop.f32.mrb[0].mxu0
        %v628 = vadd.f32 0.0, %v627
        %v629 = vpop.f32.mrb[0].mxu0
        %630 = vmatprep.mubr.bf16.mxu0 0
        %631 = vmatmul.mubr.bf16.gmra.mrb[0].mxu0 %v453
        %v632 = vpop.f32.mrb[0].mxu0
        %v633 = vadd.f32 0.0, %v632
        %v634 = vpop.f32.mrb[0].mxu0
        %v635 = vpop.f32.mrb[0].mxu0
        %v636 = vadd.f32 0.0, %v635
        %v637 = vpop.f32.mrb[0].mxu0
        %638 = vdwg.mxu0
        %v639 = vmul.f32 %v577, 0.088388346
        %v640 = vmul.f32 %v580, 0.088388346
        %v641 = vmul.f32 %v585, 0.088388346
        %v642 = vmul.f32 %v588, 0.088388346
        %v643 = vmul.f32 %v593, 0.088388346
        %v644 = vmul.f32 %v596, 0.088388346
        %v645 = vmul.f32 %v601, 0.088388346
        %v646 = vmul.f32 %v604, 0.088388346
        %v647 = vmul.f32 %v609, 0.088388346
        %v648 = vmul.f32 %v612, 0.088388346
        %v649 = vmul.f32 %v617, 0.088388346
        %v650 = vmul.f32 %v620, 0.088388346
        %v651 = vmul.f32 %v625, 0.088388346
        %v652 = vmul.f32 %v628, 0.088388346
        %v653 = vmul.f32 %v633, 0.088388346
        %v654 = vmul.f32 %v636, 0.088388346
        %v655 = vsel %vm318, %v639, -1e+30
        %v656 = vsel %vm319, %v640, -1e+30
        %v657 = vsel %vm320, %v641, -1e+30
        %v658 = vsel %vm321, %v642, -1e+30
        %v659 = vsel %vm322, %v643, -1e+30
        %v660 = vsel %vm323, %v644, -1e+30
        %v661 = vsel %vm324, %v645, -1e+30
        %v662 = vsel %vm325, %v646, -1e+30
        %v663 = vsel %vm326, %v647, -1e+30
        %v664 = vsel %vm327, %v648, -1e+30
        %v665 = vsel %vm328, %v649, -1e+30
        %v666 = vsel %vm329, %v650, -1e+30
        %v667 = vsel %vm330, %v651, -1e+30
        %v668 = vsel %vm331, %v652, -1e+30
        %v669 = vsel %vm332, %v653, -1e+30
        %v670 = vsel %vm333, %v654, -1e+30
        %671 = vmax.xlane.f32.xlu0 %v655
        %v672 = vpop.xlane.xlu0 %671
        %673 = vmax.xlane.f32.xlu0 %v656
        %v674 = vpop.xlane.xlu0 %673
        %675 = vmax.xlane.f32.xlu0 %v657
        %v676 = vpop.xlane.xlu0 %675
        %677 = vmax.xlane.f32.xlu0 %v658
        %v678 = vpop.xlane.xlu0 %677
        %679 = vmax.xlane.f32.xlu0 %v659
        %v680 = vpop.xlane.xlu0 %679
        %681 = vmax.xlane.f32.xlu0 %v660
        %v682 = vpop.xlane.xlu0 %681
        %683 = vmax.xlane.f32.xlu0 %v661
        %v684 = vpop.xlane.xlu0 %683
        %685 = vmax.xlane.f32.xlu0 %v662
        %v686 = vpop.xlane.xlu0 %685
        %687 = vmax.xlane.f32.xlu0 %v663
        %v688 = vpop.xlane.xlu0 %687
        %689 = vmax.xlane.f32.xlu0 %v664
        %v690 = vpop.xlane.xlu0 %689
        %691 = vmax.xlane.f32.xlu0 %v665
        %v692 = vpop.xlane.xlu0 %691
        %693 = vmax.xlane.f32.xlu0 %v666
        %v694 = vpop.xlane.xlu0 %693
        %695 = vmax.xlane.f32.xlu0 %v667
        %v696 = vpop.xlane.xlu0 %695
        %697 = vmax.xlane.f32.xlu0 %v668
        %v698 = vpop.xlane.xlu0 %697
        %699 = vmax.xlane.f32.xlu0 %v669
        %v700 = vpop.xlane.xlu0 %699
        %701 = vmax.xlane.f32.xlu0 %v670
        %v702 = vpop.xlane.xlu0 %701
        %v703 = vsub.f32 %v655, %v672
        %v704 = vsub.f32 %v656, %v674
        %v705 = vsub.f32 %v657, %v676
        %v706 = vsub.f32 %v658, %v678
        %v707 = vsub.f32 %v659, %v680
        %v708 = vsub.f32 %v660, %v682
        %v709 = vsub.f32 %v661, %v684
        %v710 = vsub.f32 %v662, %v686
        %v711 = vsub.f32 %v663, %v688
        %v712 = vsub.f32 %v664, %v690
        %v713 = vsub.f32 %v665, %v692
        %v714 = vsub.f32 %v666, %v694
        %v715 = vsub.f32 %v667, %v696
        %v716 = vsub.f32 %v668, %v698
        %v717 = vsub.f32 %v669, %v700
        %v718 = vsub.f32 %v670, %v702
        %v719 = vmul.f32 %v703, 1.442695
        %v720 = vpow.pop %v719
        %v721 = vmul.f32 %v704, 1.442695
        %v722 = vpow.pop %v721
        %v723 = vmul.f32 %v705, 1.442695
        %v724 = vpow.pop %v723
        %v725 = vmul.f32 %v706, 1.442695
        %v726 = vpow.pop %v725
        %v727 = vmul.f32 %v707, 1.442695
        %v728 = vpow.pop %v727
        %v729 = vmul.f32 %v708, 1.442695
        %v730 = vpow.pop %v729
        %v731 = vmul.f32 %v709, 1.442695
        %v732 = vpow.pop %v731
        %v733 = vmul.f32 %v710, 1.442695
        %v734 = vpow.pop %v733
        %v735 = vmul.f32 %v711, 1.442695
        %v736 = vpow.pop %v735
        %v737 = vmul.f32 %v712, 1.442695
        %v738 = vpow.pop %v737
        %v739 = vmul.f32 %v713, 1.442695
        %v740 = vpow.pop %v739
        %v741 = vmul.f32 %v714, 1.442695
        %v742 = vpow.pop %v741
        %v743 = vmul.f32 %v715, 1.442695
        %v744 = vpow.pop %v743
        %v745 = vmul.f32 %v716, 1.442695
        %v746 = vpow.pop %v745
        %v747 = vmul.f32 %v717, 1.442695
        %v748 = vpow.pop %v747
        %v749 = vmul.f32 %v718, 1.442695
        %v750 = vpow.pop %v749
        %751 = vadd.xlane.f32.xlu0 %v720
        %v752 = vpop.xlane.xlu0 %751
        %753 = vadd.xlane.f32.xlu0 %v722
        %v754 = vpop.xlane.xlu0 %753
        %755 = vadd.xlane.f32.xlu0 %v724
        %v756 = vpop.xlane.xlu0 %755
        %757 = vadd.xlane.f32.xlu0 %v726
        %v758 = vpop.xlane.xlu0 %757
        %759 = vadd.xlane.f32.xlu0 %v728
        %v760 = vpop.xlane.xlu0 %759
        %761 = vadd.xlane.f32.xlu0 %v730
        %v762 = vpop.xlane.xlu0 %761
        %763 = vadd.xlane.f32.xlu0 %v732
        %v764 = vpop.xlane.xlu0 %763
        %765 = vadd.xlane.f32.xlu0 %v734
        %v766 = vpop.xlane.xlu0 %765
        %767 = vadd.xlane.f32.xlu0 %v736
        %v768 = vpop.xlane.xlu0 %767
        %769 = vadd.xlane.f32.xlu0 %v738
        %v770 = vpop.xlane.xlu0 %769
        %771 = vadd.xlane.f32.xlu0 %v740
        %v772 = vpop.xlane.xlu0 %771
        %773 = vadd.xlane.f32.xlu0 %v742
        %v774 = vpop.xlane.xlu0 %773
        %775 = vadd.xlane.f32.xlu0 %v744
        %v776 = vpop.xlane.xlu0 %775
        %777 = vadd.xlane.f32.xlu0 %v746
        %v778 = vpop.xlane.xlu0 %777
        %779 = vadd.xlane.f32.xlu0 %v748
        %v780 = vpop.xlane.xlu0 %779
        %781 = vadd.xlane.f32.xlu0 %v750
        %v782 = vpop.xlane.xlu0 %781
        %v783 = vpack.c.bf16 %v722, %v720
        %v784 = vpack.c.bf16 %v726, %v724
        %v785 = vpack.c.bf16 %v730, %v728
        %v786 = vpack.c.bf16 %v734, %v732
        %v787 = vpack.c.bf16 %v738, %v736
        %v788 = vpack.c.bf16 %v742, %v740
        %v789 = vpack.c.bf16 %v746, %v744
        %v790 = vpack.c.bf16 %v750, %v748
        %v807 = vunpack.c.l.b16 %v221
        %v808 = vunpack.c.l.b16 %v224
        %v809 = vunpack.c.l.b16 %v227
        %v810 = vunpack.c.l.b16 %v230
        %v811 = vunpack.c.l.b16 %v233
        %v812 = vunpack.c.l.b16 %v236
        %v813 = vunpack.c.l.b16 %v239
        %v814 = vunpack.c.l.b16 %v242
        %v815 = vunpack.c.l.b16 %v245
        %v816 = vunpack.c.l.b16 %v248
        %v817 = vunpack.c.l.b16 %v251
        %v818 = vunpack.c.l.b16 %v254
        %v819 = vunpack.c.l.b16 %v257
        %v820 = vunpack.c.l.b16 %v260
        %v821 = vunpack.c.l.b16 %v263
        %v822 = vunpack.c.l.b16 %v266
        %v823 = vpack.c.b16 %v808, %v807
        %v824 = vpack.c.b16 %v810, %v809
        %v825 = vpack.c.b16 %v812, %v811
        %v826 = vpack.c.b16 %v814, %v813
        %v827 = vpack.c.b16 %v816, %v815
        %v828 = vpack.c.b16 %v818, %v817
        %v829 = vpack.c.b16 %v820, %v819
        %v830 = vpack.c.b16 %v822, %v821
        %839 = vmatprep.subr.bf16.mxu0 0
        %840 = vmatpush1.bf16.msra.mxu0 %v823
        %841 = vmatprep.subr.bf16.mxu0 0
        %842 = vmatpush1.bf16.msra.mxu0 %v824
        %843 = vmatprep.subr.bf16.mxu0 0
        %844 = vmatpush1.bf16.msra.mxu0 %v825
        %845 = vmatprep.subr.bf16.mxu0 0
        %846 = vmatpush1.bf16.msra.mxu0 %v826
        %847 = vmatprep.subr.bf16.mxu0 0
        %848 = vmatpush1.bf16.msra.mxu0 %v827
        %849 = vmatprep.subr.bf16.mxu0 0
        %850 = vmatpush1.bf16.msra.mxu0 %v828
        %851 = vmatprep.subr.bf16.mxu0 0
        %852 = vmatpush1.bf16.msra.mxu0 %v829
        %853 = vmatprep.subr.bf16.mxu0 0
        %854 = vmatpush1.bf16.msra.mxu0 %v830
        %855 = vmatprep.subr.bf16.mxu0 0
        %856 = vmatpush1.bf16.msra.mxu0 0
        %857 = vmatprep.subr.bf16.mxu0 0
        %858 = vmatpush1.bf16.msra.mxu0 0
        %859 = vmatprep.subr.bf16.mxu0 0
        %860 = vmatpush1.bf16.msra.mxu0 0
        %861 = vmatprep.subr.bf16.mxu0 0
        %862 = vmatpush1.bf16.msra.mxu0 0
        %863 = vmatprep.subr.bf16.mxu0 0
        %864 = vmatpush1.bf16.msra.mxu0 0
        %865 = vmatprep.subr.bf16.mxu0 0
        %866 = vmatpush1.bf16.msra.mxu0 0
        %867 = vmatprep.subr.bf16.mxu0 0
        %868 = vmatpush1.bf16.msra.mxu0 0
        %869 = vmatprep.subr.bf16.mxu0 0
        %870 = vmatpush1.bf16.msra.mxu0 0
        %871 = vmatprep.mubr.bf16.mxu0 0
        %872 = vmatmul.mubr.bf16.gmra.mrb[0].mxu0 %v783
        %v873 = vpop.f32.mrb[0].mxu0
        %v874 = vadd.f32 0.0, %v873
        %v875 = vpop.f32.mrb[0].mxu0
        %v876 = vpop.f32.mrb[0].mxu0
        %v877 = vadd.f32 0.0, %v876
        %v878 = vpop.f32.mrb[0].mxu0
        %879 = vmatprep.mubr.bf16.mxu0 0
        %880 = vmatmul.mubr.bf16.gmra.mrb[0].mxu0 %v784
        %v881 = vpop.f32.mrb[0].mxu0
        %v882 = vadd.f32 0.0, %v881
        %v883 = vpop.f32.mrb[0].mxu0
        %v884 = vpop.f32.mrb[0].mxu0
        %v885 = vadd.f32 0.0, %v884
        %v886 = vpop.f32.mrb[0].mxu0
        %887 = vmatprep.mubr.bf16.mxu0 0
        %888 = vmatmul.mubr.bf16.gmra.mrb[0].mxu0 %v785
        %v889 = vpop.f32.mrb[0].mxu0
        %v890 = vadd.f32 0.0, %v889
        %v891 = vpop.f32.mrb[0].mxu0
        %v892 = vpop.f32.mrb[0].mxu0
        %v893 = vadd.f32 0.0, %v892
        %v894 = vpop.f32.mrb[0].mxu0
        %895 = vmatprep.mubr.bf16.mxu0 0
        %896 = vmatmul.mubr.bf16.gmra.mrb[0].mxu0 %v786
        %v897 = vpop.f32.mrb[0].mxu0
        %v898 = vadd.f32 0.0, %v897
        %v899 = vpop.f32.mrb[0].mxu0
        %v900 = vpop.f32.mrb[0].mxu0
        %v901 = vadd.f32 0.0, %v900
        %v902 = vpop.f32.mrb[0].mxu0
        %903 = vmatprep.mubr.bf16.mxu0 0
        %904 = vmatmul.mubr.bf16.gmra.mrb[0].mxu0 %v787
        %v905 = vpop.f32.mrb[0].mxu0
        %v906 = vadd.f32 0.0, %v905
        %v907 = vpop.f32.mrb[0].mxu0
        %v908 = vpop.f32.mrb[0].mxu0
        %v909 = vadd.f32 0.0, %v908
        %v910 = vpop.f32.mrb[0].mxu0
        %911 = vmatprep.mubr.bf16.mxu0 0
        %912 = vmatmul.mubr.bf16.gmra.mrb[0].mxu0 %v788
        %v913 = vpop.f32.mrb[0].mxu0
        %v914 = vadd.f32 0.0, %v913
        %v915 = vpop.f32.mrb[0].mxu0
        %v916 = vpop.f32.mrb[0].mxu0
        %v917 = vadd.f32 0.0, %v916
        %v918 = vpop.f32.mrb[0].mxu0
        %919 = vmatprep.mubr.bf16.mxu0 0
        %920 = vmatmul.mubr.bf16.gmra.mrb[0].mxu0 %v789
        %v921 = vpop.f32.mrb[0].mxu0
        %v922 = vadd.f32 0.0, %v921
        %v923 = vpop.f32.mrb[0].mxu0
        %v924 = vpop.f32.mrb[0].mxu0
        %v925 = vadd.f32 0.0, %v924
        %v926 = vpop.f32.mrb[0].mxu0
        %927 = vmatprep.mubr.bf16.mxu0 0
        %928 = vmatmul.mubr.bf16.gmra.mrb[0].mxu0 %v790
        %v929 = vpop.f32.mrb[0].mxu0
        %v930 = vadd.f32 0.0, %v929
        %v931 = vpop.f32.mrb[0].mxu0
        %v932 = vpop.f32.mrb[0].mxu0
        %v933 = vadd.f32 0.0, %v932
        %v934 = vpop.f32.mrb[0].mxu0
        %935 = vdwg.mxu0
        %v936 = vrcp.pop %v752
        %v937 = vrcp.pop %v754
        %v938 = vrcp.pop %v756
        %v939 = vrcp.pop %v758
        %v940 = vrcp.pop %v760
        %v941 = vrcp.pop %v762
        %v942 = vrcp.pop %v764
        %v943 = vrcp.pop %v766
        %v944 = vrcp.pop %v768
        %v945 = vrcp.pop %v770
        %v946 = vrcp.pop %v772
        %v947 = vrcp.pop %v774
        %v948 = vrcp.pop %v776
        %v949 = vrcp.pop %v778
        %v950 = vrcp.pop %v780
        %v951 = vrcp.pop %v782
        %v952 = vmul.f32 %v874, %v936
        %v953 = vmul.f32 %v877, %v937
        %v954 = vmul.f32 %v882, %v938
        %v955 = vmul.f32 %v885, %v939
        %v956 = vmul.f32 %v890, %v940
        %v957 = vmul.f32 %v893, %v941
        %v958 = vmul.f32 %v898, %v942
        %v959 = vmul.f32 %v901, %v943
        %v960 = vmul.f32 %v906, %v944
        %v961 = vmul.f32 %v909, %v945
        %v962 = vmul.f32 %v914, %v946
        %v963 = vmul.f32 %v917, %v947
        %v964 = vmul.f32 %v922, %v948
        %v965 = vmul.f32 %v925, %v949
        %v966 = vmul.f32 %v930, %v950
        %v967 = vmul.f32 %v933, %v951
        %v984 = vrot.slane %v219, 4
        %v985 = vrot.slane %v222, 4
        %v986 = vrot.slane %v225, 4
        %v987 = vrot.slane %v228, 4
        %v988 = vrot.slane %v231, 4
        %v989 = vrot.slane %v234, 4
        %v990 = vrot.slane %v237, 4
        %v991 = vrot.slane %v240, 4
        %v992 = vrot.slane %v243, 4
        %v993 = vrot.slane %v246, 4
        %v994 = vrot.slane %v249, 4
        %v995 = vrot.slane %v252, 4
        %v996 = vrot.slane %v255, 4
        %v997 = vrot.slane %v258, 4
        %v998 = vrot.slane %v261, 4
        %v999 = vrot.slane %v264, 4
        %v1016 = vunpack.c.l.bf16 %v984
        %v1017 = vunpack.c.l.bf16 %v985
        %v1018 = vunpack.c.l.bf16 %v986
        %v1019 = vunpack.c.l.bf16 %v987
        %v1020 = vunpack.c.l.bf16 %v988
        %v1021 = vunpack.c.l.bf16 %v989
        %v1022 = vunpack.c.l.bf16 %v990
        %v1023 = vunpack.c.l.bf16 %v991
        %v1024 = vunpack.c.l.bf16 %v992
        %v1025 = vunpack.c.l.bf16 %v993
        %v1026 = vunpack.c.l.bf16 %v994
        %v1027 = vunpack.c.l.bf16 %v995
        %v1028 = vunpack.c.l.bf16 %v996
        %v1029 = vunpack.c.l.bf16 %v997
        %v1030 = vunpack.c.l.bf16 %v998
        %v1031 = vunpack.c.l.bf16 %v999
        %v1048 = vrot.slane %v220, 4
        %v1049 = vrot.slane %v223, 4
        %v1050 = vrot.slane %v226, 4
        %v1051 = vrot.slane %v229, 4
        %v1052 = vrot.slane %v232, 4
        %v1053 = vrot.slane %v235, 4
        %v1054 = vrot.slane %v238, 4
        %v1055 = vrot.slane %v241, 4
        %v1056 = vrot.slane %v244, 4
        %v1057 = vrot.slane %v247, 4
        %v1058 = vrot.slane %v250, 4
        %v1059 = vrot.slane %v253, 4
        %v1060 = vrot.slane %v256, 4
        %v1061 = vrot.slane %v259, 4
        %v1062 = vrot.slane %v262, 4
        %v1063 = vrot.slane %v265, 4
        %v1080 = vunpack.c.l.bf16 %v1048
        %v1081 = vunpack.c.l.bf16 %v1049
        %v1082 = vunpack.c.l.bf16 %v1050
        %v1083 = vunpack.c.l.bf16 %v1051
        %v1084 = vunpack.c.l.bf16 %v1052
        %v1085 = vunpack.c.l.bf16 %v1053
        %v1086 = vunpack.c.l.bf16 %v1054
        %v1087 = vunpack.c.l.bf16 %v1055
        %v1088 = vunpack.c.l.bf16 %v1056
        %v1089 = vunpack.c.l.bf16 %v1057
        %v1090 = vunpack.c.l.bf16 %v1058
        %v1091 = vunpack.c.l.bf16 %v1059
        %v1092 = vunpack.c.l.bf16 %v1060
        %v1093 = vunpack.c.l.bf16 %v1061
        %v1094 = vunpack.c.l.bf16 %v1062
        %v1095 = vunpack.c.l.bf16 %v1063
        %v1096 = vmul.f32 %v1016, %v267
        %v1097 = vmul.f32 %v1017, %v268
        %v1098 = vmul.f32 %v1018, %v269
        %v1099 = vmul.f32 %v1019, %v270
        %v1100 = vmul.f32 %v1020, %v271
        %v1101 = vmul.f32 %v1021, %v272
        %v1102 = vmul.f32 %v1022, %v273
        %v1103 = vmul.f32 %v1023, %v274
        %v1104 = vmul.f32 %v1024, %v275
        %v1105 = vmul.f32 %v1025, %v276
        %v1106 = vmul.f32 %v1026, %v277
        %v1107 = vmul.f32 %v1027, %v278
        %v1108 = vmul.f32 %v1028, %v279
        %v1109 = vmul.f32 %v1029, %v280
        %v1110 = vmul.f32 %v1030, %v281
        %v1111 = vmul.f32 %v1031, %v282
        %1112 = vrot.lane.b32.xlu0 %v1016, 64
        %v1113 = vpop.permute.xlu0 %1112
        %1114 = vrot.lane.b32.xlu0 %v1017, 64
        %v1115 = vpop.permute.xlu0 %1114
        %1116 = vrot.lane.b32.xlu0 %v1018, 64
        %v1117 = vpop.permute.xlu0 %1116
        %1118 = vrot.lane.b32.xlu0 %v1019, 64
        %v1119 = vpop.permute.xlu0 %1118
        %1120 = vrot.lane.b32.xlu0 %v1020, 64
        %v1121 = vpop.permute.xlu0 %1120
        %1122 = vrot.lane.b32.xlu0 %v1021, 64
        %v1123 = vpop.permute.xlu0 %1122
        %1124 = vrot.lane.b32.xlu0 %v1022, 64
        %v1125 = vpop.permute.xlu0 %1124
        %1126 = vrot.lane.b32.xlu0 %v1023, 64
        %v1127 = vpop.permute.xlu0 %1126
        %1128 = vrot.lane.b32.xlu0 %v1024, 64
        %v1129 = vpop.permute.xlu0 %1128
        %1130 = vrot.lane.b32.xlu0 %v1025, 64
        %v1131 = vpop.permute.xlu0 %1130
        %1132 = vrot.lane.b32.xlu0 %v1026, 64
        %v1133 = vpop.permute.xlu0 %1132
        %1134 = vrot.lane.b32.xlu0 %v1027, 64
        %v1135 = vpop.permute.xlu0 %1134
        %1136 = vrot.lane.b32.xlu0 %v1028, 64
        %v1137 = vpop.permute.xlu0 %1136
        %1138 = vrot.lane.b32.xlu0 %v1029, 64
        %v1139 = vpop.permute.xlu0 %1138
        %1140 = vrot.lane.b32.xlu0 %v1030, 64
        %v1141 = vpop.permute.xlu0 %1140
        %1142 = vrot.lane.b32.xlu0 %v1031, 64
        %v1143 = vpop.permute.xlu0 %1142
        %v1144 = vmul.f32 %v1113, %v283
        %v1145 = vmul.f32 %v1115, %v284
        %v1146 = vmul.f32 %v1117, %v285
        %v1147 = vmul.f32 %v1119, %v286
        %v1148 = vmul.f32 %v1121, %v287
        %v1149 = vmul.f32 %v1123, %v288
        %v1150 = vmul.f32 %v1125, %v289
        %v1151 = vmul.f32 %v1127, %v290
        %v1152 = vmul.f32 %v1129, %v291
        %v1153 = vmul.f32 %v1131, %v292
        %v1154 = vmul.f32 %v1133, %v293
        %v1155 = vmul.f32 %v1135, %v294
        %v1156 = vmul.f32 %v1137, %v295
        %v1157 = vmul.f32 %v1139, %v296
        %v1158 = vmul.f32 %v1141, %v297
        %v1159 = vmul.f32 %v1143, %v298
        %v1160 = vadd.f32 %v1096, %v1144
        %v1161 = vadd.f32 %v1097, %v1145
        %v1162 = vadd.f32 %v1098, %v1146
        %v1163 = vadd.f32 %v1099, %v1147
        %v1164 = vadd.f32 %v1100, %v1148
        %v1165 = vadd.f32 %v1101, %v1149
        %v1166 = vadd.f32 %v1102, %v1150
        %v1167 = vadd.f32 %v1103, %v1151
        %v1168 = vadd.f32 %v1104, %v1152
        %v1169 = vadd.f32 %v1105, %v1153
        %v1170 = vadd.f32 %v1106, %v1154
        %v1171 = vadd.f32 %v1107, %v1155
        %v1172 = vadd.f32 %v1108, %v1156
        %v1173 = vadd.f32 %v1109, %v1157
        %v1174 = vadd.f32 %v1110, %v1158
        %v1175 = vadd.f32 %v1111, %v1159
        %v1176 = vpack.c.bf16 %v1161, %v1160
        %v1177 = vpack.c.bf16 %v1163, %v1162
        %v1178 = vpack.c.bf16 %v1165, %v1164
        %v1179 = vpack.c.bf16 %v1167, %v1166
        %v1180 = vpack.c.bf16 %v1169, %v1168
        %v1181 = vpack.c.bf16 %v1171, %v1170
        %v1182 = vpack.c.bf16 %v1173, %v1172
        %v1183 = vpack.c.bf16 %v1175, %v1174
        %v1184 = vmul.f32 %v1080, %v267
        %v1185 = vmul.f32 %v1081, %v268
        %v1186 = vmul.f32 %v1082, %v269
        %v1187 = vmul.f32 %v1083, %v270
        %v1188 = vmul.f32 %v1084, %v271
        %v1189 = vmul.f32 %v1085, %v272
        %v1190 = vmul.f32 %v1086, %v273
        %v1191 = vmul.f32 %v1087, %v274
        %v1192 = vmul.f32 %v1088, %v275
        %v1193 = vmul.f32 %v1089, %v276
        %v1194 = vmul.f32 %v1090, %v277
        %v1195 = vmul.f32 %v1091, %v278
        %v1196 = vmul.f32 %v1092, %v279
        %v1197 = vmul.f32 %v1093, %v280
        %v1198 = vmul.f32 %v1094, %v281
        %v1199 = vmul.f32 %v1095, %v282
        %1200 = vrot.lane.b32.xlu0 %v1080, 64
        %v1201 = vpop.permute.xlu0 %1200
        %1202 = vrot.lane.b32.xlu0 %v1081, 64
        %v1203 = vpop.permute.xlu0 %1202
        %1204 = vrot.lane.b32.xlu0 %v1082, 64
        %v1205 = vpop.permute.xlu0 %1204
        %1206 = vrot.lane.b32.xlu0 %v1083, 64
        %v1207 = vpop.permute.xlu0 %1206
        %1208 = vrot.lane.b32.xlu0 %v1084, 64
        %v1209 = vpop.permute.xlu0 %1208
        %1210 = vrot.lane.b32.xlu0 %v1085, 64
        %v1211 = vpop.permute.xlu0 %1210
        %1212 = vrot.lane.b32.xlu0 %v1086, 64
        %v1213 = vpop.permute.xlu0 %1212
        %1214 = vrot.lane.b32.xlu0 %v1087, 64
        %v1215 = vpop.permute.xlu0 %1214
        %1216 = vrot.lane.b32.xlu0 %v1088, 64
        %v1217 = vpop.permute.xlu0 %1216
        %1218 = vrot.lane.b32.xlu0 %v1089, 64
        %v1219 = vpop.permute.xlu0 %1218
        %1220 = vrot.lane.b32.xlu0 %v1090, 64
        %v1221 = vpop.permute.xlu0 %1220
        %1222 = vrot.lane.b32.xlu0 %v1091, 64
        %v1223 = vpop.permute.xlu0 %1222
        %1224 = vrot.lane.b32.xlu0 %v1092, 64
        %v1225 = vpop.permute.xlu0 %1224
        %1226 = vrot.lane.b32.xlu0 %v1093, 64
        %v1227 = vpop.permute.xlu0 %1226
        %1228 = vrot.lane.b32.xlu0 %v1094, 64
        %v1229 = vpop.permute.xlu0 %1228
        %1230 = vrot.lane.b32.xlu0 %v1095, 64
        %v1231 = vpop.permute.xlu0 %1230
        %v1232 = vmul.f32 %v1201, %v283
        %v1233 = vmul.f32 %v1203, %v284
        %v1234 = vmul.f32 %v1205, %v285
        %v1235 = vmul.f32 %v1207, %v286
        %v1236 = vmul.f32 %v1209, %v287
        %v1237 = vmul.f32 %v1211, %v288
        %v1238 = vmul.f32 %v1213, %v289
        %v1239 = vmul.f32 %v1215, %v290
        %v1240 = vmul.f32 %v1217, %v291
        %v1241 = vmul.f32 %v1219, %v292
        %v1242 = vmul.f32 %v1221, %v293
        %v1243 = vmul.f32 %v1223, %v294
        %v1244 = vmul.f32 %v1225, %v295
        %v1245 = vmul.f32 %v1227, %v296
        %v1246 = vmul.f32 %v1229, %v297
        %v1247 = vmul.f32 %v1231, %v298
        %v1248 = vadd.f32 %v1184, %v1232
        %v1249 = vadd.f32 %v1185, %v1233
        %v1250 = vadd.f32 %v1186, %v1234
        %v1251 = vadd.f32 %v1187, %v1235
        %v1252 = vadd.f32 %v1188, %v1236
        %v1253 = vadd.f32 %v1189, %v1237
        %v1254 = vadd.f32 %v1190, %v1238
        %v1255 = vadd.f32 %v1191, %v1239
        %v1256 = vadd.f32 %v1192, %v1240
        %v1257 = vadd.f32 %v1193, %v1241
        %v1258 = vadd.f32 %v1194, %v1242
        %v1259 = vadd.f32 %v1195, %v1243
        %v1260 = vadd.f32 %v1196, %v1244
        %v1261 = vadd.f32 %v1197, %v1245
        %v1262 = vadd.f32 %v1198, %v1246
        %v1263 = vadd.f32 %v1199, %v1247
        %v1264 = vpack.c.bf16 %v1249, %v1248
        %v1265 = vpack.c.bf16 %v1251, %v1250
        %v1266 = vpack.c.bf16 %v1253, %v1252
        %v1267 = vpack.c.bf16 %v1255, %v1254
        %v1268 = vpack.c.bf16 %v1257, %v1256
        %v1269 = vpack.c.bf16 %v1259, %v1258
        %v1270 = vpack.c.bf16 %v1261, %v1260
        %v1271 = vpack.c.bf16 %v1263, %v1262
        %1272 = vmatprep.subr.bf16.mxu0 0
        %1273 = vmatpush1.bf16.xpose.msra.mxu0 %v1264
        %1274 = vmatprep.subr.bf16.mxu0 0
        %1275 = vmatpush1.bf16.xpose.msra.mxu0 %v1265
        %1276 = vmatprep.subr.bf16.mxu0 0
        %1277 = vmatpush1.bf16.xpose.msra.mxu0 %v1266
        %1278 = vmatprep.subr.bf16.mxu0 0
        %1279 = vmatpush1.bf16.xpose.msra.mxu0 %v1267
        %1280 = vmatprep.subr.bf16.mxu0 0
        %1281 = vmatpush1.bf16.xpose.msra.mxu0 %v1268
        %1282 = vmatprep.subr.bf16.mxu0 0
        %1283 = vmatpush1.bf16.xpose.msra.mxu0 %v1269
        %1284 = vmatprep.subr.bf16.mxu0 0
        %1285 = vmatpush1.bf16.xpose.msra.mxu0 %v1270
        %1286 = vmatprep.subr.bf16.mxu0 0
        %1287 = vmatpush1.bf16.xpose.msra.mxu0 %v1271
        %1288 = vmatprep.subr.bf16.mxu0 0
        %1289 = vmatpush1.bf16.xpose.msra.mxu0 0
        %1290 = vmatprep.subr.bf16.mxu0 0
        %1291 = vmatpush1.bf16.xpose.msra.mxu0 0
        %1292 = vmatprep.subr.bf16.mxu0 0
        %1293 = vmatpush1.bf16.xpose.msra.mxu0 0
        %1294 = vmatprep.subr.bf16.mxu0 0
        %1295 = vmatpush1.bf16.xpose.msra.mxu0 0
        %1296 = vmatprep.subr.bf16.mxu0 0
        %1297 = vmatpush1.bf16.xpose.msra.mxu0 0
        %1298 = vmatprep.subr.bf16.mxu0 0
        %1299 = vmatpush1.bf16.xpose.msra.mxu0 0
        %1300 = vmatprep.subr.bf16.mxu0 0
        %1301 = vmatpush1.bf16.xpose.msra.mxu0 0
        %1302 = vmatprep.subr.bf16.mxu0 0
        %1303 = vmatpush1.bf16.xpose.msra.mxu0 0
        %1304 = vmatprep.mubr.bf16.mxu0 0
        %1305 = vmatmul.mubr.bf16.gmra.mrb[0].mxu0 %v1176
        %v1306 = vpop.f32.mrb[0].mxu0
        %v1307 = vadd.f32 0.0, %v1306
        %v1308 = vpop.f32.mrb[0].mxu0
        %v1309 = vpop.f32.mrb[0].mxu0
        %v1310 = vadd.f32 0.0, %v1309
        %v1311 = vpop.f32.mrb[0].mxu0
        %1312 = vmatprep.mubr.bf16.mxu0 0
        %1313 = vmatmul.mubr.bf16.gmra.mrb[0].mxu0 %v1177
        %v1314 = vpop.f32.mrb[0].mxu0
        %v1315 = vadd.f32 0.0, %v1314
        %v1316 = vpop.f32.mrb[0].mxu0
        %v1317 = vpop.f32.mrb[0].mxu0
        %v1318 = vadd.f32 0.0, %v1317
        %v1319 = vpop.f32.mrb[0].mxu0
        %1320 = vmatprep.mubr.bf16.mxu0 0
        %1321 = vmatmul.mubr.bf16.gmra.mrb[0].mxu0 %v1178
        %v1322 = vpop.f32.mrb[0].mxu0
        %v1323 = vadd.f32 0.0, %v1322
        %v1324 = vpop.f32.mrb[0].mxu0
        %v1325 = vpop.f32.mrb[0].mxu0
        %v1326 = vadd.f32 0.0, %v1325
        %v1327 = vpop.f32.mrb[0].mxu0
        %1328 = vmatprep.mubr.bf16.mxu0 0
        %1329 = vmatmul.mubr.bf16.gmra.mrb[0].mxu0 %v1179
        %v1330 = vpop.f32.mrb[0].mxu0
        %v1331 = vadd.f32 0.0, %v1330
        %v1332 = vpop.f32.mrb[0].mxu0
        %v1333 = vpop.f32.mrb[0].mxu0
        %v1334 = vadd.f32 0.0, %v1333
        %v1335 = vpop.f32.mrb[0].mxu0
        %1336 = vmatprep.mubr.bf16.mxu0 0
        %1337 = vmatmul.mubr.bf16.gmra.mrb[0].mxu0 %v1180
        %v1338 = vpop.f32.mrb[0].mxu0
        %v1339 = vadd.f32 0.0, %v1338
        %v1340 = vpop.f32.mrb[0].mxu0
        %v1341 = vpop.f32.mrb[0].mxu0
        %v1342 = vadd.f32 0.0, %v1341
        %v1343 = vpop.f32.mrb[0].mxu0
        %1344 = vmatprep.mubr.bf16.mxu0 0
        %1345 = vmatmul.mubr.bf16.gmra.mrb[0].mxu0 %v1181
        %v1346 = vpop.f32.mrb[0].mxu0
        %v1347 = vadd.f32 0.0, %v1346
        %v1348 = vpop.f32.mrb[0].mxu0
        %v1349 = vpop.f32.mrb[0].mxu0
        %v1350 = vadd.f32 0.0, %v1349
        %v1351 = vpop.f32.mrb[0].mxu0
        %1352 = vmatprep.mubr.bf16.mxu0 0
        %1353 = vmatmul.mubr.bf16.gmra.mrb[0].mxu0 %v1182
        %v1354 = vpop.f32.mrb[0].mxu0
        %v1355 = vadd.f32 0.0, %v1354
        %v1356 = vpop.f32.mrb[0].mxu0
        %v1357 = vpop.f32.mrb[0].mxu0
        %v1358 = vadd.f32 0.0, %v1357
        %v1359 = vpop.f32.mrb[0].mxu0
        %1360 = vmatprep.mubr.bf16.mxu0 0
        %1361 = vmatmul.mubr.bf16.gmra.mrb[0].mxu0 %v1183
        %v1362 = vpop.f32.mrb[0].mxu0
        %v1363 = vadd.f32 0.0, %v1362
        %v1364 = vpop.f32.mrb[0].mxu0
        %v1365 = vpop.f32.mrb[0].mxu0
        %v1366 = vadd.f32 0.0, %v1365
        %v1367 = vpop.f32.mrb[0].mxu0
        %1368 = vdwg.mxu0
        %v1369 = vmul.f32 %v1307, 0.088388346
        %v1370 = vmul.f32 %v1310, 0.088388346
        %v1371 = vmul.f32 %v1315, 0.088388346
        %v1372 = vmul.f32 %v1318, 0.088388346
        %v1373 = vmul.f32 %v1323, 0.088388346
        %v1374 = vmul.f32 %v1326, 0.088388346
        %v1375 = vmul.f32 %v1331, 0.088388346
        %v1376 = vmul.f32 %v1334, 0.088388346
        %v1377 = vmul.f32 %v1339, 0.088388346
        %v1378 = vmul.f32 %v1342, 0.088388346
        %v1379 = vmul.f32 %v1347, 0.088388346
        %v1380 = vmul.f32 %v1350, 0.088388346
        %v1381 = vmul.f32 %v1355, 0.088388346
        %v1382 = vmul.f32 %v1358, 0.088388346
        %v1383 = vmul.f32 %v1363, 0.088388346
        %v1384 = vmul.f32 %v1366, 0.088388346
        %v1385 = vsel %vm318, %v1369, -1e+30
        %v1386 = vsel %vm319, %v1370, -1e+30
        %v1387 = vsel %vm320, %v1371, -1e+30
        %v1388 = vsel %vm321, %v1372, -1e+30
        %v1389 = vsel %vm322, %v1373, -1e+30
        %v1390 = vsel %vm323, %v1374, -1e+30
        %v1391 = vsel %vm324, %v1375, -1e+30
        %v1392 = vsel %vm325, %v1376, -1e+30
        %v1393 = vsel %vm326, %v1377, -1e+30
        %v1394 = vsel %vm327, %v1378, -1e+30
        %v1395 = vsel %vm328, %v1379, -1e+30
        %v1396 = vsel %vm329, %v1380, -1e+30
        %v1397 = vsel %vm330, %v1381, -1e+30
        %v1398 = vsel %vm331, %v1382, -1e+30
        %v1399 = vsel %vm332, %v1383, -1e+30
        %v1400 = vsel %vm333, %v1384, -1e+30
        %1401 = vmax.xlane.f32.xlu0 %v1385
        %v1402 = vpop.xlane.xlu0 %1401
        %1403 = vmax.xlane.f32.xlu0 %v1386
        %v1404 = vpop.xlane.xlu0 %1403
        %1405 = vmax.xlane.f32.xlu0 %v1387
        %v1406 = vpop.xlane.xlu0 %1405
        %1407 = vmax.xlane.f32.xlu0 %v1388
        %v1408 = vpop.xlane.xlu0 %1407
        %1409 = vmax.xlane.f32.xlu0 %v1389
        %v1410 = vpop.xlane.xlu0 %1409
        %1411 = vmax.xlane.f32.xlu0 %v1390
        %v1412 = vpop.xlane.xlu0 %1411
        %1413 = vmax.xlane.f32.xlu0 %v1391
        %v1414 = vpop.xlane.xlu0 %1413
        %1415 = vmax.xlane.f32.xlu0 %v1392
        %v1416 = vpop.xlane.xlu0 %1415
        %1417 = vmax.xlane.f32.xlu0 %v1393
        %v1418 = vpop.xlane.xlu0 %1417
        %1419 = vmax.xlane.f32.xlu0 %v1394
        %v1420 = vpop.xlane.xlu0 %1419
        %1421 = vmax.xlane.f32.xlu0 %v1395
        %v1422 = vpop.xlane.xlu0 %1421
        %1423 = vmax.xlane.f32.xlu0 %v1396
        %v1424 = vpop.xlane.xlu0 %1423
        %1425 = vmax.xlane.f32.xlu0 %v1397
        %v1426 = vpop.xlane.xlu0 %1425
        %1427 = vmax.xlane.f32.xlu0 %v1398
        %v1428 = vpop.xlane.xlu0 %1427
        %1429 = vmax.xlane.f32.xlu0 %v1399
        %v1430 = vpop.xlane.xlu0 %1429
        %1431 = vmax.xlane.f32.xlu0 %v1400
        %v1432 = vpop.xlane.xlu0 %1431
        %v1433 = vsub.f32 %v1385, %v1402
        %v1434 = vsub.f32 %v1386, %v1404
        %v1435 = vsub.f32 %v1387, %v1406
        %v1436 = vsub.f32 %v1388, %v1408
        %v1437 = vsub.f32 %v1389, %v1410
        %v1438 = vsub.f32 %v1390, %v1412
        %v1439 = vsub.f32 %v1391, %v1414
        %v1440 = vsub.f32 %v1392, %v1416
        %v1441 = vsub.f32 %v1393, %v1418
        %v1442 = vsub.f32 %v1394, %v1420
        %v1443 = vsub.f32 %v1395, %v1422
        %v1444 = vsub.f32 %v1396, %v1424
        %v1445 = vsub.f32 %v1397, %v1426
        %v1446 = vsub.f32 %v1398, %v1428
        %v1447 = vsub.f32 %v1399, %v1430
        %v1448 = vsub.f32 %v1400, %v1432
        %v1449 = vmul.f32 %v1433, 1.442695
        %v1450 = vpow.pop %v1449
        %v1451 = vmul.f32 %v1434, 1.442695
        %v1452 = vpow.pop %v1451
        %v1453 = vmul.f32 %v1435, 1.442695
        %v1454 = vpow.pop %v1453
        %v1455 = vmul.f32 %v1436, 1.442695
        %v1456 = vpow.pop %v1455
        %v1457 = vmul.f32 %v1437, 1.442695
        %v1458 = vpow.pop %v1457
        %v1459 = vmul.f32 %v1438, 1.442695
        %v1460 = vpow.pop %v1459
        %v1461 = vmul.f32 %v1439, 1.442695
        %v1462 = vpow.pop %v1461
        %v1463 = vmul.f32 %v1440, 1.442695
        %v1464 = vpow.pop %v1463
        %v1465 = vmul.f32 %v1441, 1.442695
        %v1466 = vpow.pop %v1465
        %v1467 = vmul.f32 %v1442, 1.442695
        %v1468 = vpow.pop %v1467
        %v1469 = vmul.f32 %v1443, 1.442695
        %v1470 = vpow.pop %v1469
        %v1471 = vmul.f32 %v1444, 1.442695
        %v1472 = vpow.pop %v1471
        %v1473 = vmul.f32 %v1445, 1.442695
        %v1474 = vpow.pop %v1473
        %v1475 = vmul.f32 %v1446, 1.442695
        %v1476 = vpow.pop %v1475
        %v1477 = vmul.f32 %v1447, 1.442695
        %v1478 = vpow.pop %v1477
        %v1479 = vmul.f32 %v1448, 1.442695
        %v1480 = vpow.pop %v1479
        %1481 = vadd.xlane.f32.xlu0 %v1450
        %v1482 = vpop.xlane.xlu0 %1481
        %1483 = vadd.xlane.f32.xlu0 %v1452
        %v1484 = vpop.xlane.xlu0 %1483
        %1485 = vadd.xlane.f32.xlu0 %v1454
        %v1486 = vpop.xlane.xlu0 %1485
        %1487 = vadd.xlane.f32.xlu0 %v1456
        %v1488 = vpop.xlane.xlu0 %1487
        %1489 = vadd.xlane.f32.xlu0 %v1458
        %v1490 = vpop.xlane.xlu0 %1489
        %1491 = vadd.xlane.f32.xlu0 %v1460
        %v1492 = vpop.xlane.xlu0 %1491
        %1493 = vadd.xlane.f32.xlu0 %v1462
        %v1494 = vpop.xlane.xlu0 %1493
        %1495 = vadd.xlane.f32.xlu0 %v1464
        %v1496 = vpop.xlane.xlu0 %1495
        %1497 = vadd.xlane.f32.xlu0 %v1466
        %v1498 = vpop.xlane.xlu0 %1497
        %1499 = vadd.xlane.f32.xlu0 %v1468
        %v1500 = vpop.xlane.xlu0 %1499
        %1501 = vadd.xlane.f32.xlu0 %v1470
        %v1502 = vpop.xlane.xlu0 %1501
        %1503 = vadd.xlane.f32.xlu0 %v1472
        %v1504 = vpop.xlane.xlu0 %1503
        %1505 = vadd.xlane.f32.xlu0 %v1474
        %v1506 = vpop.xlane.xlu0 %1505
        %1507 = vadd.xlane.f32.xlu0 %v1476
        %v1508 = vpop.xlane.xlu0 %1507
        %1509 = vadd.xlane.f32.xlu0 %v1478
        %v1510 = vpop.xlane.xlu0 %1509
        %1511 = vadd.xlane.f32.xlu0 %v1480
        %v1512 = vpop.xlane.xlu0 %1511
        %v1513 = vpack.c.bf16 %v1452, %v1450
        %v1514 = vpack.c.bf16 %v1456, %v1454
        %v1515 = vpack.c.bf16 %v1460, %v1458
        %v1516 = vpack.c.bf16 %v1464, %v1462
        %v1517 = vpack.c.bf16 %v1468, %v1466
        %v1518 = vpack.c.bf16 %v1472, %v1470
        %v1519 = vpack.c.bf16 %v1476, %v1474
        %v1520 = vpack.c.bf16 %v1480, %v1478
        %v1521 = vunpack.c.h.b16 %v221
        %v1522 = vunpack.c.h.b16 %v224
        %v1523 = vunpack.c.h.b16 %v227
        %v1524 = vunpack.c.h.b16 %v230
        %v1525 = vunpack.c.h.b16 %v233
        %v1526 = vunpack.c.h.b16 %v236
        %v1527 = vunpack.c.h.b16 %v239
        %v1528 = vunpack.c.h.b16 %v242
        %v1529 = vunpack.c.h.b16 %v245
        %v1530 = vunpack.c.h.b16 %v248
        %v1531 = vunpack.c.h.b16 %v251
        %v1532 = vunpack.c.h.b16 %v254
        %v1533 = vunpack.c.h.b16 %v257
        %v1534 = vunpack.c.h.b16 %v260
        %v1535 = vunpack.c.h.b16 %v263
        %v1536 = vunpack.c.h.b16 %v266
        %v1537 = vpack.c.b16 %v1522, %v1521
        %v1538 = vpack.c.b16 %v1524, %v1523
        %v1539 = vpack.c.b16 %v1526, %v1525
        %v1540 = vpack.c.b16 %v1528, %v1527
        %v1541 = vpack.c.b16 %v1530, %v1529
        %v1542 = vpack.c.b16 %v1532, %v1531
        %v1543 = vpack.c.b16 %v1534, %v1533
        %v1544 = vpack.c.b16 %v1536, %v1535
        %1553 = vmatprep.subr.bf16.mxu0 0
        %1554 = vmatpush1.bf16.msra.mxu0 %v1537
        %1555 = vmatprep.subr.bf16.mxu0 0
        %1556 = vmatpush1.bf16.msra.mxu0 %v1538
        %1557 = vmatprep.subr.bf16.mxu0 0
        %1558 = vmatpush1.bf16.msra.mxu0 %v1539
        %1559 = vmatprep.subr.bf16.mxu0 0
        %1560 = vmatpush1.bf16.msra.mxu0 %v1540
        %1561 = vmatprep.subr.bf16.mxu0 0
        %1562 = vmatpush1.bf16.msra.mxu0 %v1541
        %1563 = vmatprep.subr.bf16.mxu0 0
        %1564 = vmatpush1.bf16.msra.mxu0 %v1542
        %1565 = vmatprep.subr.bf16.mxu0 0
        %1566 = vmatpush1.bf16.msra.mxu0 %v1543
        %1567 = vmatprep.subr.bf16.mxu0 0
        %1568 = vmatpush1.bf16.msra.mxu0 %v1544
        %1569 = vmatprep.subr.bf16.mxu0 0
        %1570 = vmatpush1.bf16.msra.mxu0 0
        %1571 = vmatprep.subr.bf16.mxu0 0
        %1572 = vmatpush1.bf16.msra.mxu0 0
        %1573 = vmatprep.subr.bf16.mxu0 0
        %1574 = vmatpush1.bf16.msra.mxu0 0
        %1575 = vmatprep.subr.bf16.mxu0 0
        %1576 = vmatpush1.bf16.msra.mxu0 0
        %1577 = vmatprep.subr.bf16.mxu0 0
        %1578 = vmatpush1.bf16.msra.mxu0 0
        %1579 = vmatprep.subr.bf16.mxu0 0
        %1580 = vmatpush1.bf16.msra.mxu0 0
        %1581 = vmatprep.subr.bf16.mxu0 0
        %1582 = vmatpush1.bf16.msra.mxu0 0
        %1583 = vmatprep.subr.bf16.mxu0 0
        %1584 = vmatpush1.bf16.msra.mxu0 0
        %1585 = vmatprep.mubr.bf16.mxu0 0
        %1586 = vmatmul.mubr.bf16.gmra.mrb[0].mxu0 %v1513
        %v1587 = vpop.f32.mrb[0].mxu0
        %v1588 = vadd.f32 0.0, %v1587
        %v1589 = vpop.f32.mrb[0].mxu0
        %v1590 = vpop.f32.mrb[0].mxu0
        %v1591 = vadd.f32 0.0, %v1590
        %v1592 = vpop.f32.mrb[0].mxu0
        %1593 = vmatprep.mubr.bf16.mxu0 0
        %1594 = vmatmul.mubr.bf16.gmra.mrb[0].mxu0 %v1514
        %v1595 = vpop.f32.mrb[0].mxu0
        %v1596 = vadd.f32 0.0, %v1595
        %v1597 = vpop.f32.mrb[0].mxu0
        %v1598 = vpop.f32.mrb[0].mxu0
        %v1599 = vadd.f32 0.0, %v1598
        %v1600 = vpop.f32.mrb[0].mxu0
        %1601 = vmatprep.mubr.bf16.mxu0 0
        %1602 = vmatmul.mubr.bf16.gmra.mrb[0].mxu0 %v1515
        %v1603 = vpop.f32.mrb[0].mxu0
        %v1604 = vadd.f32 0.0, %v1603
        %v1605 = vpop.f32.mrb[0].mxu0
        %v1606 = vpop.f32.mrb[0].mxu0
        %v1607 = vadd.f32 0.0, %v1606
        %v1608 = vpop.f32.mrb[0].mxu0
        %1609 = vmatprep.mubr.bf16.mxu0 0
        %1610 = vmatmul.mubr.bf16.gmra.mrb[0].mxu0 %v1516
        %v1611 = vpop.f32.mrb[0].mxu0
        %v1612 = vadd.f32 0.0, %v1611
        %v1613 = vpop.f32.mrb[0].mxu0
        %v1614 = vpop.f32.mrb[0].mxu0
        %v1615 = vadd.f32 0.0, %v1614
        %v1616 = vpop.f32.mrb[0].mxu0
        %1617 = vmatprep.mubr.bf16.mxu0 0
        %1618 = vmatmul.mubr.bf16.gmra.mrb[0].mxu0 %v1517
        %v1619 = vpop.f32.mrb[0].mxu0
        %v1620 = vadd.f32 0.0, %v1619
        %v1621 = vpop.f32.mrb[0].mxu0
        %v1622 = vpop.f32.mrb[0].mxu0
        %v1623 = vadd.f32 0.0, %v1622
        %v1624 = vpop.f32.mrb[0].mxu0
        %1625 = vmatprep.mubr.bf16.mxu0 0
        %1626 = vmatmul.mubr.bf16.gmra.mrb[0].mxu0 %v1518
        %v1627 = vpop.f32.mrb[0].mxu0
        %v1628 = vadd.f32 0.0, %v1627
        %v1629 = vpop.f32.mrb[0].mxu0
        %v1630 = vpop.f32.mrb[0].mxu0
        %v1631 = vadd.f32 0.0, %v1630
        %v1632 = vpop.f32.mrb[0].mxu0
        %1633 = vmatprep.mubr.bf16.mxu0 0
        %1634 = vmatmul.mubr.bf16.gmra.mrb[0].mxu0 %v1519
        %v1635 = vpop.f32.mrb[0].mxu0
        %v1636 = vadd.f32 0.0, %v1635
        %v1637 = vpop.f32.mrb[0].mxu0
        %v1638 = vpop.f32.mrb[0].mxu0
        %v1639 = vadd.f32 0.0, %v1638
        %v1640 = vpop.f32.mrb[0].mxu0
        %1641 = vmatprep.mubr.bf16.mxu0 0
        %1642 = vmatmul.mubr.bf16.gmra.mrb[0].mxu0 %v1520
        %v1643 = vpop.f32.mrb[0].mxu0
        %v1644 = vadd.f32 0.0, %v1643
        %v1645 = vpop.f32.mrb[0].mxu0
        %v1646 = vpop.f32.mrb[0].mxu0
        %v1647 = vadd.f32 0.0, %v1646
        %v1648 = vpop.f32.mrb[0].mxu0
        %1649 = vdwg.mxu0
        %v1650 = vrcp.pop %v1482
        %v1651 = vrcp.pop %v1484
        %v1652 = vrcp.pop %v1486
        %v1653 = vrcp.pop %v1488
        %v1654 = vrcp.pop %v1490
        %v1655 = vrcp.pop %v1492
        %v1656 = vrcp.pop %v1494
        %v1657 = vrcp.pop %v1496
        %v1658 = vrcp.pop %v1498
        %v1659 = vrcp.pop %v1500
        %v1660 = vrcp.pop %v1502
        %v1661 = vrcp.pop %v1504
        %v1662 = vrcp.pop %v1506
        %v1663 = vrcp.pop %v1508
        %v1664 = vrcp.pop %v1510
        %v1665 = vrcp.pop %v1512
        %v1666 = vmul.f32 %v1588, %v1650
        %v1667 = vmul.f32 %v1591, %v1651
        %v1668 = vmul.f32 %v1596, %v1652
        %v1669 = vmul.f32 %v1599, %v1653
        %v1670 = vmul.f32 %v1604, %v1654
        %v1671 = vmul.f32 %v1607, %v1655
        %v1672 = vmul.f32 %v1612, %v1656
        %v1673 = vmul.f32 %v1615, %v1657
        %v1674 = vmul.f32 %v1620, %v1658
        %v1675 = vmul.f32 %v1623, %v1659
        %v1676 = vmul.f32 %v1628, %v1660
        %v1677 = vmul.f32 %v1631, %v1661
        %v1678 = vmul.f32 %v1636, %v1662
        %v1679 = vmul.f32 %v1639, %v1663
        %v1680 = vmul.f32 %v1644, %v1664
        %v1681 = vmul.f32 %v1647, %v1665
        %v1682 = vpack.c.bf16 %v953, %v952
        %v1683 = vpack.c.bf16 %v1667, %v1666
        %v1684 = vpack.c.bf16 %v955, %v954
        %v1685 = vpack.c.bf16 %v1669, %v1668
        %v1686 = vpack.c.bf16 %v957, %v956
        %v1687 = vpack.c.bf16 %v1671, %v1670
        %v1688 = vpack.c.bf16 %v959, %v958
        %v1689 = vpack.c.bf16 %v1673, %v1672
        %v1690 = vpack.c.bf16 %v961, %v960
        %v1691 = vpack.c.bf16 %v1675, %v1674
        %v1692 = vpack.c.bf16 %v963, %v962
        %v1693 = vpack.c.bf16 %v1677, %v1676
        %v1694 = vpack.c.bf16 %v965, %v964
        %v1695 = vpack.c.bf16 %v1679, %v1678
        %v1696 = vpack.c.bf16 %v967, %v966
        %v1697 = vpack.c.bf16 %v1681, %v1680
        %v1714 = vunpack.c.l.b16 %v1682
        %v1715 = vunpack.c.l.b16 %v1683
        %v1716 = vunpack.c.h.b16 %v1682
        %v1717 = vunpack.c.h.b16 %v1683
        %v1718 = vunpack.c.l.b16 %v1684
        %v1719 = vunpack.c.l.b16 %v1685
        %v1720 = vunpack.c.h.b16 %v1684
        %v1721 = vunpack.c.h.b16 %v1685
        %v1722 = vunpack.c.l.b16 %v1686
        %v1723 = vunpack.c.l.b16 %v1687
        %v1724 = vunpack.c.h.b16 %v1686
        %v1725 = vunpack.c.h.b16 %v1687
        %v1726 = vunpack.c.l.b16 %v1688
        %v1727 = vunpack.c.l.b16 %v1689
        %v1728 = vunpack.c.h.b16 %v1688
        %v1729 = vunpack.c.h.b16 %v1689
        %v1730 = vunpack.c.l.b16 %v1690
        %v1731 = vunpack.c.l.b16 %v1691
        %v1732 = vunpack.c.h.b16 %v1690
        %v1733 = vunpack.c.h.b16 %v1691
        %v1734 = vunpack.c.l.b16 %v1692
        %v1735 = vunpack.c.l.b16 %v1693
        %v1736 = vunpack.c.h.b16 %v1692
        %v1737 = vunpack.c.h.b16 %v1693
        %v1738 = vunpack.c.l.b16 %v1694
        %v1739 = vunpack.c.l.b16 %v1695
        %v1740 = vunpack.c.h.b16 %v1694
        %v1741 = vunpack.c.h.b16 %v1695
        %v1742 = vunpack.c.l.b16 %v1696
        %v1743 = vunpack.c.l.b16 %v1697
        %v1744 = vunpack.c.h.b16 %v1696
        %v1745 = vunpack.c.h.b16 %v1697
        %v1746 = vpack.c.b16 %v1715, %v1714
        %v1747 = vpack.c.b16 %v1717, %v1716
        %v1748 = vpack.c.b16 %v1719, %v1718
        %v1749 = vpack.c.b16 %v1721, %v1720
        %v1750 = vpack.c.b16 %v1723, %v1722
        %v1751 = vpack.c.b16 %v1725, %v1724
        %v1752 = vpack.c.b16 %v1727, %v1726
        %v1753 = vpack.c.b16 %v1729, %v1728
        %v1754 = vpack.c.b16 %v1731, %v1730
        %v1755 = vpack.c.b16 %v1733, %v1732
        %v1756 = vpack.c.b16 %v1735, %v1734
        %v1757 = vpack.c.b16 %v1737, %v1736
        %v1758 = vpack.c.b16 %v1739, %v1738
        %v1759 = vpack.c.b16 %v1741, %v1740
        %v1760 = vpack.c.b16 %v1743, %v1742
        %v1761 = vpack.c.b16 %v1745, %v1744
        %1778 = vst [vmem:[%s217] sm:$0xff] %v1746
        %1779 = vst [vmem:[%s217 + $0x8] sm:$0xff] %v1747
        %1780 = vst [vmem:[%s217 + $0x10] sm:$0xff] %v1748
        %1781 = vst [vmem:[%s217 + $0x18] sm:$0xff] %v1749
        %1782 = vst [vmem:[%s217 + $0x20] sm:$0xff] %v1750
        %1783 = vst [vmem:[%s217 + $0x28] sm:$0xff] %v1751
        %1784 = vst [vmem:[%s217 + $0x30] sm:$0xff] %v1752
        %1785 = vst [vmem:[%s217 + $0x38] sm:$0xff] %v1753
        %1786 = vst [vmem:[%s217 + $0x40] sm:$0xff] %v1754
        %1787 = vst [vmem:[%s217 + $0x48] sm:$0xff] %v1755
        %1788 = vst [vmem:[%s217 + $0x50] sm:$0xff] %v1756
        %1789 = vst [vmem:[%s217 + $0x58] sm:$0xff] %v1757
        %1790 = vst [vmem:[%s217 + $0x60] sm:$0xff] %v1758
        %1791 = vst [vmem:[%s217 + $0x68] sm:$0xff] %v1759
        %1792 = vst [vmem:[%s217 + $0x70] sm:$0xff] %v1760
        %1793 = vst [vmem:[%s217 + $0x78] sm:$0xff] %v1761
        %s1794 = sand.u32 %s97, 1
        %s1795 = scalar_lea.sflag [#allocation4], %s1794
        %s1796 = sand.u32 %s97, 1
        %s1797 = smul.addr %s1796, 128
        %s1798 = scalar_lea.vmem [#allocation8], %s1797
        // Predicated region
        $region45: #{transformer_forward.10} parent=31 // pred_check
          %p1799 = pneg %p107
        $region46: #{transformer_forward.10} parent=31 // pred_check_branch
          %1801 = sbr.rel (%p1799) target = $region48
        $region47: #{transformer_forward.10} parent=31 // pred_region
          %s1803 = ssub.s32 2048, 2048
          %1804 = vsyncadd %s1795, %s1803
          %s1805 = smul.addr %s21, 32
          %s1806 = smul.addr %s1805, 64
          %s1807 = scalar_lea.hbm %s3, %s1806
          %s1808 = sshll.u32 %s1798, 4
          %s1809 = int_to_ptr.vmem [resolvable:$true] %s1808
          %1814 = dma.vmem_to_hbm [thread:$0]  %s1809, 2048, %s1807, %s1795, 128, 128, 8
        $region48: #{transformer_forward.10} parent=31 // pred_fallthru
          _
      $region32: #{transformer_forward.10} parent=5 // pred_fallthru
        _
      %p1815 = scmp.le.s32.totalorder 2, %s16
      // Predicated region
      $region49: #{transformer_forward.10} parent=5 // pred_check
        %p1816 = pneg %p1815
      $region50: #{transformer_forward.10} parent=5 // pred_check_branch
        %1818 = sbr.rel (%p1816) target = $region52
      $region51: #{transformer_forward.10} parent=5 // pred_region
        %s1819 = ssub.s32 %s16, 2
        // Predicated region
        $region53: #{transformer_forward.10} parent=51 // pred_check
          %p1820 = pneg %p113
        $region54: #{transformer_forward.10} parent=51 // pred_check_branch
          %1822 = sbr.rel (%p1820) target = $region56
        $region55: #{transformer_forward.10} parent=51 // pred_region
          %s1823 = sand.u32 %s98, 1
          %s1824 = scalar_lea.sflag [#allocation4], %s1823
          %s1825 = sand.u32 %s98, 1
          %s1826 = smul.addr %s1825, 128
          %s1827 = scalar_lea.vmem [#allocation8], %s1826
          %1828 = dma.done %s1824, 2048
        $region56: #{transformer_forward.10} parent=51 // pred_fallthru
          _
      $region52: #{transformer_forward.10} parent=5 // pred_fallthru
        _
    $region6: #{transformer_forward.10} parent=1 // loop_footer
      %s20 = sadd.s32 1, %s16
    $region7: #{transformer_forward.10} parent=1 // loop_footer_branch
      %15 = sbr.rel target = $region3
    $region8: #{transformer_forward.10} parent=1 // loop_exit
      _
    %1829 = vsyncpa [#allocation3], 1
    %s1830 = scalar_lea.sflag [#allocation3], 1
    %1831 = vsyncpa %s1830, 1
    %1832 = vsyncpa [#allocation6], 1
    %1833 = vsyncpa [#allocation4], 1
    %s1834 = scalar_lea.sflag [#allocation4], 1
    %1835 = vsyncpa %s1834, 1

// kernel: transformer_forward.9
$region0: #{transformer_forward.9}
  #allocation0 [shape = 'u32[]', space=smem, size = 0x4, offset = 0x4, fixed_abs, tag = 'smem constant byte address 0x4 - core index']
  #allocation1 [shape = 'u32[144,128]{1,0:T(1,128)}', space=vmem, size = 0x12000, scoped, tag = 'internal scratch']
  #allocation2 [shape = 'bf16[128,256]{1,0:T(16,128)(2,1)}', space=vmem, size = 0x10000, scoped, tag = 'scratch operand']
  %s0 = inlined_call_operand.hbm [shape: bf16[256,256], index: 0, kind: input, shape index: {}]
  %s1 = inlined_call_operand.hbm [shape: f32[1,256], index: 1, kind: input, shape index: {}]
  %s2 = inlined_call_operand.hbm [shape: bf16[256,768], index: 2, kind: input, shape index: {}]
  %s3 = inlined_call_operand.hbm [shape: bf16[256,768], index: 3, kind: output, shape index: {}]
  %s4 = sld [smem:[#allocation0]]
  $region61: #{transformer_forward.9} parent=0
    _
  %s6 = ssub.s32 1, %s4
  %s7 = scalar_select 0, %s6, %s4
  $region1: #{transformer_forward.9} parent=0
    #allocation3 [shape = 'u8[131072]{0}', space=vmem, size = 0x20000, scoped, tag = 'input window, operand 0']
    #allocation4 [shape = 's32[2]{0}', space=sflag, size = 0x8, scoped, tag = 'scoped memory for transformer_forward.9']
    #allocation5 [shape = 's32[2]{0}', space=sflag, size = 0x8, scoped, tag = 'scoped memory for transformer_forward.9']
    #allocation6 [shape = 'u8[1024]{0}', space=vmem, size = 0x400, scoped, tag = 'input window, operand 1, single buffered']
    #allocation7 [shape = 's32[1]{0}', space=sflag, size = 0x4, scoped, tag = 'scoped memory for transformer_forward.9']
    #allocation8 [shape = 'u8[393216]{0}', space=vmem, size = 0x60000, scoped, tag = 'input window, operand 2, single buffered']
    #allocation9 [shape = 'u8[393216]{0}', space=vmem, size = 0x60000, scoped, tag = 'output window, operand 0']
    %8 = vsyncpa [#allocation4], 0
    %s9 = scalar_lea.sflag [#allocation4], 1
    %10 = vsyncpa %s9, 0
    %11 = vsyncpa [#allocation7], 0
    %12 = vsyncpa [#allocation5], 0
    %s13 = scalar_lea.sflag [#allocation5], 1
    %14 = vsyncpa %s13, 0
    loop: start=0, step=1, limit=4
    $region2: #{transformer_forward.9} parent=1 // loop_pre_header
      _
    $region3: #{transformer_forward.9} parent=1 // loop_header
      %s16 = sphi 0, %s20
      %p17 = scmp.ge.s32.totalorder %s16, 4
      %s23 = sphi 0, %s35
      %s24 = sphi 0, %s31
      %s25 = sphi 0, %s23
      %s26 = sphi 0, %s24
      %s27 = sphi 0, %s25
      %s28 = sphi 0, %s26
      %s38 = sphi 0, %s40
      %s41 = sphi 0, %s38
      %s42 = sphi 0, %s41
      %s58 = sphi 0, %s42
      %s62 = sphi 0, %s62
      %s64 = sphi 0, %s62
      %s65 = sphi 0, %s64
      %s79 = sphi 0, %s65
      %s85 = sphi 0, %s87
      %s88 = sphi 0, %s85
      %s89 = sphi 0, %s88
      %s105 = sphi 0, %s89
      %s113 = sphi 0, %s115
      %s116 = sphi 0, %s113
      %s117 = sphi 0, %s116
      %s133 = sphi 0, %s117
    $region4: #{transformer_forward.9} parent=1 // loop_header_branch
      %19 = sbr.rel (%p17) target = $region8
    $region5: #{transformer_forward.9} parent=1 // loop_body
      %s21 = ssub.s32 %s16, 1
      %s22 = ssub.s32 %s16, 2
      %s29 = sadd.s32 1, %s24
      %p30 = scmp.ge.s32.totalorder %s29, 1
      %s31 = scalar_select %p30, 0, %s29
      %s32 = sadd.s32 1, %s23
      %s33 = scalar_select %p30, %s32, %s23
      %p34 = scmp.ge.s32.totalorder %s33, 2
      %s35 = scalar_select %p34, 0, %s33
      %s36 = ssub.s32 %s23, %s35
      %p37 = scmp.eq.s32.totalorder %s36, 0
      %s39 = sadd.s32 %s38, 1
      %s40 = scalar_select %p37, %s38, %s39
      %p43 = pneg %p37
      %p44 = scmp.eq.s32.totalorder %s16, 1
      %p45 = por %p43, %p44
      %p46 = scmp.ne.s32.totalorder %s38, %s41
      %p47 = scmp.eq.s32.totalorder %s16, 0
      %p48 = por %p46, %p47
      %p49 = scmp.ne.s32.totalorder %s38, %s41
      %p50 = scmp.eq.s32.totalorder %s21, 1
      %p51 = por %p49, %p50
      %p52 = scmp.ne.s32.totalorder %s41, %s42
      %p53 = scmp.eq.s32.totalorder %s21, 0
      %p54 = por %p52, %p53
      %p55 = scmp.ne.s32.totalorder %s41, %s42
      %p56 = scmp.eq.s32.totalorder %s22, 1
      %p57 = por %p55, %p56
      %p59 = scmp.ne.s32.totalorder %s42, %s58
      %p60 = scmp.eq.s32.totalorder %s22, 0
      %p61 = por %p59, %p60
      %s63 = sadd.s32 %s62, 1
      %p66 = scmp.eq.s32.totalorder %s16, 1
      %p67 = scmp.ne.s32.totalorder %s62, %s64
      %p68 = scmp.eq.s32.totalorder %s16, 0
      %p69 = por %p67, %p68
      %p70 = scmp.ne.s32.totalorder %s62, %s64
      %p71 = scmp.eq.s32.totalorder %s21, 1
      %p72 = por %p70, %p71
      %p73 = scmp.ne.s32.totalorder %s64, %s65
      %p74 = scmp.eq.s32.totalorder %s21, 0
      %p75 = por %p73, %p74
      %p76 = scmp.ne.s32.totalorder %s64, %s65
      %p77 = scmp.eq.s32.totalorder %s22, 1
      %p78 = por %p76, %p77
      %p80 = scmp.ne.s32.totalorder %s65, %s79
      %p81 = scmp.eq.s32.totalorder %s22, 0
      %p82 = por %p80, %p81
      %s83 = ssub.s32 %s24, %s31
      %p84 = scmp.eq.s32.totalorder %s83, 0
      %s86 = sadd.s32 %s85, 1
      %s87 = scalar_select %p84, %s85, %s86
      %p90 = pneg %p84
      %p91 = scmp.eq.s32.totalorder %s16, 1
      %p92 = por %p90, %p91
      %p93 = scmp.ne.s32.totalorder %s85, %s88
      %p94 = scmp.eq.s32.totalorder %s16, 0
      %p95 = por %p93, %p94
      %p96 = scmp.ne.s32.totalorder %s85, %s88
      %p97 = scmp.eq.s32.totalorder %s21, 1
      %p98 = por %p96, %p97
      %p99 = scmp.ne.s32.totalorder %s88, %s89
      %p100 = scmp.eq.s32.totalorder %s21, 0
      %p101 = por %p99, %p100
      %p102 = scmp.ne.s32.totalorder %s88, %s89
      %p103 = scmp.eq.s32.totalorder %s22, 1
      %p104 = por %p102, %p103
      %p106 = scmp.ne.s32.totalorder %s89, %s105
      %p107 = scmp.eq.s32.totalorder %s22, 0
      %p108 = por %p106, %p107
      %s109 = ssub.s32 %s23, %s35
      %s110 = ssub.s32 %s24, %s31
      %s111 = sor.u32 %s109, %s110
      %p112 = scmp.eq.s32.totalorder %s111, 0
      %s114 = sadd.s32 %s113, 1
      %s115 = scalar_select %p112, %s113, %s114
      %p118 = pneg %p112
      %p119 = scmp.eq.s32.totalorder %s16, 1
      %p120 = por %p118, %p119
      %p121 = scmp.ne.s32.totalorder %s113, %s116
      %p122 = scmp.eq.s32.totalorder %s16, 0
      %p123 = por %p121, %p122
      %p124 = scmp.ne.s32.totalorder %s113, %s116
      %p125 = scmp.eq.s32.totalorder %s21, 1
      %p126 = por %p124, %p125
      %p127 = scmp.ne.s32.totalorder %s116, %s117
      %p128 = scmp.eq.s32.totalorder %s21, 0
      %p129 = por %p127, %p128
      %p130 = scmp.ne.s32.totalorder %s116, %s117
      %p131 = scmp.eq.s32.totalorder %s22, 1
      %p132 = por %p130, %p131
      %p134 = scmp.ne.s32.totalorder %s117, %s133
      %p135 = scmp.eq.s32.totalorder %s22, 0
      %p136 = por %p134, %p135
      %p137 = scmp.le.s32.totalorder 1, %s16
      %p138 = scmp.lt.s32.totalorder %s16, 3
      %p139 = pnand %p137, %p138
      %p140 = pneg %p139
      // Predicated region
      $region9: #{transformer_forward.9} parent=5 // pred_check
        _
      $region10: #{transformer_forward.9} parent=5 // pred_check_branch
        %142 = sbr.rel (%p139) target = $region12
      $region11: #{transformer_forward.9} parent=5 // pred_region
        %s143 = ssub.s32 %s16, 1
        // Predicated region
        $region13: #{transformer_forward.9} parent=11 // pred_check
          %p144 = pneg %p75
        $region14: #{transformer_forward.9} parent=11 // pred_check_branch
          %146 = sbr.rel (%p144) target = $region16
        $region15: #{transformer_forward.9} parent=11 // pred_region
          %s148 = ssub.s32 32, 32
          %149 = vsyncadd [#allocation7], %s148
          %s151 = sshll.u32 [#allocation6], 4
          %s152 = int_to_ptr.vmem [resolvable:$true] %s151
          %154 = dma.hbm_to_vmem [thread:$0]  %s1, 32, %s152, [#allocation7]
        $region16: #{transformer_forward.9} parent=11 // pred_fallthru
          _
        // Predicated region
        $region17: #{transformer_forward.9} parent=11 // pred_check
          %p155 = pneg %p101
        $region18: #{transformer_forward.9} parent=11 // pred_check_branch
          %157 = sbr.rel (%p155) target = $region20
        $region19: #{transformer_forward.9} parent=11 // pred_region
          %s158 = smul.u32 6, %s26
          %s160 = ssub.s32 12288, 12288
          %161 = vsyncadd [#allocation7], %s160
          %s162 = smul.addr %s158, 64
          %s163 = scalar_lea.hbm %s2, %s162
          %s164 = sshll.u32 [#allocation8], 4
          %s165 = int_to_ptr.vmem [resolvable:$true] %s164
          %170 = dma.hbm_to_vmem [thread:$0]  %s163, 12288, %s165, [#allocation7], 384, 384, 24
        $region20: #{transformer_forward.9} parent=11 // pred_fallthru
          _
      $region12: #{transformer_forward.9} parent=5 // pred_fallthru
        _
      %p171 = scmp.lt.s32.totalorder %s16, 2
      // Predicated region
      $region21: #{transformer_forward.9} parent=5 // pred_check
        %p172 = pneg %p171
      $region22: #{transformer_forward.9} parent=5 // pred_check_branch
        %174 = sbr.rel (%p172) target = $region24
      $region23: #{transformer_forward.9} parent=5 // pred_region
        // Predicated region
        $region25: #{transformer_forward.9} parent=23 // pred_check
          %p175 = pneg %p48
        $region26: #{transformer_forward.9} parent=23 // pred_check_branch
          %177 = sbr.rel (%p175) target = $region28
        $region27: #{transformer_forward.9} parent=23 // pred_region
          %s178 = sand.u32 %s38, 1
          %s179 = scalar_lea.sflag [#allocation4], %s178
          %s180 = sand.u32 %s38, 1
          %s181 = smul.addr %s180, 128
          %s182 = scalar_lea.vmem [#allocation3], %s181
          %s183 = smul.u32 16, %s23
          %s185 = ssub.s32 2048, 2048
          %186 = vsyncadd %s179, %s185
          %s187 = smul.addr %s183, 2
          %s188 = smul.addr %s187, 64
          %s189 = scalar_lea.hbm %s0, %s188
          %s190 = sshll.u32 %s182, 4
          %s191 = int_to_ptr.vmem [resolvable:$true] %s190
          %196 = dma.hbm_to_vmem [thread:$0]  %s189, 2048, %s191, %s179, 128, 128, 8
        $region28: #{transformer_forward.9} parent=23 // pred_fallthru
          _
      $region24: #{transformer_forward.9} parent=5 // pred_fallthru
        _
      %p197 = scmp.le.s32.totalorder 1, %s16
      %p198 = scmp.lt.s32.totalorder %s16, 3
      %p199 = pnand %p197, %p198
      %p200 = pneg %p199
      // Predicated region
      $region29: #{transformer_forward.9} parent=5 // pred_check
        _
      $region30: #{transformer_forward.9} parent=5 // pred_check_branch
        %202 = sbr.rel (%p199) target = $region32
      $region31: #{transformer_forward.9} parent=5 // pred_region
        %s203 = ssub.s32 %s16, 1
        %s204 = sand.u32 %s41, 1
        %s205 = scalar_lea.sflag [#allocation4], %s204
        %s206 = sand.u32 %s41, 1
        %s207 = smul.addr %s206, 128
        %s208 = scalar_lea.vmem [#allocation3], %s207
        // Predicated region
        $region33: #{transformer_forward.9} parent=31 // pred_check
          %p209 = pneg %p54
        $region34: #{transformer_forward.9} parent=31 // pred_check_branch
          %211 = sbr.rel (%p209) target = $region36
        $region35: #{transformer_forward.9} parent=31 // pred_region
          %212 = dma.done %s205, 2048
        $region36: #{transformer_forward.9} parent=31 // pred_fallthru
          _
        // Predicated region
        $region37: #{transformer_forward.9} parent=31 // pred_check
          %p213 = pneg %p75
        $region38: #{transformer_forward.9} parent=31 // pred_check_branch
          %215 = sbr.rel (%p213) target = $region40
        $region39: #{transformer_forward.9} parent=31 // pred_region
          %216 = dma.done [#allocation7], 32
        $region40: #{transformer_forward.9} parent=31 // pred_fallthru
          _
        // Predicated region
        $region41: #{transformer_forward.9} parent=31 // pred_check
          %p217 = pneg %p101
        $region42: #{transformer_forward.9} parent=31 // pred_check_branch
          %219 = sbr.rel (%p217) target = $region44
        $region43: #{transformer_forward.9} parent=31 // pred_region
          %220 = dma.done [#allocation7], 12288
        $region44: #{transformer_forward.9} parent=31 // pred_fallthru
          _
        %s221 = sand.u32 %s41, 1
        %s222 = scalar_lea.sflag [#allocation4], %s221
        %s223 = sand.u32 %s41, 1
        %s224 = smul.addr %s223, 128
        %s225 = scalar_lea.vmem [#allocation3], %s224
        %p226 = pneg %p54
        %p227 = pneg %p51
        %p228 = pneg %p75
        %p229 = pneg %p72
        %p230 = pneg %p101
        %p231 = pneg %p98
        %p232 = pneg %p129
        %p233 = pneg %p126
        %s234 = sand.u32 %s116, 1
        %s235 = scalar_lea.sflag [#allocation5], %s234
        %s236 = sand.u32 %s116, 1
        %s237 = smul.addr %s236, 384
        %s238 = scalar_lea.vmem [#allocation9], %s237
        %s239 = smul.u32 16, %s25
        %s240 = smul.u32 6, %s26
        %s241 = smul.u32 16, %s25
        %s242 = smul.u32 6, %s26
        %p243 = scmp.eq.s32.totalorder %s26, 0
        // Predicated region
        $region45: #{transformer_forward.9} parent=31 // pred_check
          %p244 = pneg %p243
        $region46: #{transformer_forward.9} parent=31 // pred_check_branch
          %246 = sbr.rel (%p244) target = $region48
        $region47: #{transformer_forward.9} parent=31 // pred_region
          %v247 = vld [vmem:[%s208] sm:$0xff]
          %v248 = vld [vmem:[%s208 + $0x8] sm:$0xff]
          %v249 = vld [vmem:[%s208 + $0x10] sm:$0xff]
          %v250 = vld [vmem:[%s208 + $0x18] sm:$0xff]
          %v251 = vld [vmem:[%s208 + $0x20] sm:$0xff]
          %v252 = vld [vmem:[%s208 + $0x28] sm:$0xff]
          %v253 = vld [vmem:[%s208 + $0x30] sm:$0xff]
          %v254 = vld [vmem:[%s208 + $0x38] sm:$0xff]
          %v255 = vld [vmem:[%s208 + $0x40] sm:$0xff]
          %v256 = vld [vmem:[%s208 + $0x48] sm:$0xff]
          %v257 = vld [vmem:[%s208 + $0x50] sm:$0xff]
          %v258 = vld [vmem:[%s208 + $0x58] sm:$0xff]
          %v259 = vld [vmem:[%s208 + $0x60] sm:$0xff]
          %v260 = vld [vmem:[%s208 + $0x68] sm:$0xff]
          %v261 = vld [vmem:[%s208 + $0x70] sm:$0xff]
          %v262 = vld [vmem:[%s208 + $0x78] sm:$0xff]
          %v263 = vunpack.c.l.bf16 %v247
          %v264 = vunpack.c.h.bf16 %v247
          %v265 = vunpack.c.l.bf16 %v248
          %v266 = vunpack.c.h.bf16 %v248
          %v267 = vunpack.c.l.bf16 %v249
          %v268 = vunpack.c.h.bf16 %v249
          %v269 = vunpack.c.l.bf16 %v250
          %v270 = vunpack.c.h.bf16 %v250
          %v271 = vunpack.c.l.bf16 %v251
          %v272 = vunpack.c.h.bf16 %v251
          %v273 = vunpack.c.l.bf16 %v252
          %v274 = vunpack.c.h.bf16 %v252
          %v275 = vunpack.c.l.bf16 %v253
          %v276 = vunpack.c.h.bf16 %v253
          %v277 = vunpack.c.l.bf16 %v254
          %v278 = vunpack.c.h.bf16 %v254
          %v279 = vunpack.c.l.bf16 %v255
          %v280 = vunpack.c.h.bf16 %v255
          %v281 = vunpack.c.l.bf16 %v256
          %v282 = vunpack.c.h.bf16 %v256
          %v283 = vunpack.c.l.bf16 %v257
          %v284 = vunpack.c.h.bf16 %v257
          %v285 = vunpack.c.l.bf16 %v258
          %v286 = vunpack.c.h.bf16 %v258
          %v287 = vunpack.c.l.bf16 %v259
          %v288 = vunpack.c.h.bf16 %v259
          %v289 = vunpack.c.l.bf16 %v260
          %v290 = vunpack.c.h.bf16 %v260
          %v291 = vunpack.c.l.bf16 %v261
          %v292 = vunpack.c.h.bf16 %v261
          %v293 = vunpack.c.l.bf16 %v262
          %v294 = vunpack.c.h.bf16 %v262
          %v295 = vmul.f32 %v263, %v263
          %v296 = vmul.f32 %v264, %v264
          %v297 = vmul.f32 %v265, %v265
          %v298 = vmul.f32 %v266, %v266
          %v299 = vmul.f32 %v267, %v267
          %v300 = vmul.f32 %v268, %v268
          %v301 = vmul.f32 %v269, %v269
          %v302 = vmul.f32 %v270, %v270
          %v303 = vmul.f32 %v271, %v271
          %v304 = vmul.f32 %v272, %v272
          %v305 = vmul.f32 %v273, %v273
          %v306 = vmul.f32 %v274, %v274
          %v307 = vmul.f32 %v275, %v275
          %v308 = vmul.f32 %v276, %v276
          %v309 = vmul.f32 %v277, %v277
          %v310 = vmul.f32 %v278, %v278
          %v311 = vmul.f32 %v279, %v279
          %v312 = vmul.f32 %v280, %v280
          %v313 = vmul.f32 %v281, %v281
          %v314 = vmul.f32 %v282, %v282
          %v315 = vmul.f32 %v283, %v283
          %v316 = vmul.f32 %v284, %v284
          %v317 = vmul.f32 %v285, %v285
          %v318 = vmul.f32 %v286, %v286
          %v319 = vmul.f32 %v287, %v287
          %v320 = vmul.f32 %v288, %v288
          %v321 = vmul.f32 %v289, %v289
          %v322 = vmul.f32 %v290, %v290
          %v323 = vmul.f32 %v291, %v291
          %v324 = vmul.f32 %v292, %v292
          %v325 = vmul.f32 %v293, %v293
          %v326 = vmul.f32 %v294, %v294
          %v327 = vadd.f32 %v295, %v296
          %328 = vadd.xlane.f32.xlu0 %v327
          %v329 = vpop.xlane.xlu0 %328
          %v330 = vadd.f32 %v297, %v298
          %331 = vadd.xlane.f32.xlu0 %v330
          %v332 = vpop.xlane.xlu0 %331
          %v333 = vadd.f32 %v299, %v300
          %334 = vadd.xlane.f32.xlu0 %v333
          %v335 = vpop.xlane.xlu0 %334
          %v336 = vadd.f32 %v301, %v302
          %337 = vadd.xlane.f32.xlu0 %v336
          %v338 = vpop.xlane.xlu0 %337
          %v339 = vadd.f32 %v303, %v304
          %340 = vadd.xlane.f32.xlu0 %v339
          %v341 = vpop.xlane.xlu0 %340
          %v342 = vadd.f32 %v305, %v306
          %343 = vadd.xlane.f32.xlu0 %v342
          %v344 = vpop.xlane.xlu0 %343
          %v345 = vadd.f32 %v307, %v308
          %346 = vadd.xlane.f32.xlu0 %v345
          %v347 = vpop.xlane.xlu0 %346
          %v348 = vadd.f32 %v309, %v310
          %349 = vadd.xlane.f32.xlu0 %v348
          %v350 = vpop.xlane.xlu0 %349
          %v351 = vadd.f32 %v311, %v312
          %352 = vadd.xlane.f32.xlu0 %v351
          %v353 = vpop.xlane.xlu0 %352
          %v354 = vadd.f32 %v313, %v314
          %355 = vadd.xlane.f32.xlu0 %v354
          %v356 = vpop.xlane.xlu0 %355
          %v357 = vadd.f32 %v315, %v316
          %358 = vadd.xlane.f32.xlu0 %v357
          %v359 = vpop.xlane.xlu0 %358
          %v360 = vadd.f32 %v317, %v318
          %361 = vadd.xlane.f32.xlu0 %v360
          %v362 = vpop.xlane.xlu0 %361
          %v363 = vadd.f32 %v319, %v320
          %364 = vadd.xlane.f32.xlu0 %v363
          %v365 = vpop.xlane.xlu0 %364
          %v366 = vadd.f32 %v321, %v322
          %367 = vadd.xlane.f32.xlu0 %v366
          %v368 = vpop.xlane.xlu0 %367
          %v369 = vadd.f32 %v323, %v324
          %370 = vadd.xlane.f32.xlu0 %v369
          %v371 = vpop.xlane.xlu0 %370
          %v372 = vadd.f32 %v325, %v326
          %373 = vadd.xlane.f32.xlu0 %v372
          %v374 = vpop.xlane.xlu0 %373
          %v375 = vrcp.pop 256.0
          %v376 = vmul.f32 %v329, %v375
          %v377 = vmul.f32 %v332, %v375
          %v378 = vmul.f32 %v335, %v375
          %v379 = vmul.f32 %v338, %v375
          %v380 = vmul.f32 %v341, %v375
          %v381 = vmul.f32 %v344, %v375
          %v382 = vmul.f32 %v347, %v375
          %v383 = vmul.f32 %v350, %v375
          %v384 = vmul.f32 %v353, %v375
          %v385 = vmul.f32 %v356, %v375
          %v386 = vmul.f32 %v359, %v375
          %v387 = vmul.f32 %v362, %v375
          %v388 = vmul.f32 %v365, %v375
          %v389 = vmul.f32 %v368, %v375
          %v390 = vmul.f32 %v371, %v375
          %v391 = vmul.f32 %v374, %v375
          %v392 = vadd.f32 %v376, 1e-05
          %v393 = vadd.f32 %v377, 1e-05
          %v394 = vadd.f32 %v378, 1e-05
          %v395 = vadd.f32 %v379, 1e-05
          %v396 = vadd.f32 %v380, 1e-05
          %v397 = vadd.f32 %v381, 1e-05
          %v398 = vadd.f32 %v382, 1e-05
          %v399 = vadd.f32 %v383, 1e-05
          %v400 = vadd.f32 %v384, 1e-05
          %v401 = vadd.f32 %v385, 1e-05
          %v402 = vadd.f32 %v386, 1e-05
          %v403 = vadd.f32 %v387, 1e-05
          %v404 = vadd.f32 %v388, 1e-05
          %v405 = vadd.f32 %v389, 1e-05
          %v406 = vadd.f32 %v390, 1e-05
          %v407 = vadd.f32 %v391, 1e-05
          %v408 = vrsqrt.pop %v392
          %v409 = vrsqrt.pop %v393
          %v410 = vrsqrt.pop %v394
          %v411 = vrsqrt.pop %v395
          %v412 = vrsqrt.pop %v396
          %v413 = vrsqrt.pop %v397
          %v414 = vrsqrt.pop %v398
          %v415 = vrsqrt.pop %v399
          %v416 = vrsqrt.pop %v400
          %v417 = vrsqrt.pop %v401
          %v418 = vrsqrt.pop %v402
          %v419 = vrsqrt.pop %v403
          %v420 = vrsqrt.pop %v404
          %v421 = vrsqrt.pop %v405
          %v422 = vrsqrt.pop %v406
          %v423 = vrsqrt.pop %v407
          %v424 = vmul.f32 %v263, %v408
          %v425 = vmul.f32 %v264, %v408
          %v426 = vmul.f32 %v265, %v409
          %v427 = vmul.f32 %v266, %v409
          %v428 = vmul.f32 %v267, %v410
          %v429 = vmul.f32 %v268, %v410
          %v430 = vmul.f32 %v269, %v411
          %v431 = vmul.f32 %v270, %v411
          %v432 = vmul.f32 %v271, %v412
          %v433 = vmul.f32 %v272, %v412
          %v434 = vmul.f32 %v273, %v413
          %v435 = vmul.f32 %v274, %v413
          %v436 = vmul.f32 %v275, %v414
          %v437 = vmul.f32 %v276, %v414
          %v438 = vmul.f32 %v277, %v415
          %v439 = vmul.f32 %v278, %v415
          %v440 = vmul.f32 %v279, %v416
          %v441 = vmul.f32 %v280, %v416
          %v442 = vmul.f32 %v281, %v417
          %v443 = vmul.f32 %v282, %v417
          %v444 = vmul.f32 %v283, %v418
          %v445 = vmul.f32 %v284, %v418
          %v446 = vmul.f32 %v285, %v419
          %v447 = vmul.f32 %v286, %v419
          %v448 = vmul.f32 %v287, %v420
          %v449 = vmul.f32 %v288, %v420
          %v450 = vmul.f32 %v289, %v421
          %v451 = vmul.f32 %v290, %v421
          %v452 = vmul.f32 %v291, %v422
          %v453 = vmul.f32 %v292, %v422
          %v454 = vmul.f32 %v293, %v423
          %v455 = vmul.f32 %v294, %v423
          %v456 = vld [vmem:[#allocation6] sm:$0x3]
          %v458 = vlaneseq
          %v459 = vshrl.u32 %v458, 7
          %v460 = vsub.s32 0, %v459
          %v461 = vrot.slane %v456, %v460
          %v462 = vlaneseq
          %v463 = vshrl.u32 %v462, 7
          %v464 = vsub.s32 1, %v463
          %v465 = vrot.slane %v456, %v464
          %v468 = vmul.f32 %v424, %v461
          %v469 = vmul.f32 %v425, %v465
          %v470 = vmul.f32 %v426, %v461
          %v471 = vmul.f32 %v427, %v465
          %v472 = vmul.f32 %v428, %v461
          %v473 = vmul.f32 %v429, %v465
          %v474 = vmul.f32 %v430, %v461
          %v475 = vmul.f32 %v431, %v465
          %v476 = vmul.f32 %v432, %v461
          %v477 = vmul.f32 %v433, %v465
          %v478 = vmul.f32 %v434, %v461
          %v479 = vmul.f32 %v435, %v465
          %v480 = vmul.f32 %v436, %v461
          %v481 = vmul.f32 %v437, %v465
          %v482 = vmul.f32 %v438, %v461
          %v483 = vmul.f32 %v439, %v465
          %v484 = vmul.f32 %v440, %v461
          %v485 = vmul.f32 %v441, %v465
          %v486 = vmul.f32 %v442, %v461
          %v487 = vmul.f32 %v443, %v465
          %v488 = vmul.f32 %v444, %v461
          %v489 = vmul.f32 %v445, %v465
          %v490 = vmul.f32 %v446, %v461
          %v491 = vmul.f32 %v447, %v465
          %v492 = vmul.f32 %v448, %v461
          %v493 = vmul.f32 %v449, %v465
          %v494 = vmul.f32 %v450, %v461
          %v495 = vmul.f32 %v451, %v465
          %v496 = vmul.f32 %v452, %v461
          %v497 = vmul.f32 %v453, %v465
          %v498 = vmul.f32 %v454, %v461
          %v499 = vmul.f32 %v455, %v465
          %v500 = vpack.c.bf16 %v470, %v468
          %v501 = vpack.c.bf16 %v471, %v469
          %v502 = vpack.c.bf16 %v474, %v472
          %v503 = vpack.c.bf16 %v475, %v473
          %v504 = vpack.c.bf16 %v478, %v476
          %v505 = vpack.c.bf16 %v479, %v477
          %v506 = vpack.c.bf16 %v482, %v480
          %v507 = vpack.c.bf16 %v483, %v481
          %v508 = vpack.c.bf16 %v486, %v484
          %v509 = vpack.c.bf16 %v487, %v485
          %v510 = vpack.c.bf16 %v490, %v488
          %v511 = vpack.c.bf16 %v491, %v489
          %v512 = vpack.c.bf16 %v494, %v492
          %v513 = vpack.c.bf16 %v495, %v493
          %v514 = vpack.c.bf16 %v498, %v496
          %v515 = vpack.c.bf16 %v499, %v497
          %516 = vst [vmem:[#allocation2] sm:$0xff] %v500
          %517 = vst [vmem:[#allocation2 + $0x8] sm:$0xff] %v501
          %518 = vst [vmem:[#allocation2 + $0x10] sm:$0xff] %v502
          %519 = vst [vmem:[#allocation2 + $0x18] sm:$0xff] %v503
          %520 = vst [vmem:[#allocation2 + $0x20] sm:$0xff] %v504
          %521 = vst [vmem:[#allocation2 + $0x28] sm:$0xff] %v505
          %522 = vst [vmem:[#allocation2 + $0x30] sm:$0xff] %v506
          %523 = vst [vmem:[#allocation2 + $0x38] sm:$0xff] %v507
          %524 = vst [vmem:[#allocation2 + $0x40] sm:$0xff] %v508
          %525 = vst [vmem:[#allocation2 + $0x48] sm:$0xff] %v509
          %526 = vst [vmem:[#allocation2 + $0x50] sm:$0xff] %v510
          %527 = vst [vmem:[#allocation2 + $0x58] sm:$0xff] %v511
          %528 = vst [vmem:[#allocation2 + $0x60] sm:$0xff] %v512
          %529 = vst [vmem:[#allocation2 + $0x68] sm:$0xff] %v513
          %530 = vst [vmem:[#allocation2 + $0x70] sm:$0xff] %v514
          %531 = vst [vmem:[#allocation2 + $0x78] sm:$0xff] %v515
        $region48: #{transformer_forward.9} parent=31 // pred_fallthru
          _
        %v532 = vld [vmem:[#allocation2] sm:$0xff]
        %v533 = vld [vmem:[#allocation2 + $0x8] sm:$0xff]
        %v534 = vld [vmem:[#allocation2 + $0x10] sm:$0xff]
        %v535 = vld [vmem:[#allocation2 + $0x18] sm:$0xff]
        %v536 = vld [vmem:[#allocation2 + $0x20] sm:$0xff]
        %v537 = vld [vmem:[#allocation2 + $0x28] sm:$0xff]
        %v538 = vld [vmem:[#allocation2 + $0x30] sm:$0xff]
        %v539 = vld [vmem:[#allocation2 + $0x38] sm:$0xff]
        %v540 = vld [vmem:[#allocation2 + $0x40] sm:$0xff]
        %v541 = vld [vmem:[#allocation2 + $0x48] sm:$0xff]
        %v542 = vld [vmem:[#allocation2 + $0x50] sm:$0xff]
        %v543 = vld [vmem:[#allocation2 + $0x58] sm:$0xff]
        %v544 = vld [vmem:[#allocation2 + $0x60] sm:$0xff]
        %v545 = vld [vmem:[#allocation2 + $0x68] sm:$0xff]
        %v546 = vld [vmem:[#allocation2 + $0x70] sm:$0xff]
        %v547 = vld [vmem:[#allocation2 + $0x78] sm:$0xff]
        %v548 = vld [vmem:[#allocation8] sm:$0xff]
        %v549 = vld [vmem:[#allocation8 + $0x8] sm:$0xff]
        %v550 = vld [vmem:[#allocation8 + $0x10] sm:$0xff]
        %v551 = vld [vmem:[#allocation8 + $0x18] sm:$0xff]
        %v552 = vld [vmem:[#allocation8 + $0x20] sm:$0xff]
        %v553 = vld [vmem:[#allocation8 + $0x28] sm:$0xff]
        %v554 = vld [vmem:[#allocation8 + $0x30] sm:$0xff]
        %v555 = vld [vmem:[#allocation8 + $0x38] sm:$0xff]
        %v556 = vld [vmem:[#allocation8 + $0x40] sm:$0xff]
        %v557 = vld [vmem:[#allocation8 + $0x48] sm:$0xff]
        %v558 = vld [vmem:[#allocation8 + $0x50] sm:$0xff]
        %v559 = vld [vmem:[#allocation8 + $0x58] sm:$0xff]
        %v560 = vld [vmem:[#allocation8 + $0x60] sm:$0xff]
        %v561 = vld [vmem:[#allocation8 + $0x68] sm:$0xff]
        %v562 = vld [vmem:[#allocation8 + $0x70] sm:$0xff]
        %v563 = vld [vmem:[#allocation8 + $0x78] sm:$0xff]
        %v564 = vld [vmem:[#allocation8 + $0x80] sm:$0xff]
        %v565 = vld [vmem:[#allocation8 + $0x88] sm:$0xff]
        %v566 = vld [vmem:[#allocation8 + $0x90] sm:$0xff]
        %v567 = vld [vmem:[#allocation8 + $0x98] sm:$0xff]
        %v568 = vld [vmem:[#allocation8 + $0xa0] sm:$0xff]
        %v569 = vld [vmem:[#allocation8 + $0xa8] sm:$0xff]
        %v570 = vld [vmem:[#allocation8 + $0xb0] sm:$0xff]
        %v571 = vld [vmem:[#allocation8 + $0xb8] sm:$0xff]
        %v572 = vld [vmem:[#allocation8 + $0xc0] sm:$0xff]
        %v573 = vld [vmem:[#allocation8 + $0xc8] sm:$0xff]
        %v574 = vld [vmem:[#allocation8 + $0xd0] sm:$0xff]
        %v575 = vld [vmem:[#allocation8 + $0xd8] sm:$0xff]
        %v576 = vld [vmem:[#allocation8 + $0xe0] sm:$0xff]
        %v577 = vld [vmem:[#allocation8 + $0xe8] sm:$0xff]
        %v578 = vld [vmem:[#allocation8 + $0xf0] sm:$0xff]
        %v579 = vld [vmem:[#allocation8 + $0xf8] sm:$0xff]
        %v580 = vld [vmem:[#allocation8 + $0x100] sm:$0xff]
        %v581 = vld [vmem:[#allocation8 + $0x108] sm:$0xff]
        %v582 = vld [vmem:[#allocation8 + $0x110] sm:$0xff]
        %v583 = vld [vmem:[#allocation8 + $0x118] sm:$0xff]
        %v584 = vld [vmem:[#allocation8 + $0x120] sm:$0xff]
        %v585 = vld [vmem:[#allocation8 + $0x128] sm:$0xff]
        %v586 = vld [vmem:[#allocation8 + $0x130] sm:$0xff]
        %v587 = vld [vmem:[#allocation8 + $0x138] sm:$0xff]
        %v588 = vld [vmem:[#allocation8 + $0x140] sm:$0xff]
        %v589 = vld [vmem:[#allocation8 + $0x148] sm:$0xff]
        %v590 = vld [vmem:[#allocation8 + $0x150] sm:$0xff]
        %v591 = vld [vmem:[#allocation8 + $0x158] sm:$0xff]
        %v592 = vld [vmem:[#allocation8 + $0x160] sm:$0xff]
        %v593 = vld [vmem:[#allocation8 + $0x168] sm:$0xff]
        %v594 = vld [vmem:[#allocation8 + $0x170] sm:$0xff]
        %v595 = vld [vmem:[#allocation8 + $0x178] sm:$0xff]
        %v596 = vld [vmem:[#allocation8 + $0x180] sm:$0xff]
        %v597 = vld [vmem:[#allocation8 + $0x188] sm:$0xff]
        %v598 = vld [vmem:[#allocation8 + $0x190] sm:$0xff]
        %v599 = vld [vmem:[#allocation8 + $0x198] sm:$0xff]
        %v600 = vld [vmem:[#allocation8 + $0x1a0] sm:$0xff]
        %v601 = vld [vmem:[#allocation8 + $0x1a8] sm:$0xff]
        %v602 = vld [vmem:[#allocation8 + $0x1b0] sm:$0xff]
        %v603 = vld [vmem:[#allocation8 + $0x1b8] sm:$0xff]
        %v604 = vld [vmem:[#allocation8 + $0x1c0] sm:$0xff]
        %v605 = vld [vmem:[#allocation8 + $0x1c8] sm:$0xff]
        %v606 = vld [vmem:[#allocation8 + $0x1d0] sm:$0xff]
        %v607 = vld [vmem:[#allocation8 + $0x1d8] sm:$0xff]
        %v608 = vld [vmem:[#allocation8 + $0x1e0] sm:$0xff]
        %v609 = vld [vmem:[#allocation8 + $0x1e8] sm:$0xff]
        %v610 = vld [vmem:[#allocation8 + $0x1f0] sm:$0xff]
        %v611 = vld [vmem:[#allocation8 + $0x1f8] sm:$0xff]
        %v612 = vld [vmem:[#allocation8 + $0x200] sm:$0xff]
        %v613 = vld [vmem:[#allocation8 + $0x208] sm:$0xff]
        %v614 = vld [vmem:[#allocation8 + $0x210] sm:$0xff]
        %v615 = vld [vmem:[#allocation8 + $0x218] sm:$0xff]
        %v616 = vld [vmem:[#allocation8 + $0x220] sm:$0xff]
        %v617 = vld [vmem:[#allocation8 + $0x228] sm:$0xff]
        %v618 = vld [vmem:[#allocation8 + $0x230] sm:$0xff]
        %v619 = vld [vmem:[#allocation8 + $0x238] sm:$0xff]
        %v620 = vld [vmem:[#allocation8 + $0x240] sm:$0xff]
        %v621 = vld [vmem:[#allocation8 + $0x248] sm:$0xff]
        %v622 = vld [vmem:[#allocation8 + $0x250] sm:$0xff]
        %v623 = vld [vmem:[#allocation8 + $0x258] sm:$0xff]
        %v624 = vld [vmem:[#allocation8 + $0x260] sm:$0xff]
        %v625 = vld [vmem:[#allocation8 + $0x268] sm:$0xff]
        %v626 = vld [vmem:[#allocation8 + $0x270] sm:$0xff]
        %v627 = vld [vmem:[#allocation8 + $0x278] sm:$0xff]
        %v628 = vld [vmem:[#allocation8 + $0x280] sm:$0xff]
        %v629 = vld [vmem:[#allocation8 + $0x288] sm:$0xff]
        %v630 = vld [vmem:[#allocation8 + $0x290] sm:$0xff]
        %v631 = vld [vmem:[#allocation8 + $0x298] sm:$0xff]
        %v632 = vld [vmem:[#allocation8 + $0x2a0] sm:$0xff]
        %v633 = vld [vmem:[#allocation8 + $0x2a8] sm:$0xff]
        %v634 = vld [vmem:[#allocation8 + $0x2b0] sm:$0xff]
        %v635 = vld [vmem:[#allocation8 + $0x2b8] sm:$0xff]
        %v636 = vld [vmem:[#allocation8 + $0x2c0] sm:$0xff]
        %v637 = vld [vmem:[#allocation8 + $0x2c8] sm:$0xff]
        %v638 = vld [vmem:[#allocation8 + $0x2d0] sm:$0xff]
        %v639 = vld [vmem:[#allocation8 + $0x2d8] sm:$0xff]
        %v640 = vld [vmem:[#allocation8 + $0x2e0] sm:$0xff]
        %v641 = vld [vmem:[#allocation8 + $0x2e8] sm:$0xff]
        %v642 = vld [vmem:[#allocation8 + $0x2f0] sm:$0xff]
        %v643 = vld [vmem:[#allocation8 + $0x2f8] sm:$0xff]
        %v740 = vunpack.c.l.b16 %v548
        %v741 = vunpack.c.h.b16 %v548
        %v742 = vunpack.c.l.b16 %v549
        %v743 = vunpack.c.h.b16 %v549
        %v744 = vunpack.c.l.b16 %v550
        %v745 = vunpack.c.h.b16 %v550
        %v746 = vunpack.c.l.b16 %v551
        %v747 = vunpack.c.h.b16 %v551
        %v748 = vunpack.c.l.b16 %v552
        %v749 = vunpack.c.h.b16 %v552
        %v750 = vunpack.c.l.b16 %v553
        %v751 = vunpack.c.h.b16 %v553
        %v752 = vunpack.c.l.b16 %v554
        %v753 = vunpack.c.h.b16 %v554
        %v754 = vunpack.c.l.b16 %v555
        %v755 = vunpack.c.h.b16 %v555
        %v756 = vunpack.c.l.b16 %v556
        %v757 = vunpack.c.h.b16 %v556
        %v758 = vunpack.c.l.b16 %v557
        %v759 = vunpack.c.h.b16 %v557
        %v760 = vunpack.c.l.b16 %v558
        %v761 = vunpack.c.h.b16 %v558
        %v762 = vunpack.c.l.b16 %v559
        %v763 = vunpack.c.h.b16 %v559
        %v764 = vunpack.c.l.b16 %v560
        %v765 = vunpack.c.h.b16 %v560
        %v766 = vunpack.c.l.b16 %v561
        %v767 = vunpack.c.h.b16 %v561
        %v768 = vunpack.c.l.b16 %v562
        %v769 = vunpack.c.h.b16 %v562
        %v770 = vunpack.c.l.b16 %v563
        %v771 = vunpack.c.h.b16 %v563
        %v772 = vunpack.c.l.b16 %v564
        %v773 = vunpack.c.h.b16 %v564
        %v774 = vunpack.c.l.b16 %v565
        %v775 = vunpack.c.h.b16 %v565
        %v776 = vunpack.c.l.b16 %v566
        %v777 = vunpack.c.h.b16 %v566
        %v778 = vunpack.c.l.b16 %v567
        %v779 = vunpack.c.h.b16 %v567
        %v780 = vunpack.c.l.b16 %v568
        %v781 = vunpack.c.h.b16 %v568
        %v782 = vunpack.c.l.b16 %v569
        %v783 = vunpack.c.h.b16 %v569
        %v784 = vunpack.c.l.b16 %v570
        %v785 = vunpack.c.h.b16 %v570
        %v786 = vunpack.c.l.b16 %v571
        %v787 = vunpack.c.h.b16 %v571
        %v788 = vunpack.c.l.b16 %v572
        %v789 = vunpack.c.h.b16 %v572
        %v790 = vunpack.c.l.b16 %v573
        %v791 = vunpack.c.h.b16 %v573
        %v792 = vunpack.c.l.b16 %v574
        %v793 = vunpack.c.h.b16 %v574
        %v794 = vunpack.c.l.b16 %v575
        %v795 = vunpack.c.h.b16 %v575
        %v796 = vunpack.c.l.b16 %v576
        %v797 = vunpack.c.h.b16 %v576
        %v798 = vunpack.c.l.b16 %v577
        %v799 = vunpack.c.h.b16 %v577
        %v800 = vunpack.c.l.b16 %v578
        %v801 = vunpack.c.h.b16 %v578
        %v802 = vunpack.c.l.b16 %v579
        %v803 = vunpack.c.h.b16 %v579
        %v804 = vunpack.c.l.b16 %v580
        %v805 = vunpack.c.h.b16 %v580
        %v806 = vunpack.c.l.b16 %v581
        %v807 = vunpack.c.h.b16 %v581
        %v808 = vunpack.c.l.b16 %v582
        %v809 = vunpack.c.h.b16 %v582
        %v810 = vunpack.c.l.b16 %v583
        %v811 = vunpack.c.h.b16 %v583
        %v812 = vunpack.c.l.b16 %v584
        %v813 = vunpack.c.h.b16 %v584
        %v814 = vunpack.c.l.b16 %v585
        %v815 = vunpack.c.h.b16 %v585
        %v816 = vunpack.c.l.b16 %v586
        %v817 = vunpack.c.h.b16 %v586
        %v818 = vunpack.c.l.b16 %v587
        %v819 = vunpack.c.h.b16 %v587
        %v820 = vunpack.c.l.b16 %v588
        %v821 = vunpack.c.h.b16 %v588
        %v822 = vunpack.c.l.b16 %v589
        %v823 = vunpack.c.h.b16 %v589
        %v824 = vunpack.c.l.b16 %v590
        %v825 = vunpack.c.h.b16 %v590
        %v826 = vunpack.c.l.b16 %v591
        %v827 = vunpack.c.h.b16 %v591
        %v828 = vunpack.c.l.b16 %v592
        %v829 = vunpack.c.h.b16 %v592
        %v830 = vunpack.c.l.b16 %v593
        %v831 = vunpack.c.h.b16 %v593
        %v832 = vunpack.c.l.b16 %v594
        %v833 = vunpack.c.h.b16 %v594
        %v834 = vunpack.c.l.b16 %v595
        %v835 = vunpack.c.h.b16 %v595
        %v836 = vunpack.c.l.b16 %v596
        %v837 = vunpack.c.h.b16 %v596
        %v838 = vunpack.c.l.b16 %v597
        %v839 = vunpack.c.h.b16 %v597
        %v840 = vunpack.c.l.b16 %v598
        %v841 = vunpack.c.h.b16 %v598
        %v842 = vunpack.c.l.b16 %v599
        %v843 = vunpack.c.h.b16 %v599
        %v844 = vunpack.c.l.b16 %v600
        %v845 = vunpack.c.h.b16 %v600
        %v846 = vunpack.c.l.b16 %v601
        %v847 = vunpack.c.h.b16 %v601
        %v848 = vunpack.c.l.b16 %v602
        %v849 = vunpack.c.h.b16 %v602
        %v850 = vunpack.c.l.b16 %v603
        %v851 = vunpack.c.h.b16 %v603
        %v852 = vunpack.c.l.b16 %v604
        %v853 = vunpack.c.h.b16 %v604
        %v854 = vunpack.c.l.b16 %v605
        %v855 = vunpack.c.h.b16 %v605
        %v856 = vunpack.c.l.b16 %v606
        %v857 = vunpack.c.h.b16 %v606
        %v858 = vunpack.c.l.b16 %v607
        %v859 = vunpack.c.h.b16 %v607
        %v860 = vunpack.c.l.b16 %v608
        %v861 = vunpack.c.h.b16 %v608
        %v862 = vunpack.c.l.b16 %v609
        %v863 = vunpack.c.h.b16 %v609
        %v864 = vunpack.c.l.b16 %v610
        %v865 = vunpack.c.h.b16 %v610
        %v866 = vunpack.c.l.b16 %v611
        %v867 = vunpack.c.h.b16 %v611
        %v868 = vunpack.c.l.b16 %v612
        %v869 = vunpack.c.h.b16 %v612
        %v870 = vunpack.c.l.b16 %v613
        %v871 = vunpack.c.h.b16 %v613
        %v872 = vunpack.c.l.b16 %v614
        %v873 = vunpack.c.h.b16 %v614
        %v874 = vunpack.c.l.b16 %v615
        %v875 = vunpack.c.h.b16 %v615
        %v876 = vunpack.c.l.b16 %v616
        %v877 = vunpack.c.h.b16 %v616
        %v878 = vunpack.c.l.b16 %v617
        %v879 = vunpack.c.h.b16 %v617
        %v880 = vunpack.c.l.b16 %v618
        %v881 = vunpack.c.h.b16 %v618
        %v882 = vunpack.c.l.b16 %v619
        %v883 = vunpack.c.h.b16 %v619
        %v884 = vunpack.c.l.b16 %v620
        %v885 = vunpack.c.h.b16 %v620
        %v886 = vunpack.c.l.b16 %v621
        %v887 = vunpack.c.h.b16 %v621
        %v888 = vunpack.c.l.b16 %v622
        %v889 = vunpack.c.h.b16 %v622
        %v890 = vunpack.c.l.b16 %v623
        %v891 = vunpack.c.h.b16 %v623
        %v892 = vunpack.c.l.b16 %v624
        %v893 = vunpack.c.h.b16 %v624
        %v894 = vunpack.c.l.b16 %v625
        %v895 = vunpack.c.h.b16 %v625
        %v896 = vunpack.c.l.b16 %v626
        %v897 = vunpack.c.h.b16 %v626
        %v898 = vunpack.c.l.b16 %v627
        %v899 = vunpack.c.h.b16 %v627
        %v900 = vunpack.c.l.b16 %v628
        %v901 = vunpack.c.h.b16 %v628
        %v902 = vunpack.c.l.b16 %v629
        %v903 = vunpack.c.h.b16 %v629
        %v904 = vunpack.c.l.b16 %v630
        %v905 = vunpack.c.h.b16 %v630
        %v906 = vunpack.c.l.b16 %v631
        %v907 = vunpack.c.h.b16 %v631
        %v908 = vunpack.c.l.b16 %v632
        %v909 = vunpack.c.h.b16 %v632
        %v910 = vunpack.c.l.b16 %v633
        %v911 = vunpack.c.h.b16 %v633
        %v912 = vunpack.c.l.b16 %v634
        %v913 = vunpack.c.h.b16 %v634
        %v914 = vunpack.c.l.b16 %v635
        %v915 = vunpack.c.h.b16 %v635
        %v916 = vunpack.c.l.b16 %v636
        %v917 = vunpack.c.h.b16 %v636
        %v918 = vunpack.c.l.b16 %v637
        %v919 = vunpack.c.h.b16 %v637
        %v920 = vunpack.c.l.b16 %v638
        %v921 = vunpack.c.h.b16 %v638
        %v922 = vunpack.c.l.b16 %v639
        %v923 = vunpack.c.h.b16 %v639
        %v924 = vunpack.c.l.b16 %v640
        %v925 = vunpack.c.h.b16 %v640
        %v926 = vunpack.c.l.b16 %v641
        %v927 = vunpack.c.h.b16 %v641
        %v928 = vunpack.c.l.b16 %v642
        %v929 = vunpack.c.h.b16 %v642
        %v930 = vunpack.c.l.b16 %v643
        %v931 = vunpack.c.h.b16 %v643
        %v932 = vpack.c.b16 %v746, %v740
        %v933 = vpack.c.b16 %v747, %v741
        %v934 = vpack.c.b16 %v748, %v742
        %v935 = vpack.c.b16 %v749, %v743
        %v936 = vpack.c.b16 %v750, %v744
        %v937 = vpack.c.b16 %v751, %v745
        %v938 = vpack.c.b16 %v758, %v752
        %v939 = vpack.c.b16 %v759, %v753
        %v940 = vpack.c.b16 %v760, %v754
        %v941 = vpack.c.b16 %v761, %v755
        %v942 = vpack.c.b16 %v762, %v756
        %v943 = vpack.c.b16 %v763, %v757
        %v944 = vpack.c.b16 %v770, %v764
        %v945 = vpack.c.b16 %v771, %v765
        %v946 = vpack.c.b16 %v772, %v766
        %v947 = vpack.c.b16 %v773, %v767
        %v948 = vpack.c.b16 %v774, %v768
        %v949 = vpack.c.b16 %v775, %v769
        %v950 = vpack.c.b16 %v782, %v776
        %v951 = vpack.c.b16 %v783, %v777
        %v952 = vpack.c.b16 %v784, %v778
        %v953 = vpack.c.b16 %v785, %v779
        %v954 = vpack.c.b16 %v786, %v780
        %v955 = vpack.c.b16 %v787, %v781
        %v956 = vpack.c.b16 %v794, %v788
        %v957 = vpack.c.b16 %v795, %v789
        %v958 = vpack.c.b16 %v796, %v790
        %v959 = vpack.c.b16 %v797, %v791
        %v960 = vpack.c.b16 %v798, %v792
        %v961 = vpack.c.b16 %v799, %v793
        %v962 = vpack.c.b16 %v806, %v800
        %v963 = vpack.c.b16 %v807, %v801
        %v964 = vpack.c.b16 %v808, %v802
        %v965 = vpack.c.b16 %v809, %v803
        %v966 = vpack.c.b16 %v810, %v804
        %v967 = vpack.c.b16 %v811, %v805
        %v968 = vpack.c.b16 %v818, %v812
        %v969 = vpack.c.b16 %v819, %v813
        %v970 = vpack.c.b16 %v820, %v814
        %v971 = vpack.c.b16 %v821, %v815
        %v972 = vpack.c.b16 %v822, %v816
        %v973 = vpack.c.b16 %v823, %v817
        %v974 = vpack.c.b16 %v830, %v824
        %v975 = vpack.c.b16 %v831, %v825
        %v976 = vpack.c.b16 %v832, %v826
        %v977 = vpack.c.b16 %v833, %v827
        %v978 = vpack.c.b16 %v834, %v828
        %v979 = vpack.c.b16 %v835, %v829
        %v980 = vpack.c.b16 %v842, %v836
        %v981 = vpack.c.b16 %v843, %v837
        %v982 = vpack.c.b16 %v844, %v838
        %v983 = vpack.c.b16 %v845, %v839
        %v984 = vpack.c.b16 %v846, %v840
        %v985 = vpack.c.b16 %v847, %v841
        %v986 = vpack.c.b16 %v854, %v848
        %v987 = vpack.c.b16 %v855, %v849
        %v988 = vpack.c.b16 %v856, %v850
        %v989 = vpack.c.b16 %v857, %v851
        %v990 = vpack.c.b16 %v858, %v852
        %v991 = vpack.c.b16 %v859, %v853
        %v992 = vpack.c.b16 %v866, %v860
        %v993 = vpack.c.b16 %v867, %v861
        %v994 = vpack.c.b16 %v868, %v862
        %v995 = vpack.c.b16 %v869, %v863
        %v996 = vpack.c.b16 %v870, %v864
        %v997 = vpack.c.b16 %v871, %v865
        %v998 = vpack.c.b16 %v878, %v872
        %v999 = vpack.c.b16 %v879, %v873
        %v1000 = vpack.c.b16 %v880, %v874
        %v1001 = vpack.c.b16 %v881, %v875
        %v1002 = vpack.c.b16 %v882, %v876
        %v1003 = vpack.c.b16 %v883, %v877
        %v1004 = vpack.c.b16 %v890, %v884
        %v1005 = vpack.c.b16 %v891, %v885
        %v1006 = vpack.c.b16 %v892, %v886
        %v1007 = vpack.c.b16 %v893, %v887
        %v1008 = vpack.c.b16 %v894, %v888
        %v1009 = vpack.c.b16 %v895, %v889
        %v1010 = vpack.c.b16 %v902, %v896
        %v1011 = vpack.c.b16 %v903, %v897
        %v1012 = vpack.c.b16 %v904, %v898
        %v1013 = vpack.c.b16 %v905, %v899
        %v1014 = vpack.c.b16 %v906, %v900
        %v1015 = vpack.c.b16 %v907, %v901
        %v1016 = vpack.c.b16 %v914, %v908
        %v1017 = vpack.c.b16 %v915, %v909
        %v1018 = vpack.c.b16 %v916, %v910
        %v1019 = vpack.c.b16 %v917, %v911
        %v1020 = vpack.c.b16 %v918, %v912
        %v1021 = vpack.c.b16 %v919, %v913
        %v1022 = vpack.c.b16 %v926, %v920
        %v1023 = vpack.c.b16 %v927, %v921
        %v1024 = vpack.c.b16 %v928, %v922
        %v1025 = vpack.c.b16 %v929, %v923
        %v1026 = vpack.c.b16 %v930, %v924
        %v1027 = vpack.c.b16 %v931, %v925
        %1124 = vmatprep.subr.bf16.mxu0 %v933
        %1125 = vmatpush1.bf16.msra.mxu0 %v932
        %1126 = vmatprep.subr.bf16.mxu0 %v939
        %1127 = vmatpush1.bf16.msra.mxu0 %v938
        %1128 = vmatprep.subr.bf16.mxu0 %v945
        %1129 = vmatpush1.bf16.msra.mxu0 %v944
        %1130 = vmatprep.subr.bf16.mxu0 %v951
        %1131 = vmatpush1.bf16.msra.mxu0 %v950
        %1132 = vmatprep.subr.bf16.mxu0 %v957
        %1133 = vmatpush1.bf16.msra.mxu0 %v956
        %1134 = vmatprep.subr.bf16.mxu0 %v963
        %1135 = vmatpush1.bf16.msra.mxu0 %v962
        %1136 = vmatprep.subr.bf16.mxu0 %v969
        %1137 = vmatpush1.bf16.msra.mxu0 %v968
        %1138 = vmatprep.subr.bf16.mxu0 %v975
        %1139 = vmatpush1.bf16.msra.mxu0 %v974
        %1140 = vmatprep.subr.bf16.mxu0 %v981
        %1141 = vmatpush1.bf16.msra.mxu0 %v980
        %1142 = vmatprep.subr.bf16.mxu0 %v987
        %1143 = vmatpush1.bf16.msra.mxu0 %v986
        %1144 = vmatprep.subr.bf16.mxu0 %v993
        %1145 = vmatpush1.bf16.msra.mxu0 %v992
        %1146 = vmatprep.subr.bf16.mxu0 %v999
        %1147 = vmatpush1.bf16.msra.mxu0 %v998
        %1148 = vmatprep.subr.bf16.mxu0 %v1005
        %1149 = vmatpush1.bf16.msra.mxu0 %v1004
        %1150 = vmatprep.subr.bf16.mxu0 %v1011
        %1151 = vmatpush1.bf16.msra.mxu0 %v1010
        %1152 = vmatprep.subr.bf16.mxu0 %v1017
        %1153 = vmatpush1.bf16.msra.mxu0 %v1016
        %1154 = vmatprep.subr.bf16.mxu0 %v1023
        %1155 = vmatpush1.bf16.msra.mxu0 %v1022
        %1156 = vmatprep.mubr.bf16.mxu0 %v533
        %1157 = vmatmul.mubr.bf16.gmra.mrb[0].mxu0 %v532
        %v1158 = vpop.f32.mrb[0].mxu0
        %v1159 = vadd.f32 0.0, %v1158
        %v1160 = vpop.f32.mrb[0].mxu0
        %v1161 = vadd.f32 0.0, %v1160
        %v1162 = vpop.f32.mrb[0].mxu0
        %v1163 = vadd.f32 0.0, %v1162
        %v1164 = vpop.f32.mrb[0].mxu0
        %v1165 = vadd.f32 0.0, %v1164
        %1166 = vmatprep.mubr.bf16.mxu0 %v535
        %1167 = vmatmul.mubr.bf16.gmra.mrb[0].mxu0 %v534
        %v1168 = vpop.f32.mrb[0].mxu0
        %v1169 = vadd.f32 0.0, %v1168
        %v1170 = vpop.f32.mrb[0].mxu0
        %v1171 = vadd.f32 0.0, %v1170
        %v1172 = vpop.f32.mrb[0].mxu0
        %v1173 = vadd.f32 0.0, %v1172
        %v1174 = vpop.f32.mrb[0].mxu0
        %v1175 = vadd.f32 0.0, %v1174
        %1176 = vmatprep.mubr.bf16.mxu0 %v537
        %1177 = vmatmul.mubr.bf16.gmra.mrb[0].mxu0 %v536
        %v1178 = vpop.f32.mrb[0].mxu0
        %v1179 = vadd.f32 0.0, %v1178
        %v1180 = vpop.f32.mrb[0].mxu0
        %v1181 = vadd.f32 0.0, %v1180
        %v1182 = vpop.f32.mrb[0].mxu0
        %v1183 = vadd.f32 0.0, %v1182
        %v1184 = vpop.f32.mrb[0].mxu0
        %v1185 = vadd.f32 0.0, %v1184
        %1186 = vmatprep.mubr.bf16.mxu0 %v539
        %1187 = vmatmul.mubr.bf16.gmra.mrb[0].mxu0 %v538
        %v1188 = vpop.f32.mrb[0].mxu0
        %v1189 = vadd.f32 0.0, %v1188
        %v1190 = vpop.f32.mrb[0].mxu0
        %v1191 = vadd.f32 0.0, %v1190
        %v1192 = vpop.f32.mrb[0].mxu0
        %v1193 = vadd.f32 0.0, %v1192
        %v1194 = vpop.f32.mrb[0].mxu0
        %v1195 = vadd.f32 0.0, %v1194
        %1196 = vmatprep.mubr.bf16.mxu0 %v541
        %1197 = vmatmul.mubr.bf16.gmra.mrb[0].mxu0 %v540
        %v1198 = vpop.f32.mrb[0].mxu0
        %v1199 = vadd.f32 0.0, %v1198
        %v1200 = vpop.f32.mrb[0].mxu0
        %v1201 = vadd.f32 0.0, %v1200
        %v1202 = vpop.f32.mrb[0].mxu0
        %v1203 = vadd.f32 0.0, %v1202
        %v1204 = vpop.f32.mrb[0].mxu0
        %v1205 = vadd.f32 0.0, %v1204
        %1206 = vmatprep.mubr.bf16.mxu0 %v543
        %1207 = vmatmul.mubr.bf16.gmra.mrb[0].mxu0 %v542
        %v1208 = vpop.f32.mrb[0].mxu0
        %v1209 = vadd.f32 0.0, %v1208
        %v1210 = vpop.f32.mrb[0].mxu0
        %v1211 = vadd.f32 0.0, %v1210
        %v1212 = vpop.f32.mrb[0].mxu0
        %v1213 = vadd.f32 0.0, %v1212
        %v1214 = vpop.f32.mrb[0].mxu0
        %v1215 = vadd.f32 0.0, %v1214
        %1216 = vmatprep.mubr.bf16.mxu0 %v545
        %1217 = vmatmul.mubr.bf16.gmra.mrb[0].mxu0 %v544
        %v1218 = vpop.f32.mrb[0].mxu0
        %v1219 = vadd.f32 0.0, %v1218
        %v1220 = vpop.f32.mrb[0].mxu0
        %v1221 = vadd.f32 0.0, %v1220
        %v1222 = vpop.f32.mrb[0].mxu0
        %v1223 = vadd.f32 0.0, %v1222
        %v1224 = vpop.f32.mrb[0].mxu0
        %v1225 = vadd.f32 0.0, %v1224
        %1226 = vmatprep.mubr.bf16.mxu0 %v547
        %1227 = vmatmul.mubr.bf16.gmra.mrb[0].mxu0 %v546
        %v1228 = vpop.f32.mrb[0].mxu0
        %v1229 = vadd.f32 0.0, %v1228
        %v1230 = vpop.f32.mrb[0].mxu0
        %v1231 = vadd.f32 0.0, %v1230
        %v1232 = vpop.f32.mrb[0].mxu0
        %v1233 = vadd.f32 0.0, %v1232
        %v1234 = vpop.f32.mrb[0].mxu0
        %v1235 = vadd.f32 0.0, %v1234
        %1236 = vdwg.mxu0
        %1237 = vmatprep.subr.bf16.mxu0 %v935
        %1238 = vmatpush1.bf16.msra.mxu0 %v934
        %1239 = vmatprep.subr.bf16.mxu0 %v941
        %1240 = vmatpush1.bf16.msra.mxu0 %v940
        %1241 = vmatprep.subr.bf16.mxu0 %v947
        %1242 = vmatpush1.bf16.msra.mxu0 %v946
        %1243 = vmatprep.subr.bf16.mxu0 %v953
        %1244 = vmatpush1.bf16.msra.mxu0 %v952
        %1245 = vmatprep.subr.bf16.mxu0 %v959
        %1246 = vmatpush1.bf16.msra.mxu0 %v958
        %1247 = vmatprep.subr.bf16.mxu0 %v965
        %1248 = vmatpush1.bf16.msra.mxu0 %v964
        %1249 = vmatprep.subr.bf16.mxu0 %v971
        %1250 = vmatpush1.bf16.msra.mxu0 %v970
        %1251 = vmatprep.subr.bf16.mxu0 %v977
        %1252 = vmatpush1.bf16.msra.mxu0 %v976
        %1253 = vmatprep.subr.bf16.mxu0 %v983
        %1254 = vmatpush1.bf16.msra.mxu0 %v982
        %1255 = vmatprep.subr.bf16.mxu0 %v989
        %1256 = vmatpush1.bf16.msra.mxu0 %v988
        %1257 = vmatprep.subr.bf16.mxu0 %v995
        %1258 = vmatpush1.bf16.msra.mxu0 %v994
        %1259 = vmatprep.subr.bf16.mxu0 %v1001
        %1260 = vmatpush1.bf16.msra.mxu0 %v1000
        %1261 = vmatprep.subr.bf16.mxu0 %v1007
        %1262 = vmatpush1.bf16.msra.mxu0 %v1006
        %1263 = vmatprep.subr.bf16.mxu0 %v1013
        %1264 = vmatpush1.bf16.msra.mxu0 %v1012
        %1265 = vmatprep.subr.bf16.mxu0 %v1019
        %1266 = vmatpush1.bf16.msra.mxu0 %v1018
        %1267 = vmatprep.subr.bf16.mxu0 %v1025
        %1268 = vmatpush1.bf16.msra.mxu0 %v1024
        %1269 = vmatprep.mubr.bf16.mxu0 %v533
        %1270 = vmatmul.mubr.bf16.gmra.mrb[0].mxu0 %v532
        %v1271 = vpop.f32.mrb[0].mxu0
        %v1272 = vadd.f32 0.0, %v1271
        %v1273 = vpop.f32.mrb[0].mxu0
        %v1274 = vadd.f32 0.0, %v1273
        %v1275 = vpop.f32.mrb[0].mxu0
        %v1276 = vadd.f32 0.0, %v1275
        %v1277 = vpop.f32.mrb[0].mxu0
        %v1278 = vadd.f32 0.0, %v1277
        %1279 = vmatprep.mubr.bf16.mxu0 %v535
        %1280 = vmatmul.mubr.bf16.gmra.mrb[0].mxu0 %v534
        %v1281 = vpop.f32.mrb[0].mxu0
        %v1282 = vadd.f32 0.0, %v1281
        %v1283 = vpop.f32.mrb[0].mxu0
        %v1284 = vadd.f32 0.0, %v1283
        %v1285 = vpop.f32.mrb[0].mxu0
        %v1286 = vadd.f32 0.0, %v1285
        %v1287 = vpop.f32.mrb[0].mxu0
        %v1288 = vadd.f32 0.0, %v1287
        %1289 = vmatprep.mubr.bf16.mxu0 %v537
        %1290 = vmatmul.mubr.bf16.gmra.mrb[0].mxu0 %v536
        %v1291 = vpop.f32.mrb[0].mxu0
        %v1292 = vadd.f32 0.0, %v1291
        %v1293 = vpop.f32.mrb[0].mxu0
        %v1294 = vadd.f32 0.0, %v1293
        %v1295 = vpop.f32.mrb[0].mxu0
        %v1296 = vadd.f32 0.0, %v1295
        %v1297 = vpop.f32.mrb[0].mxu0
        %v1298 = vadd.f32 0.0, %v1297
        %1299 = vmatprep.mubr.bf16.mxu0 %v539
        %1300 = vmatmul.mubr.bf16.gmra.mrb[0].mxu0 %v538
        %v1301 = vpop.f32.mrb[0].mxu0
        %v1302 = vadd.f32 0.0, %v1301
        %v1303 = vpop.f32.mrb[0].mxu0
        %v1304 = vadd.f32 0.0, %v1303
        %v1305 = vpop.f32.mrb[0].mxu0
        %v1306 = vadd.f32 0.0, %v1305
        %v1307 = vpop.f32.mrb[0].mxu0
        %v1308 = vadd.f32 0.0, %v1307
        %1309 = vmatprep.mubr.bf16.mxu0 %v541
        %1310 = vmatmul.mubr.bf16.gmra.mrb[0].mxu0 %v540
        %v1311 = vpop.f32.mrb[0].mxu0
        %v1312 = vadd.f32 0.0, %v1311
        %v1313 = vpop.f32.mrb[0].mxu0
        %v1314 = vadd.f32 0.0, %v1313
        %v1315 = vpop.f32.mrb[0].mxu0
        %v1316 = vadd.f32 0.0, %v1315
        %v1317 = vpop.f32.mrb[0].mxu0
        %v1318 = vadd.f32 0.0, %v1317
        %1319 = vmatprep.mubr.bf16.mxu0 %v543
        %1320 = vmatmul.mubr.bf16.gmra.mrb[0].mxu0 %v542
        %v1321 = vpop.f32.mrb[0].mxu0
        %v1322 = vadd.f32 0.0, %v1321
        %v1323 = vpop.f32.mrb[0].mxu0
        %v1324 = vadd.f32 0.0, %v1323
        %v1325 = vpop.f32.mrb[0].mxu0
        %v1326 = vadd.f32 0.0, %v1325
        %v1327 = vpop.f32.mrb[0].mxu0
        %v1328 = vadd.f32 0.0, %v1327
        %1329 = vmatprep.mubr.bf16.mxu0 %v545
        %1330 = vmatmul.mubr.bf16.gmra.mrb[0].mxu0 %v544
        %v1331 = vpop.f32.mrb[0].mxu0
        %v1332 = vadd.f32 0.0, %v1331
        %v1333 = vpop.f32.mrb[0].mxu0
        %v1334 = vadd.f32 0.0, %v1333
        %v1335 = vpop.f32.mrb[0].mxu0
        %v1336 = vadd.f32 0.0, %v1335
        %v1337 = vpop.f32.mrb[0].mxu0
        %v1338 = vadd.f32 0.0, %v1337
        %1339 = vmatprep.mubr.bf16.mxu0 %v547
        %1340 = vmatmul.mubr.bf16.gmra.mrb[0].mxu0 %v546
        %v1341 = vpop.f32.mrb[0].mxu0
        %v1342 = vadd.f32 0.0, %v1341
        %v1343 = vpop.f32.mrb[0].mxu0
        %v1344 = vadd.f32 0.0, %v1343
        %v1345 = vpop.f32.mrb[0].mxu0
        %v1346 = vadd.f32 0.0, %v1345
        %v1347 = vpop.f32.mrb[0].mxu0
        %v1348 = vadd.f32 0.0, %v1347
        %1349 = vdwg.mxu0
        %1350 = vmatprep.subr.bf16.mxu0 %v937
        %1351 = vmatpush1.bf16.msra.mxu0 %v936
        %1352 = vmatprep.subr.bf16.mxu0 %v943
        %1353 = vmatpush1.bf16.msra.mxu0 %v942
        %1354 = vmatprep.subr.bf16.mxu0 %v949
        %1355 = vmatpush1.bf16.msra.mxu0 %v948
        %1356 = vmatprep.subr.bf16.mxu0 %v955
        %1357 = vmatpush1.bf16.msra.mxu0 %v954
        %1358 = vmatprep.subr.bf16.mxu0 %v961
        %1359 = vmatpush1.bf16.msra.mxu0 %v960
        %1360 = vmatprep.subr.bf16.mxu0 %v967
        %1361 = vmatpush1.bf16.msra.mxu0 %v966
        %1362 = vmatprep.subr.bf16.mxu0 %v973
        %1363 = vmatpush1.bf16.msra.mxu0 %v972
        %1364 = vmatprep.subr.bf16.mxu0 %v979
        %1365 = vmatpush1.bf16.msra.mxu0 %v978
        %1366 = vmatprep.subr.bf16.mxu0 %v985
        %1367 = vmatpush1.bf16.msra.mxu0 %v984
        %1368 = vmatprep.subr.bf16.mxu0 %v991
        %1369 = vmatpush1.bf16.msra.mxu0 %v990
        %1370 = vmatprep.subr.bf16.mxu0 %v997
        %1371 = vmatpush1.bf16.msra.mxu0 %v996
        %1372 = vmatprep.subr.bf16.mxu0 %v1003
        %1373 = vmatpush1.bf16.msra.mxu0 %v1002
        %1374 = vmatprep.subr.bf16.mxu0 %v1009
        %1375 = vmatpush1.bf16.msra.mxu0 %v1008
        %1376 = vmatprep.subr.bf16.mxu0 %v1015
        %1377 = vmatpush1.bf16.msra.mxu0 %v1014
        %1378 = vmatprep.subr.bf16.mxu0 %v1021
        %1379 = vmatpush1.bf16.msra.mxu0 %v1020
        %1380 = vmatprep.subr.bf16.mxu0 %v1027
        %1381 = vmatpush1.bf16.msra.mxu0 %v1026
        %1382 = vmatprep.mubr.bf16.mxu0 %v533
        %1383 = vmatmul.mubr.bf16.gmra.mrb[0].mxu0 %v532
        %v1384 = vpop.f32.mrb[0].mxu0
        %v1385 = vadd.f32 0.0, %v1384
        %v1386 = vpop.f32.mrb[0].mxu0
        %v1387 = vadd.f32 0.0, %v1386
        %v1388 = vpop.f32.mrb[0].mxu0
        %v1389 = vadd.f32 0.0, %v1388
        %v1390 = vpop.f32.mrb[0].mxu0
        %v1391 = vadd.f32 0.0, %v1390
        %1392 = vmatprep.mubr.bf16.mxu0 %v535
        %1393 = vmatmul.mubr.bf16.gmra.mrb[0].mxu0 %v534
        %v1394 = vpop.f32.mrb[0].mxu0
        %v1395 = vadd.f32 0.0, %v1394
        %v1396 = vpop.f32.mrb[0].mxu0
        %v1397 = vadd.f32 0.0, %v1396
        %v1398 = vpop.f32.mrb[0].mxu0
        %v1399 = vadd.f32 0.0, %v1398
        %v1400 = vpop.f32.mrb[0].mxu0
        %v1401 = vadd.f32 0.0, %v1400
        %1402 = vmatprep.mubr.bf16.mxu0 %v537
        %1403 = vmatmul.mubr.bf16.gmra.mrb[0].mxu0 %v536
        %v1404 = vpop.f32.mrb[0].mxu0
        %v1405 = vadd.f32 0.0, %v1404
        %v1406 = vpop.f32.mrb[0].mxu0
        %v1407 = vadd.f32 0.0, %v1406
        %v1408 = vpop.f32.mrb[0].mxu0
        %v1409 = vadd.f32 0.0, %v1408
        %v1410 = vpop.f32.mrb[0].mxu0
        %v1411 = vadd.f32 0.0, %v1410
        %1412 = vmatprep.mubr.bf16.mxu0 %v539
        %1413 = vmatmul.mubr.bf16.gmra.mrb[0].mxu0 %v538
        %v1414 = vpop.f32.mrb[0].mxu0
        %v1415 = vadd.f32 0.0, %v1414
        %v1416 = vpop.f32.mrb[0].mxu0
        %v1417 = vadd.f32 0.0, %v1416
        %v1418 = vpop.f32.mrb[0].mxu0
        %v1419 = vadd.f32 0.0, %v1418
        %v1420 = vpop.f32.mrb[0].mxu0
        %v1421 = vadd.f32 0.0, %v1420
        %1422 = vmatprep.mubr.bf16.mxu0 %v541
        %1423 = vmatmul.mubr.bf16.gmra.mrb[0].mxu0 %v540
        %v1424 = vpop.f32.mrb[0].mxu0
        %v1425 = vadd.f32 0.0, %v1424
        %v1426 = vpop.f32.mrb[0].mxu0
        %v1427 = vadd.f32 0.0, %v1426
        %v1428 = vpop.f32.mrb[0].mxu0
        %v1429 = vadd.f32 0.0, %v1428
        %v1430 = vpop.f32.mrb[0].mxu0
        %v1431 = vadd.f32 0.0, %v1430
        %1432 = vmatprep.mubr.bf16.mxu0 %v543
        %1433 = vmatmul.mubr.bf16.gmra.mrb[0].mxu0 %v542
        %v1434 = vpop.f32.mrb[0].mxu0
        %v1435 = vadd.f32 0.0, %v1434
        %v1436 = vpop.f32.mrb[0].mxu0
        %v1437 = vadd.f32 0.0, %v1436
        %v1438 = vpop.f32.mrb[0].mxu0
        %v1439 = vadd.f32 0.0, %v1438
        %v1440 = vpop.f32.mrb[0].mxu0
        %v1441 = vadd.f32 0.0, %v1440
        %1442 = vmatprep.mubr.bf16.mxu0 %v545
        %1443 = vmatmul.mubr.bf16.gmra.mrb[0].mxu0 %v544
        %v1444 = vpop.f32.mrb[0].mxu0
        %v1445 = vadd.f32 0.0, %v1444
        %v1446 = vpop.f32.mrb[0].mxu0
        %v1447 = vadd.f32 0.0, %v1446
        %v1448 = vpop.f32.mrb[0].mxu0
        %v1449 = vadd.f32 0.0, %v1448
        %v1450 = vpop.f32.mrb[0].mxu0
        %v1451 = vadd.f32 0.0, %v1450
        %1452 = vmatprep.mubr.bf16.mxu0 %v547
        %1453 = vmatmul.mubr.bf16.gmra.mrb[0].mxu0 %v546
        %v1454 = vpop.f32.mrb[0].mxu0
        %v1455 = vadd.f32 0.0, %v1454
        %v1456 = vpop.f32.mrb[0].mxu0
        %v1457 = vadd.f32 0.0, %v1456
        %v1458 = vpop.f32.mrb[0].mxu0
        %v1459 = vadd.f32 0.0, %v1458
        %v1460 = vpop.f32.mrb[0].mxu0
        %v1461 = vadd.f32 0.0, %v1460
        %1462 = vdwg.mxu0
        %v1463 = vpack.c.bf16 %v1163, %v1159
        %v1464 = vpack.c.bf16 %v1165, %v1161
        %v1465 = vpack.c.bf16 %v1276, %v1272
        %v1466 = vpack.c.bf16 %v1278, %v1274
        %v1467 = vpack.c.bf16 %v1389, %v1385
        %v1468 = vpack.c.bf16 %v1391, %v1387
        %v1469 = vpack.c.bf16 %v1173, %v1169
        %v1470 = vpack.c.bf16 %v1175, %v1171
        %v1471 = vpack.c.bf16 %v1286, %v1282
        %v1472 = vpack.c.bf16 %v1288, %v1284
        %v1473 = vpack.c.bf16 %v1399, %v1395
        %v1474 = vpack.c.bf16 %v1401, %v1397
        %v1475 = vpack.c.bf16 %v1183, %v1179
        %v1476 = vpack.c.bf16 %v1185, %v1181
        %v1477 = vpack.c.bf16 %v1296, %v1292
        %v1478 = vpack.c.bf16 %v1298, %v1294
        %v1479 = vpack.c.bf16 %v1409, %v1405
        %v1480 = vpack.c.bf16 %v1411, %v1407
        %v1481 = vpack.c.bf16 %v1193, %v1189
        %v1482 = vpack.c.bf16 %v1195, %v1191
        %v1483 = vpack.c.bf16 %v1306, %v1302
        %v1484 = vpack.c.bf16 %v1308, %v1304
        %v1485 = vpack.c.bf16 %v1419, %v1415
        %v1486 = vpack.c.bf16 %v1421, %v1417
        %v1487 = vpack.c.bf16 %v1203, %v1199
        %v1488 = vpack.c.bf16 %v1205, %v1201
        %v1489 = vpack.c.bf16 %v1316, %v1312
        %v1490 = vpack.c.bf16 %v1318, %v1314
        %v1491 = vpack.c.bf16 %v1429, %v1425
        %v1492 = vpack.c.bf16 %v1431, %v1427
        %v1493 = vpack.c.bf16 %v1213, %v1209
        %v1494 = vpack.c.bf16 %v1215, %v1211
        %v1495 = vpack.c.bf16 %v1326, %v1322
        %v1496 = vpack.c.bf16 %v1328, %v1324
        %v1497 = vpack.c.bf16 %v1439, %v1435
        %v1498 = vpack.c.bf16 %v1441, %v1437
        %v1499 = vpack.c.bf16 %v1223, %v1219
        %v1500 = vpack.c.bf16 %v1225, %v1221
        %v1501 = vpack.c.bf16 %v1336, %v1332
        %v1502 = vpack.c.bf16 %v1338, %v1334
        %v1503 = vpack.c.bf16 %v1449, %v1445
        %v1504 = vpack.c.bf16 %v1451, %v1447
        %v1505 = vpack.c.bf16 %v1233, %v1229
        %v1506 = vpack.c.bf16 %v1235, %v1231
        %v1507 = vpack.c.bf16 %v1346, %v1342
        %v1508 = vpack.c.bf16 %v1348, %v1344
        %v1509 = vpack.c.bf16 %v1459, %v1455
        %v1510 = vpack.c.bf16 %v1461, %v1457
        %v1559 = vunpack.c.l.b16 %v1463
        %v1560 = vunpack.c.l.b16 %v1464
        %v1561 = vunpack.c.l.b16 %v1465
        %v1562 = vunpack.c.l.b16 %v1466
        %v1563 = vunpack.c.l.b16 %v1467
        %v1564 = vunpack.c.l.b16 %v1468
        %v1565 = vunpack.c.h.b16 %v1463
        %v1566 = vunpack.c.h.b16 %v1464
        %v1567 = vunpack.c.h.b16 %v1465
        %v1568 = vunpack.c.h.b16 %v1466
        %v1569 = vunpack.c.h.b16 %v1467
        %v1570 = vunpack.c.h.b16 %v1468
        %v1571 = vunpack.c.l.b16 %v1469
        %v1572 = vunpack.c.l.b16 %v1470
        %v1573 = vunpack.c.l.b16 %v1471
        %v1574 = vunpack.c.l.b16 %v1472
        %v1575 = vunpack.c.l.b16 %v1473
        %v1576 = vunpack.c.l.b16 %v1474
        %v1577 = vunpack.c.h.b16 %v1469
        %v1578 = vunpack.c.h.b16 %v1470
        %v1579 = vunpack.c.h.b16 %v1471
        %v1580 = vunpack.c.h.b16 %v1472
        %v1581 = vunpack.c.h.b16 %v1473
        %v1582 = vunpack.c.h.b16 %v1474
        %v1583 = vunpack.c.l.b16 %v1475
        %v1584 = vunpack.c.l.b16 %v1476
        %v1585 = vunpack.c.l.b16 %v1477
        %v1586 = vunpack.c.l.b16 %v1478
        %v1587 = vunpack.c.l.b16 %v1479
        %v1588 = vunpack.c.l.b16 %v1480
        %v1589 = vunpack.c.h.b16 %v1475
        %v1590 = vunpack.c.h.b16 %v1476
        %v1591 = vunpack.c.h.b16 %v1477
        %v1592 = vunpack.c.h.b16 %v1478
        %v1593 = vunpack.c.h.b16 %v1479
        %v1594 = vunpack.c.h.b16 %v1480
        %v1595 = vunpack.c.l.b16 %v1481
        %v1596 = vunpack.c.l.b16 %v1482
        %v1597 = vunpack.c.l.b16 %v1483
        %v1598 = vunpack.c.l.b16 %v1484
        %v1599 = vunpack.c.l.b16 %v1485
        %v1600 = vunpack.c.l.b16 %v1486
        %v1601 = vunpack.c.h.b16 %v1481
        %v1602 = vunpack.c.h.b16 %v1482
        %v1603 = vunpack.c.h.b16 %v1483
        %v1604 = vunpack.c.h.b16 %v1484
        %v1605 = vunpack.c.h.b16 %v1485
        %v1606 = vunpack.c.h.b16 %v1486
        %v1607 = vunpack.c.l.b16 %v1487
        %v1608 = vunpack.c.l.b16 %v1488
        %v1609 = vunpack.c.l.b16 %v1489
        %v1610 = vunpack.c.l.b16 %v1490
        %v1611 = vunpack.c.l.b16 %v1491
        %v1612 = vunpack.c.l.b16 %v1492
        %v1613 = vunpack.c.h.b16 %v1487
        %v1614 = vunpack.c.h.b16 %v1488
        %v1615 = vunpack.c.h.b16 %v1489
        %v1616 = vunpack.c.h.b16 %v1490
        %v1617 = vunpack.c.h.b16 %v1491
        %v1618 = vunpack.c.h.b16 %v1492
        %v1619 = vunpack.c.l.b16 %v1493
        %v1620 = vunpack.c.l.b16 %v1494
        %v1621 = vunpack.c.l.b16 %v1495
        %v1622 = vunpack.c.l.b16 %v1496
        %v1623 = vunpack.c.l.b16 %v1497
        %v1624 = vunpack.c.l.b16 %v1498
        %v1625 = vunpack.c.h.b16 %v1493
        %v1626 = vunpack.c.h.b16 %v1494
        %v1627 = vunpack.c.h.b16 %v1495
        %v1628 = vunpack.c.h.b16 %v1496
        %v1629 = vunpack.c.h.b16 %v1497
        %v1630 = vunpack.c.h.b16 %v1498
        %v1631 = vunpack.c.l.b16 %v1499
        %v1632 = vunpack.c.l.b16 %v1500
        %v1633 = vunpack.c.l.b16 %v1501
        %v1634 = vunpack.c.l.b16 %v1502
        %v1635 = vunpack.c.l.b16 %v1503
        %v1636 = vunpack.c.l.b16 %v1504
        %v1637 = vunpack.c.h.b16 %v1499
        %v1638 = vunpack.c.h.b16 %v1500
        %v1639 = vunpack.c.h.b16 %v1501
        %v1640 = vunpack.c.h.b16 %v1502
        %v1641 = vunpack.c.h.b16 %v1503
        %v1642 = vunpack.c.h.b16 %v1504
        %v1643 = vunpack.c.l.b16 %v1505
        %v1644 = vunpack.c.l.b16 %v1506
        %v1645 = vunpack.c.l.b16 %v1507
        %v1646 = vunpack.c.l.b16 %v1508
        %v1647 = vunpack.c.l.b16 %v1509
        %v1648 = vunpack.c.l.b16 %v1510
        %v1649 = vunpack.c.h.b16 %v1505
        %v1650 = vunpack.c.h.b16 %v1506
        %v1651 = vunpack.c.h.b16 %v1507
        %v1652 = vunpack.c.h.b16 %v1508
        %v1653 = vunpack.c.h.b16 %v1509
        %v1654 = vunpack.c.h.b16 %v1510
        %v1655 = vpack.c.b16 %v1560, %v1559
        %v1656 = vpack.c.b16 %v1562, %v1561
        %v1657 = vpack.c.b16 %v1564, %v1563
        %v1658 = vpack.c.b16 %v1566, %v1565
        %v1659 = vpack.c.b16 %v1568, %v1567
        %v1660 = vpack.c.b16 %v1570, %v1569
        %v1661 = vpack.c.b16 %v1572, %v1571
        %v1662 = vpack.c.b16 %v1574, %v1573
        %v1663 = vpack.c.b16 %v1576, %v1575
        %v1664 = vpack.c.b16 %v1578, %v1577
        %v1665 = vpack.c.b16 %v1580, %v1579
        %v1666 = vpack.c.b16 %v1582, %v1581
        %v1667 = vpack.c.b16 %v1584, %v1583
        %v1668 = vpack.c.b16 %v1586, %v1585
        %v1669 = vpack.c.b16 %v1588, %v1587
        %v1670 = vpack.c.b16 %v1590, %v1589
        %v1671 = vpack.c.b16 %v1592, %v1591
        %v1672 = vpack.c.b16 %v1594, %v1593
        %v1673 = vpack.c.b16 %v1596, %v1595
        %v1674 = vpack.c.b16 %v1598, %v1597
        %v1675 = vpack.c.b16 %v1600, %v1599
        %v1676 = vpack.c.b16 %v1602, %v1601
        %v1677 = vpack.c.b16 %v1604, %v1603
        %v1678 = vpack.c.b16 %v1606, %v1605
        %v1679 = vpack.c.b16 %v1608, %v1607
        %v1680 = vpack.c.b16 %v1610, %v1609
        %v1681 = vpack.c.b16 %v1612, %v1611
        %v1682 = vpack.c.b16 %v1614, %v1613
        %v1683 = vpack.c.b16 %v1616, %v1615
        %v1684 = vpack.c.b16 %v1618, %v1617
        %v1685 = vpack.c.b16 %v1620, %v1619
        %v1686 = vpack.c.b16 %v1622, %v1621
        %v1687 = vpack.c.b16 %v1624, %v1623
        %v1688 = vpack.c.b16 %v1626, %v1625
        %v1689 = vpack.c.b16 %v1628, %v1627
        %v1690 = vpack.c.b16 %v1630, %v1629
        %v1691 = vpack.c.b16 %v1632, %v1631
        %v1692 = vpack.c.b16 %v1634, %v1633
        %v1693 = vpack.c.b16 %v1636, %v1635
        %v1694 = vpack.c.b16 %v1638, %v1637
        %v1695 = vpack.c.b16 %v1640, %v1639
        %v1696 = vpack.c.b16 %v1642, %v1641
        %v1697 = vpack.c.b16 %v1644, %v1643
        %v1698 = vpack.c.b16 %v1646, %v1645
        %v1699 = vpack.c.b16 %v1648, %v1647
        %v1700 = vpack.c.b16 %v1650, %v1649
        %v1701 = vpack.c.b16 %v1652, %v1651
        %v1702 = vpack.c.b16 %v1654, %v1653
        %1751 = vst [vmem:[%s238] sm:$0xff] %v1655
        %1752 = vst [vmem:[%s238 + $0x8] sm:$0xff] %v1656
        %1753 = vst [vmem:[%s238 + $0x10] sm:$0xff] %v1657
        %1754 = vst [vmem:[%s238 + $0x18] sm:$0xff] %v1658
        %1755 = vst [vmem:[%s238 + $0x20] sm:$0xff] %v1659
        %1756 = vst [vmem:[%s238 + $0x28] sm:$0xff] %v1660
        %1757 = vst [vmem:[%s238 + $0x30] sm:$0xff] %v1661
        %1758 = vst [vmem:[%s238 + $0x38] sm:$0xff] %v1662
        %1759 = vst [vmem:[%s238 + $0x40] sm:$0xff] %v1663
        %1760 = vst [vmem:[%s238 + $0x48] sm:$0xff] %v1664
        %1761 = vst [vmem:[%s238 + $0x50] sm:$0xff] %v1665
        %1762 = vst [vmem:[%s238 + $0x58] sm:$0xff] %v1666
        %1763 = vst [vmem:[%s238 + $0x60] sm:$0xff] %v1667
        %1764 = vst [vmem:[%s238 + $0x68] sm:$0xff] %v1668
        %1765 = vst [vmem:[%s238 + $0x70] sm:$0xff] %v1669
        %1766 = vst [vmem:[%s238 + $0x78] sm:$0xff] %v1670
        %1767 = vst [vmem:[%s238 + $0x80] sm:$0xff] %v1671
        %1768 = vst [vmem:[%s238 + $0x88] sm:$0xff] %v1672
        %1769 = vst [vmem:[%s238 + $0x90] sm:$0xff] %v1673
        %1770 = vst [vmem:[%s238 + $0x98] sm:$0xff] %v1674
        %1771 = vst [vmem:[%s238 + $0xa0] sm:$0xff] %v1675
        %1772 = vst [vmem:[%s238 + $0xa8] sm:$0xff] %v1676
        %1773 = vst [vmem:[%s238 + $0xb0] sm:$0xff] %v1677
        %1774 = vst [vmem:[%s238 + $0xb8] sm:$0xff] %v1678
        %1775 = vst [vmem:[%s238 + $0xc0] sm:$0xff] %v1679
        %1776 = vst [vmem:[%s238 + $0xc8] sm:$0xff] %v1680
        %1777 = vst [vmem:[%s238 + $0xd0] sm:$0xff] %v1681
        %1778 = vst [vmem:[%s238 + $0xd8] sm:$0xff] %v1682
        %1779 = vst [vmem:[%s238 + $0xe0] sm:$0xff] %v1683
        %1780 = vst [vmem:[%s238 + $0xe8] sm:$0xff] %v1684
        %1781 = vst [vmem:[%s238 + $0xf0] sm:$0xff] %v1685
        %1782 = vst [vmem:[%s238 + $0xf8] sm:$0xff] %v1686
        %1783 = vst [vmem:[%s238 + $0x100] sm:$0xff] %v1687
        %1784 = vst [vmem:[%s238 + $0x108] sm:$0xff] %v1688
        %1785 = vst [vmem:[%s238 + $0x110] sm:$0xff] %v1689
        %1786 = vst [vmem:[%s238 + $0x118] sm:$0xff] %v1690
        %1787 = vst [vmem:[%s238 + $0x120] sm:$0xff] %v1691
        %1788 = vst [vmem:[%s238 + $0x128] sm:$0xff] %v1692
        %1789 = vst [vmem:[%s238 + $0x130] sm:$0xff] %v1693
        %1790 = vst [vmem:[%s238 + $0x138] sm:$0xff] %v1694
        %1791 = vst [vmem:[%s238 + $0x140] sm:$0xff] %v1695
        %1792 = vst [vmem:[%s238 + $0x148] sm:$0xff] %v1696
        %1793 = vst [vmem:[%s238 + $0x150] sm:$0xff] %v1697
        %1794 = vst [vmem:[%s238 + $0x158] sm:$0xff] %v1698
        %1795 = vst [vmem:[%s238 + $0x160] sm:$0xff] %v1699
        %1796 = vst [vmem:[%s238 + $0x168] sm:$0xff] %v1700
        %1797 = vst [vmem:[%s238 + $0x170] sm:$0xff] %v1701
        %1798 = vst [vmem:[%s238 + $0x178] sm:$0xff] %v1702
        %s1799 = sand.u32 %s116, 1
        %s1800 = scalar_lea.sflag [#allocation5], %s1799
        %s1801 = sand.u32 %s116, 1
        %s1802 = smul.addr %s1801, 384
        %s1803 = scalar_lea.vmem [#allocation9], %s1802
        // Predicated region
        $region49: #{transformer_forward.9} parent=31 // pred_check
          %p1804 = pneg %p126
        $region50: #{transformer_forward.9} parent=31 // pred_check_branch
          %1806 = sbr.rel (%p1804) target = $region52
        $region51: #{transformer_forward.9} parent=31 // pred_region
          %s1807 = smul.u32 16, %s25
          %s1808 = smul.u32 6, %s26
          %s1810 = ssub.s32 6144, 6144
          %1811 = vsyncadd %s1800, %s1810
          %s1812 = smul.addr %s1807, 6
          %s1813 = sadd.s32 %s1808, %s1812
          %s1814 = smul.addr %s1813, 64
          %s1815 = scalar_lea.hbm %s3, %s1814
          %s1816 = sshll.u32 %s1803, 4
          %s1817 = int_to_ptr.vmem [resolvable:$true] %s1816
          %1822 = dma.vmem_to_hbm [thread:$0]  %s1817, 6144, %s1815, %s1800, 384, 384, 24
        $region52: #{transformer_forward.9} parent=31 // pred_fallthru
          _
      $region32: #{transformer_forward.9} parent=5 // pred_fallthru
        _
      %p1823 = scmp.le.s32.totalorder 2, %s16
      // Predicated region
      $region53: #{transformer_forward.9} parent=5 // pred_check
        %p1824 = pneg %p1823
      $region54: #{transformer_forward.9} parent=5 // pred_check_branch
        %1826 = sbr.rel (%p1824) target = $region56
      $region55: #{transformer_forward.9} parent=5 // pred_region
        %s1827 = ssub.s32 %s16, 2
        // Predicated region
        $region57: #{transformer_forward.9} parent=55 // pred_check
          %p1828 = pneg %p132
        $region58: #{transformer_forward.9} parent=55 // pred_check_branch
          %1830 = sbr.rel (%p1828) target = $region60
        $region59: #{transformer_forward.9} parent=55 // pred_region
          %s1831 = sand.u32 %s117, 1
          %s1832 = scalar_lea.sflag [#allocation5], %s1831
          %s1833 = sand.u32 %s117, 1
          %s1834 = smul.addr %s1833, 384
          %s1835 = scalar_lea.vmem [#allocation9], %s1834
          %1836 = dma.done %s1832, 6144
        $region60: #{transformer_forward.9} parent=55 // pred_fallthru
          _
      $region56: #{transformer_forward.9} parent=5 // pred_fallthru
        _
    $region6: #{transformer_forward.9} parent=1 // loop_footer
      %s20 = sadd.s32 1, %s16
    $region7: #{transformer_forward.9} parent=1 // loop_footer_branch
      %15 = sbr.rel target = $region3
    $region8: #{transformer_forward.9} parent=1 // loop_exit
      _
    %1837 = vsyncpa [#allocation4], 1
    %s1838 = scalar_lea.sflag [#allocation4], 1
    %1839 = vsyncpa %s1838, 1
    %1840 = vsyncpa [#allocation7], 1
    %1841 = vsyncpa [#allocation5], 1
    %s1842 = scalar_lea.sflag [#allocation5], 1
    %1843 = vsyncpa %s1842, 1

// kernel: transformer_forward.11
$region0: #{transformer_forward.11}
  #allocation0 [shape = 'u32[]', space=smem, size = 0x4, offset = 0x4, fixed_abs, tag = 'smem constant byte address 0x4 - core index']
  #allocation1 [shape = 'u32[144,128]{1,0:T(1,128)}', space=vmem, size = 0x12000, scoped, tag = 'internal scratch']
  #allocation2 [shape = 'f32[128,256]{1,0:T(8,128)}', space=vmem, size = 0x20000, scoped, tag = 'scratch operand']
  %s0 = inlined_call_operand.hbm [shape: bf16[256,256], index: 0, kind: input, shape index: {}]
  %s1 = inlined_call_operand.hbm [shape: bf16[256,256], index: 1, kind: input, shape index: {}]
  %s2 = inlined_call_operand.hbm [shape: bf16[256,256], index: 2, kind: input, shape index: {}]
  %s3 = inlined_call_operand.hbm [shape: bf16[256,256], index: 3, kind: output, shape index: {}]
  %s4 = sld [smem:[#allocation0]]
  $region65: #{transformer_forward.11} parent=0
    _
  %s6 = ssub.s32 1, %s4
  %s7 = scalar_select 0, %s6, %s4
  $region1: #{transformer_forward.11} parent=0
    #allocation3 [shape = 'u8[131072]{0}', space=vmem, size = 0x20000, scoped, tag = 'input window, operand 0']
    #allocation4 [shape = 's32[2]{0}', space=sflag, size = 0x8, scoped, tag = 'scoped memory for transformer_forward.11']
    #allocation5 [shape = 's32[2]{0}', space=sflag, size = 0x8, scoped, tag = 'scoped memory for transformer_forward.11']
    #allocation6 [shape = 'u8[131072]{0}', space=vmem, size = 0x20000, scoped, tag = 'input window, operand 1, single buffered']
    #allocation7 [shape = 's32[1]{0}', space=sflag, size = 0x4, scoped, tag = 'scoped memory for transformer_forward.11']
    #allocation8 [shape = 'u8[131072]{0}', space=vmem, size = 0x20000, scoped, tag = 'input window, operand 2']
    #allocation9 [shape = 'u8[131072]{0}', space=vmem, size = 0x20000, scoped, tag = 'output window, operand 0']
    %8 = vsyncpa [#allocation4], 0
    %s9 = scalar_lea.sflag [#allocation4], 1
    %10 = vsyncpa %s9, 0
    %11 = vsyncpa [#allocation7], 0
    %12 = vsyncpa [#allocation5], 0
    %s13 = scalar_lea.sflag [#allocation5], 1
    %14 = vsyncpa %s13, 0
    loop: start=0, step=1, limit=4
    $region2: #{transformer_forward.11} parent=1 // loop_pre_header
      _
    $region3: #{transformer_forward.11} parent=1 // loop_header
      %s16 = sphi 0, %s20
      %p17 = scmp.ge.s32.totalorder %s16, 4
      %s23 = sphi 0, %s42
      %s24 = sphi 0, %s38
      %s25 = sphi 0, %s34
      %s26 = sphi 0, %s23
      %s27 = sphi 0, %s24
      %s28 = sphi 0, %s25
      %s29 = sphi 0, %s26
      %s30 = sphi 0, %s27
      %s31 = sphi 0, %s28
      %s47 = sphi 0, %s49
      %s50 = sphi 0, %s47
      %s51 = sphi 0, %s50
      %s67 = sphi 0, %s51
      %s75 = sphi 0, %s77
      %s78 = sphi 0, %s75
      %s79 = sphi 0, %s78
      %s95 = sphi 0, %s79
      %s103 = sphi 0, %s105
      %s106 = sphi 0, %s103
      %s107 = sphi 0, %s106
      %s123 = sphi 0, %s107
      %s131 = sphi 0, %s133
      %s134 = sphi 0, %s131
      %s135 = sphi 0, %s134
      %s151 = sphi 0, %s135
    $region4: #{transformer_forward.11} parent=1 // loop_header_branch
      %19 = sbr.rel (%p17) target = $region8
    $region5: #{transformer_forward.11} parent=1 // loop_body
      %s21 = ssub.s32 %s16, 1
      %s22 = ssub.s32 %s16, 2
      %s32 = sadd.s32 1, %s25
      %p33 = scmp.ge.s32.totalorder %s32, 1
      %s34 = scalar_select %p33, 0, %s32
      %s35 = sadd.s32 1, %s24
      %s36 = scalar_select %p33, %s35, %s24
      %p37 = scmp.ge.s32.totalorder %s36, 1
      %s38 = scalar_select %p37, 0, %s36
      %s39 = sadd.s32 1, %s23
      %s40 = scalar_select %p37, %s39, %s23
      %p41 = scmp.ge.s32.totalorder %s40, 2
      %s42 = scalar_select %p41, 0, %s40
      %s43 = ssub.s32 %s23, %s42
      %s44 = ssub.s32 %s25, %s34
      %s45 = sor.u32 %s43, %s44
      %p46 = scmp.eq.s32.totalorder %s45, 0
      %s48 = sadd.s32 %s47, 1
      %s49 = scalar_select %p46, %s47, %s48
      %p52 = pneg %p46
      %p53 = scmp.eq.s32.totalorder %s16, 1
      %p54 = por %p52, %p53
      %p55 = scmp.ne.s32.totalorder %s47, %s50
      %p56 = scmp.eq.s32.totalorder %s16, 0
      %p57 = por %p55, %p56
      %p58 = scmp.ne.s32.totalorder %s47, %s50
      %p59 = scmp.eq.s32.totalorder %s21, 1
      %p60 = por %p58, %p59
      %p61 = scmp.ne.s32.totalorder %s50, %s51
      %p62 = scmp.eq.s32.totalorder %s21, 0
      %p63 = por %p61, %p62
      %p64 = scmp.ne.s32.totalorder %s50, %s51
      %p65 = scmp.eq.s32.totalorder %s22, 1
      %p66 = por %p64, %p65
      %p68 = scmp.ne.s32.totalorder %s51, %s67
      %p69 = scmp.eq.s32.totalorder %s22, 0
      %p70 = por %p68, %p69
      %s71 = ssub.s32 %s25, %s34
      %s72 = ssub.s32 %s24, %s38
      %s73 = sor.u32 %s71, %s72
      %p74 = scmp.eq.s32.totalorder %s73, 0
      %s76 = sadd.s32 %s75, 1
      %s77 = scalar_select %p74, %s75, %s76
      %p80 = pneg %p74
      %p81 = scmp.eq.s32.totalorder %s16, 1
      %p82 = por %p80, %p81
      %p83 = scmp.ne.s32.totalorder %s75, %s78
      %p84 = scmp.eq.s32.totalorder %s16, 0
      %p85 = por %p83, %p84
      %p86 = scmp.ne.s32.totalorder %s75, %s78
      %p87 = scmp.eq.s32.totalorder %s21, 1
      %p88 = por %p86, %p87
      %p89 = scmp.ne.s32.totalorder %s78, %s79
      %p90 = scmp.eq.s32.totalorder %s21, 0
      %p91 = por %p89, %p90
      %p92 = scmp.ne.s32.totalorder %s78, %s79
      %p93 = scmp.eq.s32.totalorder %s22, 1
      %p94 = por %p92, %p93
      %p96 = scmp.ne.s32.totalorder %s79, %s95
      %p97 = scmp.eq.s32.totalorder %s22, 0
      %p98 = por %p96, %p97
      %s99 = ssub.s32 %s23, %s42
      %s100 = ssub.s32 %s24, %s38
      %s101 = sor.u32 %s99, %s100
      %p102 = scmp.eq.s32.totalorder %s101, 0
      %s104 = sadd.s32 %s103, 1
      %s105 = scalar_select %p102, %s103, %s104
      %p108 = pneg %p102
      %p109 = scmp.eq.s32.totalorder %s16, 1
      %p110 = por %p108, %p109
      %p111 = scmp.ne.s32.totalorder %s103, %s106
      %p112 = scmp.eq.s32.totalorder %s16, 0
      %p113 = por %p111, %p112
      %p114 = scmp.ne.s32.totalorder %s103, %s106
      %p115 = scmp.eq.s32.totalorder %s21, 1
      %p116 = por %p114, %p115
      %p117 = scmp.ne.s32.totalorder %s106, %s107
      %p118 = scmp.eq.s32.totalorder %s21, 0
      %p119 = por %p117, %p118
      %p120 = scmp.ne.s32.totalorder %s106, %s107
      %p121 = scmp.eq.s32.totalorder %s22, 1
      %p122 = por %p120, %p121
      %p124 = scmp.ne.s32.totalorder %s107, %s123
      %p125 = scmp.eq.s32.totalorder %s22, 0
      %p126 = por %p124, %p125
      %s127 = ssub.s32 %s23, %s42
      %s128 = ssub.s32 %s24, %s38
      %s129 = sor.u32 %s127, %s128
      %p130 = scmp.eq.s32.totalorder %s129, 0
      %s132 = sadd.s32 %s131, 1
      %s133 = scalar_select %p130, %s131, %s132
      %p136 = pneg %p130
      %p137 = scmp.eq.s32.totalorder %s16, 1
      %p138 = por %p136, %p137
      %p139 = scmp.ne.s32.totalorder %s131, %s134
      %p140 = scmp.eq.s32.totalorder %s16, 0
      %p141 = por %p139, %p140
      %p142 = scmp.ne.s32.totalorder %s131, %s134
      %p143 = scmp.eq.s32.totalorder %s21, 1
      %p144 = por %p142, %p143
      %p145 = scmp.ne.s32.totalorder %s134, %s135
      %p146 = scmp.eq.s32.totalorder %s21, 0
      %p147 = por %p145, %p146
      %p148 = scmp.ne.s32.totalorder %s134, %s135
      %p149 = scmp.eq.s32.totalorder %s22, 1
      %p150 = por %p148, %p149
      %p152 = scmp.ne.s32.totalorder %s135, %s151
      %p153 = scmp.eq.s32.totalorder %s22, 0
      %p154 = por %p152, %p153
      %p155 = scmp.le.s32.totalorder 1, %s16
      %p156 = scmp.lt.s32.totalorder %s16, 3
      %p157 = pnand %p155, %p156
      %p158 = pneg %p157
      // Predicated region
      $region9: #{transformer_forward.11} parent=5 // pred_check
        _
      $region10: #{transformer_forward.11} parent=5 // pred_check_branch
        %160 = sbr.rel (%p157) target = $region12
      $region11: #{transformer_forward.11} parent=5 // pred_region
        %s161 = ssub.s32 %s16, 1
        // Predicated region
        $region13: #{transformer_forward.11} parent=11 // pred_check
          %p162 = pneg %p91
        $region14: #{transformer_forward.11} parent=11 // pred_check_branch
          %164 = sbr.rel (%p162) target = $region16
        $region15: #{transformer_forward.11} parent=11 // pred_region
          %s165 = smul.u32 32, %s28
          %s166 = smul.u32 2, %s27
          %s168 = ssub.s32 4096, 4096
          %169 = vsyncadd [#allocation7], %s168
          %s170 = smul.addr %s165, 2
          %s171 = sadd.s32 %s166, %s170
          %s172 = smul.addr %s171, 64
          %s173 = scalar_lea.hbm %s1, %s172
          %s174 = sshll.u32 [#allocation6], 4
          %s175 = int_to_ptr.vmem [resolvable:$true] %s174
          %180 = dma.hbm_to_vmem [thread:$0]  %s173, 4096, %s175, [#allocation7], 128, 128, 8
        $region16: #{transformer_forward.11} parent=11 // pred_fallthru
          _
      $region12: #{transformer_forward.11} parent=5 // pred_fallthru
        _
      %p181 = scmp.lt.s32.totalorder %s16, 2
      // Predicated region
      $region17: #{transformer_forward.11} parent=5 // pred_check
        %p182 = pneg %p181
      $region18: #{transformer_forward.11} parent=5 // pred_check_branch
        %184 = sbr.rel (%p182) target = $region20
      $region19: #{transformer_forward.11} parent=5 // pred_region
        // Predicated region
        $region21: #{transformer_forward.11} parent=19 // pred_check
          %p185 = pneg %p57
        $region22: #{transformer_forward.11} parent=19 // pred_check_branch
          %187 = sbr.rel (%p185) target = $region24
        $region23: #{transformer_forward.11} parent=19 // pred_region
          %s188 = sand.u32 %s16, 1
          %s189 = scalar_lea.sflag [#allocation4], %s188
          %s190 = sand.u32 %s47, 1
          %s191 = smul.addr %s190, 128
          %s192 = scalar_lea.vmem [#allocation3], %s191
          %s193 = smul.u32 16, %s23
          %s194 = smul.u32 2, %s25
          %s196 = ssub.s32 2048, 2048
          %197 = vsyncadd %s189, %s196
          %s198 = smul.addr %s193, 2
          %s199 = sadd.s32 %s194, %s198
          %s200 = smul.addr %s199, 64
          %s201 = scalar_lea.hbm %s0, %s200
          %s202 = sshll.u32 %s192, 4
          %s203 = int_to_ptr.vmem [resolvable:$true] %s202
          %208 = dma.hbm_to_vmem [thread:$0]  %s201, 2048, %s203, %s189, 128, 128, 8
        $region24: #{transformer_forward.11} parent=19 // pred_fallthru
          _
        // Predicated region
        $region25: #{transformer_forward.11} parent=19 // pred_check
          %p209 = pneg %p113
        $region26: #{transformer_forward.11} parent=19 // pred_check_branch
          %211 = sbr.rel (%p209) target = $region28
        $region27: #{transformer_forward.11} parent=19 // pred_region
          %s212 = sand.u32 %s16, 1
          %s213 = scalar_lea.sflag [#allocation4], %s212
          %s214 = sand.u32 %s103, 1
          %s215 = smul.addr %s214, 128
          %s216 = scalar_lea.vmem [#allocation8], %s215
          %s217 = smul.u32 16, %s23
          %s218 = smul.u32 2, %s24
          %s220 = ssub.s32 2048, 2048
          %221 = vsyncadd %s213, %s220
          %s222 = smul.addr %s217, 2
          %s223 = sadd.s32 %s218, %s222
          %s224 = smul.addr %s223, 64
          %s225 = scalar_lea.hbm %s2, %s224
          %s226 = sshll.u32 %s216, 4
          %s227 = int_to_ptr.vmem [resolvable:$true] %s226
          %232 = dma.hbm_to_vmem [thread:$0]  %s225, 2048, %s227, %s213, 128, 128, 8
        $region28: #{transformer_forward.11} parent=19 // pred_fallthru
          _
      $region20: #{transformer_forward.11} parent=5 // pred_fallthru
        _
      %p233 = scmp.le.s32.totalorder 1, %s16
      %p234 = scmp.lt.s32.totalorder %s16, 3
      %p235 = pnand %p233, %p234
      %p236 = pneg %p235
      // Predicated region
      $region29: #{transformer_forward.11} parent=5 // pred_check
        _
      $region30: #{transformer_forward.11} parent=5 // pred_check_branch
        %238 = sbr.rel (%p235) target = $region32
      $region31: #{transformer_forward.11} parent=5 // pred_region
        %s239 = ssub.s32 %s16, 1
        %s240 = sand.u32 %s21, 1
        %s241 = scalar_lea.sflag [#allocation4], %s240
        %s242 = sand.u32 %s50, 1
        %s243 = smul.addr %s242, 128
        %s244 = scalar_lea.vmem [#allocation3], %s243
        // Predicated region
        $region33: #{transformer_forward.11} parent=31 // pred_check
          %p245 = pneg %p63
        $region34: #{transformer_forward.11} parent=31 // pred_check_branch
          %247 = sbr.rel (%p245) target = $region36
        $region35: #{transformer_forward.11} parent=31 // pred_region
          %248 = dma.done %s241, 2048
        $region36: #{transformer_forward.11} parent=31 // pred_fallthru
          _
        // Predicated region
        $region37: #{transformer_forward.11} parent=31 // pred_check
          %p249 = pneg %p91
        $region38: #{transformer_forward.11} parent=31 // pred_check_branch
          %251 = sbr.rel (%p249) target = $region40
        $region39: #{transformer_forward.11} parent=31 // pred_region
          %252 = dma.done [#allocation7], 4096
        $region40: #{transformer_forward.11} parent=31 // pred_fallthru
          _
        %s253 = sand.u32 %s21, 1
        %s254 = scalar_lea.sflag [#allocation4], %s253
        %s255 = sand.u32 %s106, 1
        %s256 = smul.addr %s255, 128
        %s257 = scalar_lea.vmem [#allocation8], %s256
        // Predicated region
        $region41: #{transformer_forward.11} parent=31 // pred_check
          %p258 = pneg %p119
        $region42: #{transformer_forward.11} parent=31 // pred_check_branch
          %260 = sbr.rel (%p258) target = $region44
        $region43: #{transformer_forward.11} parent=31 // pred_region
          %261 = dma.done %s254, 2048
        $region44: #{transformer_forward.11} parent=31 // pred_fallthru
          _
        %s262 = sand.u32 %s21, 1
        %s263 = scalar_lea.sflag [#allocation4], %s262
        %s264 = sand.u32 %s50, 1
        %s265 = smul.addr %s264, 128
        %s266 = scalar_lea.vmem [#allocation3], %s265
        %p267 = pneg %p63
        %p268 = pneg %p60
        %p269 = pneg %p91
        %p270 = pneg %p88
        %s271 = sand.u32 %s21, 1
        %s272 = scalar_lea.sflag [#allocation4], %s271
        %s273 = sand.u32 %s106, 1
        %s274 = smul.addr %s273, 128
        %s275 = scalar_lea.vmem [#allocation8], %s274
        %p276 = pneg %p119
        %p277 = pneg %p116
        %p278 = pneg %p147
        %p279 = pneg %p144
        %s280 = sand.u32 %s134, 1
        %s281 = scalar_lea.sflag [#allocation5], %s280
        %s282 = sand.u32 %s134, 1
        %s283 = smul.addr %s282, 128
        %s284 = scalar_lea.vmem [#allocation9], %s283
        %s285 = smul.u32 16, %s26
        %s286 = smul.u32 2, %s28
        %s287 = smul.u32 32, %s28
        %s288 = smul.u32 2, %s27
        %s289 = smul.u32 16, %s26
        %s290 = smul.u32 2, %s27
        %s291 = smul.u32 16, %s26
        %s292 = smul.u32 2, %s27
        %p293 = scmp.eq.s32.totalorder %s28, 0
        // Predicated region
        $region45: #{transformer_forward.11} parent=31 // pred_check
          %p294 = pneg %p293
        $region46: #{transformer_forward.11} parent=31 // pred_check_branch
          %296 = sbr.rel (%p294) target = $region48
        $region47: #{transformer_forward.11} parent=31 // pred_region
          %297 = vst [vmem:[#allocation2] sm:$0xff] 0.0
          %298 = vst [vmem:[#allocation2 + $0x8] sm:$0xff] 0.0
          %299 = vst [vmem:[#allocation2 + $0x10] sm:$0xff] 0.0
          %300 = vst [vmem:[#allocation2 + $0x18] sm:$0xff] 0.0
          %301 = vst [vmem:[#allocation2 + $0x20] sm:$0xff] 0.0
          %302 = vst [vmem:[#allocation2 + $0x28] sm:$0xff] 0.0
          %303 = vst [vmem:[#allocation2 + $0x30] sm:$0xff] 0.0
          %304 = vst [vmem:[#allocation2 + $0x38] sm:$0xff] 0.0
          %305 = vst [vmem:[#allocation2 + $0x40] sm:$0xff] 0.0
          %306 = vst [vmem:[#allocation2 + $0x48] sm:$0xff] 0.0
          %307 = vst [vmem:[#allocation2 + $0x50] sm:$0xff] 0.0
          %308 = vst [vmem:[#allocation2 + $0x58] sm:$0xff] 0.0
          %309 = vst [vmem:[#allocation2 + $0x60] sm:$0xff] 0.0
          %310 = vst [vmem:[#allocation2 + $0x68] sm:$0xff] 0.0
          %311 = vst [vmem:[#allocation2 + $0x70] sm:$0xff] 0.0
          %312 = vst [vmem:[#allocation2 + $0x78] sm:$0xff] 0.0
          %313 = vst [vmem:[#allocation2 + $0x80] sm:$0xff] 0.0
          %314 = vst [vmem:[#allocation2 + $0x88] sm:$0xff] 0.0
          %315 = vst [vmem:[#allocation2 + $0x90] sm:$0xff] 0.0
          %316 = vst [vmem:[#allocation2 + $0x98] sm:$0xff] 0.0
          %317 = vst [vmem:[#allocation2 + $0xa0] sm:$0xff] 0.0
          %318 = vst [vmem:[#allocation2 + $0xa8] sm:$0xff] 0.0
          %319 = vst [vmem:[#allocation2 + $0xb0] sm:$0xff] 0.0
          %320 = vst [vmem:[#allocation2 + $0xb8] sm:$0xff] 0.0
          %321 = vst [vmem:[#allocation2 + $0xc0] sm:$0xff] 0.0
          %322 = vst [vmem:[#allocation2 + $0xc8] sm:$0xff] 0.0
          %323 = vst [vmem:[#allocation2 + $0xd0] sm:$0xff] 0.0
          %324 = vst [vmem:[#allocation2 + $0xd8] sm:$0xff] 0.0
          %325 = vst [vmem:[#allocation2 + $0xe0] sm:$0xff] 0.0
          %326 = vst [vmem:[#allocation2 + $0xe8] sm:$0xff] 0.0
          %327 = vst [vmem:[#allocation2 + $0xf0] sm:$0xff] 0.0
          %328 = vst [vmem:[#allocation2 + $0xf8] sm:$0xff] 0.0
        $region48: #{transformer_forward.11} parent=31 // pred_fallthru
          _
        %v329 = vld [vmem:[#allocation2] sm:$0xff]
        %v330 = vld [vmem:[#allocation2 + $0x8] sm:$0xff]
        %v331 = vld [vmem:[#allocation2 + $0x10] sm:$0xff]
        %v332 = vld [vmem:[#allocation2 + $0x18] sm:$0xff]
        %v333 = vld [vmem:[#allocation2 + $0x20] sm:$0xff]
        %v334 = vld [vmem:[#allocation2 + $0x28] sm:$0xff]
        %v335 = vld [vmem:[#allocation2 + $0x30] sm:$0xff]
        %v336 = vld [vmem:[#allocation2 + $0x38] sm:$0xff]
        %v337 = vld [vmem:[#allocation2 + $0x40] sm:$0xff]
        %v338 = vld [vmem:[#allocation2 + $0x48] sm:$0xff]
        %v339 = vld [vmem:[#allocation2 + $0x50] sm:$0xff]
        %v340 = vld [vmem:[#allocation2 + $0x58] sm:$0xff]
        %v341 = vld [vmem:[#allocation2 + $0x60] sm:$0xff]
        %v342 = vld [vmem:[#allocation2 + $0x68] sm:$0xff]
        %v343 = vld [vmem:[#allocation2 + $0x70] sm:$0xff]
        %v344 = vld [vmem:[#allocation2 + $0x78] sm:$0xff]
        %v345 = vld [vmem:[#allocation2 + $0x80] sm:$0xff]
        %v346 = vld [vmem:[#allocation2 + $0x88] sm:$0xff]
        %v347 = vld [vmem:[#allocation2 + $0x90] sm:$0xff]
        %v348 = vld [vmem:[#allocation2 + $0x98] sm:$0xff]
        %v349 = vld [vmem:[#allocation2 + $0xa0] sm:$0xff]
        %v350 = vld [vmem:[#allocation2 + $0xa8] sm:$0xff]
        %v351 = vld [vmem:[#allocation2 + $0xb0] sm:$0xff]
        %v352 = vld [vmem:[#allocation2 + $0xb8] sm:$0xff]
        %v353 = vld [vmem:[#allocation2 + $0xc0] sm:$0xff]
        %v354 = vld [vmem:[#allocation2 + $0xc8] sm:$0xff]
        %v355 = vld [vmem:[#allocation2 + $0xd0] sm:$0xff]
        %v356 = vld [vmem:[#allocation2 + $0xd8] sm:$0xff]
        %v357 = vld [vmem:[#allocation2 + $0xe0] sm:$0xff]
        %v358 = vld [vmem:[#allocation2 + $0xe8] sm:$0xff]
        %v359 = vld [vmem:[#allocation2 + $0xf0] sm:$0xff]
        %v360 = vld [vmem:[#allocation2 + $0xf8] sm:$0xff]
        %v361 = vld [vmem:[%s244] sm:$0xff]
        %v362 = vld [vmem:[%s244 + $0x8] sm:$0xff]
        %v363 = vld [vmem:[%s244 + $0x10] sm:$0xff]
        %v364 = vld [vmem:[%s244 + $0x18] sm:$0xff]
        %v365 = vld [vmem:[%s244 + $0x20] sm:$0xff]
        %v366 = vld [vmem:[%s244 + $0x28] sm:$0xff]
        %v367 = vld [vmem:[%s244 + $0x30] sm:$0xff]
        %v368 = vld [vmem:[%s244 + $0x38] sm:$0xff]
        %v369 = vld [vmem:[%s244 + $0x40] sm:$0xff]
        %v370 = vld [vmem:[%s244 + $0x48] sm:$0xff]
        %v371 = vld [vmem:[%s244 + $0x50] sm:$0xff]
        %v372 = vld [vmem:[%s244 + $0x58] sm:$0xff]
        %v373 = vld [vmem:[%s244 + $0x60] sm:$0xff]
        %v374 = vld [vmem:[%s244 + $0x68] sm:$0xff]
        %v375 = vld [vmem:[%s244 + $0x70] sm:$0xff]
        %v376 = vld [vmem:[%s244 + $0x78] sm:$0xff]
        %v377 = vld [vmem:[#allocation6] sm:$0xff]
        %v378 = vld [vmem:[#allocation6 + $0x8] sm:$0xff]
        %v379 = vld [vmem:[#allocation6 + $0x10] sm:$0xff]
        %v380 = vld [vmem:[#allocation6 + $0x18] sm:$0xff]
        %v381 = vld [vmem:[#allocation6 + $0x20] sm:$0xff]
        %v382 = vld [vmem:[#allocation6 + $0x28] sm:$0xff]
        %v383 = vld [vmem:[#allocation6 + $0x30] sm:$0xff]
        %v384 = vld [vmem:[#allocation6 + $0x38] sm:$0xff]
        %v385 = vld [vmem:[#allocation6 + $0x40] sm:$0xff]
        %v386 = vld [vmem:[#allocation6 + $0x48] sm:$0xff]
        %v387 = vld [vmem:[#allocation6 + $0x50] sm:$0xff]
        %v388 = vld [vmem:[#allocation6 + $0x58] sm:$0xff]
        %v389 = vld [vmem:[#allocation6 + $0x60] sm:$0xff]
        %v390 = vld [vmem:[#allocation6 + $0x68] sm:$0xff]
        %v391 = vld [vmem:[#allocation6 + $0x70] sm:$0xff]
        %v392 = vld [vmem:[#allocation6 + $0x78] sm:$0xff]
        %v393 = vld [vmem:[#allocation6 + $0x80] sm:$0xff]
        %v394 = vld [vmem:[#allocation6 + $0x88] sm:$0xff]
        %v395 = vld [vmem:[#allocation6 + $0x90] sm:$0xff]
        %v396 = vld [vmem:[#allocation6 + $0x98] sm:$0xff]
        %v397 = vld [vmem:[#allocation6 + $0xa0] sm:$0xff]
        %v398 = vld [vmem:[#allocation6 + $0xa8] sm:$0xff]
        %v399 = vld [vmem:[#allocation6 + $0xb0] sm:$0xff]
        %v400 = vld [vmem:[#allocation6 + $0xb8] sm:$0xff]
        %v401 = vld [vmem:[#allocation6 + $0xc0] sm:$0xff]
        %v402 = vld [vmem:[#allocation6 + $0xc8] sm:$0xff]
        %v403 = vld [vmem:[#allocation6 + $0xd0] sm:$0xff]
        %v404 = vld [vmem:[#allocation6 + $0xd8] sm:$0xff]
        %v405 = vld [vmem:[#allocation6 + $0xe0] sm:$0xff]
        %v406 = vld [vmem:[#allocation6 + $0xe8] sm:$0xff]
        %v407 = vld [vmem:[#allocation6 + $0xf0] sm:$0xff]
        %v408 = vld [vmem:[#allocation6 + $0xf8] sm:$0xff]
        %v425 = vunpack.c.l.b16 %v361
        %v426 = vunpack.c.h.b16 %v361
        %v427 = vunpack.c.l.b16 %v362
        %v428 = vunpack.c.h.b16 %v362
        %v429 = vunpack.c.l.b16 %v363
        %v430 = vunpack.c.h.b16 %v363
        %v431 = vunpack.c.l.b16 %v364
        %v432 = vunpack.c.h.b16 %v364
        %v433 = vunpack.c.l.b16 %v365
        %v434 = vunpack.c.h.b16 %v365
        %v435 = vunpack.c.l.b16 %v366
        %v436 = vunpack.c.h.b16 %v366
        %v437 = vunpack.c.l.b16 %v367
        %v438 = vunpack.c.h.b16 %v367
        %v439 = vunpack.c.l.b16 %v368
        %v440 = vunpack.c.h.b16 %v368
        %v441 = vunpack.c.l.b16 %v369
        %v442 = vunpack.c.h.b16 %v369
        %v443 = vunpack.c.l.b16 %v370
        %v444 = vunpack.c.h.b16 %v370
        %v445 = vunpack.c.l.b16 %v371
        %v446 = vunpack.c.h.b16 %v371
        %v447 = vunpack.c.l.b16 %v372
        %v448 = vunpack.c.h.b16 %v372
        %v449 = vunpack.c.l.b16 %v373
        %v450 = vunpack.c.h.b16 %v373
        %v451 = vunpack.c.l.b16 %v374
        %v452 = vunpack.c.h.b16 %v374
        %v453 = vunpack.c.l.b16 %v375
        %v454 = vunpack.c.h.b16 %v375
        %v455 = vunpack.c.l.b16 %v376
        %v456 = vunpack.c.h.b16 %v376
        %v457 = vpack.c.b16 %v427, %v425
        %v458 = vpack.c.b16 %v428, %v426
        %v459 = vpack.c.b16 %v431, %v429
        %v460 = vpack.c.b16 %v432, %v430
        %v461 = vpack.c.b16 %v435, %v433
        %v462 = vpack.c.b16 %v436, %v434
        %v463 = vpack.c.b16 %v439, %v437
        %v464 = vpack.c.b16 %v440, %v438
        %v465 = vpack.c.b16 %v443, %v441
        %v466 = vpack.c.b16 %v444, %v442
        %v467 = vpack.c.b16 %v447, %v445
        %v468 = vpack.c.b16 %v448, %v446
        %v469 = vpack.c.b16 %v451, %v449
        %v470 = vpack.c.b16 %v452, %v450
        %v471 = vpack.c.b16 %v455, %v453
        %v472 = vpack.c.b16 %v456, %v454
        %v521 = vunpack.c.l.b16 %v377
        %v522 = vunpack.c.h.b16 %v377
        %v523 = vunpack.c.l.b16 %v378
        %v524 = vunpack.c.h.b16 %v378
        %v525 = vunpack.c.l.b16 %v379
        %v526 = vunpack.c.h.b16 %v379
        %v527 = vunpack.c.l.b16 %v380
        %v528 = vunpack.c.h.b16 %v380
        %v529 = vunpack.c.l.b16 %v381
        %v530 = vunpack.c.h.b16 %v381
        %v531 = vunpack.c.l.b16 %v382
        %v532 = vunpack.c.h.b16 %v382
        %v533 = vunpack.c.l.b16 %v383
        %v534 = vunpack.c.h.b16 %v383
        %v535 = vunpack.c.l.b16 %v384
        %v536 = vunpack.c.h.b16 %v384
        %v537 = vunpack.c.l.b16 %v385
        %v538 = vunpack.c.h.b16 %v385
        %v539 = vunpack.c.l.b16 %v386
        %v540 = vunpack.c.h.b16 %v386
        %v541 = vunpack.c.l.b16 %v387
        %v542 = vunpack.c.h.b16 %v387
        %v543 = vunpack.c.l.b16 %v388
        %v544 = vunpack.c.h.b16 %v388
        %v545 = vunpack.c.l.b16 %v389
        %v546 = vunpack.c.h.b16 %v389
        %v547 = vunpack.c.l.b16 %v390
        %v548 = vunpack.c.h.b16 %v390
        %v549 = vunpack.c.l.b16 %v391
        %v550 = vunpack.c.h.b16 %v391
        %v551 = vunpack.c.l.b16 %v392
        %v552 = vunpack.c.h.b16 %v392
        %v553 = vunpack.c.l.b16 %v393
        %v554 = vunpack.c.h.b16 %v393
        %v555 = vunpack.c.l.b16 %v394
        %v556 = vunpack.c.h.b16 %v394
        %v557 = vunpack.c.l.b16 %v395
        %v558 = vunpack.c.h.b16 %v395
        %v559 = vunpack.c.l.b16 %v396
        %v560 = vunpack.c.h.b16 %v396
        %v561 = vunpack.c.l.b16 %v397
        %v562 = vunpack.c.h.b16 %v397
        %v563 = vunpack.c.l.b16 %v398
        %v564 = vunpack.c.h.b16 %v398
        %v565 = vunpack.c.l.b16 %v399
        %v566 = vunpack.c.h.b16 %v399
        %v567 = vunpack.c.l.b16 %v400
        %v568 = vunpack.c.h.b16 %v400
        %v569 = vunpack.c.l.b16 %v401
        %v570 = vunpack.c.h.b16 %v401
        %v571 = vunpack.c.l.b16 %v402
        %v572 = vunpack.c.h.b16 %v402
        %v573 = vunpack.c.l.b16 %v403
        %v574 = vunpack.c.h.b16 %v403
        %v575 = vunpack.c.l.b16 %v404
        %v576 = vunpack.c.h.b16 %v404
        %v577 = vunpack.c.l.b16 %v405
        %v578 = vunpack.c.h.b16 %v405
        %v579 = vunpack.c.l.b16 %v406
        %v580 = vunpack.c.h.b16 %v406
        %v581 = vunpack.c.l.b16 %v407
        %v582 = vunpack.c.h.b16 %v407
        %v583 = vunpack.c.l.b16 %v408
        %v584 = vunpack.c.h.b16 %v408
        %v585 = vpack.c.b16 %v523, %v521
        %v586 = vpack.c.b16 %v524, %v522
        %v587 = vpack.c.b16 %v527, %v525
        %v588 = vpack.c.b16 %v528, %v526
        %v589 = vpack.c.b16 %v531, %v529
        %v590 = vpack.c.b16 %v532, %v530
        %v591 = vpack.c.b16 %v535, %v533
        %v592 = vpack.c.b16 %v536, %v534
        %v593 = vpack.c.b16 %v539, %v537
        %v594 = vpack.c.b16 %v540, %v538
        %v595 = vpack.c.b16 %v543, %v541
        %v596 = vpack.c.b16 %v544, %v542
        %v597 = vpack.c.b16 %v547, %v545
        %v598 = vpack.c.b16 %v548, %v546
        %v599 = vpack.c.b16 %v551, %v549
        %v600 = vpack.c.b16 %v552, %v550
        %v601 = vpack.c.b16 %v555, %v553
        %v602 = vpack.c.b16 %v556, %v554
        %v603 = vpack.c.b16 %v559, %v557
        %v604 = vpack.c.b16 %v560, %v558
        %v605 = vpack.c.b16 %v563, %v561
        %v606 = vpack.c.b16 %v564, %v562
        %v607 = vpack.c.b16 %v567, %v565
        %v608 = vpack.c.b16 %v568, %v566
        %v609 = vpack.c.b16 %v571, %v569
        %v610 = vpack.c.b16 %v572, %v570
        %v611 = vpack.c.b16 %v575, %v573
        %v612 = vpack.c.b16 %v576, %v574
        %v613 = vpack.c.b16 %v579, %v577
        %v614 = vpack.c.b16 %v580, %v578
        %v615 = vpack.c.b16 %v583, %v581
        %v616 = vpack.c.b16 %v584, %v582
        %649 = vmatprep.subr.bf16.mxu0 %v586
        %650 = vmatpush1.bf16.msra.mxu0 %v585
        %651 = vmatprep.subr.bf16.mxu0 %v588
        %652 = vmatpush1.bf16.msra.mxu0 %v587
        %653 = vmatprep.subr.bf16.mxu0 %v590
        %654 = vmatpush1.bf16.msra.mxu0 %v589
        %655 = vmatprep.subr.bf16.mxu0 %v592
        %656 = vmatpush1.bf16.msra.mxu0 %v591
        %657 = vmatprep.subr.bf16.mxu0 %v594
        %658 = vmatpush1.bf16.msra.mxu0 %v593
        %659 = vmatprep.subr.bf16.mxu0 %v596
        %660 = vmatpush1.bf16.msra.mxu0 %v595
        %661 = vmatprep.subr.bf16.mxu0 %v598
        %662 = vmatpush1.bf16.msra.mxu0 %v597
        %663 = vmatprep.subr.bf16.mxu0 %v600
        %664 = vmatpush1.bf16.msra.mxu0 %v599
        %665 = vmatprep.subr.bf16.mxu0 %v602
        %666 = vmatpush1.bf16.msra.mxu0 %v601
        %667 = vmatprep.subr.bf16.mxu0 %v604
        %668 = vmatpush1.bf16.msra.mxu0 %v603
        %669 = vmatprep.subr.bf16.mxu0 %v606
        %670 = vmatpush1.bf16.msra.mxu0 %v605
        %671 = vmatprep.subr.bf16.mxu0 %v608
        %672 = vmatpush1.bf16.msra.mxu0 %v607
        %673 = vmatprep.subr.bf16.mxu0 %v610
        %674 = vmatpush1.bf16.msra.mxu0 %v609
        %675 = vmatprep.subr.bf16.mxu0 %v612
        %676 = vmatpush1.bf16.msra.mxu0 %v611
        %677 = vmatprep.subr.bf16.mxu0 %v614
        %678 = vmatpush1.bf16.msra.mxu0 %v613
        %679 = vmatprep.subr.bf16.mxu0 %v616
        %680 = vmatpush1.bf16.msra.mxu0 %v615
        %681 = vmatprep.mubr.bf16.mxu0 %v458
        %682 = vmatmul.mubr.bf16.gmra.mrb[0].mxu0 %v457
        %v683 = vpop.f32.mrb[0].mxu0
        %v684 = vadd.f32 0.0, %v683
        %v685 = vpop.f32.mrb[0].mxu0
        %v686 = vadd.f32 0.0, %v685
        %v687 = vpop.f32.mrb[0].mxu0
        %v688 = vadd.f32 0.0, %v687
        %v689 = vpop.f32.mrb[0].mxu0
        %v690 = vadd.f32 0.0, %v689
        %691 = vmatprep.mubr.bf16.mxu0 %v460
        %692 = vmatmul.mubr.bf16.gmra.mrb[0].mxu0 %v459
        %v693 = vpop.f32.mrb[0].mxu0
        %v694 = vadd.f32 0.0, %v693
        %v695 = vpop.f32.mrb[0].mxu0
        %v696 = vadd.f32 0.0, %v695
        %v697 = vpop.f32.mrb[0].mxu0
        %v698 = vadd.f32 0.0, %v697
        %v699 = vpop.f32.mrb[0].mxu0
        %v700 = vadd.f32 0.0, %v699
        %701 = vmatprep.mubr.bf16.mxu0 %v462
        %702 = vmatmul.mubr.bf16.gmra.mrb[0].mxu0 %v461
        %v703 = vpop.f32.mrb[0].mxu0
        %v704 = vadd.f32 0.0, %v703
        %v705 = vpop.f32.mrb[0].mxu0
        %v706 = vadd.f32 0.0, %v705
        %v707 = vpop.f32.mrb[0].mxu0
        %v708 = vadd.f32 0.0, %v707
        %v709 = vpop.f32.mrb[0].mxu0
        %v710 = vadd.f32 0.0, %v709
        %711 = vmatprep.mubr.bf16.mxu0 %v464
        %712 = vmatmul.mubr.bf16.gmra.mrb[0].mxu0 %v463
        %v713 = vpop.f32.mrb[0].mxu0
        %v714 = vadd.f32 0.0, %v713
        %v715 = vpop.f32.mrb[0].mxu0
        %v716 = vadd.f32 0.0, %v715
        %v717 = vpop.f32.mrb[0].mxu0
        %v718 = vadd.f32 0.0, %v717
        %v719 = vpop.f32.mrb[0].mxu0
        %v720 = vadd.f32 0.0, %v719
        %721 = vmatprep.mubr.bf16.mxu0 %v466
        %722 = vmatmul.mubr.bf16.gmra.mrb[0].mxu0 %v465
        %v723 = vpop.f32.mrb[0].mxu0
        %v724 = vadd.f32 0.0, %v723
        %v725 = vpop.f32.mrb[0].mxu0
        %v726 = vadd.f32 0.0, %v725
        %v727 = vpop.f32.mrb[0].mxu0
        %v728 = vadd.f32 0.0, %v727
        %v729 = vpop.f32.mrb[0].mxu0
        %v730 = vadd.f32 0.0, %v729
        %731 = vmatprep.mubr.bf16.mxu0 %v468
        %732 = vmatmul.mubr.bf16.gmra.mrb[0].mxu0 %v467
        %v733 = vpop.f32.mrb[0].mxu0
        %v734 = vadd.f32 0.0, %v733
        %v735 = vpop.f32.mrb[0].mxu0
        %v736 = vadd.f32 0.0, %v735
        %v737 = vpop.f32.mrb[0].mxu0
        %v738 = vadd.f32 0.0, %v737
        %v739 = vpop.f32.mrb[0].mxu0
        %v740 = vadd.f32 0.0, %v739
        %741 = vmatprep.mubr.bf16.mxu0 %v470
        %742 = vmatmul.mubr.bf16.gmra.mrb[0].mxu0 %v469
        %v743 = vpop.f32.mrb[0].mxu0
        %v744 = vadd.f32 0.0, %v743
        %v745 = vpop.f32.mrb[0].mxu0
        %v746 = vadd.f32 0.0, %v745
        %v747 = vpop.f32.mrb[0].mxu0
        %v748 = vadd.f32 0.0, %v747
        %v749 = vpop.f32.mrb[0].mxu0
        %v750 = vadd.f32 0.0, %v749
        %751 = vmatprep.mubr.bf16.mxu0 %v472
        %752 = vmatmul.mubr.bf16.gmra.mrb[0].mxu0 %v471
        %v753 = vpop.f32.mrb[0].mxu0
        %v754 = vadd.f32 0.0, %v753
        %v755 = vpop.f32.mrb[0].mxu0
        %v756 = vadd.f32 0.0, %v755
        %v757 = vpop.f32.mrb[0].mxu0
        %v758 = vadd.f32 0.0, %v757
        %v759 = vpop.f32.mrb[0].mxu0
        %v760 = vadd.f32 0.0, %v759
        %761 = vdwg.mxu0
        %v762 = vadd.f32 %v329, %v684
        %v763 = vadd.f32 %v330, %v686
        %v764 = vadd.f32 %v331, %v688
        %v765 = vadd.f32 %v332, %v690
        %v766 = vadd.f32 %v333, %v694
        %v767 = vadd.f32 %v334, %v696
        %v768 = vadd.f32 %v335, %v698
        %v769 = vadd.f32 %v336, %v700
        %v770 = vadd.f32 %v337, %v704
        %v771 = vadd.f32 %v338, %v706
        %v772 = vadd.f32 %v339, %v708
        %v773 = vadd.f32 %v340, %v710
        %v774 = vadd.f32 %v341, %v714
        %v775 = vadd.f32 %v342, %v716
        %v776 = vadd.f32 %v343, %v718
        %v777 = vadd.f32 %v344, %v720
        %v778 = vadd.f32 %v345, %v724
        %v779 = vadd.f32 %v346, %v726
        %v780 = vadd.f32 %v347, %v728
        %v781 = vadd.f32 %v348, %v730
        %v782 = vadd.f32 %v349, %v734
        %v783 = vadd.f32 %v350, %v736
        %v784 = vadd.f32 %v351, %v738
        %v785 = vadd.f32 %v352, %v740
        %v786 = vadd.f32 %v353, %v744
        %v787 = vadd.f32 %v354, %v746
        %v788 = vadd.f32 %v355, %v748
        %v789 = vadd.f32 %v356, %v750
        %v790 = vadd.f32 %v357, %v754
        %v791 = vadd.f32 %v358, %v756
        %v792 = vadd.f32 %v359, %v758
        %v793 = vadd.f32 %v360, %v760
        %794 = vst [vmem:[#allocation2] sm:$0xff] %v762
        %795 = vst [vmem:[#allocation2 + $0x8] sm:$0xff] %v763
        %796 = vst [vmem:[#allocation2 + $0x10] sm:$0xff] %v764
        %797 = vst [vmem:[#allocation2 + $0x18] sm:$0xff] %v765
        %798 = vst [vmem:[#allocation2 + $0x20] sm:$0xff] %v766
        %799 = vst [vmem:[#allocation2 + $0x28] sm:$0xff] %v767
        %800 = vst [vmem:[#allocation2 + $0x30] sm:$0xff] %v768
        %801 = vst [vmem:[#allocation2 + $0x38] sm:$0xff] %v769
        %802 = vst [vmem:[#allocation2 + $0x40] sm:$0xff] %v770
        %803 = vst [vmem:[#allocation2 + $0x48] sm:$0xff] %v771
        %804 = vst [vmem:[#allocation2 + $0x50] sm:$0xff] %v772
        %805 = vst [vmem:[#allocation2 + $0x58] sm:$0xff] %v773
        %806 = vst [vmem:[#allocation2 + $0x60] sm:$0xff] %v774
        %807 = vst [vmem:[#allocation2 + $0x68] sm:$0xff] %v775
        %808 = vst [vmem:[#allocation2 + $0x70] sm:$0xff] %v776
        %809 = vst [vmem:[#allocation2 + $0x78] sm:$0xff] %v777
        %810 = vst [vmem:[#allocation2 + $0x80] sm:$0xff] %v778
        %811 = vst [vmem:[#allocation2 + $0x88] sm:$0xff] %v779
        %812 = vst [vmem:[#allocation2 + $0x90] sm:$0xff] %v780
        %813 = vst [vmem:[#allocation2 + $0x98] sm:$0xff] %v781
        %814 = vst [vmem:[#allocation2 + $0xa0] sm:$0xff] %v782
        %815 = vst [vmem:[#allocation2 + $0xa8] sm:$0xff] %v783
        %816 = vst [vmem:[#allocation2 + $0xb0] sm:$0xff] %v784
        %817 = vst [vmem:[#allocation2 + $0xb8] sm:$0xff] %v785
        %818 = vst [vmem:[#allocation2 + $0xc0] sm:$0xff] %v786
        %819 = vst [vmem:[#allocation2 + $0xc8] sm:$0xff] %v787
        %820 = vst [vmem:[#allocation2 + $0xd0] sm:$0xff] %v788
        %821 = vst [vmem:[#allocation2 + $0xd8] sm:$0xff] %v789
        %822 = vst [vmem:[#allocation2 + $0xe0] sm:$0xff] %v790
        %823 = vst [vmem:[#allocation2 + $0xe8] sm:$0xff] %v791
        %824 = vst [vmem:[#allocation2 + $0xf0] sm:$0xff] %v792
        %825 = vst [vmem:[#allocation2 + $0xf8] sm:$0xff] %v793
        // Predicated region
        $region49: #{transformer_forward.11} parent=31 // pred_check
          %p826 = pneg %p293
        $region50: #{transformer_forward.11} parent=31 // pred_check_branch
          %828 = sbr.rel (%p826) target = $region52
        $region51: #{transformer_forward.11} parent=31 // pred_region
          %v829 = vld [vmem:[#allocation2] sm:$0xff]
          %v830 = vld [vmem:[#allocation2 + $0x8] sm:$0xff]
          %v831 = vld [vmem:[#allocation2 + $0x10] sm:$0xff]
          %v832 = vld [vmem:[#allocation2 + $0x18] sm:$0xff]
          %v833 = vld [vmem:[#allocation2 + $0x20] sm:$0xff]
          %v834 = vld [vmem:[#allocation2 + $0x28] sm:$0xff]
          %v835 = vld [vmem:[#allocation2 + $0x30] sm:$0xff]
          %v836 = vld [vmem:[#allocation2 + $0x38] sm:$0xff]
          %v837 = vld [vmem:[#allocation2 + $0x40] sm:$0xff]
          %v838 = vld [vmem:[#allocation2 + $0x48] sm:$0xff]
          %v839 = vld [vmem:[#allocation2 + $0x50] sm:$0xff]
          %v840 = vld [vmem:[#allocation2 + $0x58] sm:$0xff]
          %v841 = vld [vmem:[#allocation2 + $0x60] sm:$0xff]
          %v842 = vld [vmem:[#allocation2 + $0x68] sm:$0xff]
          %v843 = vld [vmem:[#allocation2 + $0x70] sm:$0xff]
          %v844 = vld [vmem:[#allocation2 + $0x78] sm:$0xff]
          %v845 = vld [vmem:[#allocation2 + $0x80] sm:$0xff]
          %v846 = vld [vmem:[#allocation2 + $0x88] sm:$0xff]
          %v847 = vld [vmem:[#allocation2 + $0x90] sm:$0xff]
          %v848 = vld [vmem:[#allocation2 + $0x98] sm:$0xff]
          %v849 = vld [vmem:[#allocation2 + $0xa0] sm:$0xff]
          %v850 = vld [vmem:[#allocation2 + $0xa8] sm:$0xff]
          %v851 = vld [vmem:[#allocation2 + $0xb0] sm:$0xff]
          %v852 = vld [vmem:[#allocation2 + $0xb8] sm:$0xff]
          %v853 = vld [vmem:[#allocation2 + $0xc0] sm:$0xff]
          %v854 = vld [vmem:[#allocation2 + $0xc8] sm:$0xff]
          %v855 = vld [vmem:[#allocation2 + $0xd0] sm:$0xff]
          %v856 = vld [vmem:[#allocation2 + $0xd8] sm:$0xff]
          %v857 = vld [vmem:[#allocation2 + $0xe0] sm:$0xff]
          %v858 = vld [vmem:[#allocation2 + $0xe8] sm:$0xff]
          %v859 = vld [vmem:[#allocation2 + $0xf0] sm:$0xff]
          %v860 = vld [vmem:[#allocation2 + $0xf8] sm:$0xff]
          %v861 = vld [vmem:[%s257] sm:$0xff]
          %v862 = vld [vmem:[%s257 + $0x8] sm:$0xff]
          %v863 = vld [vmem:[%s257 + $0x10] sm:$0xff]
          %v864 = vld [vmem:[%s257 + $0x18] sm:$0xff]
          %v865 = vld [vmem:[%s257 + $0x20] sm:$0xff]
          %v866 = vld [vmem:[%s257 + $0x28] sm:$0xff]
          %v867 = vld [vmem:[%s257 + $0x30] sm:$0xff]
          %v868 = vld [vmem:[%s257 + $0x38] sm:$0xff]
          %v869 = vld [vmem:[%s257 + $0x40] sm:$0xff]
          %v870 = vld [vmem:[%s257 + $0x48] sm:$0xff]
          %v871 = vld [vmem:[%s257 + $0x50] sm:$0xff]
          %v872 = vld [vmem:[%s257 + $0x58] sm:$0xff]
          %v873 = vld [vmem:[%s257 + $0x60] sm:$0xff]
          %v874 = vld [vmem:[%s257 + $0x68] sm:$0xff]
          %v875 = vld [vmem:[%s257 + $0x70] sm:$0xff]
          %v876 = vld [vmem:[%s257 + $0x78] sm:$0xff]
          %v877 = vunpack.c.l.bf16 %v861
          %v878 = vunpack.c.h.bf16 %v861
          %v879 = vunpack.c.l.bf16 %v862
          %v880 = vunpack.c.h.bf16 %v862
          %v881 = vunpack.c.l.bf16 %v863
          %v882 = vunpack.c.h.bf16 %v863
          %v883 = vunpack.c.l.bf16 %v864
          %v884 = vunpack.c.h.bf16 %v864
          %v885 = vunpack.c.l.bf16 %v865
          %v886 = vunpack.c.h.bf16 %v865
          %v887 = vunpack.c.l.bf16 %v866
          %v888 = vunpack.c.h.bf16 %v866
          %v889 = vunpack.c.l.bf16 %v867
          %v890 = vunpack.c.h.bf16 %v867
          %v891 = vunpack.c.l.bf16 %v868
          %v892 = vunpack.c.h.bf16 %v868
          %v893 = vunpack.c.l.bf16 %v869
          %v894 = vunpack.c.h.bf16 %v869
          %v895 = vunpack.c.l.bf16 %v870
          %v896 = vunpack.c.h.bf16 %v870
          %v897 = vunpack.c.l.bf16 %v871
          %v898 = vunpack.c.h.bf16 %v871
          %v899 = vunpack.c.l.bf16 %v872
          %v900 = vunpack.c.h.bf16 %v872
          %v901 = vunpack.c.l.bf16 %v873
          %v902 = vunpack.c.h.bf16 %v873
          %v903 = vunpack.c.l.bf16 %v874
          %v904 = vunpack.c.h.bf16 %v874
          %v905 = vunpack.c.l.bf16 %v875
          %v906 = vunpack.c.h.bf16 %v875
          %v907 = vunpack.c.l.bf16 %v876
          %v908 = vunpack.c.h.bf16 %v876
          %v909 = vadd.f32 %v829, %v877
          %v910 = vadd.f32 %v830, %v878
          %v911 = vadd.f32 %v831, %v879
          %v912 = vadd.f32 %v832, %v880
          %v913 = vadd.f32 %v833, %v881
          %v914 = vadd.f32 %v834, %v882
          %v915 = vadd.f32 %v835, %v883
          %v916 = vadd.f32 %v836, %v884
          %v917 = vadd.f32 %v837, %v885
          %v918 = vadd.f32 %v838, %v886
          %v919 = vadd.f32 %v839, %v887
          %v920 = vadd.f32 %v840, %v888
          %v921 = vadd.f32 %v841, %v889
          %v922 = vadd.f32 %v842, %v890
          %v923 = vadd.f32 %v843, %v891
          %v924 = vadd.f32 %v844, %v892
          %v925 = vadd.f32 %v845, %v893
          %v926 = vadd.f32 %v846, %v894
          %v927 = vadd.f32 %v847, %v895
          %v928 = vadd.f32 %v848, %v896
          %v929 = vadd.f32 %v849, %v897
          %v930 = vadd.f32 %v850, %v898
          %v931 = vadd.f32 %v851, %v899
          %v932 = vadd.f32 %v852, %v900
          %v933 = vadd.f32 %v853, %v901
          %v934 = vadd.f32 %v854, %v902
          %v935 = vadd.f32 %v855, %v903
          %v936 = vadd.f32 %v856, %v904
          %v937 = vadd.f32 %v857, %v905
          %v938 = vadd.f32 %v858, %v906
          %v939 = vadd.f32 %v859, %v907
          %v940 = vadd.f32 %v860, %v908
          %v941 = vpack.c.bf16 %v911, %v909
          %v942 = vpack.c.bf16 %v912, %v910
          %v943 = vpack.c.bf16 %v915, %v913
          %v944 = vpack.c.bf16 %v916, %v914
          %v945 = vpack.c.bf16 %v919, %v917
          %v946 = vpack.c.bf16 %v920, %v918
          %v947 = vpack.c.bf16 %v923, %v921
          %v948 = vpack.c.bf16 %v924, %v922
          %v949 = vpack.c.bf16 %v927, %v925
          %v950 = vpack.c.bf16 %v928, %v926
          %v951 = vpack.c.bf16 %v931, %v929
          %v952 = vpack.c.bf16 %v932, %v930
          %v953 = vpack.c.bf16 %v935, %v933
          %v954 = vpack.c.bf16 %v936, %v934
          %v955 = vpack.c.bf16 %v939, %v937
          %v956 = vpack.c.bf16 %v940, %v938
          %v973 = vunpack.c.l.b16 %v941
          %v974 = vunpack.c.l.b16 %v942
          %v975 = vunpack.c.h.b16 %v941
          %v976 = vunpack.c.h.b16 %v942
          %v977 = vunpack.c.l.b16 %v943
          %v978 = vunpack.c.l.b16 %v944
          %v979 = vunpack.c.h.b16 %v943
          %v980 = vunpack.c.h.b16 %v944
          %v981 = vunpack.c.l.b16 %v945
          %v982 = vunpack.c.l.b16 %v946
          %v983 = vunpack.c.h.b16 %v945
          %v984 = vunpack.c.h.b16 %v946
          %v985 = vunpack.c.l.b16 %v947
          %v986 = vunpack.c.l.b16 %v948
          %v987 = vunpack.c.h.b16 %v947
          %v988 = vunpack.c.h.b16 %v948
          %v989 = vunpack.c.l.b16 %v949
          %v990 = vunpack.c.l.b16 %v950
          %v991 = vunpack.c.h.b16 %v949
          %v992 = vunpack.c.h.b16 %v950
          %v993 = vunpack.c.l.b16 %v951
          %v994 = vunpack.c.l.b16 %v952
          %v995 = vunpack.c.h.b16 %v951
          %v996 = vunpack.c.h.b16 %v952
          %v997 = vunpack.c.l.b16 %v953
          %v998 = vunpack.c.l.b16 %v954
          %v999 = vunpack.c.h.b16 %v953
          %v1000 = vunpack.c.h.b16 %v954
          %v1001 = vunpack.c.l.b16 %v955
          %v1002 = vunpack.c.l.b16 %v956
          %v1003 = vunpack.c.h.b16 %v955
          %v1004 = vunpack.c.h.b16 %v956
          %v1005 = vpack.c.b16 %v974, %v973
          %v1006 = vpack.c.b16 %v976, %v975
          %v1007 = vpack.c.b16 %v978, %v977
          %v1008 = vpack.c.b16 %v980, %v979
          %v1009 = vpack.c.b16 %v982, %v981
          %v1010 = vpack.c.b16 %v984, %v983
          %v1011 = vpack.c.b16 %v986, %v985
          %v1012 = vpack.c.b16 %v988, %v987
          %v1013 = vpack.c.b16 %v990, %v989
          %v1014 = vpack.c.b16 %v992, %v991
          %v1015 = vpack.c.b16 %v994, %v993
          %v1016 = vpack.c.b16 %v996, %v995
          %v1017 = vpack.c.b16 %v998, %v997
          %v1018 = vpack.c.b16 %v1000, %v999
          %v1019 = vpack.c.b16 %v1002, %v1001
          %v1020 = vpack.c.b16 %v1004, %v1003
          %1037 = vst [vmem:[%s284] sm:$0xff] %v1005
          %1038 = vst [vmem:[%s284 + $0x8] sm:$0xff] %v1006
          %1039 = vst [vmem:[%s284 + $0x10] sm:$0xff] %v1007
          %1040 = vst [vmem:[%s284 + $0x18] sm:$0xff] %v1008
          %1041 = vst [vmem:[%s284 + $0x20] sm:$0xff] %v1009
          %1042 = vst [vmem:[%s284 + $0x28] sm:$0xff] %v1010
          %1043 = vst [vmem:[%s284 + $0x30] sm:$0xff] %v1011
          %1044 = vst [vmem:[%s284 + $0x38] sm:$0xff] %v1012
          %1045 = vst [vmem:[%s284 + $0x40] sm:$0xff] %v1013
          %1046 = vst [vmem:[%s284 + $0x48] sm:$0xff] %v1014
          %1047 = vst [vmem:[%s284 + $0x50] sm:$0xff] %v1015
          %1048 = vst [vmem:[%s284 + $0x58] sm:$0xff] %v1016
          %1049 = vst [vmem:[%s284 + $0x60] sm:$0xff] %v1017
          %1050 = vst [vmem:[%s284 + $0x68] sm:$0xff] %v1018
          %1051 = vst [vmem:[%s284 + $0x70] sm:$0xff] %v1019
          %1052 = vst [vmem:[%s284 + $0x78] sm:$0xff] %v1020
        $region52: #{transformer_forward.11} parent=31 // pred_fallthru
          _
        %s1053 = sand.u32 %s134, 1
        %s1054 = scalar_lea.sflag [#allocation5], %s1053
        %s1055 = sand.u32 %s134, 1
        %s1056 = smul.addr %s1055, 128
        %s1057 = scalar_lea.vmem [#allocation9], %s1056
        // Predicated region
        $region53: #{transformer_forward.11} parent=31 // pred_check
          %p1058 = pneg %p144
        $region54: #{transformer_forward.11} parent=31 // pred_check_branch
          %1060 = sbr.rel (%p1058) target = $region56
        $region55: #{transformer_forward.11} parent=31 // pred_region
          %s1061 = smul.u32 16, %s26
          %s1062 = smul.u32 2, %s27
          %s1064 = ssub.s32 2048, 2048
          %1065 = vsyncadd %s1054, %s1064
          %s1066 = smul.addr %s1061, 2
          %s1067 = sadd.s32 %s1062, %s1066
          %s1068 = smul.addr %s1067, 64
          %s1069 = scalar_lea.hbm %s3, %s1068
          %s1070 = sshll.u32 %s1057, 4
          %s1071 = int_to_ptr.vmem [resolvable:$true] %s1070
          %1076 = dma.vmem_to_hbm [thread:$0]  %s1071, 2048, %s1069, %s1054, 128, 128, 8
        $region56: #{transformer_forward.11} parent=31 // pred_fallthru
          _
      $region32: #{transformer_forward.11} parent=5 // pred_fallthru
        _
      %p1077 = scmp.le.s32.totalorder 2, %s16
      // Predicated region
      $region57: #{transformer_forward.11} parent=5 // pred_check
        %p1078 = pneg %p1077
      $region58: #{transformer_forward.11} parent=5 // pred_check_branch
        %1080 = sbr.rel (%p1078) target = $region60
      $region59: #{transformer_forward.11} parent=5 // pred_region
        %s1081 = ssub.s32 %s16, 2
        // Predicated region
        $region61: #{transformer_forward.11} parent=59 // pred_check
          %p1082 = pneg %p150
        $region62: #{transformer_forward.11} parent=59 // pred_check_branch
          %1084 = sbr.rel (%p1082) target = $region64
        $region63: #{transformer_forward.11} parent=59 // pred_region
          %s1085 = sand.u32 %s135, 1
          %s1086 = scalar_lea.sflag [#allocation5], %s1085
          %s1087 = sand.u32 %s135, 1
          %s1088 = smul.addr %s1087, 128
          %s1089 = scalar_lea.vmem [#allocation9], %s1088
          %1090 = dma.done %s1086, 2048
        $region64: #{transformer_forward.11} parent=59 // pred_fallthru
          _
      $region60: #{transformer_forward.11} parent=5 // pred_fallthru
        _
    $region6: #{transformer_forward.11} parent=1 // loop_footer
      %s20 = sadd.s32 1, %s16
    $region7: #{transformer_forward.11} parent=1 // loop_footer_branch
      %15 = sbr.rel target = $region3
    $region8: #{transformer_forward.11} parent=1 // loop_exit
      _
    %1091 = vsyncpa [#allocation4], 1
    %s1092 = scalar_lea.sflag [#allocation4], 1
    %1093 = vsyncpa %s1092, 1
    %1094 = vsyncpa [#allocation7], 1
    %1095 = vsyncpa [#allocation5], 1
    %s1096 = scalar_lea.sflag [#allocation5], 1
    %1097 = vsyncpa %s1096, 1

// kernel: transformer_forward.17
$region0: #{transformer_forward.17}
  #allocation0 [shape = 'u32[]', space=smem, size = 0x4, offset = 0x4, fixed_abs, tag = 'smem constant byte address 0x4 - core index']
  #allocation1 [shape = 'u32[144,128]{1,0:T(1,128)}', space=vmem, size = 0x12000, scoped, tag = 'internal scratch']
  #allocation2 [shape = 'bf16[128,256]{1,0:T(16,128)(2,1)}', space=vmem, size = 0x10000, scoped, tag = 'scratch operand']
  %s0 = inlined_call_operand.hbm [shape: bf16[256,256], index: 0, kind: input, shape index: {}]
  %s1 = inlined_call_operand.hbm [shape: f32[1,256], index: 1, kind: input, shape index: {}]
  %s2 = inlined_call_operand.hbm [shape: bf16[256,256], index: 2, kind: input, shape index: {}]
  %s3 = inlined_call_operand.hbm [shape: f32[256,256], index: 3, kind: output, shape index: {}]
  %s4 = sld [smem:[#allocation0]]
  $region61: #{transformer_forward.17} parent=0
    _
  %s6 = ssub.s32 1, %s4
  %s7 = scalar_select 0, %s6, %s4
  $region1: #{transformer_forward.17} parent=0
    #allocation3 [shape = 'u8[131072]{0}', space=vmem, size = 0x20000, scoped, tag = 'input window, operand 0']
    #allocation4 [shape = 's32[2]{0}', space=sflag, size = 0x8, scoped, tag = 'scoped memory for transformer_forward.17']
    #allocation5 [shape = 's32[2]{0}', space=sflag, size = 0x8, scoped, tag = 'scoped memory for transformer_forward.17']
    #allocation6 [shape = 'u8[1024]{0}', space=vmem, size = 0x400, scoped, tag = 'input window, operand 1, single buffered']
    #allocation7 [shape = 's32[1]{0}', space=sflag, size = 0x4, scoped, tag = 'scoped memory for transformer_forward.17']
    #allocation8 [shape = 'u8[131072]{0}', space=vmem, size = 0x20000, scoped, tag = 'input window, operand 2, single buffered']
    #allocation9 [shape = 'u8[262144]{0}', space=vmem, size = 0x40000, scoped, tag = 'output window, operand 0']
    %8 = vsyncpa [#allocation4], 0
    %s9 = scalar_lea.sflag [#allocation4], 1
    %10 = vsyncpa %s9, 0
    %11 = vsyncpa [#allocation7], 0
    %12 = vsyncpa [#allocation5], 0
    %s13 = scalar_lea.sflag [#allocation5], 1
    %14 = vsyncpa %s13, 0
    loop: start=0, step=1, limit=4
    $region2: #{transformer_forward.17} parent=1 // loop_pre_header
      _
    $region3: #{transformer_forward.17} parent=1 // loop_header
      %s16 = sphi 0, %s20
      %p17 = scmp.ge.s32.totalorder %s16, 4
      %s23 = sphi 0, %s35
      %s24 = sphi 0, %s31
      %s25 = sphi 0, %s23
      %s26 = sphi 0, %s24
      %s27 = sphi 0, %s25
      %s28 = sphi 0, %s26
      %s38 = sphi 0, %s40
      %s41 = sphi 0, %s38
      %s42 = sphi 0, %s41
      %s58 = sphi 0, %s42
      %s62 = sphi 0, %s62
      %s64 = sphi 0, %s62
      %s65 = sphi 0, %s64
      %s79 = sphi 0, %s65
      %s85 = sphi 0, %s87
      %s88 = sphi 0, %s85
      %s89 = sphi 0, %s88
      %s105 = sphi 0, %s89
      %s113 = sphi 0, %s115
      %s116 = sphi 0, %s113
      %s117 = sphi 0, %s116
      %s133 = sphi 0, %s117
    $region4: #{transformer_forward.17} parent=1 // loop_header_branch
      %19 = sbr.rel (%p17) target = $region8
    $region5: #{transformer_forward.17} parent=1 // loop_body
      %s21 = ssub.s32 %s16, 1
      %s22 = ssub.s32 %s16, 2
      %s29 = sadd.s32 1, %s24
      %p30 = scmp.ge.s32.totalorder %s29, 1
      %s31 = scalar_select %p30, 0, %s29
      %s32 = sadd.s32 1, %s23
      %s33 = scalar_select %p30, %s32, %s23
      %p34 = scmp.ge.s32.totalorder %s33, 2
      %s35 = scalar_select %p34, 0, %s33
      %s36 = ssub.s32 %s23, %s35
      %p37 = scmp.eq.s32.totalorder %s36, 0
      %s39 = sadd.s32 %s38, 1
      %s40 = scalar_select %p37, %s38, %s39
      %p43 = pneg %p37
      %p44 = scmp.eq.s32.totalorder %s16, 1
      %p45 = por %p43, %p44
      %p46 = scmp.ne.s32.totalorder %s38, %s41
      %p47 = scmp.eq.s32.totalorder %s16, 0
      %p48 = por %p46, %p47
      %p49 = scmp.ne.s32.totalorder %s38, %s41
      %p50 = scmp.eq.s32.totalorder %s21, 1
      %p51 = por %p49, %p50
      %p52 = scmp.ne.s32.totalorder %s41, %s42
      %p53 = scmp.eq.s32.totalorder %s21, 0
      %p54 = por %p52, %p53
      %p55 = scmp.ne.s32.totalorder %s41, %s42
      %p56 = scmp.eq.s32.totalorder %s22, 1
      %p57 = por %p55, %p56
      %p59 = scmp.ne.s32.totalorder %s42, %s58
      %p60 = scmp.eq.s32.totalorder %s22, 0
      %p61 = por %p59, %p60
      %s63 = sadd.s32 %s62, 1
      %p66 = scmp.eq.s32.totalorder %s16, 1
      %p67 = scmp.ne.s32.totalorder %s62, %s64
      %p68 = scmp.eq.s32.totalorder %s16, 0
      %p69 = por %p67, %p68
      %p70 = scmp.ne.s32.totalorder %s62, %s64
      %p71 = scmp.eq.s32.totalorder %s21, 1
      %p72 = por %p70, %p71
      %p73 = scmp.ne.s32.totalorder %s64, %s65
      %p74 = scmp.eq.s32.totalorder %s21, 0
      %p75 = por %p73, %p74
      %p76 = scmp.ne.s32.totalorder %s64, %s65
      %p77 = scmp.eq.s32.totalorder %s22, 1
      %p78 = por %p76, %p77
      %p80 = scmp.ne.s32.totalorder %s65, %s79
      %p81 = scmp.eq.s32.totalorder %s22, 0
      %p82 = por %p80, %p81
      %s83 = ssub.s32 %s24, %s31
      %p84 = scmp.eq.s32.totalorder %s83, 0
      %s86 = sadd.s32 %s85, 1
      %s87 = scalar_select %p84, %s85, %s86
      %p90 = pneg %p84
      %p91 = scmp.eq.s32.totalorder %s16, 1
      %p92 = por %p90, %p91
      %p93 = scmp.ne.s32.totalorder %s85, %s88
      %p94 = scmp.eq.s32.totalorder %s16, 0
      %p95 = por %p93, %p94
      %p96 = scmp.ne.s32.totalorder %s85, %s88
      %p97 = scmp.eq.s32.totalorder %s21, 1
      %p98 = por %p96, %p97
      %p99 = scmp.ne.s32.totalorder %s88, %s89
      %p100 = scmp.eq.s32.totalorder %s21, 0
      %p101 = por %p99, %p100
      %p102 = scmp.ne.s32.totalorder %s88, %s89
      %p103 = scmp.eq.s32.totalorder %s22, 1
      %p104 = por %p102, %p103
      %p106 = scmp.ne.s32.totalorder %s89, %s105
      %p107 = scmp.eq.s32.totalorder %s22, 0
      %p108 = por %p106, %p107
      %s109 = ssub.s32 %s23, %s35
      %s110 = ssub.s32 %s24, %s31
      %s111 = sor.u32 %s109, %s110
      %p112 = scmp.eq.s32.totalorder %s111, 0
      %s114 = sadd.s32 %s113, 1
      %s115 = scalar_select %p112, %s113, %s114
      %p118 = pneg %p112
      %p119 = scmp.eq.s32.totalorder %s16, 1
      %p120 = por %p118, %p119
      %p121 = scmp.ne.s32.totalorder %s113, %s116
      %p122 = scmp.eq.s32.totalorder %s16, 0
      %p123 = por %p121, %p122
      %p124 = scmp.ne.s32.totalorder %s113, %s116
      %p125 = scmp.eq.s32.totalorder %s21, 1
      %p126 = por %p124, %p125
      %p127 = scmp.ne.s32.totalorder %s116, %s117
      %p128 = scmp.eq.s32.totalorder %s21, 0
      %p129 = por %p127, %p128
      %p130 = scmp.ne.s32.totalorder %s116, %s117
      %p131 = scmp.eq.s32.totalorder %s22, 1
      %p132 = por %p130, %p131
      %p134 = scmp.ne.s32.totalorder %s117, %s133
      %p135 = scmp.eq.s32.totalorder %s22, 0
      %p136 = por %p134, %p135
      %p137 = scmp.le.s32.totalorder 1, %s16
      %p138 = scmp.lt.s32.totalorder %s16, 3
      %p139 = pnand %p137, %p138
      %p140 = pneg %p139
      // Predicated region
      $region9: #{transformer_forward.17} parent=5 // pred_check
        _
      $region10: #{transformer_forward.17} parent=5 // pred_check_branch
        %142 = sbr.rel (%p139) target = $region12
      $region11: #{transformer_forward.17} parent=5 // pred_region
        %s143 = ssub.s32 %s16, 1
        // Predicated region
        $region13: #{transformer_forward.17} parent=11 // pred_check
          %p144 = pneg %p75
        $region14: #{transformer_forward.17} parent=11 // pred_check_branch
          %146 = sbr.rel (%p144) target = $region16
        $region15: #{transformer_forward.17} parent=11 // pred_region
          %s148 = ssub.s32 32, 32
          %149 = vsyncadd [#allocation7], %s148
          %s151 = sshll.u32 [#allocation6], 4
          %s152 = int_to_ptr.vmem [resolvable:$true] %s151
          %154 = dma.hbm_to_vmem [thread:$0]  %s1, 32, %s152, [#allocation7]
        $region16: #{transformer_forward.17} parent=11 // pred_fallthru
          _
        // Predicated region
        $region17: #{transformer_forward.17} parent=11 // pred_check
          %p155 = pneg %p101
        $region18: #{transformer_forward.17} parent=11 // pred_check_branch
          %157 = sbr.rel (%p155) target = $region20
        $region19: #{transformer_forward.17} parent=11 // pred_region
          %s158 = smul.u32 2, %s26
          %s160 = ssub.s32 4096, 4096
          %161 = vsyncadd [#allocation7], %s160
          %s162 = smul.addr %s158, 64
          %s163 = scalar_lea.hbm %s2, %s162
          %s164 = sshll.u32 [#allocation8], 4
          %s165 = int_to_ptr.vmem [resolvable:$true] %s164
          %170 = dma.hbm_to_vmem [thread:$0]  %s163, 4096, %s165, [#allocation7], 128, 128, 8
        $region20: #{transformer_forward.17} parent=11 // pred_fallthru
          _
      $region12: #{transformer_forward.17} parent=5 // pred_fallthru
        _
      %p171 = scmp.lt.s32.totalorder %s16, 2
      // Predicated region
      $region21: #{transformer_forward.17} parent=5 // pred_check
        %p172 = pneg %p171
      $region22: #{transformer_forward.17} parent=5 // pred_check_branch
        %174 = sbr.rel (%p172) target = $region24
      $region23: #{transformer_forward.17} parent=5 // pred_region
        // Predicated region
        $region25: #{transformer_forward.17} parent=23 // pred_check
          %p175 = pneg %p48
        $region26: #{transformer_forward.17} parent=23 // pred_check_branch
          %177 = sbr.rel (%p175) target = $region28
        $region27: #{transformer_forward.17} parent=23 // pred_region
          %s178 = sand.u32 %s38, 1
          %s179 = scalar_lea.sflag [#allocation4], %s178
          %s180 = sand.u32 %s38, 1
          %s181 = smul.addr %s180, 128
          %s182 = scalar_lea.vmem [#allocation3], %s181
          %s183 = smul.u32 16, %s23
          %s185 = ssub.s32 2048, 2048
          %186 = vsyncadd %s179, %s185
          %s187 = smul.addr %s183, 2
          %s188 = smul.addr %s187, 64
          %s189 = scalar_lea.hbm %s0, %s188
          %s190 = sshll.u32 %s182, 4
          %s191 = int_to_ptr.vmem [resolvable:$true] %s190
          %196 = dma.hbm_to_vmem [thread:$0]  %s189, 2048, %s191, %s179, 128, 128, 8
        $region28: #{transformer_forward.17} parent=23 // pred_fallthru
          _
      $region24: #{transformer_forward.17} parent=5 // pred_fallthru
        _
      %p197 = scmp.le.s32.totalorder 1, %s16
      %p198 = scmp.lt.s32.totalorder %s16, 3
      %p199 = pnand %p197, %p198
      %p200 = pneg %p199
      // Predicated region
      $region29: #{transformer_forward.17} parent=5 // pred_check
        _
      $region30: #{transformer_forward.17} parent=5 // pred_check_branch
        %202 = sbr.rel (%p199) target = $region32
      $region31: #{transformer_forward.17} parent=5 // pred_region
        %s203 = ssub.s32 %s16, 1
        %s204 = sand.u32 %s41, 1
        %s205 = scalar_lea.sflag [#allocation4], %s204
        %s206 = sand.u32 %s41, 1
        %s207 = smul.addr %s206, 128
        %s208 = scalar_lea.vmem [#allocation3], %s207
        // Predicated region
        $region33: #{transformer_forward.17} parent=31 // pred_check
          %p209 = pneg %p54
        $region34: #{transformer_forward.17} parent=31 // pred_check_branch
          %211 = sbr.rel (%p209) target = $region36
        $region35: #{transformer_forward.17} parent=31 // pred_region
          %212 = dma.done %s205, 2048
        $region36: #{transformer_forward.17} parent=31 // pred_fallthru
          _
        // Predicated region
        $region37: #{transformer_forward.17} parent=31 // pred_check
          %p213 = pneg %p75
        $region38: #{transformer_forward.17} parent=31 // pred_check_branch
          %215 = sbr.rel (%p213) target = $region40
        $region39: #{transformer_forward.17} parent=31 // pred_region
          %216 = dma.done [#allocation7], 32
        $region40: #{transformer_forward.17} parent=31 // pred_fallthru
          _
        // Predicated region
        $region41: #{transformer_forward.17} parent=31 // pred_check
          %p217 = pneg %p101
        $region42: #{transformer_forward.17} parent=31 // pred_check_branch
          %219 = sbr.rel (%p217) target = $region44
        $region43: #{transformer_forward.17} parent=31 // pred_region
          %220 = dma.done [#allocation7], 4096
        $region44: #{transformer_forward.17} parent=31 // pred_fallthru
          _
        %s221 = sand.u32 %s41, 1
        %s222 = scalar_lea.sflag [#allocation4], %s221
        %s223 = sand.u32 %s41, 1
        %s224 = smul.addr %s223, 128
        %s225 = scalar_lea.vmem [#allocation3], %s224
        %p226 = pneg %p54
        %p227 = pneg %p51
        %p228 = pneg %p75
        %p229 = pneg %p72
        %p230 = pneg %p101
        %p231 = pneg %p98
        %p232 = pneg %p129
        %p233 = pneg %p126
        %s234 = sand.u32 %s116, 1
        %s235 = scalar_lea.sflag [#allocation5], %s234
        %s236 = sand.u32 %s116, 1
        %s237 = smul.addr %s236, 256
        %s238 = scalar_lea.vmem [#allocation9], %s237
        %s239 = smul.u32 16, %s25
        %s240 = smul.u32 2, %s26
        %s241 = smul.u32 16, %s25
        %s242 = smul.u32 2, %s26
        %p243 = scmp.eq.s32.totalorder %s26, 0
        // Predicated region
        $region45: #{transformer_forward.17} parent=31 // pred_check
          %p244 = pneg %p243
        $region46: #{transformer_forward.17} parent=31 // pred_check_branch
          %246 = sbr.rel (%p244) target = $region48
        $region47: #{transformer_forward.17} parent=31 // pred_region
          %v247 = vld [vmem:[%s208] sm:$0xff]
          %v248 = vld [vmem:[%s208 + $0x8] sm:$0xff]
          %v249 = vld [vmem:[%s208 + $0x10] sm:$0xff]
          %v250 = vld [vmem:[%s208 + $0x18] sm:$0xff]
          %v251 = vld [vmem:[%s208 + $0x20] sm:$0xff]
          %v252 = vld [vmem:[%s208 + $0x28] sm:$0xff]
          %v253 = vld [vmem:[%s208 + $0x30] sm:$0xff]
          %v254 = vld [vmem:[%s208 + $0x38] sm:$0xff]
          %v255 = vld [vmem:[%s208 + $0x40] sm:$0xff]
          %v256 = vld [vmem:[%s208 + $0x48] sm:$0xff]
          %v257 = vld [vmem:[%s208 + $0x50] sm:$0xff]
          %v258 = vld [vmem:[%s208 + $0x58] sm:$0xff]
          %v259 = vld [vmem:[%s208 + $0x60] sm:$0xff]
          %v260 = vld [vmem:[%s208 + $0x68] sm:$0xff]
          %v261 = vld [vmem:[%s208 + $0x70] sm:$0xff]
          %v262 = vld [vmem:[%s208 + $0x78] sm:$0xff]
          %v263 = vunpack.c.l.bf16 %v247
          %v264 = vunpack.c.h.bf16 %v247
          %v265 = vunpack.c.l.bf16 %v248
          %v266 = vunpack.c.h.bf16 %v248
          %v267 = vunpack.c.l.bf16 %v249
          %v268 = vunpack.c.h.bf16 %v249
          %v269 = vunpack.c.l.bf16 %v250
          %v270 = vunpack.c.h.bf16 %v250
          %v271 = vunpack.c.l.bf16 %v251
          %v272 = vunpack.c.h.bf16 %v251
          %v273 = vunpack.c.l.bf16 %v252
          %v274 = vunpack.c.h.bf16 %v252
          %v275 = vunpack.c.l.bf16 %v253
          %v276 = vunpack.c.h.bf16 %v253
          %v277 = vunpack.c.l.bf16 %v254
          %v278 = vunpack.c.h.bf16 %v254
          %v279 = vunpack.c.l.bf16 %v255
          %v280 = vunpack.c.h.bf16 %v255
          %v281 = vunpack.c.l.bf16 %v256
          %v282 = vunpack.c.h.bf16 %v256
          %v283 = vunpack.c.l.bf16 %v257
          %v284 = vunpack.c.h.bf16 %v257
          %v285 = vunpack.c.l.bf16 %v258
          %v286 = vunpack.c.h.bf16 %v258
          %v287 = vunpack.c.l.bf16 %v259
          %v288 = vunpack.c.h.bf16 %v259
          %v289 = vunpack.c.l.bf16 %v260
          %v290 = vunpack.c.h.bf16 %v260
          %v291 = vunpack.c.l.bf16 %v261
          %v292 = vunpack.c.h.bf16 %v261
          %v293 = vunpack.c.l.bf16 %v262
          %v294 = vunpack.c.h.bf16 %v262
          %v295 = vmul.f32 %v263, %v263
          %v296 = vmul.f32 %v264, %v264
          %v297 = vmul.f32 %v265, %v265
          %v298 = vmul.f32 %v266, %v266
          %v299 = vmul.f32 %v267, %v267
          %v300 = vmul.f32 %v268, %v268
          %v301 = vmul.f32 %v269, %v269
          %v302 = vmul.f32 %v270, %v270
          %v303 = vmul.f32 %v271, %v271
          %v304 = vmul.f32 %v272, %v272
          %v305 = vmul.f32 %v273, %v273
          %v306 = vmul.f32 %v274, %v274
          %v307 = vmul.f32 %v275, %v275
          %v308 = vmul.f32 %v276, %v276
          %v309 = vmul.f32 %v277, %v277
          %v310 = vmul.f32 %v278, %v278
          %v311 = vmul.f32 %v279, %v279
          %v312 = vmul.f32 %v280, %v280
          %v313 = vmul.f32 %v281, %v281
          %v314 = vmul.f32 %v282, %v282
          %v315 = vmul.f32 %v283, %v283
          %v316 = vmul.f32 %v284, %v284
          %v317 = vmul.f32 %v285, %v285
          %v318 = vmul.f32 %v286, %v286
          %v319 = vmul.f32 %v287, %v287
          %v320 = vmul.f32 %v288, %v288
          %v321 = vmul.f32 %v289, %v289
          %v322 = vmul.f32 %v290, %v290
          %v323 = vmul.f32 %v291, %v291
          %v324 = vmul.f32 %v292, %v292
          %v325 = vmul.f32 %v293, %v293
          %v326 = vmul.f32 %v294, %v294
          %v327 = vadd.f32 %v295, %v296
          %328 = vadd.xlane.f32.xlu0 %v327
          %v329 = vpop.xlane.xlu0 %328
          %v330 = vadd.f32 %v297, %v298
          %331 = vadd.xlane.f32.xlu0 %v330
          %v332 = vpop.xlane.xlu0 %331
          %v333 = vadd.f32 %v299, %v300
          %334 = vadd.xlane.f32.xlu0 %v333
          %v335 = vpop.xlane.xlu0 %334
          %v336 = vadd.f32 %v301, %v302
          %337 = vadd.xlane.f32.xlu0 %v336
          %v338 = vpop.xlane.xlu0 %337
          %v339 = vadd.f32 %v303, %v304
          %340 = vadd.xlane.f32.xlu0 %v339
          %v341 = vpop.xlane.xlu0 %340
          %v342 = vadd.f32 %v305, %v306
          %343 = vadd.xlane.f32.xlu0 %v342
          %v344 = vpop.xlane.xlu0 %343
          %v345 = vadd.f32 %v307, %v308
          %346 = vadd.xlane.f32.xlu0 %v345
          %v347 = vpop.xlane.xlu0 %346
          %v348 = vadd.f32 %v309, %v310
          %349 = vadd.xlane.f32.xlu0 %v348
          %v350 = vpop.xlane.xlu0 %349
          %v351 = vadd.f32 %v311, %v312
          %352 = vadd.xlane.f32.xlu0 %v351
          %v353 = vpop.xlane.xlu0 %352
          %v354 = vadd.f32 %v313, %v314
          %355 = vadd.xlane.f32.xlu0 %v354
          %v356 = vpop.xlane.xlu0 %355
          %v357 = vadd.f32 %v315, %v316
          %358 = vadd.xlane.f32.xlu0 %v357
          %v359 = vpop.xlane.xlu0 %358
          %v360 = vadd.f32 %v317, %v318
          %361 = vadd.xlane.f32.xlu0 %v360
          %v362 = vpop.xlane.xlu0 %361
          %v363 = vadd.f32 %v319, %v320
          %364 = vadd.xlane.f32.xlu0 %v363
          %v365 = vpop.xlane.xlu0 %364
          %v366 = vadd.f32 %v321, %v322
          %367 = vadd.xlane.f32.xlu0 %v366
          %v368 = vpop.xlane.xlu0 %367
          %v369 = vadd.f32 %v323, %v324
          %370 = vadd.xlane.f32.xlu0 %v369
          %v371 = vpop.xlane.xlu0 %370
          %v372 = vadd.f32 %v325, %v326
          %373 = vadd.xlane.f32.xlu0 %v372
          %v374 = vpop.xlane.xlu0 %373
          %v375 = vrcp.pop 256.0
          %v376 = vmul.f32 %v329, %v375
          %v377 = vmul.f32 %v332, %v375
          %v378 = vmul.f32 %v335, %v375
          %v379 = vmul.f32 %v338, %v375
          %v380 = vmul.f32 %v341, %v375
          %v381 = vmul.f32 %v344, %v375
          %v382 = vmul.f32 %v347, %v375
          %v383 = vmul.f32 %v350, %v375
          %v384 = vmul.f32 %v353, %v375
          %v385 = vmul.f32 %v356, %v375
          %v386 = vmul.f32 %v359, %v375
          %v387 = vmul.f32 %v362, %v375
          %v388 = vmul.f32 %v365, %v375
          %v389 = vmul.f32 %v368, %v375
          %v390 = vmul.f32 %v371, %v375
          %v391 = vmul.f32 %v374, %v375
          %v392 = vadd.f32 %v376, 1e-05
          %v393 = vadd.f32 %v377, 1e-05
          %v394 = vadd.f32 %v378, 1e-05
          %v395 = vadd.f32 %v379, 1e-05
          %v396 = vadd.f32 %v380, 1e-05
          %v397 = vadd.f32 %v381, 1e-05
          %v398 = vadd.f32 %v382, 1e-05
          %v399 = vadd.f32 %v383, 1e-05
          %v400 = vadd.f32 %v384, 1e-05
          %v401 = vadd.f32 %v385, 1e-05
          %v402 = vadd.f32 %v386, 1e-05
          %v403 = vadd.f32 %v387, 1e-05
          %v404 = vadd.f32 %v388, 1e-05
          %v405 = vadd.f32 %v389, 1e-05
          %v406 = vadd.f32 %v390, 1e-05
          %v407 = vadd.f32 %v391, 1e-05
          %v408 = vrsqrt.pop %v392
          %v409 = vrsqrt.pop %v393
          %v410 = vrsqrt.pop %v394
          %v411 = vrsqrt.pop %v395
          %v412 = vrsqrt.pop %v396
          %v413 = vrsqrt.pop %v397
          %v414 = vrsqrt.pop %v398
          %v415 = vrsqrt.pop %v399
          %v416 = vrsqrt.pop %v400
          %v417 = vrsqrt.pop %v401
          %v418 = vrsqrt.pop %v402
          %v419 = vrsqrt.pop %v403
          %v420 = vrsqrt.pop %v404
          %v421 = vrsqrt.pop %v405
          %v422 = vrsqrt.pop %v406
          %v423 = vrsqrt.pop %v407
          %v424 = vmul.f32 %v263, %v408
          %v425 = vmul.f32 %v264, %v408
          %v426 = vmul.f32 %v265, %v409
          %v427 = vmul.f32 %v266, %v409
          %v428 = vmul.f32 %v267, %v410
          %v429 = vmul.f32 %v268, %v410
          %v430 = vmul.f32 %v269, %v411
          %v431 = vmul.f32 %v270, %v411
          %v432 = vmul.f32 %v271, %v412
          %v433 = vmul.f32 %v272, %v412
          %v434 = vmul.f32 %v273, %v413
          %v435 = vmul.f32 %v274, %v413
          %v436 = vmul.f32 %v275, %v414
          %v437 = vmul.f32 %v276, %v414
          %v438 = vmul.f32 %v277, %v415
          %v439 = vmul.f32 %v278, %v415
          %v440 = vmul.f32 %v279, %v416
          %v441 = vmul.f32 %v280, %v416
          %v442 = vmul.f32 %v281, %v417
          %v443 = vmul.f32 %v282, %v417
          %v444 = vmul.f32 %v283, %v418
          %v445 = vmul.f32 %v284, %v418
          %v446 = vmul.f32 %v285, %v419
          %v447 = vmul.f32 %v286, %v419
          %v448 = vmul.f32 %v287, %v420
          %v449 = vmul.f32 %v288, %v420
          %v450 = vmul.f32 %v289, %v421
          %v451 = vmul.f32 %v290, %v421
          %v452 = vmul.f32 %v291, %v422
          %v453 = vmul.f32 %v292, %v422
          %v454 = vmul.f32 %v293, %v423
          %v455 = vmul.f32 %v294, %v423
          %v456 = vld [vmem:[#allocation6] sm:$0x3]
          %v458 = vlaneseq
          %v459 = vshrl.u32 %v458, 7
          %v460 = vsub.s32 0, %v459
          %v461 = vrot.slane %v456, %v460
          %v462 = vlaneseq
          %v463 = vshrl.u32 %v462, 7
          %v464 = vsub.s32 1, %v463
          %v465 = vrot.slane %v456, %v464
          %v468 = vmul.f32 %v424, %v461
          %v469 = vmul.f32 %v425, %v465
          %v470 = vmul.f32 %v426, %v461
          %v471 = vmul.f32 %v427, %v465
          %v472 = vmul.f32 %v428, %v461
          %v473 = vmul.f32 %v429, %v465
          %v474 = vmul.f32 %v430, %v461
          %v475 = vmul.f32 %v431, %v465
          %v476 = vmul.f32 %v432, %v461
          %v477 = vmul.f32 %v433, %v465
          %v478 = vmul.f32 %v434, %v461
          %v479 = vmul.f32 %v435, %v465
          %v480 = vmul.f32 %v436, %v461
          %v481 = vmul.f32 %v437, %v465
          %v482 = vmul.f32 %v438, %v461
          %v483 = vmul.f32 %v439, %v465
          %v484 = vmul.f32 %v440, %v461
          %v485 = vmul.f32 %v441, %v465
          %v486 = vmul.f32 %v442, %v461
          %v487 = vmul.f32 %v443, %v465
          %v488 = vmul.f32 %v444, %v461
          %v489 = vmul.f32 %v445, %v465
          %v490 = vmul.f32 %v446, %v461
          %v491 = vmul.f32 %v447, %v465
          %v492 = vmul.f32 %v448, %v461
          %v493 = vmul.f32 %v449, %v465
          %v494 = vmul.f32 %v450, %v461
          %v495 = vmul.f32 %v451, %v465
          %v496 = vmul.f32 %v452, %v461
          %v497 = vmul.f32 %v453, %v465
          %v498 = vmul.f32 %v454, %v461
          %v499 = vmul.f32 %v455, %v465
          %v500 = vpack.c.bf16 %v470, %v468
          %v501 = vpack.c.bf16 %v471, %v469
          %v502 = vpack.c.bf16 %v474, %v472
          %v503 = vpack.c.bf16 %v475, %v473
          %v504 = vpack.c.bf16 %v478, %v476
          %v505 = vpack.c.bf16 %v479, %v477
          %v506 = vpack.c.bf16 %v482, %v480
          %v507 = vpack.c.bf16 %v483, %v481
          %v508 = vpack.c.bf16 %v486, %v484
          %v509 = vpack.c.bf16 %v487, %v485
          %v510 = vpack.c.bf16 %v490, %v488
          %v511 = vpack.c.bf16 %v491, %v489
          %v512 = vpack.c.bf16 %v494, %v492
          %v513 = vpack.c.bf16 %v495, %v493
          %v514 = vpack.c.bf16 %v498, %v496
          %v515 = vpack.c.bf16 %v499, %v497
          %516 = vst [vmem:[#allocation2] sm:$0xff] %v500
          %517 = vst [vmem:[#allocation2 + $0x8] sm:$0xff] %v501
          %518 = vst [vmem:[#allocation2 + $0x10] sm:$0xff] %v502
          %519 = vst [vmem:[#allocation2 + $0x18] sm:$0xff] %v503
          %520 = vst [vmem:[#allocation2 + $0x20] sm:$0xff] %v504
          %521 = vst [vmem:[#allocation2 + $0x28] sm:$0xff] %v505
          %522 = vst [vmem:[#allocation2 + $0x30] sm:$0xff] %v506
          %523 = vst [vmem:[#allocation2 + $0x38] sm:$0xff] %v507
          %524 = vst [vmem:[#allocation2 + $0x40] sm:$0xff] %v508
          %525 = vst [vmem:[#allocation2 + $0x48] sm:$0xff] %v509
          %526 = vst [vmem:[#allocation2 + $0x50] sm:$0xff] %v510
          %527 = vst [vmem:[#allocation2 + $0x58] sm:$0xff] %v511
          %528 = vst [vmem:[#allocation2 + $0x60] sm:$0xff] %v512
          %529 = vst [vmem:[#allocation2 + $0x68] sm:$0xff] %v513
          %530 = vst [vmem:[#allocation2 + $0x70] sm:$0xff] %v514
          %531 = vst [vmem:[#allocation2 + $0x78] sm:$0xff] %v515
        $region48: #{transformer_forward.17} parent=31 // pred_fallthru
          _
        %v532 = vld [vmem:[#allocation2] sm:$0xff]
        %v533 = vld [vmem:[#allocation2 + $0x8] sm:$0xff]
        %v534 = vld [vmem:[#allocation2 + $0x10] sm:$0xff]
        %v535 = vld [vmem:[#allocation2 + $0x18] sm:$0xff]
        %v536 = vld [vmem:[#allocation2 + $0x20] sm:$0xff]
        %v537 = vld [vmem:[#allocation2 + $0x28] sm:$0xff]
        %v538 = vld [vmem:[#allocation2 + $0x30] sm:$0xff]
        %v539 = vld [vmem:[#allocation2 + $0x38] sm:$0xff]
        %v540 = vld [vmem:[#allocation2 + $0x40] sm:$0xff]
        %v541 = vld [vmem:[#allocation2 + $0x48] sm:$0xff]
        %v542 = vld [vmem:[#allocation2 + $0x50] sm:$0xff]
        %v543 = vld [vmem:[#allocation2 + $0x58] sm:$0xff]
        %v544 = vld [vmem:[#allocation2 + $0x60] sm:$0xff]
        %v545 = vld [vmem:[#allocation2 + $0x68] sm:$0xff]
        %v546 = vld [vmem:[#allocation2 + $0x70] sm:$0xff]
        %v547 = vld [vmem:[#allocation2 + $0x78] sm:$0xff]
        %v548 = vld [vmem:[#allocation8] sm:$0xff]
        %v549 = vld [vmem:[#allocation8 + $0x8] sm:$0xff]
        %v550 = vld [vmem:[#allocation8 + $0x10] sm:$0xff]
        %v551 = vld [vmem:[#allocation8 + $0x18] sm:$0xff]
        %v552 = vld [vmem:[#allocation8 + $0x20] sm:$0xff]
        %v553 = vld [vmem:[#allocation8 + $0x28] sm:$0xff]
        %v554 = vld [vmem:[#allocation8 + $0x30] sm:$0xff]
        %v555 = vld [vmem:[#allocation8 + $0x38] sm:$0xff]
        %v556 = vld [vmem:[#allocation8 + $0x40] sm:$0xff]
        %v557 = vld [vmem:[#allocation8 + $0x48] sm:$0xff]
        %v558 = vld [vmem:[#allocation8 + $0x50] sm:$0xff]
        %v559 = vld [vmem:[#allocation8 + $0x58] sm:$0xff]
        %v560 = vld [vmem:[#allocation8 + $0x60] sm:$0xff]
        %v561 = vld [vmem:[#allocation8 + $0x68] sm:$0xff]
        %v562 = vld [vmem:[#allocation8 + $0x70] sm:$0xff]
        %v563 = vld [vmem:[#allocation8 + $0x78] sm:$0xff]
        %v564 = vld [vmem:[#allocation8 + $0x80] sm:$0xff]
        %v565 = vld [vmem:[#allocation8 + $0x88] sm:$0xff]
        %v566 = vld [vmem:[#allocation8 + $0x90] sm:$0xff]
        %v567 = vld [vmem:[#allocation8 + $0x98] sm:$0xff]
        %v568 = vld [vmem:[#allocation8 + $0xa0] sm:$0xff]
        %v569 = vld [vmem:[#allocation8 + $0xa8] sm:$0xff]
        %v570 = vld [vmem:[#allocation8 + $0xb0] sm:$0xff]
        %v571 = vld [vmem:[#allocation8 + $0xb8] sm:$0xff]
        %v572 = vld [vmem:[#allocation8 + $0xc0] sm:$0xff]
        %v573 = vld [vmem:[#allocation8 + $0xc8] sm:$0xff]
        %v574 = vld [vmem:[#allocation8 + $0xd0] sm:$0xff]
        %v575 = vld [vmem:[#allocation8 + $0xd8] sm:$0xff]
        %v576 = vld [vmem:[#allocation8 + $0xe0] sm:$0xff]
        %v577 = vld [vmem:[#allocation8 + $0xe8] sm:$0xff]
        %v578 = vld [vmem:[#allocation8 + $0xf0] sm:$0xff]
        %v579 = vld [vmem:[#allocation8 + $0xf8] sm:$0xff]
        %v612 = vunpack.c.l.b16 %v548
        %v613 = vunpack.c.h.b16 %v548
        %v614 = vunpack.c.l.b16 %v549
        %v615 = vunpack.c.h.b16 %v549
        %v616 = vunpack.c.l.b16 %v550
        %v617 = vunpack.c.h.b16 %v550
        %v618 = vunpack.c.l.b16 %v551
        %v619 = vunpack.c.h.b16 %v551
        %v620 = vunpack.c.l.b16 %v552
        %v621 = vunpack.c.h.b16 %v552
        %v622 = vunpack.c.l.b16 %v553
        %v623 = vunpack.c.h.b16 %v553
        %v624 = vunpack.c.l.b16 %v554
        %v625 = vunpack.c.h.b16 %v554
        %v626 = vunpack.c.l.b16 %v555
        %v627 = vunpack.c.h.b16 %v555
        %v628 = vunpack.c.l.b16 %v556
        %v629 = vunpack.c.h.b16 %v556
        %v630 = vunpack.c.l.b16 %v557
        %v631 = vunpack.c.h.b16 %v557
        %v632 = vunpack.c.l.b16 %v558
        %v633 = vunpack.c.h.b16 %v558
        %v634 = vunpack.c.l.b16 %v559
        %v635 = vunpack.c.h.b16 %v559
        %v636 = vunpack.c.l.b16 %v560
        %v637 = vunpack.c.h.b16 %v560
        %v638 = vunpack.c.l.b16 %v561
        %v639 = vunpack.c.h.b16 %v561
        %v640 = vunpack.c.l.b16 %v562
        %v641 = vunpack.c.h.b16 %v562
        %v642 = vunpack.c.l.b16 %v563
        %v643 = vunpack.c.h.b16 %v563
        %v644 = vunpack.c.l.b16 %v564
        %v645 = vunpack.c.h.b16 %v564
        %v646 = vunpack.c.l.b16 %v565
        %v647 = vunpack.c.h.b16 %v565
        %v648 = vunpack.c.l.b16 %v566
        %v649 = vunpack.c.h.b16 %v566
        %v650 = vunpack.c.l.b16 %v567
        %v651 = vunpack.c.h.b16 %v567
        %v652 = vunpack.c.l.b16 %v568
        %v653 = vunpack.c.h.b16 %v568
        %v654 = vunpack.c.l.b16 %v569
        %v655 = vunpack.c.h.b16 %v569
        %v656 = vunpack.c.l.b16 %v570
        %v657 = vunpack.c.h.b16 %v570
        %v658 = vunpack.c.l.b16 %v571
        %v659 = vunpack.c.h.b16 %v571
        %v660 = vunpack.c.l.b16 %v572
        %v661 = vunpack.c.h.b16 %v572
        %v662 = vunpack.c.l.b16 %v573
        %v663 = vunpack.c.h.b16 %v573
        %v664 = vunpack.c.l.b16 %v574
        %v665 = vunpack.c.h.b16 %v574
        %v666 = vunpack.c.l.b16 %v575
        %v667 = vunpack.c.h.b16 %v575
        %v668 = vunpack.c.l.b16 %v576
        %v669 = vunpack.c.h.b16 %v576
        %v670 = vunpack.c.l.b16 %v577
        %v671 = vunpack.c.h.b16 %v577
        %v672 = vunpack.c.l.b16 %v578
        %v673 = vunpack.c.h.b16 %v578
        %v674 = vunpack.c.l.b16 %v579
        %v675 = vunpack.c.h.b16 %v579
        %v676 = vpack.c.b16 %v614, %v612
        %v677 = vpack.c.b16 %v615, %v613
        %v678 = vpack.c.b16 %v618, %v616
        %v679 = vpack.c.b16 %v619, %v617
        %v680 = vpack.c.b16 %v622, %v620
        %v681 = vpack.c.b16 %v623, %v621
        %v682 = vpack.c.b16 %v626, %v624
        %v683 = vpack.c.b16 %v627, %v625
        %v684 = vpack.c.b16 %v630, %v628
        %v685 = vpack.c.b16 %v631, %v629
        %v686 = vpack.c.b16 %v634, %v632
        %v687 = vpack.c.b16 %v635, %v633
        %v688 = vpack.c.b16 %v638, %v636
        %v689 = vpack.c.b16 %v639, %v637
        %v690 = vpack.c.b16 %v642, %v640
        %v691 = vpack.c.b16 %v643, %v641
        %v692 = vpack.c.b16 %v646, %v644
        %v693 = vpack.c.b16 %v647, %v645
        %v694 = vpack.c.b16 %v650, %v648
        %v695 = vpack.c.b16 %v651, %v649
        %v696 = vpack.c.b16 %v654, %v652
        %v697 = vpack.c.b16 %v655, %v653
        %v698 = vpack.c.b16 %v658, %v656
        %v699 = vpack.c.b16 %v659, %v657
        %v700 = vpack.c.b16 %v662, %v660
        %v701 = vpack.c.b16 %v663, %v661
        %v702 = vpack.c.b16 %v666, %v664
        %v703 = vpack.c.b16 %v667, %v665
        %v704 = vpack.c.b16 %v670, %v668
        %v705 = vpack.c.b16 %v671, %v669
        %v706 = vpack.c.b16 %v674, %v672
        %v707 = vpack.c.b16 %v675, %v673
        %740 = vmatprep.subr.bf16.mxu0 %v677
        %741 = vmatpush1.bf16.msra.mxu0 %v676
        %742 = vmatprep.subr.bf16.mxu0 %v679
        %743 = vmatpush1.bf16.msra.mxu0 %v678
        %744 = vmatprep.subr.bf16.mxu0 %v681
        %745 = vmatpush1.bf16.msra.mxu0 %v680
        %746 = vmatprep.subr.bf16.mxu0 %v683
        %747 = vmatpush1.bf16.msra.mxu0 %v682
        %748 = vmatprep.subr.bf16.mxu0 %v685
        %749 = vmatpush1.bf16.msra.mxu0 %v684
        %750 = vmatprep.subr.bf16.mxu0 %v687
        %751 = vmatpush1.bf16.msra.mxu0 %v686
        %752 = vmatprep.subr.bf16.mxu0 %v689
        %753 = vmatpush1.bf16.msra.mxu0 %v688
        %754 = vmatprep.subr.bf16.mxu0 %v691
        %755 = vmatpush1.bf16.msra.mxu0 %v690
        %756 = vmatprep.subr.bf16.mxu0 %v693
        %757 = vmatpush1.bf16.msra.mxu0 %v692
        %758 = vmatprep.subr.bf16.mxu0 %v695
        %759 = vmatpush1.bf16.msra.mxu0 %v694
        %760 = vmatprep.subr.bf16.mxu0 %v697
        %761 = vmatpush1.bf16.msra.mxu0 %v696
        %762 = vmatprep.subr.bf16.mxu0 %v699
        %763 = vmatpush1.bf16.msra.mxu0 %v698
        %764 = vmatprep.subr.bf16.mxu0 %v701
        %765 = vmatpush1.bf16.msra.mxu0 %v700
        %766 = vmatprep.subr.bf16.mxu0 %v703
        %767 = vmatpush1.bf16.msra.mxu0 %v702
        %768 = vmatprep.subr.bf16.mxu0 %v705
        %769 = vmatpush1.bf16.msra.mxu0 %v704
        %770 = vmatprep.subr.bf16.mxu0 %v707
        %771 = vmatpush1.bf16.msra.mxu0 %v706
        %772 = vmatprep.mubr.bf16.mxu0 %v533
        %773 = vmatmul.mubr.bf16.gmra.mrb[0].mxu0 %v532
        %v774 = vpop.f32.mrb[0].mxu0
        %v775 = vadd.f32 0.0, %v774
        %v776 = vpop.f32.mrb[0].mxu0
        %v777 = vadd.f32 0.0, %v776
        %v778 = vpop.f32.mrb[0].mxu0
        %v779 = vadd.f32 0.0, %v778
        %v780 = vpop.f32.mrb[0].mxu0
        %v781 = vadd.f32 0.0, %v780
        %782 = vmatprep.mubr.bf16.mxu0 %v535
        %783 = vmatmul.mubr.bf16.gmra.mrb[0].mxu0 %v534
        %v784 = vpop.f32.mrb[0].mxu0
        %v785 = vadd.f32 0.0, %v784
        %v786 = vpop.f32.mrb[0].mxu0
        %v787 = vadd.f32 0.0, %v786
        %v788 = vpop.f32.mrb[0].mxu0
        %v789 = vadd.f32 0.0, %v788
        %v790 = vpop.f32.mrb[0].mxu0
        %v791 = vadd.f32 0.0, %v790
        %792 = vmatprep.mubr.bf16.mxu0 %v537
        %793 = vmatmul.mubr.bf16.gmra.mrb[0].mxu0 %v536
        %v794 = vpop.f32.mrb[0].mxu0
        %v795 = vadd.f32 0.0, %v794
        %v796 = vpop.f32.mrb[0].mxu0
        %v797 = vadd.f32 0.0, %v796
        %v798 = vpop.f32.mrb[0].mxu0
        %v799 = vadd.f32 0.0, %v798
        %v800 = vpop.f32.mrb[0].mxu0
        %v801 = vadd.f32 0.0, %v800
        %802 = vmatprep.mubr.bf16.mxu0 %v539
        %803 = vmatmul.mubr.bf16.gmra.mrb[0].mxu0 %v538
        %v804 = vpop.f32.mrb[0].mxu0
        %v805 = vadd.f32 0.0, %v804
        %v806 = vpop.f32.mrb[0].mxu0
        %v807 = vadd.f32 0.0, %v806
        %v808 = vpop.f32.mrb[0].mxu0
        %v809 = vadd.f32 0.0, %v808
        %v810 = vpop.f32.mrb[0].mxu0
        %v811 = vadd.f32 0.0, %v810
        %812 = vmatprep.mubr.bf16.mxu0 %v541
        %813 = vmatmul.mubr.bf16.gmra.mrb[0].mxu0 %v540
        %v814 = vpop.f32.mrb[0].mxu0
        %v815 = vadd.f32 0.0, %v814
        %v816 = vpop.f32.mrb[0].mxu0
        %v817 = vadd.f32 0.0, %v816
        %v818 = vpop.f32.mrb[0].mxu0
        %v819 = vadd.f32 0.0, %v818
        %v820 = vpop.f32.mrb[0].mxu0
        %v821 = vadd.f32 0.0, %v820
        %822 = vmatprep.mubr.bf16.mxu0 %v543
        %823 = vmatmul.mubr.bf16.gmra.mrb[0].mxu0 %v542
        %v824 = vpop.f32.mrb[0].mxu0
        %v825 = vadd.f32 0.0, %v824
        %v826 = vpop.f32.mrb[0].mxu0
        %v827 = vadd.f32 0.0, %v826
        %v828 = vpop.f32.mrb[0].mxu0
        %v829 = vadd.f32 0.0, %v828
        %v830 = vpop.f32.mrb[0].mxu0
        %v831 = vadd.f32 0.0, %v830
        %832 = vmatprep.mubr.bf16.mxu0 %v545
        %833 = vmatmul.mubr.bf16.gmra.mrb[0].mxu0 %v544
        %v834 = vpop.f32.mrb[0].mxu0
        %v835 = vadd.f32 0.0, %v834
        %v836 = vpop.f32.mrb[0].mxu0
        %v837 = vadd.f32 0.0, %v836
        %v838 = vpop.f32.mrb[0].mxu0
        %v839 = vadd.f32 0.0, %v838
        %v840 = vpop.f32.mrb[0].mxu0
        %v841 = vadd.f32 0.0, %v840
        %842 = vmatprep.mubr.bf16.mxu0 %v547
        %843 = vmatmul.mubr.bf16.gmra.mrb[0].mxu0 %v546
        %v844 = vpop.f32.mrb[0].mxu0
        %v845 = vadd.f32 0.0, %v844
        %v846 = vpop.f32.mrb[0].mxu0
        %v847 = vadd.f32 0.0, %v846
        %v848 = vpop.f32.mrb[0].mxu0
        %v849 = vadd.f32 0.0, %v848
        %v850 = vpop.f32.mrb[0].mxu0
        %v851 = vadd.f32 0.0, %v850
        %852 = vdwg.mxu0
        %853 = vst [vmem:[%s238] sm:$0xff] %v775
        %854 = vst [vmem:[%s238 + $0x8] sm:$0xff] %v777
        %855 = vst [vmem:[%s238 + $0x10] sm:$0xff] %v779
        %856 = vst [vmem:[%s238 + $0x18] sm:$0xff] %v781
        %857 = vst [vmem:[%s238 + $0x20] sm:$0xff] %v785
        %858 = vst [vmem:[%s238 + $0x28] sm:$0xff] %v787
        %859 = vst [vmem:[%s238 + $0x30] sm:$0xff] %v789
        %860 = vst [vmem:[%s238 + $0x38] sm:$0xff] %v791
        %861 = vst [vmem:[%s238 + $0x40] sm:$0xff] %v795
        %862 = vst [vmem:[%s238 + $0x48] sm:$0xff] %v797
        %863 = vst [vmem:[%s238 + $0x50] sm:$0xff] %v799
        %864 = vst [vmem:[%s238 + $0x58] sm:$0xff] %v801
        %865 = vst [vmem:[%s238 + $0x60] sm:$0xff] %v805
        %866 = vst [vmem:[%s238 + $0x68] sm:$0xff] %v807
        %867 = vst [vmem:[%s238 + $0x70] sm:$0xff] %v809
        %868 = vst [vmem:[%s238 + $0x78] sm:$0xff] %v811
        %869 = vst [vmem:[%s238 + $0x80] sm:$0xff] %v815
        %870 = vst [vmem:[%s238 + $0x88] sm:$0xff] %v817
        %871 = vst [vmem:[%s238 + $0x90] sm:$0xff] %v819
        %872 = vst [vmem:[%s238 + $0x98] sm:$0xff] %v821
        %873 = vst [vmem:[%s238 + $0xa0] sm:$0xff] %v825
        %874 = vst [vmem:[%s238 + $0xa8] sm:$0xff] %v827
        %875 = vst [vmem:[%s238 + $0xb0] sm:$0xff] %v829
        %876 = vst [vmem:[%s238 + $0xb8] sm:$0xff] %v831
        %877 = vst [vmem:[%s238 + $0xc0] sm:$0xff] %v835
        %878 = vst [vmem:[%s238 + $0xc8] sm:$0xff] %v837
        %879 = vst [vmem:[%s238 + $0xd0] sm:$0xff] %v839
        %880 = vst [vmem:[%s238 + $0xd8] sm:$0xff] %v841
        %881 = vst [vmem:[%s238 + $0xe0] sm:$0xff] %v845
        %882 = vst [vmem:[%s238 + $0xe8] sm:$0xff] %v847
        %883 = vst [vmem:[%s238 + $0xf0] sm:$0xff] %v849
        %884 = vst [vmem:[%s238 + $0xf8] sm:$0xff] %v851
        %s885 = sand.u32 %s116, 1
        %s886 = scalar_lea.sflag [#allocation5], %s885
        %s887 = sand.u32 %s116, 1
        %s888 = smul.addr %s887, 256
        %s889 = scalar_lea.vmem [#allocation9], %s888
        // Predicated region
        $region49: #{transformer_forward.17} parent=31 // pred_check
          %p890 = pneg %p126
        $region50: #{transformer_forward.17} parent=31 // pred_check_branch
          %892 = sbr.rel (%p890) target = $region52
        $region51: #{transformer_forward.17} parent=31 // pred_region
          %s893 = smul.u32 16, %s25
          %s894 = smul.u32 2, %s26
          %s896 = ssub.s32 4096, 4096
          %897 = vsyncadd %s886, %s896
          %s898 = smul.addr %s893, 2
          %s899 = sadd.s32 %s894, %s898
          %s900 = smul.addr %s899, 128
          %s901 = scalar_lea.hbm %s3, %s900
          %s902 = sshll.u32 %s889, 4
          %s903 = int_to_ptr.vmem [resolvable:$true] %s902
          %908 = dma.vmem_to_hbm [thread:$0]  %s903, 4096, %s901, %s886, 256, 256, 16
        $region52: #{transformer_forward.17} parent=31 // pred_fallthru
          _
      $region32: #{transformer_forward.17} parent=5 // pred_fallthru
        _
      %p909 = scmp.le.s32.totalorder 2, %s16
      // Predicated region
      $region53: #{transformer_forward.17} parent=5 // pred_check
        %p910 = pneg %p909
      $region54: #{transformer_forward.17} parent=5 // pred_check_branch
        %912 = sbr.rel (%p910) target = $region56
      $region55: #{transformer_forward.17} parent=5 // pred_region
        %s913 = ssub.s32 %s16, 2
        // Predicated region
        $region57: #{transformer_forward.17} parent=55 // pred_check
          %p914 = pneg %p132
        $region58: #{transformer_forward.17} parent=55 // pred_check_branch
          %916 = sbr.rel (%p914) target = $region60
        $region59: #{transformer_forward.17} parent=55 // pred_region
          %s917 = sand.u32 %s117, 1
          %s918 = scalar_lea.sflag [#allocation5], %s917
          %s919 = sand.u32 %s117, 1
          %s920 = smul.addr %s919, 256
          %s921 = scalar_lea.vmem [#allocation9], %s920
          %922 = dma.done %s918, 4096
        $region60: #{transformer_forward.17} parent=55 // pred_fallthru
          _
      $region56: #{transformer_forward.17} parent=5 // pred_fallthru
        _
    $region6: #{transformer_forward.17} parent=1 // loop_footer
      %s20 = sadd.s32 1, %s16
    $region7: #{transformer_forward.17} parent=1 // loop_footer_branch
      %15 = sbr.rel target = $region3
    $region8: #{transformer_forward.17} parent=1 // loop_exit
      _
    %923 = vsyncpa [#allocation4], 1
    %s924 = scalar_lea.sflag [#allocation4], 1
    %925 = vsyncpa %s924, 1
    %926 = vsyncpa [#allocation7], 1
    %927 = vsyncpa [#allocation5], 1
    %s928 = scalar_lea.sflag [#allocation5], 1
    %929 = vsyncpa %s928, 1

// kernel: transformer_forward.12
$region0: #{transformer_forward.12}
  #allocation0 [shape = 'u32[]', space=smem, size = 0x4, offset = 0x4, fixed_abs, tag = 'smem constant byte address 0x4 - core index']
  #allocation1 [shape = 'u32[144,128]{1,0:T(1,128)}', space=vmem, size = 0x12000, scoped, tag = 'internal scratch']
  #allocation2 [shape = 'f32[128,256]{1,0:T(8,128)}', space=vmem, size = 0x20000, scoped, tag = 'scratch operand']
  #allocation3 [shape = 'bf16[128,256]{1,0:T(16,128)(2,1)}', space=vmem, size = 0x10000, scoped, tag = 'scratch operand']
  %s0 = inlined_call_operand.hbm [shape: bf16[256,256], index: 0, kind: input, shape index: {}]
  %s1 = inlined_call_operand.hbm [shape: f32[1,256], index: 1, kind: input, shape index: {}]
  %s2 = inlined_call_operand.hbm [shape: bf16[256,768], index: 2, kind: input, shape index: {}]
  %s3 = inlined_call_operand.hbm [shape: bf16[256,768], index: 3, kind: input, shape index: {}]
  %s4 = inlined_call_operand.hbm [shape: bf16[768,256], index: 4, kind: input, shape index: {}]
  %s5 = inlined_call_operand.hbm [shape: bf16[256,256], index: 5, kind: output, shape index: {}]
  %s6 = sld [smem:[#allocation0]]
  $region81: #{transformer_forward.12} parent=0
    _
  %s8 = ssub.s32 1, %s6
  %s9 = scalar_select 0, %s8, %s6
  $region1: #{transformer_forward.12} parent=0
    #allocation4 [shape = 'u8[131072]{0}', space=vmem, size = 0x20000, scoped, tag = 'input window, operand 0']
    #allocation5 [shape = 's32[2]{0}', space=sflag, size = 0x8, scoped, tag = 'scoped memory for transformer_forward.12']
    #allocation6 [shape = 's32[2]{0}', space=sflag, size = 0x8, scoped, tag = 'scoped memory for transformer_forward.12']
    #allocation7 [shape = 'u8[1024]{0}', space=vmem, size = 0x400, scoped, tag = 'input window, operand 1, single buffered']
    #allocation8 [shape = 's32[1]{0}', space=sflag, size = 0x4, scoped, tag = 'scoped memory for transformer_forward.12']
    #allocation9 [shape = 'u8[393216]{0}', space=vmem, size = 0x60000, scoped, tag = 'input window, operand 2, single buffered']
    #allocation10 [shape = 'u8[393216]{0}', space=vmem, size = 0x60000, scoped, tag = 'input window, operand 3, single buffered']
    #allocation11 [shape = 's32[1]{0}', space=sflag, size = 0x4, scoped, tag = 'scoped memory for transformer_forward.12']
    #allocation12 [shape = 'u8[393216]{0}', space=vmem, size = 0x60000, scoped, tag = 'input window, operand 4, single buffered']
    #allocation13 [shape = 'u8[131072]{0}', space=vmem, size = 0x20000, scoped, tag = 'output window, operand 0']
    %10 = vsyncpa [#allocation5], 0
    %s11 = scalar_lea.sflag [#allocation5], 1
    %12 = vsyncpa %s11, 0
    %13 = vsyncpa [#allocation8], 0
    %14 = vsyncpa [#allocation11], 0
    %15 = vsyncpa [#allocation6], 0
    %s16 = scalar_lea.sflag [#allocation6], 1
    %17 = vsyncpa %s16, 0
    loop: start=0, step=1, limit=4
    $region2: #{transformer_forward.12} parent=1 // loop_pre_header
      _
    $region3: #{transformer_forward.12} parent=1 // loop_header
      %s19 = sphi 0, %s23
      %p20 = scmp.ge.s32.totalorder %s19, 4
      %s26 = sphi 0, %s38
      %s27 = sphi 0, %s34
      %s28 = sphi 0, %s26
      %s29 = sphi 0, %s27
      %s30 = sphi 0, %s28
      %s31 = sphi 0, %s29
      %s41 = sphi 0, %s43
      %s44 = sphi 0, %s41
      %s45 = sphi 0, %s44
      %s61 = sphi 0, %s45
      %s65 = sphi 0, %s65
      %s67 = sphi 0, %s65
      %s68 = sphi 0, %s67
      %s82 = sphi 0, %s68
      %s88 = sphi 0, %s90
      %s91 = sphi 0, %s88
      %s92 = sphi 0, %s91
      %s108 = sphi 0, %s92
      %s114 = sphi 0, %s116
      %s117 = sphi 0, %s114
      %s118 = sphi 0, %s117
      %s134 = sphi 0, %s118
      %s140 = sphi 0, %s142
      %s143 = sphi 0, %s140
      %s144 = sphi 0, %s143
      %s160 = sphi 0, %s144
      %s166 = sphi 0, %s168
      %s169 = sphi 0, %s166
      %s170 = sphi 0, %s169
      %s186 = sphi 0, %s170
    $region4: #{transformer_forward.12} parent=1 // loop_header_branch
      %22 = sbr.rel (%p20) target = $region8
    $region5: #{transformer_forward.12} parent=1 // loop_body
      %s24 = ssub.s32 %s19, 1
      %s25 = ssub.s32 %s19, 2
      %s32 = sadd.s32 1, %s27
      %p33 = scmp.ge.s32.totalorder %s32, 1
      %s34 = scalar_select %p33, 0, %s32
      %s35 = sadd.s32 1, %s26
      %s36 = scalar_select %p33, %s35, %s26
      %p37 = scmp.ge.s32.totalorder %s36, 2
      %s38 = scalar_select %p37, 0, %s36
      %s39 = ssub.s32 %s26, %s38
      %p40 = scmp.eq.s32.totalorder %s39, 0
      %s42 = sadd.s32 %s41, 1
      %s43 = scalar_select %p40, %s41, %s42
      %p46 = pneg %p40
      %p47 = scmp.eq.s32.totalorder %s19, 1
      %p48 = por %p46, %p47
      %p49 = scmp.ne.s32.totalorder %s41, %s44
      %p50 = scmp.eq.s32.totalorder %s19, 0
      %p51 = por %p49, %p50
      %p52 = scmp.ne.s32.totalorder %s41, %s44
      %p53 = scmp.eq.s32.totalorder %s24, 1
      %p54 = por %p52, %p53
      %p55 = scmp.ne.s32.totalorder %s44, %s45
      %p56 = scmp.eq.s32.totalorder %s24, 0
      %p57 = por %p55, %p56
      %p58 = scmp.ne.s32.totalorder %s44, %s45
      %p59 = scmp.eq.s32.totalorder %s25, 1
      %p60 = por %p58, %p59
      %p62 = scmp.ne.s32.totalorder %s45, %s61
      %p63 = scmp.eq.s32.totalorder %s25, 0
      %p64 = por %p62, %p63
      %s66 = sadd.s32 %s65, 1
      %p69 = scmp.eq.s32.totalorder %s19, 1
      %p70 = scmp.ne.s32.totalorder %s65, %s67
      %p71 = scmp.eq.s32.totalorder %s19, 0
      %p72 = por %p70, %p71
      %p73 = scmp.ne.s32.totalorder %s65, %s67
      %p74 = scmp.eq.s32.totalorder %s24, 1
      %p75 = por %p73, %p74
      %p76 = scmp.ne.s32.totalorder %s67, %s68
      %p77 = scmp.eq.s32.totalorder %s24, 0
      %p78 = por %p76, %p77
      %p79 = scmp.ne.s32.totalorder %s67, %s68
      %p80 = scmp.eq.s32.totalorder %s25, 1
      %p81 = por %p79, %p80
      %p83 = scmp.ne.s32.totalorder %s68, %s82
      %p84 = scmp.eq.s32.totalorder %s25, 0
      %p85 = por %p83, %p84
      %s86 = ssub.s32 %s27, %s34
      %p87 = scmp.eq.s32.totalorder %s86, 0
      %s89 = sadd.s32 %s88, 1
      %s90 = scalar_select %p87, %s88, %s89
      %p93 = pneg %p87
      %p94 = scmp.eq.s32.totalorder %s19, 1
      %p95 = por %p93, %p94
      %p96 = scmp.ne.s32.totalorder %s88, %s91
      %p97 = scmp.eq.s32.totalorder %s19, 0
      %p98 = por %p96, %p97
      %p99 = scmp.ne.s32.totalorder %s88, %s91
      %p100 = scmp.eq.s32.totalorder %s24, 1
      %p101 = por %p99, %p100
      %p102 = scmp.ne.s32.totalorder %s91, %s92
      %p103 = scmp.eq.s32.totalorder %s24, 0
      %p104 = por %p102, %p103
      %p105 = scmp.ne.s32.totalorder %s91, %s92
      %p106 = scmp.eq.s32.totalorder %s25, 1
      %p107 = por %p105, %p106
      %p109 = scmp.ne.s32.totalorder %s92, %s108
      %p110 = scmp.eq.s32.totalorder %s25, 0
      %p111 = por %p109, %p110
      %s112 = ssub.s32 %s27, %s34
      %p113 = scmp.eq.s32.totalorder %s112, 0
      %s115 = sadd.s32 %s114, 1
      %s116 = scalar_select %p113, %s114, %s115
      %p119 = pneg %p113
      %p120 = scmp.eq.s32.totalorder %s19, 1
      %p121 = por %p119, %p120
      %p122 = scmp.ne.s32.totalorder %s114, %s117
      %p123 = scmp.eq.s32.totalorder %s19, 0
      %p124 = por %p122, %p123
      %p125 = scmp.ne.s32.totalorder %s114, %s117
      %p126 = scmp.eq.s32.totalorder %s24, 1
      %p127 = por %p125, %p126
      %p128 = scmp.ne.s32.totalorder %s117, %s118
      %p129 = scmp.eq.s32.totalorder %s24, 0
      %p130 = por %p128, %p129
      %p131 = scmp.ne.s32.totalorder %s117, %s118
      %p132 = scmp.eq.s32.totalorder %s25, 1
      %p133 = por %p131, %p132
      %p135 = scmp.ne.s32.totalorder %s118, %s134
      %p136 = scmp.eq.s32.totalorder %s25, 0
      %p137 = por %p135, %p136
      %s138 = ssub.s32 %s27, %s34
      %p139 = scmp.eq.s32.totalorder %s138, 0
      %s141 = sadd.s32 %s140, 1
      %s142 = scalar_select %p139, %s140, %s141
      %p145 = pneg %p139
      %p146 = scmp.eq.s32.totalorder %s19, 1
      %p147 = por %p145, %p146
      %p148 = scmp.ne.s32.totalorder %s140, %s143
      %p149 = scmp.eq.s32.totalorder %s19, 0
      %p150 = por %p148, %p149
      %p151 = scmp.ne.s32.totalorder %s140, %s143
      %p152 = scmp.eq.s32.totalorder %s24, 1
      %p153 = por %p151, %p152
      %p154 = scmp.ne.s32.totalorder %s143, %s144
      %p155 = scmp.eq.s32.totalorder %s24, 0
      %p156 = por %p154, %p155
      %p157 = scmp.ne.s32.totalorder %s143, %s144
      %p158 = scmp.eq.s32.totalorder %s25, 1
      %p159 = por %p157, %p158
      %p161 = scmp.ne.s32.totalorder %s144, %s160
      %p162 = scmp.eq.s32.totalorder %s25, 0
      %p163 = por %p161, %p162
      %s164 = ssub.s32 %s26, %s38
      %p165 = scmp.eq.s32.totalorder %s164, 0
      %s167 = sadd.s32 %s166, 1
      %s168 = scalar_select %p165, %s166, %s167
      %p171 = pneg %p165
      %p172 = scmp.eq.s32.totalorder %s19, 1
      %p173 = por %p171, %p172
      %p174 = scmp.ne.s32.totalorder %s166, %s169
      %p175 = scmp.eq.s32.totalorder %s19, 0
      %p176 = por %p174, %p175
      %p177 = scmp.ne.s32.totalorder %s166, %s169
      %p178 = scmp.eq.s32.totalorder %s24, 1
      %p179 = por %p177, %p178
      %p180 = scmp.ne.s32.totalorder %s169, %s170
      %p181 = scmp.eq.s32.totalorder %s24, 0
      %p182 = por %p180, %p181
      %p183 = scmp.ne.s32.totalorder %s169, %s170
      %p184 = scmp.eq.s32.totalorder %s25, 1
      %p185 = por %p183, %p184
      %p187 = scmp.ne.s32.totalorder %s170, %s186
      %p188 = scmp.eq.s32.totalorder %s25, 0
      %p189 = por %p187, %p188
      %p190 = scmp.le.s32.totalorder 1, %s19
      %p191 = scmp.lt.s32.totalorder %s19, 3
      %p192 = pnand %p190, %p191
      %p193 = pneg %p192
      // Predicated region
      $region9: #{transformer_forward.12} parent=5 // pred_check
        _
      $region10: #{transformer_forward.12} parent=5 // pred_check_branch
        %195 = sbr.rel (%p192) target = $region12
      $region11: #{transformer_forward.12} parent=5 // pred_region
        %s196 = ssub.s32 %s19, 1
        // Predicated region
        $region13: #{transformer_forward.12} parent=11 // pred_check
          %p197 = pneg %p78
        $region14: #{transformer_forward.12} parent=11 // pred_check_branch
          %199 = sbr.rel (%p197) target = $region16
        $region15: #{transformer_forward.12} parent=11 // pred_region
          %s201 = ssub.s32 32, 32
          %202 = vsyncadd [#allocation8], %s201
          %s204 = sshll.u32 [#allocation7], 4
          %s205 = int_to_ptr.vmem [resolvable:$true] %s204
          %207 = dma.hbm_to_vmem [thread:$0]  %s1, 32, %s205, [#allocation8]
        $region16: #{transformer_forward.12} parent=11 // pred_fallthru
          _
        // Predicated region
        $region17: #{transformer_forward.12} parent=11 // pred_check
          %p208 = pneg %p104
        $region18: #{transformer_forward.12} parent=11 // pred_check_branch
          %210 = sbr.rel (%p208) target = $region20
        $region19: #{transformer_forward.12} parent=11 // pred_region
          %s211 = smul.u32 6, %s29
          %s213 = ssub.s32 12288, 12288
          %214 = vsyncadd [#allocation8], %s213
          %s215 = smul.addr %s211, 64
          %s216 = scalar_lea.hbm %s2, %s215
          %s217 = sshll.u32 [#allocation9], 4
          %s218 = int_to_ptr.vmem [resolvable:$true] %s217
          %223 = dma.hbm_to_vmem [thread:$0]  %s216, 12288, %s218, [#allocation8], 384, 384, 24
        $region20: #{transformer_forward.12} parent=11 // pred_fallthru
          _
        // Predicated region
        $region21: #{transformer_forward.12} parent=11 // pred_check
          %p224 = pneg %p130
        $region22: #{transformer_forward.12} parent=11 // pred_check_branch
          %226 = sbr.rel (%p224) target = $region24
        $region23: #{transformer_forward.12} parent=11 // pred_region
          %s227 = smul.u32 6, %s29
          %s229 = ssub.s32 12288, 12288
          %230 = vsyncadd [#allocation11], %s229
          %s231 = smul.addr %s227, 64
          %s232 = scalar_lea.hbm %s3, %s231
          %s233 = sshll.u32 [#allocation10], 4
          %s234 = int_to_ptr.vmem [resolvable:$true] %s233
          %239 = dma.hbm_to_vmem [thread:$0]  %s232, 12288, %s234, [#allocation11], 384, 384, 24
        $region24: #{transformer_forward.12} parent=11 // pred_fallthru
          _
        // Predicated region
        $region25: #{transformer_forward.12} parent=11 // pred_check
          %p240 = pneg %p156
        $region26: #{transformer_forward.12} parent=11 // pred_check_branch
          %242 = sbr.rel (%p240) target = $region28
        $region27: #{transformer_forward.12} parent=11 // pred_region
          %s243 = smul.u32 96, %s29
          %s245 = ssub.s32 12288, 12288
          %246 = vsyncadd [#allocation11], %s245
          %s247 = smul.addr %s243, 2
          %s248 = smul.addr %s247, 64
          %s249 = scalar_lea.hbm %s4, %s248
          %s250 = sshll.u32 [#allocation12], 4
          %s251 = int_to_ptr.vmem [resolvable:$true] %s250
          %256 = dma.hbm_to_vmem [thread:$0]  %s249, 12288, %s251, [#allocation11], 128, 128, 8
        $region28: #{transformer_forward.12} parent=11 // pred_fallthru
          _
      $region12: #{transformer_forward.12} parent=5 // pred_fallthru
        _
      %p257 = scmp.lt.s32.totalorder %s19, 2
      // Predicated region
      $region29: #{transformer_forward.12} parent=5 // pred_check
        %p258 = pneg %p257
      $region30: #{transformer_forward.12} parent=5 // pred_check_branch
        %260 = sbr.rel (%p258) target = $region32
      $region31: #{transformer_forward.12} parent=5 // pred_region
        // Predicated region
        $region33: #{transformer_forward.12} parent=31 // pred_check
          %p261 = pneg %p51
        $region34: #{transformer_forward.12} parent=31 // pred_check_branch
          %263 = sbr.rel (%p261) target = $region36
        $region35: #{transformer_forward.12} parent=31 // pred_region
          %s264 = sand.u32 %s41, 1
          %s265 = scalar_lea.sflag [#allocation5], %s264
          %s266 = sand.u32 %s41, 1
          %s267 = smul.addr %s266, 128
          %s268 = scalar_lea.vmem [#allocation4], %s267
          %s269 = smul.u32 16, %s26
          %s271 = ssub.s32 2048, 2048
          %272 = vsyncadd %s265, %s271
          %s273 = smul.addr %s269, 2
          %s274 = smul.addr %s273, 64
          %s275 = scalar_lea.hbm %s0, %s274
          %s276 = sshll.u32 %s268, 4
          %s277 = int_to_ptr.vmem [resolvable:$true] %s276
          %282 = dma.hbm_to_vmem [thread:$0]  %s275, 2048, %s277, %s265, 128, 128, 8
        $region36: #{transformer_forward.12} parent=31 // pred_fallthru
          _
      $region32: #{transformer_forward.12} parent=5 // pred_fallthru
        _
      %p283 = scmp.le.s32.totalorder 1, %s19
      %p284 = scmp.lt.s32.totalorder %s19, 3
      %p285 = pnand %p283, %p284
      %p286 = pneg %p285
      // Predicated region
      $region37: #{transformer_forward.12} parent=5 // pred_check
        _
      $region38: #{transformer_forward.12} parent=5 // pred_check_branch
        %288 = sbr.rel (%p285) target = $region40
      $region39: #{transformer_forward.12} parent=5 // pred_region
        %s289 = ssub.s32 %s19, 1
        %s290 = sand.u32 %s44, 1
        %s291 = scalar_lea.sflag [#allocation5], %s290
        %s292 = sand.u32 %s44, 1
        %s293 = smul.addr %s292, 128
        %s294 = scalar_lea.vmem [#allocation4], %s293
        // Predicated region
        $region41: #{transformer_forward.12} parent=39 // pred_check
          %p295 = pneg %p57
        $region42: #{transformer_forward.12} parent=39 // pred_check_branch
          %297 = sbr.rel (%p295) target = $region44
        $region43: #{transformer_forward.12} parent=39 // pred_region
          %298 = dma.done %s291, 2048
        $region44: #{transformer_forward.12} parent=39 // pred_fallthru
          _
        // Predicated region
        $region45: #{transformer_forward.12} parent=39 // pred_check
          %p299 = pneg %p78
        $region46: #{transformer_forward.12} parent=39 // pred_check_branch
          %301 = sbr.rel (%p299) target = $region48
        $region47: #{transformer_forward.12} parent=39 // pred_region
          %302 = dma.done [#allocation8], 32
        $region48: #{transformer_forward.12} parent=39 // pred_fallthru
          _
        // Predicated region
        $region49: #{transformer_forward.12} parent=39 // pred_check
          %p303 = pneg %p104
        $region50: #{transformer_forward.12} parent=39 // pred_check_branch
          %305 = sbr.rel (%p303) target = $region52
        $region51: #{transformer_forward.12} parent=39 // pred_region
          %306 = dma.done [#allocation8], 12288
        $region52: #{transformer_forward.12} parent=39 // pred_fallthru
          _
        // Predicated region
        $region53: #{transformer_forward.12} parent=39 // pred_check
          %p307 = pneg %p130
        $region54: #{transformer_forward.12} parent=39 // pred_check_branch
          %309 = sbr.rel (%p307) target = $region56
        $region55: #{transformer_forward.12} parent=39 // pred_region
          %310 = dma.done [#allocation11], 12288
        $region56: #{transformer_forward.12} parent=39 // pred_fallthru
          _
        // Predicated region
        $region57: #{transformer_forward.12} parent=39 // pred_check
          %p311 = pneg %p156
        $region58: #{transformer_forward.12} parent=39 // pred_check_branch
          %313 = sbr.rel (%p311) target = $region60
        $region59: #{transformer_forward.12} parent=39 // pred_region
          %314 = dma.done [#allocation11], 12288
        $region60: #{transformer_forward.12} parent=39 // pred_fallthru
          _
        %s315 = sand.u32 %s44, 1
        %s316 = scalar_lea.sflag [#allocation5], %s315
        %s317 = sand.u32 %s44, 1
        %s318 = smul.addr %s317, 128
        %s319 = scalar_lea.vmem [#allocation4], %s318
        %p320 = pneg %p57
        %p321 = pneg %p54
        %p322 = pneg %p78
        %p323 = pneg %p75
        %p324 = pneg %p104
        %p325 = pneg %p101
        %p326 = pneg %p130
        %p327 = pneg %p127
        %p328 = pneg %p156
        %p329 = pneg %p153
        %p330 = pneg %p182
        %p331 = pneg %p179
        %s332 = sand.u32 %s169, 1
        %s333 = scalar_lea.sflag [#allocation6], %s332
        %s334 = sand.u32 %s169, 1
        %s335 = smul.addr %s334, 128
        %s336 = scalar_lea.vmem [#allocation13], %s335
        %s337 = smul.u32 16, %s28
        %s338 = smul.u32 6, %s29
        %s339 = smul.u32 6, %s29
        %s340 = smul.u32 96, %s29
        %s341 = smul.u32 16, %s28
        %p342 = scmp.eq.s32.totalorder %s29, 0
        // Predicated region
        $region61: #{transformer_forward.12} parent=39 // pred_check
          %p343 = pneg %p342
        $region62: #{transformer_forward.12} parent=39 // pred_check_branch
          %345 = sbr.rel (%p343) target = $region64
        $region63: #{transformer_forward.12} parent=39 // pred_region
          %346 = vst [vmem:[#allocation2] sm:$0xff] 0.0
          %347 = vst [vmem:[#allocation2 + $0x8] sm:$0xff] 0.0
          %348 = vst [vmem:[#allocation2 + $0x10] sm:$0xff] 0.0
          %349 = vst [vmem:[#allocation2 + $0x18] sm:$0xff] 0.0
          %350 = vst [vmem:[#allocation2 + $0x20] sm:$0xff] 0.0
          %351 = vst [vmem:[#allocation2 + $0x28] sm:$0xff] 0.0
          %352 = vst [vmem:[#allocation2 + $0x30] sm:$0xff] 0.0
          %353 = vst [vmem:[#allocation2 + $0x38] sm:$0xff] 0.0
          %354 = vst [vmem:[#allocation2 + $0x40] sm:$0xff] 0.0
          %355 = vst [vmem:[#allocation2 + $0x48] sm:$0xff] 0.0
          %356 = vst [vmem:[#allocation2 + $0x50] sm:$0xff] 0.0
          %357 = vst [vmem:[#allocation2 + $0x58] sm:$0xff] 0.0
          %358 = vst [vmem:[#allocation2 + $0x60] sm:$0xff] 0.0
          %359 = vst [vmem:[#allocation2 + $0x68] sm:$0xff] 0.0
          %360 = vst [vmem:[#allocation2 + $0x70] sm:$0xff] 0.0
          %361 = vst [vmem:[#allocation2 + $0x78] sm:$0xff] 0.0
          %362 = vst [vmem:[#allocation2 + $0x80] sm:$0xff] 0.0
          %363 = vst [vmem:[#allocation2 + $0x88] sm:$0xff] 0.0
          %364 = vst [vmem:[#allocation2 + $0x90] sm:$0xff] 0.0
          %365 = vst [vmem:[#allocation2 + $0x98] sm:$0xff] 0.0
          %366 = vst [vmem:[#allocation2 + $0xa0] sm:$0xff] 0.0
          %367 = vst [vmem:[#allocation2 + $0xa8] sm:$0xff] 0.0
          %368 = vst [vmem:[#allocation2 + $0xb0] sm:$0xff] 0.0
          %369 = vst [vmem:[#allocation2 + $0xb8] sm:$0xff] 0.0
          %370 = vst [vmem:[#allocation2 + $0xc0] sm:$0xff] 0.0
          %371 = vst [vmem:[#allocation2 + $0xc8] sm:$0xff] 0.0
          %372 = vst [vmem:[#allocation2 + $0xd0] sm:$0xff] 0.0
          %373 = vst [vmem:[#allocation2 + $0xd8] sm:$0xff] 0.0
          %374 = vst [vmem:[#allocation2 + $0xe0] sm:$0xff] 0.0
          %375 = vst [vmem:[#allocation2 + $0xe8] sm:$0xff] 0.0
          %376 = vst [vmem:[#allocation2 + $0xf0] sm:$0xff] 0.0
          %377 = vst [vmem:[#allocation2 + $0xf8] sm:$0xff] 0.0
          %v378 = vld [vmem:[%s294] sm:$0xff]
          %v379 = vld [vmem:[%s294 + $0x8] sm:$0xff]
          %v380 = vld [vmem:[%s294 + $0x10] sm:$0xff]
          %v381 = vld [vmem:[%s294 + $0x18] sm:$0xff]
          %v382 = vld [vmem:[%s294 + $0x20] sm:$0xff]
          %v383 = vld [vmem:[%s294 + $0x28] sm:$0xff]
          %v384 = vld [vmem:[%s294 + $0x30] sm:$0xff]
          %v385 = vld [vmem:[%s294 + $0x38] sm:$0xff]
          %v386 = vld [vmem:[%s294 + $0x40] sm:$0xff]
          %v387 = vld [vmem:[%s294 + $0x48] sm:$0xff]
          %v388 = vld [vmem:[%s294 + $0x50] sm:$0xff]
          %v389 = vld [vmem:[%s294 + $0x58] sm:$0xff]
          %v390 = vld [vmem:[%s294 + $0x60] sm:$0xff]
          %v391 = vld [vmem:[%s294 + $0x68] sm:$0xff]
          %v392 = vld [vmem:[%s294 + $0x70] sm:$0xff]
          %v393 = vld [vmem:[%s294 + $0x78] sm:$0xff]
          %v394 = vunpack.c.l.bf16 %v378
          %v395 = vunpack.c.h.bf16 %v378
          %v396 = vunpack.c.l.bf16 %v379
          %v397 = vunpack.c.h.bf16 %v379
          %v398 = vunpack.c.l.bf16 %v380
          %v399 = vunpack.c.h.bf16 %v380
          %v400 = vunpack.c.l.bf16 %v381
          %v401 = vunpack.c.h.bf16 %v381
          %v402 = vunpack.c.l.bf16 %v382
          %v403 = vunpack.c.h.bf16 %v382
          %v404 = vunpack.c.l.bf16 %v383
          %v405 = vunpack.c.h.bf16 %v383
          %v406 = vunpack.c.l.bf16 %v384
          %v407 = vunpack.c.h.bf16 %v384
          %v408 = vunpack.c.l.bf16 %v385
          %v409 = vunpack.c.h.bf16 %v385
          %v410 = vunpack.c.l.bf16 %v386
          %v411 = vunpack.c.h.bf16 %v386
          %v412 = vunpack.c.l.bf16 %v387
          %v413 = vunpack.c.h.bf16 %v387
          %v414 = vunpack.c.l.bf16 %v388
          %v415 = vunpack.c.h.bf16 %v388
          %v416 = vunpack.c.l.bf16 %v389
          %v417 = vunpack.c.h.bf16 %v389
          %v418 = vunpack.c.l.bf16 %v390
          %v419 = vunpack.c.h.bf16 %v390
          %v420 = vunpack.c.l.bf16 %v391
          %v421 = vunpack.c.h.bf16 %v391
          %v422 = vunpack.c.l.bf16 %v392
          %v423 = vunpack.c.h.bf16 %v392
          %v424 = vunpack.c.l.bf16 %v393
          %v425 = vunpack.c.h.bf16 %v393
          %v426 = vmul.f32 %v394, %v394
          %v427 = vmul.f32 %v395, %v395
          %v428 = vmul.f32 %v396, %v396
          %v429 = vmul.f32 %v397, %v397
          %v430 = vmul.f32 %v398, %v398
          %v431 = vmul.f32 %v399, %v399
          %v432 = vmul.f32 %v400, %v400
          %v433 = vmul.f32 %v401, %v401
          %v434 = vmul.f32 %v402, %v402
          %v435 = vmul.f32 %v403, %v403
          %v436 = vmul.f32 %v404, %v404
          %v437 = vmul.f32 %v405, %v405
          %v438 = vmul.f32 %v406, %v406
          %v439 = vmul.f32 %v407, %v407
          %v440 = vmul.f32 %v408, %v408
          %v441 = vmul.f32 %v409, %v409
          %v442 = vmul.f32 %v410, %v410
          %v443 = vmul.f32 %v411, %v411
          %v444 = vmul.f32 %v412, %v412
          %v445 = vmul.f32 %v413, %v413
          %v446 = vmul.f32 %v414, %v414
          %v447 = vmul.f32 %v415, %v415
          %v448 = vmul.f32 %v416, %v416
          %v449 = vmul.f32 %v417, %v417
          %v450 = vmul.f32 %v418, %v418
          %v451 = vmul.f32 %v419, %v419
          %v452 = vmul.f32 %v420, %v420
          %v453 = vmul.f32 %v421, %v421
          %v454 = vmul.f32 %v422, %v422
          %v455 = vmul.f32 %v423, %v423
          %v456 = vmul.f32 %v424, %v424
          %v457 = vmul.f32 %v425, %v425
          %v458 = vadd.f32 %v426, %v427
          %459 = vadd.xlane.f32.xlu0 %v458
          %v460 = vpop.xlane.xlu0 %459
          %v461 = vadd.f32 %v428, %v429
          %462 = vadd.xlane.f32.xlu0 %v461
          %v463 = vpop.xlane.xlu0 %462
          %v464 = vadd.f32 %v430, %v431
          %465 = vadd.xlane.f32.xlu0 %v464
          %v466 = vpop.xlane.xlu0 %465
          %v467 = vadd.f32 %v432, %v433
          %468 = vadd.xlane.f32.xlu0 %v467
          %v469 = vpop.xlane.xlu0 %468
          %v470 = vadd.f32 %v434, %v435
          %471 = vadd.xlane.f32.xlu0 %v470
          %v472 = vpop.xlane.xlu0 %471
          %v473 = vadd.f32 %v436, %v437
          %474 = vadd.xlane.f32.xlu0 %v473
          %v475 = vpop.xlane.xlu0 %474
          %v476 = vadd.f32 %v438, %v439
          %477 = vadd.xlane.f32.xlu0 %v476
          %v478 = vpop.xlane.xlu0 %477
          %v479 = vadd.f32 %v440, %v441
          %480 = vadd.xlane.f32.xlu0 %v479
          %v481 = vpop.xlane.xlu0 %480
          %v482 = vadd.f32 %v442, %v443
          %483 = vadd.xlane.f32.xlu0 %v482
          %v484 = vpop.xlane.xlu0 %483
          %v485 = vadd.f32 %v444, %v445
          %486 = vadd.xlane.f32.xlu0 %v485
          %v487 = vpop.xlane.xlu0 %486
          %v488 = vadd.f32 %v446, %v447
          %489 = vadd.xlane.f32.xlu0 %v488
          %v490 = vpop.xlane.xlu0 %489
          %v491 = vadd.f32 %v448, %v449
          %492 = vadd.xlane.f32.xlu0 %v491
          %v493 = vpop.xlane.xlu0 %492
          %v494 = vadd.f32 %v450, %v451
          %495 = vadd.xlane.f32.xlu0 %v494
          %v496 = vpop.xlane.xlu0 %495
          %v497 = vadd.f32 %v452, %v453
          %498 = vadd.xlane.f32.xlu0 %v497
          %v499 = vpop.xlane.xlu0 %498
          %v500 = vadd.f32 %v454, %v455
          %501 = vadd.xlane.f32.xlu0 %v500
          %v502 = vpop.xlane.xlu0 %501
          %v503 = vadd.f32 %v456, %v457
          %504 = vadd.xlane.f32.xlu0 %v503
          %v505 = vpop.xlane.xlu0 %504
          %v506 = vrcp.pop 256.0
          %v507 = vmul.f32 %v460, %v506
          %v508 = vmul.f32 %v463, %v506
          %v509 = vmul.f32 %v466, %v506
          %v510 = vmul.f32 %v469, %v506
          %v511 = vmul.f32 %v472, %v506
          %v512 = vmul.f32 %v475, %v506
          %v513 = vmul.f32 %v478, %v506
          %v514 = vmul.f32 %v481, %v506
          %v515 = vmul.f32 %v484, %v506
          %v516 = vmul.f32 %v487, %v506
          %v517 = vmul.f32 %v490, %v506
          %v518 = vmul.f32 %v493, %v506
          %v519 = vmul.f32 %v496, %v506
          %v520 = vmul.f32 %v499, %v506
          %v521 = vmul.f32 %v502, %v506
          %v522 = vmul.f32 %v505, %v506
          %v523 = vadd.f32 %v507, 1e-05
          %v524 = vadd.f32 %v508, 1e-05
          %v525 = vadd.f32 %v509, 1e-05
          %v526 = vadd.f32 %v510, 1e-05
          %v527 = vadd.f32 %v511, 1e-05
          %v528 = vadd.f32 %v512, 1e-05
          %v529 = vadd.f32 %v513, 1e-05
          %v530 = vadd.f32 %v514, 1e-05
          %v531 = vadd.f32 %v515, 1e-05
          %v532 = vadd.f32 %v516, 1e-05
          %v533 = vadd.f32 %v517, 1e-05
          %v534 = vadd.f32 %v518, 1e-05
          %v535 = vadd.f32 %v519, 1e-05
          %v536 = vadd.f32 %v520, 1e-05
          %v537 = vadd.f32 %v521, 1e-05
          %v538 = vadd.f32 %v522, 1e-05
          %v539 = vrsqrt.pop %v523
          %v540 = vrsqrt.pop %v524
          %v541 = vrsqrt.pop %v525
          %v542 = vrsqrt.pop %v526
          %v543 = vrsqrt.pop %v527
          %v544 = vrsqrt.pop %v528
          %v545 = vrsqrt.pop %v529
          %v546 = vrsqrt.pop %v530
          %v547 = vrsqrt.pop %v531
          %v548 = vrsqrt.pop %v532
          %v549 = vrsqrt.pop %v533
          %v550 = vrsqrt.pop %v534
          %v551 = vrsqrt.pop %v535
          %v552 = vrsqrt.pop %v536
          %v553 = vrsqrt.pop %v537
          %v554 = vrsqrt.pop %v538
          %v555 = vmul.f32 %v394, %v539
          %v556 = vmul.f32 %v395, %v539
          %v557 = vmul.f32 %v396, %v540
          %v558 = vmul.f32 %v397, %v540
          %v559 = vmul.f32 %v398, %v541
          %v560 = vmul.f32 %v399, %v541
          %v561 = vmul.f32 %v400, %v542
          %v562 = vmul.f32 %v401, %v542
          %v563 = vmul.f32 %v402, %v543
          %v564 = vmul.f32 %v403, %v543
          %v565 = vmul.f32 %v404, %v544
          %v566 = vmul.f32 %v405, %v544
          %v567 = vmul.f32 %v406, %v545
          %v568 = vmul.f32 %v407, %v545
          %v569 = vmul.f32 %v408, %v546
          %v570 = vmul.f32 %v409, %v546
          %v571 = vmul.f32 %v410, %v547
          %v572 = vmul.f32 %v411, %v547
          %v573 = vmul.f32 %v412, %v548
          %v574 = vmul.f32 %v413, %v548
          %v575 = vmul.f32 %v414, %v549
          %v576 = vmul.f32 %v415, %v549
          %v577 = vmul.f32 %v416, %v550
          %v578 = vmul.f32 %v417, %v550
          %v579 = vmul.f32 %v418, %v551
          %v580 = vmul.f32 %v419, %v551
          %v581 = vmul.f32 %v420, %v552
          %v582 = vmul.f32 %v421, %v552
          %v583 = vmul.f32 %v422, %v553
          %v584 = vmul.f32 %v423, %v553
          %v585 = vmul.f32 %v424, %v554
          %v586 = vmul.f32 %v425, %v554
          %v587 = vld [vmem:[#allocation7] sm:$0x3]
          %v589 = vlaneseq
          %v590 = vshrl.u32 %v589, 7
          %v591 = vsub.s32 0, %v590
          %v592 = vrot.slane %v587, %v591
          %v593 = vlaneseq
          %v594 = vshrl.u32 %v593, 7
          %v595 = vsub.s32 1, %v594
          %v596 = vrot.slane %v587, %v595
          %v599 = vmul.f32 %v555, %v592
          %v600 = vmul.f32 %v556, %v596
          %v601 = vmul.f32 %v557, %v592
          %v602 = vmul.f32 %v558, %v596
          %v603 = vmul.f32 %v559, %v592
          %v604 = vmul.f32 %v560, %v596
          %v605 = vmul.f32 %v561, %v592
          %v606 = vmul.f32 %v562, %v596
          %v607 = vmul.f32 %v563, %v592
          %v608 = vmul.f32 %v564, %v596
          %v609 = vmul.f32 %v565, %v592
          %v610 = vmul.f32 %v566, %v596
          %v611 = vmul.f32 %v567, %v592
          %v612 = vmul.f32 %v568, %v596
          %v613 = vmul.f32 %v569, %v592
          %v614 = vmul.f32 %v570, %v596
          %v615 = vmul.f32 %v571, %v592
          %v616 = vmul.f32 %v572, %v596
          %v617 = vmul.f32 %v573, %v592
          %v618 = vmul.f32 %v574, %v596
          %v619 = vmul.f32 %v575, %v592
          %v620 = vmul.f32 %v576, %v596
          %v621 = vmul.f32 %v577, %v592
          %v622 = vmul.f32 %v578, %v596
          %v623 = vmul.f32 %v579, %v592
          %v624 = vmul.f32 %v580, %v596
          %v625 = vmul.f32 %v581, %v592
          %v626 = vmul.f32 %v582, %v596
          %v627 = vmul.f32 %v583, %v592
          %v628 = vmul.f32 %v584, %v596
          %v629 = vmul.f32 %v585, %v592
          %v630 = vmul.f32 %v586, %v596
          %v631 = vpack.c.bf16 %v601, %v599
          %v632 = vpack.c.bf16 %v602, %v600
          %v633 = vpack.c.bf16 %v605, %v603
          %v634 = vpack.c.bf16 %v606, %v604
          %v635 = vpack.c.bf16 %v609, %v607
          %v636 = vpack.c.bf16 %v610, %v608
          %v637 = vpack.c.bf16 %v613, %v611
          %v638 = vpack.c.bf16 %v614, %v612
          %v639 = vpack.c.bf16 %v617, %v615
          %v640 = vpack.c.bf16 %v618, %v616
          %v641 = vpack.c.bf16 %v621, %v619
          %v642 = vpack.c.bf16 %v622, %v620
          %v643 = vpack.c.bf16 %v625, %v623
          %v644 = vpack.c.bf16 %v626, %v624
          %v645 = vpack.c.bf16 %v629, %v627
          %v646 = vpack.c.bf16 %v630, %v628
          %647 = vst [vmem:[#allocation3] sm:$0xff] %v631
          %648 = vst [vmem:[#allocation3 + $0x8] sm:$0xff] %v632
          %649 = vst [vmem:[#allocation3 + $0x10] sm:$0xff] %v633
          %650 = vst [vmem:[#allocation3 + $0x18] sm:$0xff] %v634
          %651 = vst [vmem:[#allocation3 + $0x20] sm:$0xff] %v635
          %652 = vst [vmem:[#allocation3 + $0x28] sm:$0xff] %v636
          %653 = vst [vmem:[#allocation3 + $0x30] sm:$0xff] %v637
          %654 = vst [vmem:[#allocation3 + $0x38] sm:$0xff] %v638
          %655 = vst [vmem:[#allocation3 + $0x40] sm:$0xff] %v639
          %656 = vst [vmem:[#allocation3 + $0x48] sm:$0xff] %v640
          %657 = vst [vmem:[#allocation3 + $0x50] sm:$0xff] %v641
          %658 = vst [vmem:[#allocation3 + $0x58] sm:$0xff] %v642
          %659 = vst [vmem:[#allocation3 + $0x60] sm:$0xff] %v643
          %660 = vst [vmem:[#allocation3 + $0x68] sm:$0xff] %v644
          %661 = vst [vmem:[#allocation3 + $0x70] sm:$0xff] %v645
          %662 = vst [vmem:[#allocation3 + $0x78] sm:$0xff] %v646
        $region64: #{transformer_forward.12} parent=39 // pred_fallthru
          _
        %v663 = vld [vmem:[#allocation3] sm:$0xff]
        %v664 = vld [vmem:[#allocation3 + $0x8] sm:$0xff]
        %v665 = vld [vmem:[#allocation3 + $0x10] sm:$0xff]
        %v666 = vld [vmem:[#allocation3 + $0x18] sm:$0xff]
        %v667 = vld [vmem:[#allocation3 + $0x20] sm:$0xff]
        %v668 = vld [vmem:[#allocation3 + $0x28] sm:$0xff]
        %v669 = vld [vmem:[#allocation3 + $0x30] sm:$0xff]
        %v670 = vld [vmem:[#allocation3 + $0x38] sm:$0xff]
        %v671 = vld [vmem:[#allocation3 + $0x40] sm:$0xff]
        %v672 = vld [vmem:[#allocation3 + $0x48] sm:$0xff]
        %v673 = vld [vmem:[#allocation3 + $0x50] sm:$0xff]
        %v674 = vld [vmem:[#allocation3 + $0x58] sm:$0xff]
        %v675 = vld [vmem:[#allocation3 + $0x60] sm:$0xff]
        %v676 = vld [vmem:[#allocation3 + $0x68] sm:$0xff]
        %v677 = vld [vmem:[#allocation3 + $0x70] sm:$0xff]
        %v678 = vld [vmem:[#allocation3 + $0x78] sm:$0xff]
        %v679 = vld [vmem:[#allocation9] sm:$0xff]
        %v680 = vld [vmem:[#allocation9 + $0x8] sm:$0xff]
        %v681 = vld [vmem:[#allocation9 + $0x10] sm:$0xff]
        %v682 = vld [vmem:[#allocation9 + $0x18] sm:$0xff]
        %v683 = vld [vmem:[#allocation9 + $0x20] sm:$0xff]
        %v684 = vld [vmem:[#allocation9 + $0x28] sm:$0xff]
        %v685 = vld [vmem:[#allocation9 + $0x30] sm:$0xff]
        %v686 = vld [vmem:[#allocation9 + $0x38] sm:$0xff]
        %v687 = vld [vmem:[#allocation9 + $0x40] sm:$0xff]
        %v688 = vld [vmem:[#allocation9 + $0x48] sm:$0xff]
        %v689 = vld [vmem:[#allocation9 + $0x50] sm:$0xff]
        %v690 = vld [vmem:[#allocation9 + $0x58] sm:$0xff]
        %v691 = vld [vmem:[#allocation9 + $0x60] sm:$0xff]
        %v692 = vld [vmem:[#allocation9 + $0x68] sm:$0xff]
        %v693 = vld [vmem:[#allocation9 + $0x70] sm:$0xff]
        %v694 = vld [vmem:[#allocation9 + $0x78] sm:$0xff]
        %v695 = vld [vmem:[#allocation9 + $0x80] sm:$0xff]
        %v696 = vld [vmem:[#allocation9 + $0x88] sm:$0xff]
        %v697 = vld [vmem:[#allocation9 + $0x90] sm:$0xff]
        %v698 = vld [vmem:[#allocation9 + $0x98] sm:$0xff]
        %v699 = vld [vmem:[#allocation9 + $0xa0] sm:$0xff]
        %v700 = vld [vmem:[#allocation9 + $0xa8] sm:$0xff]
        %v701 = vld [vmem:[#allocation9 + $0xb0] sm:$0xff]
        %v702 = vld [vmem:[#allocation9 + $0xb8] sm:$0xff]
        %v703 = vld [vmem:[#allocation9 + $0xc0] sm:$0xff]
        %v704 = vld [vmem:[#allocation9 + $0xc8] sm:$0xff]
        %v705 = vld [vmem:[#allocation9 + $0xd0] sm:$0xff]
        %v706 = vld [vmem:[#allocation9 + $0xd8] sm:$0xff]
        %v707 = vld [vmem:[#allocation9 + $0xe0] sm:$0xff]
        %v708 = vld [vmem:[#allocation9 + $0xe8] sm:$0xff]
        %v709 = vld [vmem:[#allocation9 + $0xf0] sm:$0xff]
        %v710 = vld [vmem:[#allocation9 + $0xf8] sm:$0xff]
        %v711 = vld [vmem:[#allocation9 + $0x100] sm:$0xff]
        %v712 = vld [vmem:[#allocation9 + $0x108] sm:$0xff]
        %v713 = vld [vmem:[#allocation9 + $0x110] sm:$0xff]
        %v714 = vld [vmem:[#allocation9 + $0x118] sm:$0xff]
        %v715 = vld [vmem:[#allocation9 + $0x120] sm:$0xff]
        %v716 = vld [vmem:[#allocation9 + $0x128] sm:$0xff]
        %v717 = vld [vmem:[#allocation9 + $0x130] sm:$0xff]
        %v718 = vld [vmem:[#allocation9 + $0x138] sm:$0xff]
        %v719 = vld [vmem:[#allocation9 + $0x140] sm:$0xff]
        %v720 = vld [vmem:[#allocation9 + $0x148] sm:$0xff]
        %v721 = vld [vmem:[#allocation9 + $0x150] sm:$0xff]
        %v722 = vld [vmem:[#allocation9 + $0x158] sm:$0xff]
        %v723 = vld [vmem:[#allocation9 + $0x160] sm:$0xff]
        %v724 = vld [vmem:[#allocation9 + $0x168] sm:$0xff]
        %v725 = vld [vmem:[#allocation9 + $0x170] sm:$0xff]
        %v726 = vld [vmem:[#allocation9 + $0x178] sm:$0xff]
        %v727 = vld [vmem:[#allocation9 + $0x180] sm:$0xff]
        %v728 = vld [vmem:[#allocation9 + $0x188] sm:$0xff]
        %v729 = vld [vmem:[#allocation9 + $0x190] sm:$0xff]
        %v730 = vld [vmem:[#allocation9 + $0x198] sm:$0xff]
        %v731 = vld [vmem:[#allocation9 + $0x1a0] sm:$0xff]
        %v732 = vld [vmem:[#allocation9 + $0x1a8] sm:$0xff]
        %v733 = vld [vmem:[#allocation9 + $0x1b0] sm:$0xff]
        %v734 = vld [vmem:[#allocation9 + $0x1b8] sm:$0xff]
        %v735 = vld [vmem:[#allocation9 + $0x1c0] sm:$0xff]
        %v736 = vld [vmem:[#allocation9 + $0x1c8] sm:$0xff]
        %v737 = vld [vmem:[#allocation9 + $0x1d0] sm:$0xff]
        %v738 = vld [vmem:[#allocation9 + $0x1d8] sm:$0xff]
        %v739 = vld [vmem:[#allocation9 + $0x1e0] sm:$0xff]
        %v740 = vld [vmem:[#allocation9 + $0x1e8] sm:$0xff]
        %v741 = vld [vmem:[#allocation9 + $0x1f0] sm:$0xff]
        %v742 = vld [vmem:[#allocation9 + $0x1f8] sm:$0xff]
        %v743 = vld [vmem:[#allocation9 + $0x200] sm:$0xff]
        %v744 = vld [vmem:[#allocation9 + $0x208] sm:$0xff]
        %v745 = vld [vmem:[#allocation9 + $0x210] sm:$0xff]
        %v746 = vld [vmem:[#allocation9 + $0x218] sm:$0xff]
        %v747 = vld [vmem:[#allocation9 + $0x220] sm:$0xff]
        %v748 = vld [vmem:[#allocation9 + $0x228] sm:$0xff]
        %v749 = vld [vmem:[#allocation9 + $0x230] sm:$0xff]
        %v750 = vld [vmem:[#allocation9 + $0x238] sm:$0xff]
        %v751 = vld [vmem:[#allocation9 + $0x240] sm:$0xff]
        %v752 = vld [vmem:[#allocation9 + $0x248] sm:$0xff]
        %v753 = vld [vmem:[#allocation9 + $0x250] sm:$0xff]
        %v754 = vld [vmem:[#allocation9 + $0x258] sm:$0xff]
        %v755 = vld [vmem:[#allocation9 + $0x260] sm:$0xff]
        %v756 = vld [vmem:[#allocation9 + $0x268] sm:$0xff]
        %v757 = vld [vmem:[#allocation9 + $0x270] sm:$0xff]
        %v758 = vld [vmem:[#allocation9 + $0x278] sm:$0xff]
        %v759 = vld [vmem:[#allocation9 + $0x280] sm:$0xff]
        %v760 = vld [vmem:[#allocation9 + $0x288] sm:$0xff]
        %v761 = vld [vmem:[#allocation9 + $0x290] sm:$0xff]
        %v762 = vld [vmem:[#allocation9 + $0x298] sm:$0xff]
        %v763 = vld [vmem:[#allocation9 + $0x2a0] sm:$0xff]
        %v764 = vld [vmem:[#allocation9 + $0x2a8] sm:$0xff]
        %v765 = vld [vmem:[#allocation9 + $0x2b0] sm:$0xff]
        %v766 = vld [vmem:[#allocation9 + $0x2b8] sm:$0xff]
        %v767 = vld [vmem:[#allocation9 + $0x2c0] sm:$0xff]
        %v768 = vld [vmem:[#allocation9 + $0x2c8] sm:$0xff]
        %v769 = vld [vmem:[#allocation9 + $0x2d0] sm:$0xff]
        %v770 = vld [vmem:[#allocation9 + $0x2d8] sm:$0xff]
        %v771 = vld [vmem:[#allocation9 + $0x2e0] sm:$0xff]
        %v772 = vld [vmem:[#allocation9 + $0x2e8] sm:$0xff]
        %v773 = vld [vmem:[#allocation9 + $0x2f0] sm:$0xff]
        %v774 = vld [vmem:[#allocation9 + $0x2f8] sm:$0xff]
        %v871 = vunpack.c.l.b16 %v679
        %v872 = vunpack.c.h.b16 %v679
        %v873 = vunpack.c.l.b16 %v680
        %v874 = vunpack.c.h.b16 %v680
        %v875 = vunpack.c.l.b16 %v681
        %v876 = vunpack.c.h.b16 %v681
        %v877 = vunpack.c.l.b16 %v682
        %v878 = vunpack.c.h.b16 %v682
        %v879 = vunpack.c.l.b16 %v683
        %v880 = vunpack.c.h.b16 %v683
        %v881 = vunpack.c.l.b16 %v684
        %v882 = vunpack.c.h.b16 %v684
        %v883 = vunpack.c.l.b16 %v685
        %v884 = vunpack.c.h.b16 %v685
        %v885 = vunpack.c.l.b16 %v686
        %v886 = vunpack.c.h.b16 %v686
        %v887 = vunpack.c.l.b16 %v687
        %v888 = vunpack.c.h.b16 %v687
        %v889 = vunpack.c.l.b16 %v688
        %v890 = vunpack.c.h.b16 %v688
        %v891 = vunpack.c.l.b16 %v689
        %v892 = vunpack.c.h.b16 %v689
        %v893 = vunpack.c.l.b16 %v690
        %v894 = vunpack.c.h.b16 %v690
        %v895 = vunpack.c.l.b16 %v691
        %v896 = vunpack.c.h.b16 %v691
        %v897 = vunpack.c.l.b16 %v692
        %v898 = vunpack.c.h.b16 %v692
        %v899 = vunpack.c.l.b16 %v693
        %v900 = vunpack.c.h.b16 %v693
        %v901 = vunpack.c.l.b16 %v694
        %v902 = vunpack.c.h.b16 %v694
        %v903 = vunpack.c.l.b16 %v695
        %v904 = vunpack.c.h.b16 %v695
        %v905 = vunpack.c.l.b16 %v696
        %v906 = vunpack.c.h.b16 %v696
        %v907 = vunpack.c.l.b16 %v697
        %v908 = vunpack.c.h.b16 %v697
        %v909 = vunpack.c.l.b16 %v698
        %v910 = vunpack.c.h.b16 %v698
        %v911 = vunpack.c.l.b16 %v699
        %v912 = vunpack.c.h.b16 %v699
        %v913 = vunpack.c.l.b16 %v700
        %v914 = vunpack.c.h.b16 %v700
        %v915 = vunpack.c.l.b16 %v701
        %v916 = vunpack.c.h.b16 %v701
        %v917 = vunpack.c.l.b16 %v702
        %v918 = vunpack.c.h.b16 %v702
        %v919 = vunpack.c.l.b16 %v703
        %v920 = vunpack.c.h.b16 %v703
        %v921 = vunpack.c.l.b16 %v704
        %v922 = vunpack.c.h.b16 %v704
        %v923 = vunpack.c.l.b16 %v705
        %v924 = vunpack.c.h.b16 %v705
        %v925 = vunpack.c.l.b16 %v706
        %v926 = vunpack.c.h.b16 %v706
        %v927 = vunpack.c.l.b16 %v707
        %v928 = vunpack.c.h.b16 %v707
        %v929 = vunpack.c.l.b16 %v708
        %v930 = vunpack.c.h.b16 %v708
        %v931 = vunpack.c.l.b16 %v709
        %v932 = vunpack.c.h.b16 %v709
        %v933 = vunpack.c.l.b16 %v710
        %v934 = vunpack.c.h.b16 %v710
        %v935 = vunpack.c.l.b16 %v711
        %v936 = vunpack.c.h.b16 %v711
        %v937 = vunpack.c.l.b16 %v712
        %v938 = vunpack.c.h.b16 %v712
        %v939 = vunpack.c.l.b16 %v713
        %v940 = vunpack.c.h.b16 %v713
        %v941 = vunpack.c.l.b16 %v714
        %v942 = vunpack.c.h.b16 %v714
        %v943 = vunpack.c.l.b16 %v715
        %v944 = vunpack.c.h.b16 %v715
        %v945 = vunpack.c.l.b16 %v716
        %v946 = vunpack.c.h.b16 %v716
        %v947 = vunpack.c.l.b16 %v717
        %v948 = vunpack.c.h.b16 %v717
        %v949 = vunpack.c.l.b16 %v718
        %v950 = vunpack.c.h.b16 %v718
        %v951 = vunpack.c.l.b16 %v719
        %v952 = vunpack.c.h.b16 %v719
        %v953 = vunpack.c.l.b16 %v720
        %v954 = vunpack.c.h.b16 %v720
        %v955 = vunpack.c.l.b16 %v721
        %v956 = vunpack.c.h.b16 %v721
        %v957 = vunpack.c.l.b16 %v722
        %v958 = vunpack.c.h.b16 %v722
        %v959 = vunpack.c.l.b16 %v723
        %v960 = vunpack.c.h.b16 %v723
        %v961 = vunpack.c.l.b16 %v724
        %v962 = vunpack.c.h.b16 %v724
        %v963 = vunpack.c.l.b16 %v725
        %v964 = vunpack.c.h.b16 %v725
        %v965 = vunpack.c.l.b16 %v726
        %v966 = vunpack.c.h.b16 %v726
        %v967 = vunpack.c.l.b16 %v727
        %v968 = vunpack.c.h.b16 %v727
        %v969 = vunpack.c.l.b16 %v728
        %v970 = vunpack.c.h.b16 %v728
        %v971 = vunpack.c.l.b16 %v729
        %v972 = vunpack.c.h.b16 %v729
        %v973 = vunpack.c.l.b16 %v730
        %v974 = vunpack.c.h.b16 %v730
        %v975 = vunpack.c.l.b16 %v731
        %v976 = vunpack.c.h.b16 %v731
        %v977 = vunpack.c.l.b16 %v732
        %v978 = vunpack.c.h.b16 %v732
        %v979 = vunpack.c.l.b16 %v733
        %v980 = vunpack.c.h.b16 %v733
        %v981 = vunpack.c.l.b16 %v734
        %v982 = vunpack.c.h.b16 %v734
        %v983 = vunpack.c.l.b16 %v735
        %v984 = vunpack.c.h.b16 %v735
        %v985 = vunpack.c.l.b16 %v736
        %v986 = vunpack.c.h.b16 %v736
        %v987 = vunpack.c.l.b16 %v737
        %v988 = vunpack.c.h.b16 %v737
        %v989 = vunpack.c.l.b16 %v738
        %v990 = vunpack.c.h.b16 %v738
        %v991 = vunpack.c.l.b16 %v739
        %v992 = vunpack.c.h.b16 %v739
        %v993 = vunpack.c.l.b16 %v740
        %v994 = vunpack.c.h.b16 %v740
        %v995 = vunpack.c.l.b16 %v741
        %v996 = vunpack.c.h.b16 %v741
        %v997 = vunpack.c.l.b16 %v742
        %v998 = vunpack.c.h.b16 %v742
        %v999 = vunpack.c.l.b16 %v743
        %v1000 = vunpack.c.h.b16 %v743
        %v1001 = vunpack.c.l.b16 %v744
        %v1002 = vunpack.c.h.b16 %v744
        %v1003 = vunpack.c.l.b16 %v745
        %v1004 = vunpack.c.h.b16 %v745
        %v1005 = vunpack.c.l.b16 %v746
        %v1006 = vunpack.c.h.b16 %v746
        %v1007 = vunpack.c.l.b16 %v747
        %v1008 = vunpack.c.h.b16 %v747
        %v1009 = vunpack.c.l.b16 %v748
        %v1010 = vunpack.c.h.b16 %v748
        %v1011 = vunpack.c.l.b16 %v749
        %v1012 = vunpack.c.h.b16 %v749
        %v1013 = vunpack.c.l.b16 %v750
        %v1014 = vunpack.c.h.b16 %v750
        %v1015 = vunpack.c.l.b16 %v751
        %v1016 = vunpack.c.h.b16 %v751
        %v1017 = vunpack.c.l.b16 %v752
        %v1018 = vunpack.c.h.b16 %v752
        %v1019 = vunpack.c.l.b16 %v753
        %v1020 = vunpack.c.h.b16 %v753
        %v1021 = vunpack.c.l.b16 %v754
        %v1022 = vunpack.c.h.b16 %v754
        %v1023 = vunpack.c.l.b16 %v755
        %v1024 = vunpack.c.h.b16 %v755
        %v1025 = vunpack.c.l.b16 %v756
        %v1026 = vunpack.c.h.b16 %v756
        %v1027 = vunpack.c.l.b16 %v757
        %v1028 = vunpack.c.h.b16 %v757
        %v1029 = vunpack.c.l.b16 %v758
        %v1030 = vunpack.c.h.b16 %v758
        %v1031 = vunpack.c.l.b16 %v759
        %v1032 = vunpack.c.h.b16 %v759
        %v1033 = vunpack.c.l.b16 %v760
        %v1034 = vunpack.c.h.b16 %v760
        %v1035 = vunpack.c.l.b16 %v761
        %v1036 = vunpack.c.h.b16 %v761
        %v1037 = vunpack.c.l.b16 %v762
        %v1038 = vunpack.c.h.b16 %v762
        %v1039 = vunpack.c.l.b16 %v763
        %v1040 = vunpack.c.h.b16 %v763
        %v1041 = vunpack.c.l.b16 %v764
        %v1042 = vunpack.c.h.b16 %v764
        %v1043 = vunpack.c.l.b16 %v765
        %v1044 = vunpack.c.h.b16 %v765
        %v1045 = vunpack.c.l.b16 %v766
        %v1046 = vunpack.c.h.b16 %v766
        %v1047 = vunpack.c.l.b16 %v767
        %v1048 = vunpack.c.h.b16 %v767
        %v1049 = vunpack.c.l.b16 %v768
        %v1050 = vunpack.c.h.b16 %v768
        %v1051 = vunpack.c.l.b16 %v769
        %v1052 = vunpack.c.h.b16 %v769
        %v1053 = vunpack.c.l.b16 %v770
        %v1054 = vunpack.c.h.b16 %v770
        %v1055 = vunpack.c.l.b16 %v771
        %v1056 = vunpack.c.h.b16 %v771
        %v1057 = vunpack.c.l.b16 %v772
        %v1058 = vunpack.c.h.b16 %v772
        %v1059 = vunpack.c.l.b16 %v773
        %v1060 = vunpack.c.h.b16 %v773
        %v1061 = vunpack.c.l.b16 %v774
        %v1062 = vunpack.c.h.b16 %v774
        %v1063 = vpack.c.b16 %v877, %v871
        %v1064 = vpack.c.b16 %v878, %v872
        %v1065 = vpack.c.b16 %v879, %v873
        %v1066 = vpack.c.b16 %v880, %v874
        %v1067 = vpack.c.b16 %v881, %v875
        %v1068 = vpack.c.b16 %v882, %v876
        %v1069 = vpack.c.b16 %v889, %v883
        %v1070 = vpack.c.b16 %v890, %v884
        %v1071 = vpack.c.b16 %v891, %v885
        %v1072 = vpack.c.b16 %v892, %v886
        %v1073 = vpack.c.b16 %v893, %v887
        %v1074 = vpack.c.b16 %v894, %v888
        %v1075 = vpack.c.b16 %v901, %v895
        %v1076 = vpack.c.b16 %v902, %v896
        %v1077 = vpack.c.b16 %v903, %v897
        %v1078 = vpack.c.b16 %v904, %v898
        %v1079 = vpack.c.b16 %v905, %v899
        %v1080 = vpack.c.b16 %v906, %v900
        %v1081 = vpack.c.b16 %v913, %v907
        %v1082 = vpack.c.b16 %v914, %v908
        %v1083 = vpack.c.b16 %v915, %v909
        %v1084 = vpack.c.b16 %v916, %v910
        %v1085 = vpack.c.b16 %v917, %v911
        %v1086 = vpack.c.b16 %v918, %v912
        %v1087 = vpack.c.b16 %v925, %v919
        %v1088 = vpack.c.b16 %v926, %v920
        %v1089 = vpack.c.b16 %v927, %v921
        %v1090 = vpack.c.b16 %v928, %v922
        %v1091 = vpack.c.b16 %v929, %v923
        %v1092 = vpack.c.b16 %v930, %v924
        %v1093 = vpack.c.b16 %v937, %v931
        %v1094 = vpack.c.b16 %v938, %v932
        %v1095 = vpack.c.b16 %v939, %v933
        %v1096 = vpack.c.b16 %v940, %v934
        %v1097 = vpack.c.b16 %v941, %v935
        %v1098 = vpack.c.b16 %v942, %v936
        %v1099 = vpack.c.b16 %v949, %v943
        %v1100 = vpack.c.b16 %v950, %v944
        %v1101 = vpack.c.b16 %v951, %v945
        %v1102 = vpack.c.b16 %v952, %v946
        %v1103 = vpack.c.b16 %v953, %v947
        %v1104 = vpack.c.b16 %v954, %v948
        %v1105 = vpack.c.b16 %v961, %v955
        %v1106 = vpack.c.b16 %v962, %v956
        %v1107 = vpack.c.b16 %v963, %v957
        %v1108 = vpack.c.b16 %v964, %v958
        %v1109 = vpack.c.b16 %v965, %v959
        %v1110 = vpack.c.b16 %v966, %v960
        %v1111 = vpack.c.b16 %v973, %v967
        %v1112 = vpack.c.b16 %v974, %v968
        %v1113 = vpack.c.b16 %v975, %v969
        %v1114 = vpack.c.b16 %v976, %v970
        %v1115 = vpack.c.b16 %v977, %v971
        %v1116 = vpack.c.b16 %v978, %v972
        %v1117 = vpack.c.b16 %v985, %v979
        %v1118 = vpack.c.b16 %v986, %v980
        %v1119 = vpack.c.b16 %v987, %v981
        %v1120 = vpack.c.b16 %v988, %v982
        %v1121 = vpack.c.b16 %v989, %v983
        %v1122 = vpack.c.b16 %v990, %v984
        %v1123 = vpack.c.b16 %v997, %v991
        %v1124 = vpack.c.b16 %v998, %v992
        %v1125 = vpack.c.b16 %v999, %v993
        %v1126 = vpack.c.b16 %v1000, %v994
        %v1127 = vpack.c.b16 %v1001, %v995
        %v1128 = vpack.c.b16 %v1002, %v996
        %v1129 = vpack.c.b16 %v1009, %v1003
        %v1130 = vpack.c.b16 %v1010, %v1004
        %v1131 = vpack.c.b16 %v1011, %v1005
        %v1132 = vpack.c.b16 %v1012, %v1006
        %v1133 = vpack.c.b16 %v1013, %v1007
        %v1134 = vpack.c.b16 %v1014, %v1008
        %v1135 = vpack.c.b16 %v1021, %v1015
        %v1136 = vpack.c.b16 %v1022, %v1016
        %v1137 = vpack.c.b16 %v1023, %v1017
        %v1138 = vpack.c.b16 %v1024, %v1018
        %v1139 = vpack.c.b16 %v1025, %v1019
        %v1140 = vpack.c.b16 %v1026, %v1020
        %v1141 = vpack.c.b16 %v1033, %v1027
        %v1142 = vpack.c.b16 %v1034, %v1028
        %v1143 = vpack.c.b16 %v1035, %v1029
        %v1144 = vpack.c.b16 %v1036, %v1030
        %v1145 = vpack.c.b16 %v1037, %v1031
        %v1146 = vpack.c.b16 %v1038, %v1032
        %v1147 = vpack.c.b16 %v1045, %v1039
        %v1148 = vpack.c.b16 %v1046, %v1040
        %v1149 = vpack.c.b16 %v1047, %v1041
        %v1150 = vpack.c.b16 %v1048, %v1042
        %v1151 = vpack.c.b16 %v1049, %v1043
        %v1152 = vpack.c.b16 %v1050, %v1044
        %v1153 = vpack.c.b16 %v1057, %v1051
        %v1154 = vpack.c.b16 %v1058, %v1052
        %v1155 = vpack.c.b16 %v1059, %v1053
        %v1156 = vpack.c.b16 %v1060, %v1054
        %v1157 = vpack.c.b16 %v1061, %v1055
        %v1158 = vpack.c.b16 %v1062, %v1056
        %1255 = vmatprep.subr.bf16.mxu0 %v1064
        %1256 = vmatpush1.bf16.msra.mxu0 %v1063
        %1257 = vmatprep.subr.bf16.mxu0 %v1070
        %1258 = vmatpush1.bf16.msra.mxu0 %v1069
        %1259 = vmatprep.subr.bf16.mxu0 %v1076
        %1260 = vmatpush1.bf16.msra.mxu0 %v1075
        %1261 = vmatprep.subr.bf16.mxu0 %v1082
        %1262 = vmatpush1.bf16.msra.mxu0 %v1081
        %1263 = vmatprep.subr.bf16.mxu0 %v1088
        %1264 = vmatpush1.bf16.msra.mxu0 %v1087
        %1265 = vmatprep.subr.bf16.mxu0 %v1094
        %1266 = vmatpush1.bf16.msra.mxu0 %v1093
        %1267 = vmatprep.subr.bf16.mxu0 %v1100
        %1268 = vmatpush1.bf16.msra.mxu0 %v1099
        %1269 = vmatprep.subr.bf16.mxu0 %v1106
        %1270 = vmatpush1.bf16.msra.mxu0 %v1105
        %1271 = vmatprep.subr.bf16.mxu0 %v1112
        %1272 = vmatpush1.bf16.msra.mxu0 %v1111
        %1273 = vmatprep.subr.bf16.mxu0 %v1118
        %1274 = vmatpush1.bf16.msra.mxu0 %v1117
        %1275 = vmatprep.subr.bf16.mxu0 %v1124
        %1276 = vmatpush1.bf16.msra.mxu0 %v1123
        %1277 = vmatprep.subr.bf16.mxu0 %v1130
        %1278 = vmatpush1.bf16.msra.mxu0 %v1129
        %1279 = vmatprep.subr.bf16.mxu0 %v1136
        %1280 = vmatpush1.bf16.msra.mxu0 %v1135
        %1281 = vmatprep.subr.bf16.mxu0 %v1142
        %1282 = vmatpush1.bf16.msra.mxu0 %v1141
        %1283 = vmatprep.subr.bf16.mxu0 %v1148
        %1284 = vmatpush1.bf16.msra.mxu0 %v1147
        %1285 = vmatprep.subr.bf16.mxu0 %v1154
        %1286 = vmatpush1.bf16.msra.mxu0 %v1153
        %1287 = vmatprep.mubr.bf16.mxu0 %v664
        %1288 = vmatmul.mubr.bf16.gmra.mrb[0].mxu0 %v663
        %v1289 = vpop.f32.mrb[0].mxu0
        %v1290 = vadd.f32 0.0, %v1289
        %v1291 = vpop.f32.mrb[0].mxu0
        %v1292 = vadd.f32 0.0, %v1291
        %v1293 = vpop.f32.mrb[0].mxu0
        %v1294 = vadd.f32 0.0, %v1293
        %v1295 = vpop.f32.mrb[0].mxu0
        %v1296 = vadd.f32 0.0, %v1295
        %1297 = vmatprep.mubr.bf16.mxu0 %v666
        %1298 = vmatmul.mubr.bf16.gmra.mrb[0].mxu0 %v665
        %v1299 = vpop.f32.mrb[0].mxu0
        %v1300 = vadd.f32 0.0, %v1299
        %v1301 = vpop.f32.mrb[0].mxu0
        %v1302 = vadd.f32 0.0, %v1301
        %v1303 = vpop.f32.mrb[0].mxu0
        %v1304 = vadd.f32 0.0, %v1303
        %v1305 = vpop.f32.mrb[0].mxu0
        %v1306 = vadd.f32 0.0, %v1305
        %1307 = vmatprep.mubr.bf16.mxu0 %v668
        %1308 = vmatmul.mubr.bf16.gmra.mrb[0].mxu0 %v667
        %v1309 = vpop.f32.mrb[0].mxu0
        %v1310 = vadd.f32 0.0, %v1309
        %v1311 = vpop.f32.mrb[0].mxu0
        %v1312 = vadd.f32 0.0, %v1311
        %v1313 = vpop.f32.mrb[0].mxu0
        %v1314 = vadd.f32 0.0, %v1313
        %v1315 = vpop.f32.mrb[0].mxu0
        %v1316 = vadd.f32 0.0, %v1315
        %1317 = vmatprep.mubr.bf16.mxu0 %v670
        %1318 = vmatmul.mubr.bf16.gmra.mrb[0].mxu0 %v669
        %v1319 = vpop.f32.mrb[0].mxu0
        %v1320 = vadd.f32 0.0, %v1319
        %v1321 = vpop.f32.mrb[0].mxu0
        %v1322 = vadd.f32 0.0, %v1321
        %v1323 = vpop.f32.mrb[0].mxu0
        %v1324 = vadd.f32 0.0, %v1323
        %v1325 = vpop.f32.mrb[0].mxu0
        %v1326 = vadd.f32 0.0, %v1325
        %1327 = vmatprep.mubr.bf16.mxu0 %v672
        %1328 = vmatmul.mubr.bf16.gmra.mrb[0].mxu0 %v671
        %v1329 = vpop.f32.mrb[0].mxu0
        %v1330 = vadd.f32 0.0, %v1329
        %v1331 = vpop.f32.mrb[0].mxu0
        %v1332 = vadd.f32 0.0, %v1331
        %v1333 = vpop.f32.mrb[0].mxu0
        %v1334 = vadd.f32 0.0, %v1333
        %v1335 = vpop.f32.mrb[0].mxu0
        %v1336 = vadd.f32 0.0, %v1335
        %1337 = vmatprep.mubr.bf16.mxu0 %v674
        %1338 = vmatmul.mubr.bf16.gmra.mrb[0].mxu0 %v673
        %v1339 = vpop.f32.mrb[0].mxu0
        %v1340 = vadd.f32 0.0, %v1339
        %v1341 = vpop.f32.mrb[0].mxu0
        %v1342 = vadd.f32 0.0, %v1341
        %v1343 = vpop.f32.mrb[0].mxu0
        %v1344 = vadd.f32 0.0, %v1343
        %v1345 = vpop.f32.mrb[0].mxu0
        %v1346 = vadd.f32 0.0, %v1345
        %1347 = vmatprep.mubr.bf16.mxu0 %v676
        %1348 = vmatmul.mubr.bf16.gmra.mrb[0].mxu0 %v675
        %v1349 = vpop.f32.mrb[0].mxu0
        %v1350 = vadd.f32 0.0, %v1349
        %v1351 = vpop.f32.mrb[0].mxu0
        %v1352 = vadd.f32 0.0, %v1351
        %v1353 = vpop.f32.mrb[0].mxu0
        %v1354 = vadd.f32 0.0, %v1353
        %v1355 = vpop.f32.mrb[0].mxu0
        %v1356 = vadd.f32 0.0, %v1355
        %1357 = vmatprep.mubr.bf16.mxu0 %v678
        %1358 = vmatmul.mubr.bf16.gmra.mrb[0].mxu0 %v677
        %v1359 = vpop.f32.mrb[0].mxu0
        %v1360 = vadd.f32 0.0, %v1359
        %v1361 = vpop.f32.mrb[0].mxu0
        %v1362 = vadd.f32 0.0, %v1361
        %v1363 = vpop.f32.mrb[0].mxu0
        %v1364 = vadd.f32 0.0, %v1363
        %v1365 = vpop.f32.mrb[0].mxu0
        %v1366 = vadd.f32 0.0, %v1365
        %1367 = vdwg.mxu0
        %1368 = vmatprep.subr.bf16.mxu0 %v1066
        %1369 = vmatpush1.bf16.msra.mxu0 %v1065
        %1370 = vmatprep.subr.bf16.mxu0 %v1072
        %1371 = vmatpush1.bf16.msra.mxu0 %v1071
        %1372 = vmatprep.subr.bf16.mxu0 %v1078
        %1373 = vmatpush1.bf16.msra.mxu0 %v1077
        %1374 = vmatprep.subr.bf16.mxu0 %v1084
        %1375 = vmatpush1.bf16.msra.mxu0 %v1083
        %1376 = vmatprep.subr.bf16.mxu0 %v1090
        %1377 = vmatpush1.bf16.msra.mxu0 %v1089
        %1378 = vmatprep.subr.bf16.mxu0 %v1096
        %1379 = vmatpush1.bf16.msra.mxu0 %v1095
        %1380 = vmatprep.subr.bf16.mxu0 %v1102
        %1381 = vmatpush1.bf16.msra.mxu0 %v1101
        %1382 = vmatprep.subr.bf16.mxu0 %v1108
        %1383 = vmatpush1.bf16.msra.mxu0 %v1107
        %1384 = vmatprep.subr.bf16.mxu0 %v1114
        %1385 = vmatpush1.bf16.msra.mxu0 %v1113
        %1386 = vmatprep.subr.bf16.mxu0 %v1120
        %1387 = vmatpush1.bf16.msra.mxu0 %v1119
        %1388 = vmatprep.subr.bf16.mxu0 %v1126
        %1389 = vmatpush1.bf16.msra.mxu0 %v1125
        %1390 = vmatprep.subr.bf16.mxu0 %v1132
        %1391 = vmatpush1.bf16.msra.mxu0 %v1131
        %1392 = vmatprep.subr.bf16.mxu0 %v1138
        %1393 = vmatpush1.bf16.msra.mxu0 %v1137
        %1394 = vmatprep.subr.bf16.mxu0 %v1144
        %1395 = vmatpush1.bf16.msra.mxu0 %v1143
        %1396 = vmatprep.subr.bf16.mxu0 %v1150
        %1397 = vmatpush1.bf16.msra.mxu0 %v1149
        %1398 = vmatprep.subr.bf16.mxu0 %v1156
        %1399 = vmatpush1.bf16.msra.mxu0 %v1155
        %1400 = vmatprep.mubr.bf16.mxu0 %v664
        %1401 = vmatmul.mubr.bf16.gmra.mrb[0].mxu0 %v663
        %v1402 = vpop.f32.mrb[0].mxu0
        %v1403 = vadd.f32 0.0, %v1402
        %v1404 = vpop.f32.mrb[0].mxu0
        %v1405 = vadd.f32 0.0, %v1404
        %v1406 = vpop.f32.mrb[0].mxu0
        %v1407 = vadd.f32 0.0, %v1406
        %v1408 = vpop.f32.mrb[0].mxu0
        %v1409 = vadd.f32 0.0, %v1408
        %1410 = vmatprep.mubr.bf16.mxu0 %v666
        %1411 = vmatmul.mubr.bf16.gmra.mrb[0].mxu0 %v665
        %v1412 = vpop.f32.mrb[0].mxu0
        %v1413 = vadd.f32 0.0, %v1412
        %v1414 = vpop.f32.mrb[0].mxu0
        %v1415 = vadd.f32 0.0, %v1414
        %v1416 = vpop.f32.mrb[0].mxu0
        %v1417 = vadd.f32 0.0, %v1416
        %v1418 = vpop.f32.mrb[0].mxu0
        %v1419 = vadd.f32 0.0, %v1418
        %1420 = vmatprep.mubr.bf16.mxu0 %v668
        %1421 = vmatmul.mubr.bf16.gmra.mrb[0].mxu0 %v667
        %v1422 = vpop.f32.mrb[0].mxu0
        %v1423 = vadd.f32 0.0, %v1422
        %v1424 = vpop.f32.mrb[0].mxu0
        %v1425 = vadd.f32 0.0, %v1424
        %v1426 = vpop.f32.mrb[0].mxu0
        %v1427 = vadd.f32 0.0, %v1426
        %v1428 = vpop.f32.mrb[0].mxu0
        %v1429 = vadd.f32 0.0, %v1428
        %1430 = vmatprep.mubr.bf16.mxu0 %v670
        %1431 = vmatmul.mubr.bf16.gmra.mrb[0].mxu0 %v669
        %v1432 = vpop.f32.mrb[0].mxu0
        %v1433 = vadd.f32 0.0, %v1432
        %v1434 = vpop.f32.mrb[0].mxu0
        %v1435 = vadd.f32 0.0, %v1434
        %v1436 = vpop.f32.mrb[0].mxu0
        %v1437 = vadd.f32 0.0, %v1436
        %v1438 = vpop.f32.mrb[0].mxu0
        %v1439 = vadd.f32 0.0, %v1438
        %1440 = vmatprep.mubr.bf16.mxu0 %v672
        %1441 = vmatmul.mubr.bf16.gmra.mrb[0].mxu0 %v671
        %v1442 = vpop.f32.mrb[0].mxu0
        %v1443 = vadd.f32 0.0, %v1442
        %v1444 = vpop.f32.mrb[0].mxu0
        %v1445 = vadd.f32 0.0, %v1444
        %v1446 = vpop.f32.mrb[0].mxu0
        %v1447 = vadd.f32 0.0, %v1446
        %v1448 = vpop.f32.mrb[0].mxu0
        %v1449 = vadd.f32 0.0, %v1448
        %1450 = vmatprep.mubr.bf16.mxu0 %v674
        %1451 = vmatmul.mubr.bf16.gmra.mrb[0].mxu0 %v673
        %v1452 = vpop.f32.mrb[0].mxu0
        %v1453 = vadd.f32 0.0, %v1452
        %v1454 = vpop.f32.mrb[0].mxu0
        %v1455 = vadd.f32 0.0, %v1454
        %v1456 = vpop.f32.mrb[0].mxu0
        %v1457 = vadd.f32 0.0, %v1456
        %v1458 = vpop.f32.mrb[0].mxu0
        %v1459 = vadd.f32 0.0, %v1458
        %1460 = vmatprep.mubr.bf16.mxu0 %v676
        %1461 = vmatmul.mubr.bf16.gmra.mrb[0].mxu0 %v675
        %v1462 = vpop.f32.mrb[0].mxu0
        %v1463 = vadd.f32 0.0, %v1462
        %v1464 = vpop.f32.mrb[0].mxu0
        %v1465 = vadd.f32 0.0, %v1464
        %v1466 = vpop.f32.mrb[0].mxu0
        %v1467 = vadd.f32 0.0, %v1466
        %v1468 = vpop.f32.mrb[0].mxu0
        %v1469 = vadd.f32 0.0, %v1468
        %1470 = vmatprep.mubr.bf16.mxu0 %v678
        %1471 = vmatmul.mubr.bf16.gmra.mrb[0].mxu0 %v677
        %v1472 = vpop.f32.mrb[0].mxu0
        %v1473 = vadd.f32 0.0, %v1472
        %v1474 = vpop.f32.mrb[0].mxu0
        %v1475 = vadd.f32 0.0, %v1474
        %v1476 = vpop.f32.mrb[0].mxu0
        %v1477 = vadd.f32 0.0, %v1476
        %v1478 = vpop.f32.mrb[0].mxu0
        %v1479 = vadd.f32 0.0, %v1478
        %1480 = vdwg.mxu0
        %1481 = vmatprep.subr.bf16.mxu0 %v1068
        %1482 = vmatpush1.bf16.msra.mxu0 %v1067
        %1483 = vmatprep.subr.bf16.mxu0 %v1074
        %1484 = vmatpush1.bf16.msra.mxu0 %v1073
        %1485 = vmatprep.subr.bf16.mxu0 %v1080
        %1486 = vmatpush1.bf16.msra.mxu0 %v1079
        %1487 = vmatprep.subr.bf16.mxu0 %v1086
        %1488 = vmatpush1.bf16.msra.mxu0 %v1085
        %1489 = vmatprep.subr.bf16.mxu0 %v1092
        %1490 = vmatpush1.bf16.msra.mxu0 %v1091
        %1491 = vmatprep.subr.bf16.mxu0 %v1098
        %1492 = vmatpush1.bf16.msra.mxu0 %v1097
        %1493 = vmatprep.subr.bf16.mxu0 %v1104
        %1494 = vmatpush1.bf16.msra.mxu0 %v1103
        %1495 = vmatprep.subr.bf16.mxu0 %v1110
        %1496 = vmatpush1.bf16.msra.mxu0 %v1109
        %1497 = vmatprep.subr.bf16.mxu0 %v1116
        %1498 = vmatpush1.bf16.msra.mxu0 %v1115
        %1499 = vmatprep.subr.bf16.mxu0 %v1122
        %1500 = vmatpush1.bf16.msra.mxu0 %v1121
        %1501 = vmatprep.subr.bf16.mxu0 %v1128
        %1502 = vmatpush1.bf16.msra.mxu0 %v1127
        %1503 = vmatprep.subr.bf16.mxu0 %v1134
        %1504 = vmatpush1.bf16.msra.mxu0 %v1133
        %1505 = vmatprep.subr.bf16.mxu0 %v1140
        %1506 = vmatpush1.bf16.msra.mxu0 %v1139
        %1507 = vmatprep.subr.bf16.mxu0 %v1146
        %1508 = vmatpush1.bf16.msra.mxu0 %v1145
        %1509 = vmatprep.subr.bf16.mxu0 %v1152
        %1510 = vmatpush1.bf16.msra.mxu0 %v1151
        %1511 = vmatprep.subr.bf16.mxu0 %v1158
        %1512 = vmatpush1.bf16.msra.mxu0 %v1157
        %1513 = vmatprep.mubr.bf16.mxu0 %v664
        %1514 = vmatmul.mubr.bf16.gmra.mrb[0].mxu0 %v663
        %v1515 = vpop.f32.mrb[0].mxu0
        %v1516 = vadd.f32 0.0, %v1515
        %v1517 = vpop.f32.mrb[0].mxu0
        %v1518 = vadd.f32 0.0, %v1517
        %v1519 = vpop.f32.mrb[0].mxu0
        %v1520 = vadd.f32 0.0, %v1519
        %v1521 = vpop.f32.mrb[0].mxu0
        %v1522 = vadd.f32 0.0, %v1521
        %1523 = vmatprep.mubr.bf16.mxu0 %v666
        %1524 = vmatmul.mubr.bf16.gmra.mrb[0].mxu0 %v665
        %v1525 = vpop.f32.mrb[0].mxu0
        %v1526 = vadd.f32 0.0, %v1525
        %v1527 = vpop.f32.mrb[0].mxu0
        %v1528 = vadd.f32 0.0, %v1527
        %v1529 = vpop.f32.mrb[0].mxu0
        %v1530 = vadd.f32 0.0, %v1529
        %v1531 = vpop.f32.mrb[0].mxu0
        %v1532 = vadd.f32 0.0, %v1531
        %1533 = vmatprep.mubr.bf16.mxu0 %v668
        %1534 = vmatmul.mubr.bf16.gmra.mrb[0].mxu0 %v667
        %v1535 = vpop.f32.mrb[0].mxu0
        %v1536 = vadd.f32 0.0, %v1535
        %v1537 = vpop.f32.mrb[0].mxu0
        %v1538 = vadd.f32 0.0, %v1537
        %v1539 = vpop.f32.mrb[0].mxu0
        %v1540 = vadd.f32 0.0, %v1539
        %v1541 = vpop.f32.mrb[0].mxu0
        %v1542 = vadd.f32 0.0, %v1541
        %1543 = vmatprep.mubr.bf16.mxu0 %v670
        %1544 = vmatmul.mubr.bf16.gmra.mrb[0].mxu0 %v669
        %v1545 = vpop.f32.mrb[0].mxu0
        %v1546 = vadd.f32 0.0, %v1545
        %v1547 = vpop.f32.mrb[0].mxu0
        %v1548 = vadd.f32 0.0, %v1547
        %v1549 = vpop.f32.mrb[0].mxu0
        %v1550 = vadd.f32 0.0, %v1549
        %v1551 = vpop.f32.mrb[0].mxu0
        %v1552 = vadd.f32 0.0, %v1551
        %1553 = vmatprep.mubr.bf16.mxu0 %v672
        %1554 = vmatmul.mubr.bf16.gmra.mrb[0].mxu0 %v671
        %v1555 = vpop.f32.mrb[0].mxu0
        %v1556 = vadd.f32 0.0, %v1555
        %v1557 = vpop.f32.mrb[0].mxu0
        %v1558 = vadd.f32 0.0, %v1557
        %v1559 = vpop.f32.mrb[0].mxu0
        %v1560 = vadd.f32 0.0, %v1559
        %v1561 = vpop.f32.mrb[0].mxu0
        %v1562 = vadd.f32 0.0, %v1561
        %1563 = vmatprep.mubr.bf16.mxu0 %v674
        %1564 = vmatmul.mubr.bf16.gmra.mrb[0].mxu0 %v673
        %v1565 = vpop.f32.mrb[0].mxu0
        %v1566 = vadd.f32 0.0, %v1565
        %v1567 = vpop.f32.mrb[0].mxu0
        %v1568 = vadd.f32 0.0, %v1567
        %v1569 = vpop.f32.mrb[0].mxu0
        %v1570 = vadd.f32 0.0, %v1569
        %v1571 = vpop.f32.mrb[0].mxu0
        %v1572 = vadd.f32 0.0, %v1571
        %1573 = vmatprep.mubr.bf16.mxu0 %v676
        %1574 = vmatmul.mubr.bf16.gmra.mrb[0].mxu0 %v675
        %v1575 = vpop.f32.mrb[0].mxu0
        %v1576 = vadd.f32 0.0, %v1575
        %v1577 = vpop.f32.mrb[0].mxu0
        %v1578 = vadd.f32 0.0, %v1577
        %v1579 = vpop.f32.mrb[0].mxu0
        %v1580 = vadd.f32 0.0, %v1579
        %v1581 = vpop.f32.mrb[0].mxu0
        %v1582 = vadd.f32 0.0, %v1581
        %1583 = vmatprep.mubr.bf16.mxu0 %v678
        %1584 = vmatmul.mubr.bf16.gmra.mrb[0].mxu0 %v677
        %v1585 = vpop.f32.mrb[0].mxu0
        %v1586 = vadd.f32 0.0, %v1585
        %v1587 = vpop.f32.mrb[0].mxu0
        %v1588 = vadd.f32 0.0, %v1587
        %v1589 = vpop.f32.mrb[0].mxu0
        %v1590 = vadd.f32 0.0, %v1589
        %v1591 = vpop.f32.mrb[0].mxu0
        %v1592 = vadd.f32 0.0, %v1591
        %1593 = vdwg.mxu0
        %v1594 = vld [vmem:[#allocation10] sm:$0xff]
        %v1595 = vld [vmem:[#allocation10 + $0x8] sm:$0xff]
        %v1596 = vld [vmem:[#allocation10 + $0x10] sm:$0xff]
        %v1597 = vld [vmem:[#allocation10 + $0x18] sm:$0xff]
        %v1598 = vld [vmem:[#allocation10 + $0x20] sm:$0xff]
        %v1599 = vld [vmem:[#allocation10 + $0x28] sm:$0xff]
        %v1600 = vld [vmem:[#allocation10 + $0x30] sm:$0xff]
        %v1601 = vld [vmem:[#allocation10 + $0x38] sm:$0xff]
        %v1602 = vld [vmem:[#allocation10 + $0x40] sm:$0xff]
        %v1603 = vld [vmem:[#allocation10 + $0x48] sm:$0xff]
        %v1604 = vld [vmem:[#allocation10 + $0x50] sm:$0xff]
        %v1605 = vld [vmem:[#allocation10 + $0x58] sm:$0xff]
        %v1606 = vld [vmem:[#allocation10 + $0x60] sm:$0xff]
        %v1607 = vld [vmem:[#allocation10 + $0x68] sm:$0xff]
        %v1608 = vld [vmem:[#allocation10 + $0x70] sm:$0xff]
        %v1609 = vld [vmem:[#allocation10 + $0x78] sm:$0xff]
        %v1610 = vld [vmem:[#allocation10 + $0x80] sm:$0xff]
        %v1611 = vld [vmem:[#allocation10 + $0x88] sm:$0xff]
        %v1612 = vld [vmem:[#allocation10 + $0x90] sm:$0xff]
        %v1613 = vld [vmem:[#allocation10 + $0x98] sm:$0xff]
        %v1614 = vld [vmem:[#allocation10 + $0xa0] sm:$0xff]
        %v1615 = vld [vmem:[#allocation10 + $0xa8] sm:$0xff]
        %v1616 = vld [vmem:[#allocation10 + $0xb0] sm:$0xff]
        %v1617 = vld [vmem:[#allocation10 + $0xb8] sm:$0xff]
        %v1618 = vld [vmem:[#allocation10 + $0xc0] sm:$0xff]
        %v1619 = vld [vmem:[#allocation10 + $0xc8] sm:$0xff]
        %v1620 = vld [vmem:[#allocation10 + $0xd0] sm:$0xff]
        %v1621 = vld [vmem:[#allocation10 + $0xd8] sm:$0xff]
        %v1622 = vld [vmem:[#allocation10 + $0xe0] sm:$0xff]
        %v1623 = vld [vmem:[#allocation10 + $0xe8] sm:$0xff]
        %v1624 = vld [vmem:[#allocation10 + $0xf0] sm:$0xff]
        %v1625 = vld [vmem:[#allocation10 + $0xf8] sm:$0xff]
        %v1626 = vld [vmem:[#allocation10 + $0x100] sm:$0xff]
        %v1627 = vld [vmem:[#allocation10 + $0x108] sm:$0xff]
        %v1628 = vld [vmem:[#allocation10 + $0x110] sm:$0xff]
        %v1629 = vld [vmem:[#allocation10 + $0x118] sm:$0xff]
        %v1630 = vld [vmem:[#allocation10 + $0x120] sm:$0xff]
        %v1631 = vld [vmem:[#allocation10 + $0x128] sm:$0xff]
        %v1632 = vld [vmem:[#allocation10 + $0x130] sm:$0xff]
        %v1633 = vld [vmem:[#allocation10 + $0x138] sm:$0xff]
        %v1634 = vld [vmem:[#allocation10 + $0x140] sm:$0xff]
        %v1635 = vld [vmem:[#allocation10 + $0x148] sm:$0xff]
        %v1636 = vld [vmem:[#allocation10 + $0x150] sm:$0xff]
        %v1637 = vld [vmem:[#allocation10 + $0x158] sm:$0xff]
        %v1638 = vld [vmem:[#allocation10 + $0x160] sm:$0xff]
        %v1639 = vld [vmem:[#allocation10 + $0x168] sm:$0xff]
        %v1640 = vld [vmem:[#allocation10 + $0x170] sm:$0xff]
        %v1641 = vld [vmem:[#allocation10 + $0x178] sm:$0xff]
        %v1642 = vld [vmem:[#allocation10 + $0x180] sm:$0xff]
        %v1643 = vld [vmem:[#allocation10 + $0x188] sm:$0xff]
        %v1644 = vld [vmem:[#allocation10 + $0x190] sm:$0xff]
        %v1645 = vld [vmem:[#allocation10 + $0x198] sm:$0xff]
        %v1646 = vld [vmem:[#allocation10 + $0x1a0] sm:$0xff]
        %v1647 = vld [vmem:[#allocation10 + $0x1a8] sm:$0xff]
        %v1648 = vld [vmem:[#allocation10 + $0x1b0] sm:$0xff]
        %v1649 = vld [vmem:[#allocation10 + $0x1b8] sm:$0xff]
        %v1650 = vld [vmem:[#allocation10 + $0x1c0] sm:$0xff]
        %v1651 = vld [vmem:[#allocation10 + $0x1c8] sm:$0xff]
        %v1652 = vld [vmem:[#allocation10 + $0x1d0] sm:$0xff]
        %v1653 = vld [vmem:[#allocation10 + $0x1d8] sm:$0xff]
        %v1654 = vld [vmem:[#allocation10 + $0x1e0] sm:$0xff]
        %v1655 = vld [vmem:[#allocation10 + $0x1e8] sm:$0xff]
        %v1656 = vld [vmem:[#allocation10 + $0x1f0] sm:$0xff]
        %v1657 = vld [vmem:[#allocation10 + $0x1f8] sm:$0xff]
        %v1658 = vld [vmem:[#allocation10 + $0x200] sm:$0xff]
        %v1659 = vld [vmem:[#allocation10 + $0x208] sm:$0xff]
        %v1660 = vld [vmem:[#allocation10 + $0x210] sm:$0xff]
        %v1661 = vld [vmem:[#allocation10 + $0x218] sm:$0xff]
        %v1662 = vld [vmem:[#allocation10 + $0x220] sm:$0xff]
        %v1663 = vld [vmem:[#allocation10 + $0x228] sm:$0xff]
        %v1664 = vld [vmem:[#allocation10 + $0x230] sm:$0xff]
        %v1665 = vld [vmem:[#allocation10 + $0x238] sm:$0xff]
        %v1666 = vld [vmem:[#allocation10 + $0x240] sm:$0xff]
        %v1667 = vld [vmem:[#allocation10 + $0x248] sm:$0xff]
        %v1668 = vld [vmem:[#allocation10 + $0x250] sm:$0xff]
        %v1669 = vld [vmem:[#allocation10 + $0x258] sm:$0xff]
        %v1670 = vld [vmem:[#allocation10 + $0x260] sm:$0xff]
        %v1671 = vld [vmem:[#allocation10 + $0x268] sm:$0xff]
        %v1672 = vld [vmem:[#allocation10 + $0x270] sm:$0xff]
        %v1673 = vld [vmem:[#allocation10 + $0x278] sm:$0xff]
        %v1674 = vld [vmem:[#allocation10 + $0x280] sm:$0xff]
        %v1675 = vld [vmem:[#allocation10 + $0x288] sm:$0xff]
        %v1676 = vld [vmem:[#allocation10 + $0x290] sm:$0xff]
        %v1677 = vld [vmem:[#allocation10 + $0x298] sm:$0xff]
        %v1678 = vld [vmem:[#allocation10 + $0x2a0] sm:$0xff]
        %v1679 = vld [vmem:[#allocation10 + $0x2a8] sm:$0xff]
        %v1680 = vld [vmem:[#allocation10 + $0x2b0] sm:$0xff]
        %v1681 = vld [vmem:[#allocation10 + $0x2b8] sm:$0xff]
        %v1682 = vld [vmem:[#allocation10 + $0x2c0] sm:$0xff]
        %v1683 = vld [vmem:[#allocation10 + $0x2c8] sm:$0xff]
        %v1684 = vld [vmem:[#allocation10 + $0x2d0] sm:$0xff]
        %v1685 = vld [vmem:[#allocation10 + $0x2d8] sm:$0xff]
        %v1686 = vld [vmem:[#allocation10 + $0x2e0] sm:$0xff]
        %v1687 = vld [vmem:[#allocation10 + $0x2e8] sm:$0xff]
        %v1688 = vld [vmem:[#allocation10 + $0x2f0] sm:$0xff]
        %v1689 = vld [vmem:[#allocation10 + $0x2f8] sm:$0xff]
        %v1786 = vunpack.c.l.b16 %v1594
        %v1787 = vunpack.c.h.b16 %v1594
        %v1788 = vunpack.c.l.b16 %v1595
        %v1789 = vunpack.c.h.b16 %v1595
        %v1790 = vunpack.c.l.b16 %v1596
        %v1791 = vunpack.c.h.b16 %v1596
        %v1792 = vunpack.c.l.b16 %v1597
        %v1793 = vunpack.c.h.b16 %v1597
        %v1794 = vunpack.c.l.b16 %v1598
        %v1795 = vunpack.c.h.b16 %v1598
        %v1796 = vunpack.c.l.b16 %v1599
        %v1797 = vunpack.c.h.b16 %v1599
        %v1798 = vunpack.c.l.b16 %v1600
        %v1799 = vunpack.c.h.b16 %v1600
        %v1800 = vunpack.c.l.b16 %v1601
        %v1801 = vunpack.c.h.b16 %v1601
        %v1802 = vunpack.c.l.b16 %v1602
        %v1803 = vunpack.c.h.b16 %v1602
        %v1804 = vunpack.c.l.b16 %v1603
        %v1805 = vunpack.c.h.b16 %v1603
        %v1806 = vunpack.c.l.b16 %v1604
        %v1807 = vunpack.c.h.b16 %v1604
        %v1808 = vunpack.c.l.b16 %v1605
        %v1809 = vunpack.c.h.b16 %v1605
        %v1810 = vunpack.c.l.b16 %v1606
        %v1811 = vunpack.c.h.b16 %v1606
        %v1812 = vunpack.c.l.b16 %v1607
        %v1813 = vunpack.c.h.b16 %v1607
        %v1814 = vunpack.c.l.b16 %v1608
        %v1815 = vunpack.c.h.b16 %v1608
        %v1816 = vunpack.c.l.b16 %v1609
        %v1817 = vunpack.c.h.b16 %v1609
        %v1818 = vunpack.c.l.b16 %v1610
        %v1819 = vunpack.c.h.b16 %v1610
        %v1820 = vunpack.c.l.b16 %v1611
        %v1821 = vunpack.c.h.b16 %v1611
        %v1822 = vunpack.c.l.b16 %v1612
        %v1823 = vunpack.c.h.b16 %v1612
        %v1824 = vunpack.c.l.b16 %v1613
        %v1825 = vunpack.c.h.b16 %v1613
        %v1826 = vunpack.c.l.b16 %v1614
        %v1827 = vunpack.c.h.b16 %v1614
        %v1828 = vunpack.c.l.b16 %v1615
        %v1829 = vunpack.c.h.b16 %v1615
        %v1830 = vunpack.c.l.b16 %v1616
        %v1831 = vunpack.c.h.b16 %v1616
        %v1832 = vunpack.c.l.b16 %v1617
        %v1833 = vunpack.c.h.b16 %v1617
        %v1834 = vunpack.c.l.b16 %v1618
        %v1835 = vunpack.c.h.b16 %v1618
        %v1836 = vunpack.c.l.b16 %v1619
        %v1837 = vunpack.c.h.b16 %v1619
        %v1838 = vunpack.c.l.b16 %v1620
        %v1839 = vunpack.c.h.b16 %v1620
        %v1840 = vunpack.c.l.b16 %v1621
        %v1841 = vunpack.c.h.b16 %v1621
        %v1842 = vunpack.c.l.b16 %v1622
        %v1843 = vunpack.c.h.b16 %v1622
        %v1844 = vunpack.c.l.b16 %v1623
        %v1845 = vunpack.c.h.b16 %v1623
        %v1846 = vunpack.c.l.b16 %v1624
        %v1847 = vunpack.c.h.b16 %v1624
        %v1848 = vunpack.c.l.b16 %v1625
        %v1849 = vunpack.c.h.b16 %v1625
        %v1850 = vunpack.c.l.b16 %v1626
        %v1851 = vunpack.c.h.b16 %v1626
        %v1852 = vunpack.c.l.b16 %v1627
        %v1853 = vunpack.c.h.b16 %v1627
        %v1854 = vunpack.c.l.b16 %v1628
        %v1855 = vunpack.c.h.b16 %v1628
        %v1856 = vunpack.c.l.b16 %v1629
        %v1857 = vunpack.c.h.b16 %v1629
        %v1858 = vunpack.c.l.b16 %v1630
        %v1859 = vunpack.c.h.b16 %v1630
        %v1860 = vunpack.c.l.b16 %v1631
        %v1861 = vunpack.c.h.b16 %v1631
        %v1862 = vunpack.c.l.b16 %v1632
        %v1863 = vunpack.c.h.b16 %v1632
        %v1864 = vunpack.c.l.b16 %v1633
        %v1865 = vunpack.c.h.b16 %v1633
        %v1866 = vunpack.c.l.b16 %v1634
        %v1867 = vunpack.c.h.b16 %v1634
        %v1868 = vunpack.c.l.b16 %v1635
        %v1869 = vunpack.c.h.b16 %v1635
        %v1870 = vunpack.c.l.b16 %v1636
        %v1871 = vunpack.c.h.b16 %v1636
        %v1872 = vunpack.c.l.b16 %v1637
        %v1873 = vunpack.c.h.b16 %v1637
        %v1874 = vunpack.c.l.b16 %v1638
        %v1875 = vunpack.c.h.b16 %v1638
        %v1876 = vunpack.c.l.b16 %v1639
        %v1877 = vunpack.c.h.b16 %v1639
        %v1878 = vunpack.c.l.b16 %v1640
        %v1879 = vunpack.c.h.b16 %v1640
        %v1880 = vunpack.c.l.b16 %v1641
        %v1881 = vunpack.c.h.b16 %v1641
        %v1882 = vunpack.c.l.b16 %v1642
        %v1883 = vunpack.c.h.b16 %v1642
        %v1884 = vunpack.c.l.b16 %v1643
        %v1885 = vunpack.c.h.b16 %v1643
        %v1886 = vunpack.c.l.b16 %v1644
        %v1887 = vunpack.c.h.b16 %v1644
        %v1888 = vunpack.c.l.b16 %v1645
        %v1889 = vunpack.c.h.b16 %v1645
        %v1890 = vunpack.c.l.b16 %v1646
        %v1891 = vunpack.c.h.b16 %v1646
        %v1892 = vunpack.c.l.b16 %v1647
        %v1893 = vunpack.c.h.b16 %v1647
        %v1894 = vunpack.c.l.b16 %v1648
        %v1895 = vunpack.c.h.b16 %v1648
        %v1896 = vunpack.c.l.b16 %v1649
        %v1897 = vunpack.c.h.b16 %v1649
        %v1898 = vunpack.c.l.b16 %v1650
        %v1899 = vunpack.c.h.b16 %v1650
        %v1900 = vunpack.c.l.b16 %v1651
        %v1901 = vunpack.c.h.b16 %v1651
        %v1902 = vunpack.c.l.b16 %v1652
        %v1903 = vunpack.c.h.b16 %v1652
        %v1904 = vunpack.c.l.b16 %v1653
        %v1905 = vunpack.c.h.b16 %v1653
        %v1906 = vunpack.c.l.b16 %v1654
        %v1907 = vunpack.c.h.b16 %v1654
        %v1908 = vunpack.c.l.b16 %v1655
        %v1909 = vunpack.c.h.b16 %v1655
        %v1910 = vunpack.c.l.b16 %v1656
        %v1911 = vunpack.c.h.b16 %v1656
        %v1912 = vunpack.c.l.b16 %v1657
        %v1913 = vunpack.c.h.b16 %v1657
        %v1914 = vunpack.c.l.b16 %v1658
        %v1915 = vunpack.c.h.b16 %v1658
        %v1916 = vunpack.c.l.b16 %v1659
        %v1917 = vunpack.c.h.b16 %v1659
        %v1918 = vunpack.c.l.b16 %v1660
        %v1919 = vunpack.c.h.b16 %v1660
        %v1920 = vunpack.c.l.b16 %v1661
        %v1921 = vunpack.c.h.b16 %v1661
        %v1922 = vunpack.c.l.b16 %v1662
        %v1923 = vunpack.c.h.b16 %v1662
        %v1924 = vunpack.c.l.b16 %v1663
        %v1925 = vunpack.c.h.b16 %v1663
        %v1926 = vunpack.c.l.b16 %v1664
        %v1927 = vunpack.c.h.b16 %v1664
        %v1928 = vunpack.c.l.b16 %v1665
        %v1929 = vunpack.c.h.b16 %v1665
        %v1930 = vunpack.c.l.b16 %v1666
        %v1931 = vunpack.c.h.b16 %v1666
        %v1932 = vunpack.c.l.b16 %v1667
        %v1933 = vunpack.c.h.b16 %v1667
        %v1934 = vunpack.c.l.b16 %v1668
        %v1935 = vunpack.c.h.b16 %v1668
        %v1936 = vunpack.c.l.b16 %v1669
        %v1937 = vunpack.c.h.b16 %v1669
        %v1938 = vunpack.c.l.b16 %v1670
        %v1939 = vunpack.c.h.b16 %v1670
        %v1940 = vunpack.c.l.b16 %v1671
        %v1941 = vunpack.c.h.b16 %v1671
        %v1942 = vunpack.c.l.b16 %v1672
        %v1943 = vunpack.c.h.b16 %v1672
        %v1944 = vunpack.c.l.b16 %v1673
        %v1945 = vunpack.c.h.b16 %v1673
        %v1946 = vunpack.c.l.b16 %v1674
        %v1947 = vunpack.c.h.b16 %v1674
        %v1948 = vunpack.c.l.b16 %v1675
        %v1949 = vunpack.c.h.b16 %v1675
        %v1950 = vunpack.c.l.b16 %v1676
        %v1951 = vunpack.c.h.b16 %v1676
        %v1952 = vunpack.c.l.b16 %v1677
        %v1953 = vunpack.c.h.b16 %v1677
        %v1954 = vunpack.c.l.b16 %v1678
        %v1955 = vunpack.c.h.b16 %v1678
        %v1956 = vunpack.c.l.b16 %v1679
        %v1957 = vunpack.c.h.b16 %v1679
        %v1958 = vunpack.c.l.b16 %v1680
        %v1959 = vunpack.c.h.b16 %v1680
        %v1960 = vunpack.c.l.b16 %v1681
        %v1961 = vunpack.c.h.b16 %v1681
        %v1962 = vunpack.c.l.b16 %v1682
        %v1963 = vunpack.c.h.b16 %v1682
        %v1964 = vunpack.c.l.b16 %v1683
        %v1965 = vunpack.c.h.b16 %v1683
        %v1966 = vunpack.c.l.b16 %v1684
        %v1967 = vunpack.c.h.b16 %v1684
        %v1968 = vunpack.c.l.b16 %v1685
        %v1969 = vunpack.c.h.b16 %v1685
        %v1970 = vunpack.c.l.b16 %v1686
        %v1971 = vunpack.c.h.b16 %v1686
        %v1972 = vunpack.c.l.b16 %v1687
        %v1973 = vunpack.c.h.b16 %v1687
        %v1974 = vunpack.c.l.b16 %v1688
        %v1975 = vunpack.c.h.b16 %v1688
        %v1976 = vunpack.c.l.b16 %v1689
        %v1977 = vunpack.c.h.b16 %v1689
        %v1978 = vpack.c.b16 %v1792, %v1786
        %v1979 = vpack.c.b16 %v1793, %v1787
        %v1980 = vpack.c.b16 %v1794, %v1788
        %v1981 = vpack.c.b16 %v1795, %v1789
        %v1982 = vpack.c.b16 %v1796, %v1790
        %v1983 = vpack.c.b16 %v1797, %v1791
        %v1984 = vpack.c.b16 %v1804, %v1798
        %v1985 = vpack.c.b16 %v1805, %v1799
        %v1986 = vpack.c.b16 %v1806, %v1800
        %v1987 = vpack.c.b16 %v1807, %v1801
        %v1988 = vpack.c.b16 %v1808, %v1802
        %v1989 = vpack.c.b16 %v1809, %v1803
        %v1990 = vpack.c.b16 %v1816, %v1810
        %v1991 = vpack.c.b16 %v1817, %v1811
        %v1992 = vpack.c.b16 %v1818, %v1812
        %v1993 = vpack.c.b16 %v1819, %v1813
        %v1994 = vpack.c.b16 %v1820, %v1814
        %v1995 = vpack.c.b16 %v1821, %v1815
        %v1996 = vpack.c.b16 %v1828, %v1822
        %v1997 = vpack.c.b16 %v1829, %v1823
        %v1998 = vpack.c.b16 %v1830, %v1824
        %v1999 = vpack.c.b16 %v1831, %v1825
        %v2000 = vpack.c.b16 %v1832, %v1826
        %v2001 = vpack.c.b16 %v1833, %v1827
        %v2002 = vpack.c.b16 %v1840, %v1834
        %v2003 = vpack.c.b16 %v1841, %v1835
        %v2004 = vpack.c.b16 %v1842, %v1836
        %v2005 = vpack.c.b16 %v1843, %v1837
        %v2006 = vpack.c.b16 %v1844, %v1838
        %v2007 = vpack.c.b16 %v1845, %v1839
        %v2008 = vpack.c.b16 %v1852, %v1846
        %v2009 = vpack.c.b16 %v1853, %v1847
        %v2010 = vpack.c.b16 %v1854, %v1848
        %v2011 = vpack.c.b16 %v1855, %v1849
        %v2012 = vpack.c.b16 %v1856, %v1850
        %v2013 = vpack.c.b16 %v1857, %v1851
        %v2014 = vpack.c.b16 %v1864, %v1858
        %v2015 = vpack.c.b16 %v1865, %v1859
        %v2016 = vpack.c.b16 %v1866, %v1860
        %v2017 = vpack.c.b16 %v1867, %v1861
        %v2018 = vpack.c.b16 %v1868, %v1862
        %v2019 = vpack.c.b16 %v1869, %v1863
        %v2020 = vpack.c.b16 %v1876, %v1870
        %v2021 = vpack.c.b16 %v1877, %v1871
        %v2022 = vpack.c.b16 %v1878, %v1872
        %v2023 = vpack.c.b16 %v1879, %v1873
        %v2024 = vpack.c.b16 %v1880, %v1874
        %v2025 = vpack.c.b16 %v1881, %v1875
        %v2026 = vpack.c.b16 %v1888, %v1882
        %v2027 = vpack.c.b16 %v1889, %v1883
        %v2028 = vpack.c.b16 %v1890, %v1884
        %v2029 = vpack.c.b16 %v1891, %v1885
        %v2030 = vpack.c.b16 %v1892, %v1886
        %v2031 = vpack.c.b16 %v1893, %v1887
        %v2032 = vpack.c.b16 %v1900, %v1894
        %v2033 = vpack.c.b16 %v1901, %v1895
        %v2034 = vpack.c.b16 %v1902, %v1896
        %v2035 = vpack.c.b16 %v1903, %v1897
        %v2036 = vpack.c.b16 %v1904, %v1898
        %v2037 = vpack.c.b16 %v1905, %v1899
        %v2038 = vpack.c.b16 %v1912, %v1906
        %v2039 = vpack.c.b16 %v1913, %v1907
        %v2040 = vpack.c.b16 %v1914, %v1908
        %v2041 = vpack.c.b16 %v1915, %v1909
        %v2042 = vpack.c.b16 %v1916, %v1910
        %v2043 = vpack.c.b16 %v1917, %v1911
        %v2044 = vpack.c.b16 %v1924, %v1918
        %v2045 = vpack.c.b16 %v1925, %v1919
        %v2046 = vpack.c.b16 %v1926, %v1920
        %v2047 = vpack.c.b16 %v1927, %v1921
        %v2048 = vpack.c.b16 %v1928, %v1922
        %v2049 = vpack.c.b16 %v1929, %v1923
        %v2050 = vpack.c.b16 %v1936, %v1930
        %v2051 = vpack.c.b16 %v1937, %v1931
        %v2052 = vpack.c.b16 %v1938, %v1932
        %v2053 = vpack.c.b16 %v1939, %v1933
        %v2054 = vpack.c.b16 %v1940, %v1934
        %v2055 = vpack.c.b16 %v1941, %v1935
        %v2056 = vpack.c.b16 %v1948, %v1942
        %v2057 = vpack.c.b16 %v1949, %v1943
        %v2058 = vpack.c.b16 %v1950, %v1944
        %v2059 = vpack.c.b16 %v1951, %v1945
        %v2060 = vpack.c.b16 %v1952, %v1946
        %v2061 = vpack.c.b16 %v1953, %v1947
        %v2062 = vpack.c.b16 %v1960, %v1954
        %v2063 = vpack.c.b16 %v1961, %v1955
        %v2064 = vpack.c.b16 %v1962, %v1956
        %v2065 = vpack.c.b16 %v1963, %v1957
        %v2066 = vpack.c.b16 %v1964, %v1958
        %v2067 = vpack.c.b16 %v1965, %v1959
        %v2068 = vpack.c.b16 %v1972, %v1966
        %v2069 = vpack.c.b16 %v1973, %v1967
        %v2070 = vpack.c.b16 %v1974, %v1968
        %v2071 = vpack.c.b16 %v1975, %v1969
        %v2072 = vpack.c.b16 %v1976, %v1970
        %v2073 = vpack.c.b16 %v1977, %v1971
        %2170 = vmatprep.subr.bf16.mxu0 %v1979
        %2171 = vmatpush1.bf16.msra.mxu0 %v1978
        %2172 = vmatprep.subr.bf16.mxu0 %v1985
        %2173 = vmatpush1.bf16.msra.mxu0 %v1984
        %2174 = vmatprep.subr.bf16.mxu0 %v1991
        %2175 = vmatpush1.bf16.msra.mxu0 %v1990
        %2176 = vmatprep.subr.bf16.mxu0 %v1997
        %2177 = vmatpush1.bf16.msra.mxu0 %v1996
        %2178 = vmatprep.subr.bf16.mxu0 %v2003
        %2179 = vmatpush1.bf16.msra.mxu0 %v2002
        %2180 = vmatprep.subr.bf16.mxu0 %v2009
        %2181 = vmatpush1.bf16.msra.mxu0 %v2008
        %2182 = vmatprep.subr.bf16.mxu0 %v2015
        %2183 = vmatpush1.bf16.msra.mxu0 %v2014
        %2184 = vmatprep.subr.bf16.mxu0 %v2021
        %2185 = vmatpush1.bf16.msra.mxu0 %v2020
        %2186 = vmatprep.subr.bf16.mxu0 %v2027
        %2187 = vmatpush1.bf16.msra.mxu0 %v2026
        %2188 = vmatprep.subr.bf16.mxu0 %v2033
        %2189 = vmatpush1.bf16.msra.mxu0 %v2032
        %2190 = vmatprep.subr.bf16.mxu0 %v2039
        %2191 = vmatpush1.bf16.msra.mxu0 %v2038
        %2192 = vmatprep.subr.bf16.mxu0 %v2045
        %2193 = vmatpush1.bf16.msra.mxu0 %v2044
        %2194 = vmatprep.subr.bf16.mxu0 %v2051
        %2195 = vmatpush1.bf16.msra.mxu0 %v2050
        %2196 = vmatprep.subr.bf16.mxu0 %v2057
        %2197 = vmatpush1.bf16.msra.mxu0 %v2056
        %2198 = vmatprep.subr.bf16.mxu0 %v2063
        %2199 = vmatpush1.bf16.msra.mxu0 %v2062
        %2200 = vmatprep.subr.bf16.mxu0 %v2069
        %2201 = vmatpush1.bf16.msra.mxu0 %v2068
        %2202 = vmatprep.mubr.bf16.mxu0 %v664
        %2203 = vmatmul.mubr.bf16.gmra.mrb[0].mxu0 %v663
        %v2204 = vpop.f32.mrb[0].mxu0
        %v2205 = vadd.f32 0.0, %v2204
        %v2206 = vpop.f32.mrb[0].mxu0
        %v2207 = vadd.f32 0.0, %v2206
        %v2208 = vpop.f32.mrb[0].mxu0
        %v2209 = vadd.f32 0.0, %v2208
        %v2210 = vpop.f32.mrb[0].mxu0
        %v2211 = vadd.f32 0.0, %v2210
        %2212 = vmatprep.mubr.bf16.mxu0 %v666
        %2213 = vmatmul.mubr.bf16.gmra.mrb[0].mxu0 %v665
        %v2214 = vpop.f32.mrb[0].mxu0
        %v2215 = vadd.f32 0.0, %v2214
        %v2216 = vpop.f32.mrb[0].mxu0
        %v2217 = vadd.f32 0.0, %v2216
        %v2218 = vpop.f32.mrb[0].mxu0
        %v2219 = vadd.f32 0.0, %v2218
        %v2220 = vpop.f32.mrb[0].mxu0
        %v2221 = vadd.f32 0.0, %v2220
        %2222 = vmatprep.mubr.bf16.mxu0 %v668
        %2223 = vmatmul.mubr.bf16.gmra.mrb[0].mxu0 %v667
        %v2224 = vpop.f32.mrb[0].mxu0
        %v2225 = vadd.f32 0.0, %v2224
        %v2226 = vpop.f32.mrb[0].mxu0
        %v2227 = vadd.f32 0.0, %v2226
        %v2228 = vpop.f32.mrb[0].mxu0
        %v2229 = vadd.f32 0.0, %v2228
        %v2230 = vpop.f32.mrb[0].mxu0
        %v2231 = vadd.f32 0.0, %v2230
        %2232 = vmatprep.mubr.bf16.mxu0 %v670
        %2233 = vmatmul.mubr.bf16.gmra.mrb[0].mxu0 %v669
        %v2234 = vpop.f32.mrb[0].mxu0
        %v2235 = vadd.f32 0.0, %v2234
        %v2236 = vpop.f32.mrb[0].mxu0
        %v2237 = vadd.f32 0.0, %v2236
        %v2238 = vpop.f32.mrb[0].mxu0
        %v2239 = vadd.f32 0.0, %v2238
        %v2240 = vpop.f32.mrb[0].mxu0
        %v2241 = vadd.f32 0.0, %v2240
        %2242 = vmatprep.mubr.bf16.mxu0 %v672
        %2243 = vmatmul.mubr.bf16.gmra.mrb[0].mxu0 %v671
        %v2244 = vpop.f32.mrb[0].mxu0
        %v2245 = vadd.f32 0.0, %v2244
        %v2246 = vpop.f32.mrb[0].mxu0
        %v2247 = vadd.f32 0.0, %v2246
        %v2248 = vpop.f32.mrb[0].mxu0
        %v2249 = vadd.f32 0.0, %v2248
        %v2250 = vpop.f32.mrb[0].mxu0
        %v2251 = vadd.f32 0.0, %v2250
        %2252 = vmatprep.mubr.bf16.mxu0 %v674
        %2253 = vmatmul.mubr.bf16.gmra.mrb[0].mxu0 %v673
        %v2254 = vpop.f32.mrb[0].mxu0
        %v2255 = vadd.f32 0.0, %v2254
        %v2256 = vpop.f32.mrb[0].mxu0
        %v2257 = vadd.f32 0.0, %v2256
        %v2258 = vpop.f32.mrb[0].mxu0
        %v2259 = vadd.f32 0.0, %v2258
        %v2260 = vpop.f32.mrb[0].mxu0
        %v2261 = vadd.f32 0.0, %v2260
        %2262 = vmatprep.mubr.bf16.mxu0 %v676
        %2263 = vmatmul.mubr.bf16.gmra.mrb[0].mxu0 %v675
        %v2264 = vpop.f32.mrb[0].mxu0
        %v2265 = vadd.f32 0.0, %v2264
        %v2266 = vpop.f32.mrb[0].mxu0
        %v2267 = vadd.f32 0.0, %v2266
        %v2268 = vpop.f32.mrb[0].mxu0
        %v2269 = vadd.f32 0.0, %v2268
        %v2270 = vpop.f32.mrb[0].mxu0
        %v2271 = vadd.f32 0.0, %v2270
        %2272 = vmatprep.mubr.bf16.mxu0 %v678
        %2273 = vmatmul.mubr.bf16.gmra.mrb[0].mxu0 %v677
        %v2274 = vpop.f32.mrb[0].mxu0
        %v2275 = vadd.f32 0.0, %v2274
        %v2276 = vpop.f32.mrb[0].mxu0
        %v2277 = vadd.f32 0.0, %v2276
        %v2278 = vpop.f32.mrb[0].mxu0
        %v2279 = vadd.f32 0.0, %v2278
        %v2280 = vpop.f32.mrb[0].mxu0
        %v2281 = vadd.f32 0.0, %v2280
        %2282 = vdwg.mxu0
        %2283 = vmatprep.subr.bf16.mxu0 %v1981
        %2284 = vmatpush1.bf16.msra.mxu0 %v1980
        %2285 = vmatprep.subr.bf16.mxu0 %v1987
        %2286 = vmatpush1.bf16.msra.mxu0 %v1986
        %2287 = vmatprep.subr.bf16.mxu0 %v1993
        %2288 = vmatpush1.bf16.msra.mxu0 %v1992
        %2289 = vmatprep.subr.bf16.mxu0 %v1999
        %2290 = vmatpush1.bf16.msra.mxu0 %v1998
        %2291 = vmatprep.subr.bf16.mxu0 %v2005
        %2292 = vmatpush1.bf16.msra.mxu0 %v2004
        %2293 = vmatprep.subr.bf16.mxu0 %v2011
        %2294 = vmatpush1.bf16.msra.mxu0 %v2010
        %2295 = vmatprep.subr.bf16.mxu0 %v2017
        %2296 = vmatpush1.bf16.msra.mxu0 %v2016
        %2297 = vmatprep.subr.bf16.mxu0 %v2023
        %2298 = vmatpush1.bf16.msra.mxu0 %v2022
        %2299 = vmatprep.subr.bf16.mxu0 %v2029
        %2300 = vmatpush1.bf16.msra.mxu0 %v2028
        %2301 = vmatprep.subr.bf16.mxu0 %v2035
        %2302 = vmatpush1.bf16.msra.mxu0 %v2034
        %2303 = vmatprep.subr.bf16.mxu0 %v2041
        %2304 = vmatpush1.bf16.msra.mxu0 %v2040
        %2305 = vmatprep.subr.bf16.mxu0 %v2047
        %2306 = vmatpush1.bf16.msra.mxu0 %v2046
        %2307 = vmatprep.subr.bf16.mxu0 %v2053
        %2308 = vmatpush1.bf16.msra.mxu0 %v2052
        %2309 = vmatprep.subr.bf16.mxu0 %v2059
        %2310 = vmatpush1.bf16.msra.mxu0 %v2058
        %2311 = vmatprep.subr.bf16.mxu0 %v2065
        %2312 = vmatpush1.bf16.msra.mxu0 %v2064
        %2313 = vmatprep.subr.bf16.mxu0 %v2071
        %2314 = vmatpush1.bf16.msra.mxu0 %v2070
        %2315 = vmatprep.mubr.bf16.mxu0 %v664
        %2316 = vmatmul.mubr.bf16.gmra.mrb[0].mxu0 %v663
        %v2317 = vpop.f32.mrb[0].mxu0
        %v2318 = vadd.f32 0.0, %v2317
        %v2319 = vpop.f32.mrb[0].mxu0
        %v2320 = vadd.f32 0.0, %v2319
        %v2321 = vpop.f32.mrb[0].mxu0
        %v2322 = vadd.f32 0.0, %v2321
        %v2323 = vpop.f32.mrb[0].mxu0
        %v2324 = vadd.f32 0.0, %v2323
        %2325 = vmatprep.mubr.bf16.mxu0 %v666
        %2326 = vmatmul.mubr.bf16.gmra.mrb[0].mxu0 %v665
        %v2327 = vpop.f32.mrb[0].mxu0
        %v2328 = vadd.f32 0.0, %v2327
        %v2329 = vpop.f32.mrb[0].mxu0
        %v2330 = vadd.f32 0.0, %v2329
        %v2331 = vpop.f32.mrb[0].mxu0
        %v2332 = vadd.f32 0.0, %v2331
        %v2333 = vpop.f32.mrb[0].mxu0
        %v2334 = vadd.f32 0.0, %v2333
        %2335 = vmatprep.mubr.bf16.mxu0 %v668
        %2336 = vmatmul.mubr.bf16.gmra.mrb[0].mxu0 %v667
        %v2337 = vpop.f32.mrb[0].mxu0
        %v2338 = vadd.f32 0.0, %v2337
        %v2339 = vpop.f32.mrb[0].mxu0
        %v2340 = vadd.f32 0.0, %v2339
        %v2341 = vpop.f32.mrb[0].mxu0
        %v2342 = vadd.f32 0.0, %v2341
        %v2343 = vpop.f32.mrb[0].mxu0
        %v2344 = vadd.f32 0.0, %v2343
        %2345 = vmatprep.mubr.bf16.mxu0 %v670
        %2346 = vmatmul.mubr.bf16.gmra.mrb[0].mxu0 %v669
        %v2347 = vpop.f32.mrb[0].mxu0
        %v2348 = vadd.f32 0.0, %v2347
        %v2349 = vpop.f32.mrb[0].mxu0
        %v2350 = vadd.f32 0.0, %v2349
        %v2351 = vpop.f32.mrb[0].mxu0
        %v2352 = vadd.f32 0.0, %v2351
        %v2353 = vpop.f32.mrb[0].mxu0
        %v2354 = vadd.f32 0.0, %v2353
        %2355 = vmatprep.mubr.bf16.mxu0 %v672
        %2356 = vmatmul.mubr.bf16.gmra.mrb[0].mxu0 %v671
        %v2357 = vpop.f32.mrb[0].mxu0
        %v2358 = vadd.f32 0.0, %v2357
        %v2359 = vpop.f32.mrb[0].mxu0
        %v2360 = vadd.f32 0.0, %v2359
        %v2361 = vpop.f32.mrb[0].mxu0
        %v2362 = vadd.f32 0.0, %v2361
        %v2363 = vpop.f32.mrb[0].mxu0
        %v2364 = vadd.f32 0.0, %v2363
        %2365 = vmatprep.mubr.bf16.mxu0 %v674
        %2366 = vmatmul.mubr.bf16.gmra.mrb[0].mxu0 %v673
        %v2367 = vpop.f32.mrb[0].mxu0
        %v2368 = vadd.f32 0.0, %v2367
        %v2369 = vpop.f32.mrb[0].mxu0
        %v2370 = vadd.f32 0.0, %v2369
        %v2371 = vpop.f32.mrb[0].mxu0
        %v2372 = vadd.f32 0.0, %v2371
        %v2373 = vpop.f32.mrb[0].mxu0
        %v2374 = vadd.f32 0.0, %v2373
        %2375 = vmatprep.mubr.bf16.mxu0 %v676
        %2376 = vmatmul.mubr.bf16.gmra.mrb[0].mxu0 %v675
        %v2377 = vpop.f32.mrb[0].mxu0
        %v2378 = vadd.f32 0.0, %v2377
        %v2379 = vpop.f32.mrb[0].mxu0
        %v2380 = vadd.f32 0.0, %v2379
        %v2381 = vpop.f32.mrb[0].mxu0
        %v2382 = vadd.f32 0.0, %v2381
        %v2383 = vpop.f32.mrb[0].mxu0
        %v2384 = vadd.f32 0.0, %v2383
        %2385 = vmatprep.mubr.bf16.mxu0 %v678
        %2386 = vmatmul.mubr.bf16.gmra.mrb[0].mxu0 %v677
        %v2387 = vpop.f32.mrb[0].mxu0
        %v2388 = vadd.f32 0.0, %v2387
        %v2389 = vpop.f32.mrb[0].mxu0
        %v2390 = vadd.f32 0.0, %v2389
        %v2391 = vpop.f32.mrb[0].mxu0
        %v2392 = vadd.f32 0.0, %v2391
        %v2393 = vpop.f32.mrb[0].mxu0
        %v2394 = vadd.f32 0.0, %v2393
        %2395 = vdwg.mxu0
        %2396 = vmatprep.subr.bf16.mxu0 %v1983
        %2397 = vmatpush1.bf16.msra.mxu0 %v1982
        %2398 = vmatprep.subr.bf16.mxu0 %v1989
        %2399 = vmatpush1.bf16.msra.mxu0 %v1988
        %2400 = vmatprep.subr.bf16.mxu0 %v1995
        %2401 = vmatpush1.bf16.msra.mxu0 %v1994
        %2402 = vmatprep.subr.bf16.mxu0 %v2001
        %2403 = vmatpush1.bf16.msra.mxu0 %v2000
        %2404 = vmatprep.subr.bf16.mxu0 %v2007
        %2405 = vmatpush1.bf16.msra.mxu0 %v2006
        %2406 = vmatprep.subr.bf16.mxu0 %v2013
        %2407 = vmatpush1.bf16.msra.mxu0 %v2012
        %2408 = vmatprep.subr.bf16.mxu0 %v2019
        %2409 = vmatpush1.bf16.msra.mxu0 %v2018
        %2410 = vmatprep.subr.bf16.mxu0 %v2025
        %2411 = vmatpush1.bf16.msra.mxu0 %v2024
        %2412 = vmatprep.subr.bf16.mxu0 %v2031
        %2413 = vmatpush1.bf16.msra.mxu0 %v2030
        %2414 = vmatprep.subr.bf16.mxu0 %v2037
        %2415 = vmatpush1.bf16.msra.mxu0 %v2036
        %2416 = vmatprep.subr.bf16.mxu0 %v2043
        %2417 = vmatpush1.bf16.msra.mxu0 %v2042
        %2418 = vmatprep.subr.bf16.mxu0 %v2049
        %2419 = vmatpush1.bf16.msra.mxu0 %v2048
        %2420 = vmatprep.subr.bf16.mxu0 %v2055
        %2421 = vmatpush1.bf16.msra.mxu0 %v2054
        %2422 = vmatprep.subr.bf16.mxu0 %v2061
        %2423 = vmatpush1.bf16.msra.mxu0 %v2060
        %2424 = vmatprep.subr.bf16.mxu0 %v2067
        %2425 = vmatpush1.bf16.msra.mxu0 %v2066
        %2426 = vmatprep.subr.bf16.mxu0 %v2073
        %2427 = vmatpush1.bf16.msra.mxu0 %v2072
        %2428 = vmatprep.mubr.bf16.mxu0 %v664
        %2429 = vmatmul.mubr.bf16.gmra.mrb[0].mxu0 %v663
        %v2430 = vpop.f32.mrb[0].mxu0
        %v2431 = vadd.f32 0.0, %v2430
        %v2432 = vpop.f32.mrb[0].mxu0
        %v2433 = vadd.f32 0.0, %v2432
        %v2434 = vpop.f32.mrb[0].mxu0
        %v2435 = vadd.f32 0.0, %v2434
        %v2436 = vpop.f32.mrb[0].mxu0
        %v2437 = vadd.f32 0.0, %v2436
        %2438 = vmatprep.mubr.bf16.mxu0 %v666
        %2439 = vmatmul.mubr.bf16.gmra.mrb[0].mxu0 %v665
        %v2440 = vpop.f32.mrb[0].mxu0
        %v2441 = vadd.f32 0.0, %v2440
        %v2442 = vpop.f32.mrb[0].mxu0
        %v2443 = vadd.f32 0.0, %v2442
        %v2444 = vpop.f32.mrb[0].mxu0
        %v2445 = vadd.f32 0.0, %v2444
        %v2446 = vpop.f32.mrb[0].mxu0
        %v2447 = vadd.f32 0.0, %v2446
        %2448 = vmatprep.mubr.bf16.mxu0 %v668
        %2449 = vmatmul.mubr.bf16.gmra.mrb[0].mxu0 %v667
        %v2450 = vpop.f32.mrb[0].mxu0
        %v2451 = vadd.f32 0.0, %v2450
        %v2452 = vpop.f32.mrb[0].mxu0
        %v2453 = vadd.f32 0.0, %v2452
        %v2454 = vpop.f32.mrb[0].mxu0
        %v2455 = vadd.f32 0.0, %v2454
        %v2456 = vpop.f32.mrb[0].mxu0
        %v2457 = vadd.f32 0.0, %v2456
        %2458 = vmatprep.mubr.bf16.mxu0 %v670
        %2459 = vmatmul.mubr.bf16.gmra.mrb[0].mxu0 %v669
        %v2460 = vpop.f32.mrb[0].mxu0
        %v2461 = vadd.f32 0.0, %v2460
        %v2462 = vpop.f32.mrb[0].mxu0
        %v2463 = vadd.f32 0.0, %v2462
        %v2464 = vpop.f32.mrb[0].mxu0
        %v2465 = vadd.f32 0.0, %v2464
        %v2466 = vpop.f32.mrb[0].mxu0
        %v2467 = vadd.f32 0.0, %v2466
        %2468 = vmatprep.mubr.bf16.mxu0 %v672
        %2469 = vmatmul.mubr.bf16.gmra.mrb[0].mxu0 %v671
        %v2470 = vpop.f32.mrb[0].mxu0
        %v2471 = vadd.f32 0.0, %v2470
        %v2472 = vpop.f32.mrb[0].mxu0
        %v2473 = vadd.f32 0.0, %v2472
        %v2474 = vpop.f32.mrb[0].mxu0
        %v2475 = vadd.f32 0.0, %v2474
        %v2476 = vpop.f32.mrb[0].mxu0
        %v2477 = vadd.f32 0.0, %v2476
        %2478 = vmatprep.mubr.bf16.mxu0 %v674
        %2479 = vmatmul.mubr.bf16.gmra.mrb[0].mxu0 %v673
        %v2480 = vpop.f32.mrb[0].mxu0
        %v2481 = vadd.f32 0.0, %v2480
        %v2482 = vpop.f32.mrb[0].mxu0
        %v2483 = vadd.f32 0.0, %v2482
        %v2484 = vpop.f32.mrb[0].mxu0
        %v2485 = vadd.f32 0.0, %v2484
        %v2486 = vpop.f32.mrb[0].mxu0
        %v2487 = vadd.f32 0.0, %v2486
        %2488 = vmatprep.mubr.bf16.mxu0 %v676
        %2489 = vmatmul.mubr.bf16.gmra.mrb[0].mxu0 %v675
        %v2490 = vpop.f32.mrb[0].mxu0
        %v2491 = vadd.f32 0.0, %v2490
        %v2492 = vpop.f32.mrb[0].mxu0
        %v2493 = vadd.f32 0.0, %v2492
        %v2494 = vpop.f32.mrb[0].mxu0
        %v2495 = vadd.f32 0.0, %v2494
        %v2496 = vpop.f32.mrb[0].mxu0
        %v2497 = vadd.f32 0.0, %v2496
        %2498 = vmatprep.mubr.bf16.mxu0 %v678
        %2499 = vmatmul.mubr.bf16.gmra.mrb[0].mxu0 %v677
        %v2500 = vpop.f32.mrb[0].mxu0
        %v2501 = vadd.f32 0.0, %v2500
        %v2502 = vpop.f32.mrb[0].mxu0
        %v2503 = vadd.f32 0.0, %v2502
        %v2504 = vpop.f32.mrb[0].mxu0
        %v2505 = vadd.f32 0.0, %v2504
        %v2506 = vpop.f32.mrb[0].mxu0
        %v2507 = vadd.f32 0.0, %v2506
        %2508 = vdwg.mxu0
        %v2509 = vxor.u32 %v1290, 2147483648
        %v2510 = vxor.u32 %v1292, 2147483648
        %v2511 = vxor.u32 %v1403, 2147483648
        %v2512 = vxor.u32 %v1405, 2147483648
        %v2513 = vxor.u32 %v1516, 2147483648
        %v2514 = vxor.u32 %v1518, 2147483648
        %v2515 = vxor.u32 %v1294, 2147483648
        %v2516 = vxor.u32 %v1296, 2147483648
        %v2517 = vxor.u32 %v1407, 2147483648
        %v2518 = vxor.u32 %v1409, 2147483648
        %v2519 = vxor.u32 %v1520, 2147483648
        %v2520 = vxor.u32 %v1522, 2147483648
        %v2521 = vxor.u32 %v1300, 2147483648
        %v2522 = vxor.u32 %v1302, 2147483648
        %v2523 = vxor.u32 %v1413, 2147483648
        %v2524 = vxor.u32 %v1415, 2147483648
        %v2525 = vxor.u32 %v1526, 2147483648
        %v2526 = vxor.u32 %v1528, 2147483648
        %v2527 = vxor.u32 %v1304, 2147483648
        %v2528 = vxor.u32 %v1306, 2147483648
        %v2529 = vxor.u32 %v1417, 2147483648
        %v2530 = vxor.u32 %v1419, 2147483648
        %v2531 = vxor.u32 %v1530, 2147483648
        %v2532 = vxor.u32 %v1532, 2147483648
        %v2533 = vxor.u32 %v1310, 2147483648
        %v2534 = vxor.u32 %v1312, 2147483648
        %v2535 = vxor.u32 %v1423, 2147483648
        %v2536 = vxor.u32 %v1425, 2147483648
        %v2537 = vxor.u32 %v1536, 2147483648
        %v2538 = vxor.u32 %v1538, 2147483648
        %v2539 = vxor.u32 %v1314, 2147483648
        %v2540 = vxor.u32 %v1316, 2147483648
        %v2541 = vxor.u32 %v1427, 2147483648
        %v2542 = vxor.u32 %v1429, 2147483648
        %v2543 = vxor.u32 %v1540, 2147483648
        %v2544 = vxor.u32 %v1542, 2147483648
        %v2545 = vxor.u32 %v1320, 2147483648
        %v2546 = vxor.u32 %v1322, 2147483648
        %v2547 = vxor.u32 %v1433, 2147483648
        %v2548 = vxor.u32 %v1435, 2147483648
        %v2549 = vxor.u32 %v1546, 2147483648
        %v2550 = vxor.u32 %v1548, 2147483648
        %v2551 = vxor.u32 %v1324, 2147483648
        %v2552 = vxor.u32 %v1326, 2147483648
        %v2553 = vxor.u32 %v1437, 2147483648
        %v2554 = vxor.u32 %v1439, 2147483648
        %v2555 = vxor.u32 %v1550, 2147483648
        %v2556 = vxor.u32 %v1552, 2147483648
        %v2557 = vxor.u32 %v1330, 2147483648
        %v2558 = vxor.u32 %v1332, 2147483648
        %v2559 = vxor.u32 %v1443, 2147483648
        %v2560 = vxor.u32 %v1445, 2147483648
        %v2561 = vxor.u32 %v1556, 2147483648
        %v2562 = vxor.u32 %v1558, 2147483648
        %v2563 = vxor.u32 %v1334, 2147483648
        %v2564 = vxor.u32 %v1336, 2147483648
        %v2565 = vxor.u32 %v1447, 2147483648
        %v2566 = vxor.u32 %v1449, 2147483648
        %v2567 = vxor.u32 %v1560, 2147483648
        %v2568 = vxor.u32 %v1562, 2147483648
        %v2569 = vxor.u32 %v1340, 2147483648
        %v2570 = vxor.u32 %v1342, 2147483648
        %v2571 = vxor.u32 %v1453, 2147483648
        %v2572 = vxor.u32 %v1455, 2147483648
        %v2573 = vxor.u32 %v1566, 2147483648
        %v2574 = vxor.u32 %v1568, 2147483648
        %v2575 = vxor.u32 %v1344, 2147483648
        %v2576 = vxor.u32 %v1346, 2147483648
        %v2577 = vxor.u32 %v1457, 2147483648
        %v2578 = vxor.u32 %v1459, 2147483648
        %v2579 = vxor.u32 %v1570, 2147483648
        %v2580 = vxor.u32 %v1572, 2147483648
        %v2581 = vxor.u32 %v1350, 2147483648
        %v2582 = vxor.u32 %v1352, 2147483648
        %v2583 = vxor.u32 %v1463, 2147483648
        %v2584 = vxor.u32 %v1465, 2147483648
        %v2585 = vxor.u32 %v1576, 2147483648
        %v2586 = vxor.u32 %v1578, 2147483648
        %v2587 = vxor.u32 %v1354, 2147483648
        %v2588 = vxor.u32 %v1356, 2147483648
        %v2589 = vxor.u32 %v1467, 2147483648
        %v2590 = vxor.u32 %v1469, 2147483648
        %v2591 = vxor.u32 %v1580, 2147483648
        %v2592 = vxor.u32 %v1582, 2147483648
        %v2593 = vxor.u32 %v1360, 2147483648
        %v2594 = vxor.u32 %v1362, 2147483648
        %v2595 = vxor.u32 %v1473, 2147483648
        %v2596 = vxor.u32 %v1475, 2147483648
        %v2597 = vxor.u32 %v1586, 2147483648
        %v2598 = vxor.u32 %v1588, 2147483648
        %v2599 = vxor.u32 %v1364, 2147483648
        %v2600 = vxor.u32 %v1366, 2147483648
        %v2601 = vxor.u32 %v1477, 2147483648
        %v2602 = vxor.u32 %v1479, 2147483648
        %v2603 = vxor.u32 %v1590, 2147483648
        %v2604 = vxor.u32 %v1592, 2147483648
        %v2605 = vmul.f32 %v2509, 1.442695
        %v2606 = vpow.pop %v2605
        %v2607 = vmul.f32 %v2510, 1.442695
        %v2608 = vpow.pop %v2607
        %v2609 = vmul.f32 %v2511, 1.442695
        %v2610 = vpow.pop %v2609
        %v2611 = vmul.f32 %v2512, 1.442695
        %v2612 = vpow.pop %v2611
        %v2613 = vmul.f32 %v2513, 1.442695
        %v2614 = vpow.pop %v2613
        %v2615 = vmul.f32 %v2514, 1.442695
        %v2616 = vpow.pop %v2615
        %v2617 = vmul.f32 %v2515, 1.442695
        %v2618 = vpow.pop %v2617
        %v2619 = vmul.f32 %v2516, 1.442695
        %v2620 = vpow.pop %v2619
        %v2621 = vmul.f32 %v2517, 1.442695
        %v2622 = vpow.pop %v2621
        %v2623 = vmul.f32 %v2518, 1.442695
        %v2624 = vpow.pop %v2623
        %v2625 = vmul.f32 %v2519, 1.442695
        %v2626 = vpow.pop %v2625
        %v2627 = vmul.f32 %v2520, 1.442695
        %v2628 = vpow.pop %v2627
        %v2629 = vmul.f32 %v2521, 1.442695
        %v2630 = vpow.pop %v2629
        %v2631 = vmul.f32 %v2522, 1.442695
        %v2632 = vpow.pop %v2631
        %v2633 = vmul.f32 %v2523, 1.442695
        %v2634 = vpow.pop %v2633
        %v2635 = vmul.f32 %v2524, 1.442695
        %v2636 = vpow.pop %v2635
        %v2637 = vmul.f32 %v2525, 1.442695
        %v2638 = vpow.pop %v2637
        %v2639 = vmul.f32 %v2526, 1.442695
        %v2640 = vpow.pop %v2639
        %v2641 = vmul.f32 %v2527, 1.442695
        %v2642 = vpow.pop %v2641
        %v2643 = vmul.f32 %v2528, 1.442695
        %v2644 = vpow.pop %v2643
        %v2645 = vmul.f32 %v2529, 1.442695
        %v2646 = vpow.pop %v2645
        %v2647 = vmul.f32 %v2530, 1.442695
        %v2648 = vpow.pop %v2647
        %v2649 = vmul.f32 %v2531, 1.442695
        %v2650 = vpow.pop %v2649
        %v2651 = vmul.f32 %v2532, 1.442695
        %v2652 = vpow.pop %v2651
        %v2653 = vmul.f32 %v2533, 1.442695
        %v2654 = vpow.pop %v2653
        %v2655 = vmul.f32 %v2534, 1.442695
        %v2656 = vpow.pop %v2655
        %v2657 = vmul.f32 %v2535, 1.442695
        %v2658 = vpow.pop %v2657
        %v2659 = vmul.f32 %v2536, 1.442695
        %v2660 = vpow.pop %v2659
        %v2661 = vmul.f32 %v2537, 1.442695
        %v2662 = vpow.pop %v2661
        %v2663 = vmul.f32 %v2538, 1.442695
        %v2664 = vpow.pop %v2663
        %v2665 = vmul.f32 %v2539, 1.442695
        %v2666 = vpow.pop %v2665
        %v2667 = vmul.f32 %v2540, 1.442695
        %v2668 = vpow.pop %v2667
        %v2669 = vmul.f32 %v2541, 1.442695
        %v2670 = vpow.pop %v2669
        %v2671 = vmul.f32 %v2542, 1.442695
        %v2672 = vpow.pop %v2671
        %v2673 = vmul.f32 %v2543, 1.442695
        %v2674 = vpow.pop %v2673
        %v2675 = vmul.f32 %v2544, 1.442695
        %v2676 = vpow.pop %v2675
        %v2677 = vmul.f32 %v2545, 1.442695
        %v2678 = vpow.pop %v2677
        %v2679 = vmul.f32 %v2546, 1.442695
        %v2680 = vpow.pop %v2679
        %v2681 = vmul.f32 %v2547, 1.442695
        %v2682 = vpow.pop %v2681
        %v2683 = vmul.f32 %v2548, 1.442695
        %v2684 = vpow.pop %v2683
        %v2685 = vmul.f32 %v2549, 1.442695
        %v2686 = vpow.pop %v2685
        %v2687 = vmul.f32 %v2550, 1.442695
        %v2688 = vpow.pop %v2687
        %v2689 = vmul.f32 %v2551, 1.442695
        %v2690 = vpow.pop %v2689
        %v2691 = vmul.f32 %v2552, 1.442695
        %v2692 = vpow.pop %v2691
        %v2693 = vmul.f32 %v2553, 1.442695
        %v2694 = vpow.pop %v2693
        %v2695 = vmul.f32 %v2554, 1.442695
        %v2696 = vpow.pop %v2695
        %v2697 = vmul.f32 %v2555, 1.442695
        %v2698 = vpow.pop %v2697
        %v2699 = vmul.f32 %v2556, 1.442695
        %v2700 = vpow.pop %v2699
        %v2701 = vmul.f32 %v2557, 1.442695
        %v2702 = vpow.pop %v2701
        %v2703 = vmul.f32 %v2558, 1.442695
        %v2704 = vpow.pop %v2703
        %v2705 = vmul.f32 %v2559, 1.442695
        %v2706 = vpow.pop %v2705
        %v2707 = vmul.f32 %v2560, 1.442695
        %v2708 = vpow.pop %v2707
        %v2709 = vmul.f32 %v2561, 1.442695
        %v2710 = vpow.pop %v2709
        %v2711 = vmul.f32 %v2562, 1.442695
        %v2712 = vpow.pop %v2711
        %v2713 = vmul.f32 %v2563, 1.442695
        %v2714 = vpow.pop %v2713
        %v2715 = vmul.f32 %v2564, 1.442695
        %v2716 = vpow.pop %v2715
        %v2717 = vmul.f32 %v2565, 1.442695
        %v2718 = vpow.pop %v2717
        %v2719 = vmul.f32 %v2566, 1.442695
        %v2720 = vpow.pop %v2719
        %v2721 = vmul.f32 %v2567, 1.442695
        %v2722 = vpow.pop %v2721
        %v2723 = vmul.f32 %v2568, 1.442695
        %v2724 = vpow.pop %v2723
        %v2725 = vmul.f32 %v2569, 1.442695
        %v2726 = vpow.pop %v2725
        %v2727 = vmul.f32 %v2570, 1.442695
        %v2728 = vpow.pop %v2727
        %v2729 = vmul.f32 %v2571, 1.442695
        %v2730 = vpow.pop %v2729
        %v2731 = vmul.f32 %v2572, 1.442695
        %v2732 = vpow.pop %v2731
        %v2733 = vmul.f32 %v2573, 1.442695
        %v2734 = vpow.pop %v2733
        %v2735 = vmul.f32 %v2574, 1.442695
        %v2736 = vpow.pop %v2735
        %v2737 = vmul.f32 %v2575, 1.442695
        %v2738 = vpow.pop %v2737
        %v2739 = vmul.f32 %v2576, 1.442695
        %v2740 = vpow.pop %v2739
        %v2741 = vmul.f32 %v2577, 1.442695
        %v2742 = vpow.pop %v2741
        %v2743 = vmul.f32 %v2578, 1.442695
        %v2744 = vpow.pop %v2743
        %v2745 = vmul.f32 %v2579, 1.442695
        %v2746 = vpow.pop %v2745
        %v2747 = vmul.f32 %v2580, 1.442695
        %v2748 = vpow.pop %v2747
        %v2749 = vmul.f32 %v2581, 1.442695
        %v2750 = vpow.pop %v2749
        %v2751 = vmul.f32 %v2582, 1.442695
        %v2752 = vpow.pop %v2751
        %v2753 = vmul.f32 %v2583, 1.442695
        %v2754 = vpow.pop %v2753
        %v2755 = vmul.f32 %v2584, 1.442695
        %v2756 = vpow.pop %v2755
        %v2757 = vmul.f32 %v2585, 1.442695
        %v2758 = vpow.pop %v2757
        %v2759 = vmul.f32 %v2586, 1.442695
        %v2760 = vpow.pop %v2759
        %v2761 = vmul.f32 %v2587, 1.442695
        %v2762 = vpow.pop %v2761
        %v2763 = vmul.f32 %v2588, 1.442695
        %v2764 = vpow.pop %v2763
        %v2765 = vmul.f32 %v2589, 1.442695
        %v2766 = vpow.pop %v2765
        %v2767 = vmul.f32 %v2590, 1.442695
        %v2768 = vpow.pop %v2767
        %v2769 = vmul.f32 %v2591, 1.442695
        %v2770 = vpow.pop %v2769
        %v2771 = vmul.f32 %v2592, 1.442695
        %v2772 = vpow.pop %v2771
        %v2773 = vmul.f32 %v2593, 1.442695
        %v2774 = vpow.pop %v2773
        %v2775 = vmul.f32 %v2594, 1.442695
        %v2776 = vpow.pop %v2775
        %v2777 = vmul.f32 %v2595, 1.442695
        %v2778 = vpow.pop %v2777
        %v2779 = vmul.f32 %v2596, 1.442695
        %v2780 = vpow.pop %v2779
        %v2781 = vmul.f32 %v2597, 1.442695
        %v2782 = vpow.pop %v2781
        %v2783 = vmul.f32 %v2598, 1.442695
        %v2784 = vpow.pop %v2783
        %v2785 = vmul.f32 %v2599, 1.442695
        %v2786 = vpow.pop %v2785
        %v2787 = vmul.f32 %v2600, 1.442695
        %v2788 = vpow.pop %v2787
        %v2789 = vmul.f32 %v2601, 1.442695
        %v2790 = vpow.pop %v2789
        %v2791 = vmul.f32 %v2602, 1.442695
        %v2792 = vpow.pop %v2791
        %v2793 = vmul.f32 %v2603, 1.442695
        %v2794 = vpow.pop %v2793
        %v2795 = vmul.f32 %v2604, 1.442695
        %v2796 = vpow.pop %v2795
        %v2797 = vadd.f32 %v2606, 1.0
        %v2798 = vadd.f32 %v2608, 1.0
        %v2799 = vadd.f32 %v2610, 1.0
        %v2800 = vadd.f32 %v2612, 1.0
        %v2801 = vadd.f32 %v2614, 1.0
        %v2802 = vadd.f32 %v2616, 1.0
        %v2803 = vadd.f32 %v2618, 1.0
        %v2804 = vadd.f32 %v2620, 1.0
        %v2805 = vadd.f32 %v2622, 1.0
        %v2806 = vadd.f32 %v2624, 1.0
        %v2807 = vadd.f32 %v2626, 1.0
        %v2808 = vadd.f32 %v2628, 1.0
        %v2809 = vadd.f32 %v2630, 1.0
        %v2810 = vadd.f32 %v2632, 1.0
        %v2811 = vadd.f32 %v2634, 1.0
        %v2812 = vadd.f32 %v2636, 1.0
        %v2813 = vadd.f32 %v2638, 1.0
        %v2814 = vadd.f32 %v2640, 1.0
        %v2815 = vadd.f32 %v2642, 1.0
        %v2816 = vadd.f32 %v2644, 1.0
        %v2817 = vadd.f32 %v2646, 1.0
        %v2818 = vadd.f32 %v2648, 1.0
        %v2819 = vadd.f32 %v2650, 1.0
        %v2820 = vadd.f32 %v2652, 1.0
        %v2821 = vadd.f32 %v2654, 1.0
        %v2822 = vadd.f32 %v2656, 1.0
        %v2823 = vadd.f32 %v2658, 1.0
        %v2824 = vadd.f32 %v2660, 1.0
        %v2825 = vadd.f32 %v2662, 1.0
        %v2826 = vadd.f32 %v2664, 1.0
        %v2827 = vadd.f32 %v2666, 1.0
        %v2828 = vadd.f32 %v2668, 1.0
        %v2829 = vadd.f32 %v2670, 1.0
        %v2830 = vadd.f32 %v2672, 1.0
        %v2831 = vadd.f32 %v2674, 1.0
        %v2832 = vadd.f32 %v2676, 1.0
        %v2833 = vadd.f32 %v2678, 1.0
        %v2834 = vadd.f32 %v2680, 1.0
        %v2835 = vadd.f32 %v2682, 1.0
        %v2836 = vadd.f32 %v2684, 1.0
        %v2837 = vadd.f32 %v2686, 1.0
        %v2838 = vadd.f32 %v2688, 1.0
        %v2839 = vadd.f32 %v2690, 1.0
        %v2840 = vadd.f32 %v2692, 1.0
        %v2841 = vadd.f32 %v2694, 1.0
        %v2842 = vadd.f32 %v2696, 1.0
        %v2843 = vadd.f32 %v2698, 1.0
        %v2844 = vadd.f32 %v2700, 1.0
        %v2845 = vadd.f32 %v2702, 1.0
        %v2846 = vadd.f32 %v2704, 1.0
        %v2847 = vadd.f32 %v2706, 1.0
        %v2848 = vadd.f32 %v2708, 1.0
        %v2849 = vadd.f32 %v2710, 1.0
        %v2850 = vadd.f32 %v2712, 1.0
        %v2851 = vadd.f32 %v2714, 1.0
        %v2852 = vadd.f32 %v2716, 1.0
        %v2853 = vadd.f32 %v2718, 1.0
        %v2854 = vadd.f32 %v2720, 1.0
        %v2855 = vadd.f32 %v2722, 1.0
        %v2856 = vadd.f32 %v2724, 1.0
        %v2857 = vadd.f32 %v2726, 1.0
        %v2858 = vadd.f32 %v2728, 1.0
        %v2859 = vadd.f32 %v2730, 1.0
        %v2860 = vadd.f32 %v2732, 1.0
        %v2861 = vadd.f32 %v2734, 1.0
        %v2862 = vadd.f32 %v2736, 1.0
        %v2863 = vadd.f32 %v2738, 1.0
        %v2864 = vadd.f32 %v2740, 1.0
        %v2865 = vadd.f32 %v2742, 1.0
        %v2866 = vadd.f32 %v2744, 1.0
        %v2867 = vadd.f32 %v2746, 1.0
        %v2868 = vadd.f32 %v2748, 1.0
        %v2869 = vadd.f32 %v2750, 1.0
        %v2870 = vadd.f32 %v2752, 1.0
        %v2871 = vadd.f32 %v2754, 1.0
        %v2872 = vadd.f32 %v2756, 1.0
        %v2873 = vadd.f32 %v2758, 1.0
        %v2874 = vadd.f32 %v2760, 1.0
        %v2875 = vadd.f32 %v2762, 1.0
        %v2876 = vadd.f32 %v2764, 1.0
        %v2877 = vadd.f32 %v2766, 1.0
        %v2878 = vadd.f32 %v2768, 1.0
        %v2879 = vadd.f32 %v2770, 1.0
        %v2880 = vadd.f32 %v2772, 1.0
        %v2881 = vadd.f32 %v2774, 1.0
        %v2882 = vadd.f32 %v2776, 1.0
        %v2883 = vadd.f32 %v2778, 1.0
        %v2884 = vadd.f32 %v2780, 1.0
        %v2885 = vadd.f32 %v2782, 1.0
        %v2886 = vadd.f32 %v2784, 1.0
        %v2887 = vadd.f32 %v2786, 1.0
        %v2888 = vadd.f32 %v2788, 1.0
        %v2889 = vadd.f32 %v2790, 1.0
        %v2890 = vadd.f32 %v2792, 1.0
        %v2891 = vadd.f32 %v2794, 1.0
        %v2892 = vadd.f32 %v2796, 1.0
        %v2893 = vrcp.pop %v2797
        %v2894 = vmul.f32 1.0, %v2893
        %v2895 = vrcp.pop %v2798
        %v2896 = vmul.f32 1.0, %v2895
        %v2897 = vrcp.pop %v2799
        %v2898 = vmul.f32 1.0, %v2897
        %v2899 = vrcp.pop %v2800
        %v2900 = vmul.f32 1.0, %v2899
        %v2901 = vrcp.pop %v2801
        %v2902 = vmul.f32 1.0, %v2901
        %v2903 = vrcp.pop %v2802
        %v2904 = vmul.f32 1.0, %v2903
        %v2905 = vrcp.pop %v2803
        %v2906 = vmul.f32 1.0, %v2905
        %v2907 = vrcp.pop %v2804
        %v2908 = vmul.f32 1.0, %v2907
        %v2909 = vrcp.pop %v2805
        %v2910 = vmul.f32 1.0, %v2909
        %v2911 = vrcp.pop %v2806
        %v2912 = vmul.f32 1.0, %v2911
        %v2913 = vrcp.pop %v2807
        %v2914 = vmul.f32 1.0, %v2913
        %v2915 = vrcp.pop %v2808
        %v2916 = vmul.f32 1.0, %v2915
        %v2917 = vrcp.pop %v2809
        %v2918 = vmul.f32 1.0, %v2917
        %v2919 = vrcp.pop %v2810
        %v2920 = vmul.f32 1.0, %v2919
        %v2921 = vrcp.pop %v2811
        %v2922 = vmul.f32 1.0, %v2921
        %v2923 = vrcp.pop %v2812
        %v2924 = vmul.f32 1.0, %v2923
        %v2925 = vrcp.pop %v2813
        %v2926 = vmul.f32 1.0, %v2925
        %v2927 = vrcp.pop %v2814
        %v2928 = vmul.f32 1.0, %v2927
        %v2929 = vrcp.pop %v2815
        %v2930 = vmul.f32 1.0, %v2929
        %v2931 = vrcp.pop %v2816
        %v2932 = vmul.f32 1.0, %v2931
        %v2933 = vrcp.pop %v2817
        %v2934 = vmul.f32 1.0, %v2933
        %v2935 = vrcp.pop %v2818
        %v2936 = vmul.f32 1.0, %v2935
        %v2937 = vrcp.pop %v2819
        %v2938 = vmul.f32 1.0, %v2937
        %v2939 = vrcp.pop %v2820
        %v2940 = vmul.f32 1.0, %v2939
        %v2941 = vrcp.pop %v2821
        %v2942 = vmul.f32 1.0, %v2941
        %v2943 = vrcp.pop %v2822
        %v2944 = vmul.f32 1.0, %v2943
        %v2945 = vrcp.pop %v2823
        %v2946 = vmul.f32 1.0, %v2945
        %v2947 = vrcp.pop %v2824
        %v2948 = vmul.f32 1.0, %v2947
        %v2949 = vrcp.pop %v2825
        %v2950 = vmul.f32 1.0, %v2949
        %v2951 = vrcp.pop %v2826
        %v2952 = vmul.f32 1.0, %v2951
        %v2953 = vrcp.pop %v2827
        %v2954 = vmul.f32 1.0, %v2953
        %v2955 = vrcp.pop %v2828
        %v2956 = vmul.f32 1.0, %v2955
        %v2957 = vrcp.pop %v2829
        %v2958 = vmul.f32 1.0, %v2957
        %v2959 = vrcp.pop %v2830
        %v2960 = vmul.f32 1.0, %v2959
        %v2961 = vrcp.pop %v2831
        %v2962 = vmul.f32 1.0, %v2961
        %v2963 = vrcp.pop %v2832
        %v2964 = vmul.f32 1.0, %v2963
        %v2965 = vrcp.pop %v2833
        %v2966 = vmul.f32 1.0, %v2965
        %v2967 = vrcp.pop %v2834
        %v2968 = vmul.f32 1.0, %v2967
        %v2969 = vrcp.pop %v2835
        %v2970 = vmul.f32 1.0, %v2969
        %v2971 = vrcp.pop %v2836
        %v2972 = vmul.f32 1.0, %v2971
        %v2973 = vrcp.pop %v2837
        %v2974 = vmul.f32 1.0, %v2973
        %v2975 = vrcp.pop %v2838
        %v2976 = vmul.f32 1.0, %v2975
        %v2977 = vrcp.pop %v2839
        %v2978 = vmul.f32 1.0, %v2977
        %v2979 = vrcp.pop %v2840
        %v2980 = vmul.f32 1.0, %v2979
        %v2981 = vrcp.pop %v2841
        %v2982 = vmul.f32 1.0, %v2981
        %v2983 = vrcp.pop %v2842
        %v2984 = vmul.f32 1.0, %v2983
        %v2985 = vrcp.pop %v2843
        %v2986 = vmul.f32 1.0, %v2985
        %v2987 = vrcp.pop %v2844
        %v2988 = vmul.f32 1.0, %v2987
        %v2989 = vrcp.pop %v2845
        %v2990 = vmul.f32 1.0, %v2989
        %v2991 = vrcp.pop %v2846
        %v2992 = vmul.f32 1.0, %v2991
        %v2993 = vrcp.pop %v2847
        %v2994 = vmul.f32 1.0, %v2993
        %v2995 = vrcp.pop %v2848
        %v2996 = vmul.f32 1.0, %v2995
        %v2997 = vrcp.pop %v2849
        %v2998 = vmul.f32 1.0, %v2997
        %v2999 = vrcp.pop %v2850
        %v3000 = vmul.f32 1.0, %v2999
        %v3001 = vrcp.pop %v2851
        %v3002 = vmul.f32 1.0, %v3001
        %v3003 = vrcp.pop %v2852
        %v3004 = vmul.f32 1.0, %v3003
        %v3005 = vrcp.pop %v2853
        %v3006 = vmul.f32 1.0, %v3005
        %v3007 = vrcp.pop %v2854
        %v3008 = vmul.f32 1.0, %v3007
        %v3009 = vrcp.pop %v2855
        %v3010 = vmul.f32 1.0, %v3009
        %v3011 = vrcp.pop %v2856
        %v3012 = vmul.f32 1.0, %v3011
        %v3013 = vrcp.pop %v2857
        %v3014 = vmul.f32 1.0, %v3013
        %v3015 = vrcp.pop %v2858
        %v3016 = vmul.f32 1.0, %v3015
        %v3017 = vrcp.pop %v2859
        %v3018 = vmul.f32 1.0, %v3017
        %v3019 = vrcp.pop %v2860
        %v3020 = vmul.f32 1.0, %v3019
        %v3021 = vrcp.pop %v2861
        %v3022 = vmul.f32 1.0, %v3021
        %v3023 = vrcp.pop %v2862
        %v3024 = vmul.f32 1.0, %v3023
        %v3025 = vrcp.pop %v2863
        %v3026 = vmul.f32 1.0, %v3025
        %v3027 = vrcp.pop %v2864
        %v3028 = vmul.f32 1.0, %v3027
        %v3029 = vrcp.pop %v2865
        %v3030 = vmul.f32 1.0, %v3029
        %v3031 = vrcp.pop %v2866
        %v3032 = vmul.f32 1.0, %v3031
        %v3033 = vrcp.pop %v2867
        %v3034 = vmul.f32 1.0, %v3033
        %v3035 = vrcp.pop %v2868
        %v3036 = vmul.f32 1.0, %v3035
        %v3037 = vrcp.pop %v2869
        %v3038 = vmul.f32 1.0, %v3037
        %v3039 = vrcp.pop %v2870
        %v3040 = vmul.f32 1.0, %v3039
        %v3041 = vrcp.pop %v2871
        %v3042 = vmul.f32 1.0, %v3041
        %v3043 = vrcp.pop %v2872
        %v3044 = vmul.f32 1.0, %v3043
        %v3045 = vrcp.pop %v2873
        %v3046 = vmul.f32 1.0, %v3045
        %v3047 = vrcp.pop %v2874
        %v3048 = vmul.f32 1.0, %v3047
        %v3049 = vrcp.pop %v2875
        %v3050 = vmul.f32 1.0, %v3049
        %v3051 = vrcp.pop %v2876
        %v3052 = vmul.f32 1.0, %v3051
        %v3053 = vrcp.pop %v2877
        %v3054 = vmul.f32 1.0, %v3053
        %v3055 = vrcp.pop %v2878
        %v3056 = vmul.f32 1.0, %v3055
        %v3057 = vrcp.pop %v2879
        %v3058 = vmul.f32 1.0, %v3057
        %v3059 = vrcp.pop %v2880
        %v3060 = vmul.f32 1.0, %v3059
        %v3061 = vrcp.pop %v2881
        %v3062 = vmul.f32 1.0, %v3061
        %v3063 = vrcp.pop %v2882
        %v3064 = vmul.f32 1.0, %v3063
        %v3065 = vrcp.pop %v2883
        %v3066 = vmul.f32 1.0, %v3065
        %v3067 = vrcp.pop %v2884
        %v3068 = vmul.f32 1.0, %v3067
        %v3069 = vrcp.pop %v2885
        %v3070 = vmul.f32 1.0, %v3069
        %v3071 = vrcp.pop %v2886
        %v3072 = vmul.f32 1.0, %v3071
        %v3073 = vrcp.pop %v2887
        %v3074 = vmul.f32 1.0, %v3073
        %v3075 = vrcp.pop %v2888
        %v3076 = vmul.f32 1.0, %v3075
        %v3077 = vrcp.pop %v2889
        %v3078 = vmul.f32 1.0, %v3077
        %v3079 = vrcp.pop %v2890
        %v3080 = vmul.f32 1.0, %v3079
        %v3081 = vrcp.pop %v2891
        %v3082 = vmul.f32 1.0, %v3081
        %v3083 = vrcp.pop %v2892
        %v3084 = vmul.f32 1.0, %v3083
        %v3085 = vmul.f32 %v1290, %v2894
        %v3086 = vmul.f32 %v1292, %v2896
        %v3087 = vmul.f32 %v1403, %v2898
        %v3088 = vmul.f32 %v1405, %v2900
        %v3089 = vmul.f32 %v1516, %v2902
        %v3090 = vmul.f32 %v1518, %v2904
        %v3091 = vmul.f32 %v1294, %v2906
        %v3092 = vmul.f32 %v1296, %v2908
        %v3093 = vmul.f32 %v1407, %v2910
        %v3094 = vmul.f32 %v1409, %v2912
        %v3095 = vmul.f32 %v1520, %v2914
        %v3096 = vmul.f32 %v1522, %v2916
        %v3097 = vmul.f32 %v1300, %v2918
        %v3098 = vmul.f32 %v1302, %v2920
        %v3099 = vmul.f32 %v1413, %v2922
        %v3100 = vmul.f32 %v1415, %v2924
        %v3101 = vmul.f32 %v1526, %v2926
        %v3102 = vmul.f32 %v1528, %v2928
        %v3103 = vmul.f32 %v1304, %v2930
        %v3104 = vmul.f32 %v1306, %v2932
        %v3105 = vmul.f32 %v1417, %v2934
        %v3106 = vmul.f32 %v1419, %v2936
        %v3107 = vmul.f32 %v1530, %v2938
        %v3108 = vmul.f32 %v1532, %v2940
        %v3109 = vmul.f32 %v1310, %v2942
        %v3110 = vmul.f32 %v1312, %v2944
        %v3111 = vmul.f32 %v1423, %v2946
        %v3112 = vmul.f32 %v1425, %v2948
        %v3113 = vmul.f32 %v1536, %v2950
        %v3114 = vmul.f32 %v1538, %v2952
        %v3115 = vmul.f32 %v1314, %v2954
        %v3116 = vmul.f32 %v1316, %v2956
        %v3117 = vmul.f32 %v1427, %v2958
        %v3118 = vmul.f32 %v1429, %v2960
        %v3119 = vmul.f32 %v1540, %v2962
        %v3120 = vmul.f32 %v1542, %v2964
        %v3121 = vmul.f32 %v1320, %v2966
        %v3122 = vmul.f32 %v1322, %v2968
        %v3123 = vmul.f32 %v1433, %v2970
        %v3124 = vmul.f32 %v1435, %v2972
        %v3125 = vmul.f32 %v1546, %v2974
        %v3126 = vmul.f32 %v1548, %v2976
        %v3127 = vmul.f32 %v1324, %v2978
        %v3128 = vmul.f32 %v1326, %v2980
        %v3129 = vmul.f32 %v1437, %v2982
        %v3130 = vmul.f32 %v1439, %v2984
        %v3131 = vmul.f32 %v1550, %v2986
        %v3132 = vmul.f32 %v1552, %v2988
        %v3133 = vmul.f32 %v1330, %v2990
        %v3134 = vmul.f32 %v1332, %v2992
        %v3135 = vmul.f32 %v1443, %v2994
        %v3136 = vmul.f32 %v1445, %v2996
        %v3137 = vmul.f32 %v1556, %v2998
        %v3138 = vmul.f32 %v1558, %v3000
        %v3139 = vmul.f32 %v1334, %v3002
        %v3140 = vmul.f32 %v1336, %v3004
        %v3141 = vmul.f32 %v1447, %v3006
        %v3142 = vmul.f32 %v1449, %v3008
        %v3143 = vmul.f32 %v1560, %v3010
        %v3144 = vmul.f32 %v1562, %v3012
        %v3145 = vmul.f32 %v1340, %v3014
        %v3146 = vmul.f32 %v1342, %v3016
        %v3147 = vmul.f32 %v1453, %v3018
        %v3148 = vmul.f32 %v1455, %v3020
        %v3149 = vmul.f32 %v1566, %v3022
        %v3150 = vmul.f32 %v1568, %v3024
        %v3151 = vmul.f32 %v1344, %v3026
        %v3152 = vmul.f32 %v1346, %v3028
        %v3153 = vmul.f32 %v1457, %v3030
        %v3154 = vmul.f32 %v1459, %v3032
        %v3155 = vmul.f32 %v1570, %v3034
        %v3156 = vmul.f32 %v1572, %v3036
        %v3157 = vmul.f32 %v1350, %v3038
        %v3158 = vmul.f32 %v1352, %v3040
        %v3159 = vmul.f32 %v1463, %v3042
        %v3160 = vmul.f32 %v1465, %v3044
        %v3161 = vmul.f32 %v1576, %v3046
        %v3162 = vmul.f32 %v1578, %v3048
        %v3163 = vmul.f32 %v1354, %v3050
        %v3164 = vmul.f32 %v1356, %v3052
        %v3165 = vmul.f32 %v1467, %v3054
        %v3166 = vmul.f32 %v1469, %v3056
        %v3167 = vmul.f32 %v1580, %v3058
        %v3168 = vmul.f32 %v1582, %v3060
        %v3169 = vmul.f32 %v1360, %v3062
        %v3170 = vmul.f32 %v1362, %v3064
        %v3171 = vmul.f32 %v1473, %v3066
        %v3172 = vmul.f32 %v1475, %v3068
        %v3173 = vmul.f32 %v1586, %v3070
        %v3174 = vmul.f32 %v1588, %v3072
        %v3175 = vmul.f32 %v1364, %v3074
        %v3176 = vmul.f32 %v1366, %v3076
        %v3177 = vmul.f32 %v1477, %v3078
        %v3178 = vmul.f32 %v1479, %v3080
        %v3179 = vmul.f32 %v1590, %v3082
        %v3180 = vmul.f32 %v1592, %v3084
        %v3181 = vmul.f32 %v3085, %v2205
        %v3182 = vmul.f32 %v3086, %v2207
        %v3183 = vmul.f32 %v3087, %v2318
        %v3184 = vmul.f32 %v3088, %v2320
        %v3185 = vmul.f32 %v3089, %v2431
        %v3186 = vmul.f32 %v3090, %v2433
        %v3187 = vmul.f32 %v3091, %v2209
        %v3188 = vmul.f32 %v3092, %v2211
        %v3189 = vmul.f32 %v3093, %v2322
        %v3190 = vmul.f32 %v3094, %v2324
        %v3191 = vmul.f32 %v3095, %v2435
        %v3192 = vmul.f32 %v3096, %v2437
        %v3193 = vmul.f32 %v3097, %v2215
        %v3194 = vmul.f32 %v3098, %v2217
        %v3195 = vmul.f32 %v3099, %v2328
        %v3196 = vmul.f32 %v3100, %v2330
        %v3197 = vmul.f32 %v3101, %v2441
        %v3198 = vmul.f32 %v3102, %v2443
        %v3199 = vmul.f32 %v3103, %v2219
        %v3200 = vmul.f32 %v3104, %v2221
        %v3201 = vmul.f32 %v3105, %v2332
        %v3202 = vmul.f32 %v3106, %v2334
        %v3203 = vmul.f32 %v3107, %v2445
        %v3204 = vmul.f32 %v3108, %v2447
        %v3205 = vmul.f32 %v3109, %v2225
        %v3206 = vmul.f32 %v3110, %v2227
        %v3207 = vmul.f32 %v3111, %v2338
        %v3208 = vmul.f32 %v3112, %v2340
        %v3209 = vmul.f32 %v3113, %v2451
        %v3210 = vmul.f32 %v3114, %v2453
        %v3211 = vmul.f32 %v3115, %v2229
        %v3212 = vmul.f32 %v3116, %v2231
        %v3213 = vmul.f32 %v3117, %v2342
        %v3214 = vmul.f32 %v3118, %v2344
        %v3215 = vmul.f32 %v3119, %v2455
        %v3216 = vmul.f32 %v3120, %v2457
        %v3217 = vmul.f32 %v3121, %v2235
        %v3218 = vmul.f32 %v3122, %v2237
        %v3219 = vmul.f32 %v3123, %v2348
        %v3220 = vmul.f32 %v3124, %v2350
        %v3221 = vmul.f32 %v3125, %v2461
        %v3222 = vmul.f32 %v3126, %v2463
        %v3223 = vmul.f32 %v3127, %v2239
        %v3224 = vmul.f32 %v3128, %v2241
        %v3225 = vmul.f32 %v3129, %v2352
        %v3226 = vmul.f32 %v3130, %v2354
        %v3227 = vmul.f32 %v3131, %v2465
        %v3228 = vmul.f32 %v3132, %v2467
        %v3229 = vmul.f32 %v3133, %v2245
        %v3230 = vmul.f32 %v3134, %v2247
        %v3231 = vmul.f32 %v3135, %v2358
        %v3232 = vmul.f32 %v3136, %v2360
        %v3233 = vmul.f32 %v3137, %v2471
        %v3234 = vmul.f32 %v3138, %v2473
        %v3235 = vmul.f32 %v3139, %v2249
        %v3236 = vmul.f32 %v3140, %v2251
        %v3237 = vmul.f32 %v3141, %v2362
        %v3238 = vmul.f32 %v3142, %v2364
        %v3239 = vmul.f32 %v3143, %v2475
        %v3240 = vmul.f32 %v3144, %v2477
        %v3241 = vmul.f32 %v3145, %v2255
        %v3242 = vmul.f32 %v3146, %v2257
        %v3243 = vmul.f32 %v3147, %v2368
        %v3244 = vmul.f32 %v3148, %v2370
        %v3245 = vmul.f32 %v3149, %v2481
        %v3246 = vmul.f32 %v3150, %v2483
        %v3247 = vmul.f32 %v3151, %v2259
        %v3248 = vmul.f32 %v3152, %v2261
        %v3249 = vmul.f32 %v3153, %v2372
        %v3250 = vmul.f32 %v3154, %v2374
        %v3251 = vmul.f32 %v3155, %v2485
        %v3252 = vmul.f32 %v3156, %v2487
        %v3253 = vmul.f32 %v3157, %v2265
        %v3254 = vmul.f32 %v3158, %v2267
        %v3255 = vmul.f32 %v3159, %v2378
        %v3256 = vmul.f32 %v3160, %v2380
        %v3257 = vmul.f32 %v3161, %v2491
        %v3258 = vmul.f32 %v3162, %v2493
        %v3259 = vmul.f32 %v3163, %v2269
        %v3260 = vmul.f32 %v3164, %v2271
        %v3261 = vmul.f32 %v3165, %v2382
        %v3262 = vmul.f32 %v3166, %v2384
        %v3263 = vmul.f32 %v3167, %v2495
        %v3264 = vmul.f32 %v3168, %v2497
        %v3265 = vmul.f32 %v3169, %v2275
        %v3266 = vmul.f32 %v3170, %v2277
        %v3267 = vmul.f32 %v3171, %v2388
        %v3268 = vmul.f32 %v3172, %v2390
        %v3269 = vmul.f32 %v3173, %v2501
        %v3270 = vmul.f32 %v3174, %v2503
        %v3271 = vmul.f32 %v3175, %v2279
        %v3272 = vmul.f32 %v3176, %v2281
        %v3273 = vmul.f32 %v3177, %v2392
        %v3274 = vmul.f32 %v3178, %v2394
        %v3275 = vmul.f32 %v3179, %v2505
        %v3276 = vmul.f32 %v3180, %v2507
        %v3277 = vld [vmem:[#allocation2] sm:$0xff]
        %v3278 = vld [vmem:[#allocation2 + $0x8] sm:$0xff]
        %v3279 = vld [vmem:[#allocation2 + $0x10] sm:$0xff]
        %v3280 = vld [vmem:[#allocation2 + $0x18] sm:$0xff]
        %v3281 = vld [vmem:[#allocation2 + $0x20] sm:$0xff]
        %v3282 = vld [vmem:[#allocation2 + $0x28] sm:$0xff]
        %v3283 = vld [vmem:[#allocation2 + $0x30] sm:$0xff]
        %v3284 = vld [vmem:[#allocation2 + $0x38] sm:$0xff]
        %v3285 = vld [vmem:[#allocation2 + $0x40] sm:$0xff]
        %v3286 = vld [vmem:[#allocation2 + $0x48] sm:$0xff]
        %v3287 = vld [vmem:[#allocation2 + $0x50] sm:$0xff]
        %v3288 = vld [vmem:[#allocation2 + $0x58] sm:$0xff]
        %v3289 = vld [vmem:[#allocation2 + $0x60] sm:$0xff]
        %v3290 = vld [vmem:[#allocation2 + $0x68] sm:$0xff]
        %v3291 = vld [vmem:[#allocation2 + $0x70] sm:$0xff]
        %v3292 = vld [vmem:[#allocation2 + $0x78] sm:$0xff]
        %v3293 = vld [vmem:[#allocation2 + $0x80] sm:$0xff]
        %v3294 = vld [vmem:[#allocation2 + $0x88] sm:$0xff]
        %v3295 = vld [vmem:[#allocation2 + $0x90] sm:$0xff]
        %v3296 = vld [vmem:[#allocation2 + $0x98] sm:$0xff]
        %v3297 = vld [vmem:[#allocation2 + $0xa0] sm:$0xff]
        %v3298 = vld [vmem:[#allocation2 + $0xa8] sm:$0xff]
        %v3299 = vld [vmem:[#allocation2 + $0xb0] sm:$0xff]
        %v3300 = vld [vmem:[#allocation2 + $0xb8] sm:$0xff]
        %v3301 = vld [vmem:[#allocation2 + $0xc0] sm:$0xff]
        %v3302 = vld [vmem:[#allocation2 + $0xc8] sm:$0xff]
        %v3303 = vld [vmem:[#allocation2 + $0xd0] sm:$0xff]
        %v3304 = vld [vmem:[#allocation2 + $0xd8] sm:$0xff]
        %v3305 = vld [vmem:[#allocation2 + $0xe0] sm:$0xff]
        %v3306 = vld [vmem:[#allocation2 + $0xe8] sm:$0xff]
        %v3307 = vld [vmem:[#allocation2 + $0xf0] sm:$0xff]
        %v3308 = vld [vmem:[#allocation2 + $0xf8] sm:$0xff]
        %v3309 = vpack.c.bf16 %v3187, %v3181
        %v3310 = vpack.c.bf16 %v3188, %v3182
        %v3311 = vpack.c.bf16 %v3189, %v3183
        %v3312 = vpack.c.bf16 %v3190, %v3184
        %v3313 = vpack.c.bf16 %v3191, %v3185
        %v3314 = vpack.c.bf16 %v3192, %v3186
        %v3315 = vpack.c.bf16 %v3199, %v3193
        %v3316 = vpack.c.bf16 %v3200, %v3194
        %v3317 = vpack.c.bf16 %v3201, %v3195
        %v3318 = vpack.c.bf16 %v3202, %v3196
        %v3319 = vpack.c.bf16 %v3203, %v3197
        %v3320 = vpack.c.bf16 %v3204, %v3198
        %v3321 = vpack.c.bf16 %v3211, %v3205
        %v3322 = vpack.c.bf16 %v3212, %v3206
        %v3323 = vpack.c.bf16 %v3213, %v3207
        %v3324 = vpack.c.bf16 %v3214, %v3208
        %v3325 = vpack.c.bf16 %v3215, %v3209
        %v3326 = vpack.c.bf16 %v3216, %v3210
        %v3327 = vpack.c.bf16 %v3223, %v3217
        %v3328 = vpack.c.bf16 %v3224, %v3218
        %v3329 = vpack.c.bf16 %v3225, %v3219
        %v3330 = vpack.c.bf16 %v3226, %v3220
        %v3331 = vpack.c.bf16 %v3227, %v3221
        %v3332 = vpack.c.bf16 %v3228, %v3222
        %v3333 = vpack.c.bf16 %v3235, %v3229
        %v3334 = vpack.c.bf16 %v3236, %v3230
        %v3335 = vpack.c.bf16 %v3237, %v3231
        %v3336 = vpack.c.bf16 %v3238, %v3232
        %v3337 = vpack.c.bf16 %v3239, %v3233
        %v3338 = vpack.c.bf16 %v3240, %v3234
        %v3339 = vpack.c.bf16 %v3247, %v3241
        %v3340 = vpack.c.bf16 %v3248, %v3242
        %v3341 = vpack.c.bf16 %v3249, %v3243
        %v3342 = vpack.c.bf16 %v3250, %v3244
        %v3343 = vpack.c.bf16 %v3251, %v3245
        %v3344 = vpack.c.bf16 %v3252, %v3246
        %v3345 = vpack.c.bf16 %v3259, %v3253
        %v3346 = vpack.c.bf16 %v3260, %v3254
        %v3347 = vpack.c.bf16 %v3261, %v3255
        %v3348 = vpack.c.bf16 %v3262, %v3256
        %v3349 = vpack.c.bf16 %v3263, %v3257
        %v3350 = vpack.c.bf16 %v3264, %v3258
        %v3351 = vpack.c.bf16 %v3271, %v3265
        %v3352 = vpack.c.bf16 %v3272, %v3266
        %v3353 = vpack.c.bf16 %v3273, %v3267
        %v3354 = vpack.c.bf16 %v3274, %v3268
        %v3355 = vpack.c.bf16 %v3275, %v3269
        %v3356 = vpack.c.bf16 %v3276, %v3270
        %v3357 = vld [vmem:[#allocation12] sm:$0xff]
        %v3358 = vld [vmem:[#allocation12 + $0x8] sm:$0xff]
        %v3359 = vld [vmem:[#allocation12 + $0x10] sm:$0xff]
        %v3360 = vld [vmem:[#allocation12 + $0x18] sm:$0xff]
        %v3361 = vld [vmem:[#allocation12 + $0x20] sm:$0xff]
        %v3362 = vld [vmem:[#allocation12 + $0x28] sm:$0xff]
        %v3363 = vld [vmem:[#allocation12 + $0x30] sm:$0xff]
        %v3364 = vld [vmem:[#allocation12 + $0x38] sm:$0xff]
        %v3365 = vld [vmem:[#allocation12 + $0x40] sm:$0xff]
        %v3366 = vld [vmem:[#allocation12 + $0x48] sm:$0xff]
        %v3367 = vld [vmem:[#allocation12 + $0x50] sm:$0xff]
        %v3368 = vld [vmem:[#allocation12 + $0x58] sm:$0xff]
        %v3369 = vld [vmem:[#allocation12 + $0x60] sm:$0xff]
        %v3370 = vld [vmem:[#allocation12 + $0x68] sm:$0xff]
        %v3371 = vld [vmem:[#allocation12 + $0x70] sm:$0xff]
        %v3372 = vld [vmem:[#allocation12 + $0x78] sm:$0xff]
        %v3373 = vld [vmem:[#allocation12 + $0x80] sm:$0xff]
        %v3374 = vld [vmem:[#allocation12 + $0x88] sm:$0xff]
        %v3375 = vld [vmem:[#allocation12 + $0x90] sm:$0xff]
        %v3376 = vld [vmem:[#allocation12 + $0x98] sm:$0xff]
        %v3377 = vld [vmem:[#allocation12 + $0xa0] sm:$0xff]
        %v3378 = vld [vmem:[#allocation12 + $0xa8] sm:$0xff]
        %v3379 = vld [vmem:[#allocation12 + $0xb0] sm:$0xff]
        %v3380 = vld [vmem:[#allocation12 + $0xb8] sm:$0xff]
        %v3381 = vld [vmem:[#allocation12 + $0xc0] sm:$0xff]
        %v3382 = vld [vmem:[#allocation12 + $0xc8] sm:$0xff]
        %v3383 = vld [vmem:[#allocation12 + $0xd0] sm:$0xff]
        %v3384 = vld [vmem:[#allocation12 + $0xd8] sm:$0xff]
        %v3385 = vld [vmem:[#allocation12 + $0xe0] sm:$0xff]
        %v3386 = vld [vmem:[#allocation12 + $0xe8] sm:$0xff]
        %v3387 = vld [vmem:[#allocation12 + $0xf0] sm:$0xff]
        %v3388 = vld [vmem:[#allocation12 + $0xf8] sm:$0xff]
        %v3389 = vld [vmem:[#allocation12 + $0x100] sm:$0xff]
        %v3390 = vld [vmem:[#allocation12 + $0x108] sm:$0xff]
        %v3391 = vld [vmem:[#allocation12 + $0x110] sm:$0xff]
        %v3392 = vld [vmem:[#allocation12 + $0x118] sm:$0xff]
        %v3393 = vld [vmem:[#allocation12 + $0x120] sm:$0xff]
        %v3394 = vld [vmem:[#allocation12 + $0x128] sm:$0xff]
        %v3395 = vld [vmem:[#allocation12 + $0x130] sm:$0xff]
        %v3396 = vld [vmem:[#allocation12 + $0x138] sm:$0xff]
        %v3397 = vld [vmem:[#allocation12 + $0x140] sm:$0xff]
        %v3398 = vld [vmem:[#allocation12 + $0x148] sm:$0xff]
        %v3399 = vld [vmem:[#allocation12 + $0x150] sm:$0xff]
        %v3400 = vld [vmem:[#allocation12 + $0x158] sm:$0xff]
        %v3401 = vld [vmem:[#allocation12 + $0x160] sm:$0xff]
        %v3402 = vld [vmem:[#allocation12 + $0x168] sm:$0xff]
        %v3403 = vld [vmem:[#allocation12 + $0x170] sm:$0xff]
        %v3404 = vld [vmem:[#allocation12 + $0x178] sm:$0xff]
        %v3405 = vld [vmem:[#allocation12 + $0x180] sm:$0xff]
        %v3406 = vld [vmem:[#allocation12 + $0x188] sm:$0xff]
        %v3407 = vld [vmem:[#allocation12 + $0x190] sm:$0xff]
        %v3408 = vld [vmem:[#allocation12 + $0x198] sm:$0xff]
        %v3409 = vld [vmem:[#allocation12 + $0x1a0] sm:$0xff]
        %v3410 = vld [vmem:[#allocation12 + $0x1a8] sm:$0xff]
        %v3411 = vld [vmem:[#allocation12 + $0x1b0] sm:$0xff]
        %v3412 = vld [vmem:[#allocation12 + $0x1b8] sm:$0xff]
        %v3413 = vld [vmem:[#allocation12 + $0x1c0] sm:$0xff]
        %v3414 = vld [vmem:[#allocation12 + $0x1c8] sm:$0xff]
        %v3415 = vld [vmem:[#allocation12 + $0x1d0] sm:$0xff]
        %v3416 = vld [vmem:[#allocation12 + $0x1d8] sm:$0xff]
        %v3417 = vld [vmem:[#allocation12 + $0x1e0] sm:$0xff]
        %v3418 = vld [vmem:[#allocation12 + $0x1e8] sm:$0xff]
        %v3419 = vld [vmem:[#allocation12 + $0x1f0] sm:$0xff]
        %v3420 = vld [vmem:[#allocation12 + $0x1f8] sm:$0xff]
        %v3421 = vld [vmem:[#allocation12 + $0x200] sm:$0xff]
        %v3422 = vld [vmem:[#allocation12 + $0x208] sm:$0xff]
        %v3423 = vld [vmem:[#allocation12 + $0x210] sm:$0xff]
        %v3424 = vld [vmem:[#allocation12 + $0x218] sm:$0xff]
        %v3425 = vld [vmem:[#allocation12 + $0x220] sm:$0xff]
        %v3426 = vld [vmem:[#allocation12 + $0x228] sm:$0xff]
        %v3427 = vld [vmem:[#allocation12 + $0x230] sm:$0xff]
        %v3428 = vld [vmem:[#allocation12 + $0x238] sm:$0xff]
        %v3429 = vld [vmem:[#allocation12 + $0x240] sm:$0xff]
        %v3430 = vld [vmem:[#allocation12 + $0x248] sm:$0xff]
        %v3431 = vld [vmem:[#allocation12 + $0x250] sm:$0xff]
        %v3432 = vld [vmem:[#allocation12 + $0x258] sm:$0xff]
        %v3433 = vld [vmem:[#allocation12 + $0x260] sm:$0xff]
        %v3434 = vld [vmem:[#allocation12 + $0x268] sm:$0xff]
        %v3435 = vld [vmem:[#allocation12 + $0x270] sm:$0xff]
        %v3436 = vld [vmem:[#allocation12 + $0x278] sm:$0xff]
        %v3437 = vld [vmem:[#allocation12 + $0x280] sm:$0xff]
        %v3438 = vld [vmem:[#allocation12 + $0x288] sm:$0xff]
        %v3439 = vld [vmem:[#allocation12 + $0x290] sm:$0xff]
        %v3440 = vld [vmem:[#allocation12 + $0x298] sm:$0xff]
        %v3441 = vld [vmem:[#allocation12 + $0x2a0] sm:$0xff]
        %v3442 = vld [vmem:[#allocation12 + $0x2a8] sm:$0xff]
        %v3443 = vld [vmem:[#allocation12 + $0x2b0] sm:$0xff]
        %v3444 = vld [vmem:[#allocation12 + $0x2b8] sm:$0xff]
        %v3445 = vld [vmem:[#allocation12 + $0x2c0] sm:$0xff]
        %v3446 = vld [vmem:[#allocation12 + $0x2c8] sm:$0xff]
        %v3447 = vld [vmem:[#allocation12 + $0x2d0] sm:$0xff]
        %v3448 = vld [vmem:[#allocation12 + $0x2d8] sm:$0xff]
        %v3449 = vld [vmem:[#allocation12 + $0x2e0] sm:$0xff]
        %v3450 = vld [vmem:[#allocation12 + $0x2e8] sm:$0xff]
        %v3451 = vld [vmem:[#allocation12 + $0x2f0] sm:$0xff]
        %v3452 = vld [vmem:[#allocation12 + $0x2f8] sm:$0xff]
        %v3549 = vunpack.c.l.b16 %v3357
        %v3550 = vunpack.c.h.b16 %v3357
        %v3551 = vunpack.c.l.b16 %v3358
        %v3552 = vunpack.c.h.b16 %v3358
        %v3553 = vunpack.c.l.b16 %v3359
        %v3554 = vunpack.c.h.b16 %v3359
        %v3555 = vunpack.c.l.b16 %v3360
        %v3556 = vunpack.c.h.b16 %v3360
        %v3557 = vunpack.c.l.b16 %v3361
        %v3558 = vunpack.c.h.b16 %v3361
        %v3559 = vunpack.c.l.b16 %v3362
        %v3560 = vunpack.c.h.b16 %v3362
        %v3561 = vunpack.c.l.b16 %v3363
        %v3562 = vunpack.c.h.b16 %v3363
        %v3563 = vunpack.c.l.b16 %v3364
        %v3564 = vunpack.c.h.b16 %v3364
        %v3565 = vunpack.c.l.b16 %v3365
        %v3566 = vunpack.c.h.b16 %v3365
        %v3567 = vunpack.c.l.b16 %v3366
        %v3568 = vunpack.c.h.b16 %v3366
        %v3569 = vunpack.c.l.b16 %v3367
        %v3570 = vunpack.c.h.b16 %v3367
        %v3571 = vunpack.c.l.b16 %v3368
        %v3572 = vunpack.c.h.b16 %v3368
        %v3573 = vunpack.c.l.b16 %v3369
        %v3574 = vunpack.c.h.b16 %v3369
        %v3575 = vunpack.c.l.b16 %v3370
        %v3576 = vunpack.c.h.b16 %v3370
        %v3577 = vunpack.c.l.b16 %v3371
        %v3578 = vunpack.c.h.b16 %v3371
        %v3579 = vunpack.c.l.b16 %v3372
        %v3580 = vunpack.c.h.b16 %v3372
        %v3581 = vunpack.c.l.b16 %v3373
        %v3582 = vunpack.c.h.b16 %v3373
        %v3583 = vunpack.c.l.b16 %v3374
        %v3584 = vunpack.c.h.b16 %v3374
        %v3585 = vunpack.c.l.b16 %v3375
        %v3586 = vunpack.c.h.b16 %v3375
        %v3587 = vunpack.c.l.b16 %v3376
        %v3588 = vunpack.c.h.b16 %v3376
        %v3589 = vunpack.c.l.b16 %v3377
        %v3590 = vunpack.c.h.b16 %v3377
        %v3591 = vunpack.c.l.b16 %v3378
        %v3592 = vunpack.c.h.b16 %v3378
        %v3593 = vunpack.c.l.b16 %v3379
        %v3594 = vunpack.c.h.b16 %v3379
        %v3595 = vunpack.c.l.b16 %v3380
        %v3596 = vunpack.c.h.b16 %v3380
        %v3597 = vunpack.c.l.b16 %v3381
        %v3598 = vunpack.c.h.b16 %v3381
        %v3599 = vunpack.c.l.b16 %v3382
        %v3600 = vunpack.c.h.b16 %v3382
        %v3601 = vunpack.c.l.b16 %v3383
        %v3602 = vunpack.c.h.b16 %v3383
        %v3603 = vunpack.c.l.b16 %v3384
        %v3604 = vunpack.c.h.b16 %v3384
        %v3605 = vunpack.c.l.b16 %v3385
        %v3606 = vunpack.c.h.b16 %v3385
        %v3607 = vunpack.c.l.b16 %v3386
        %v3608 = vunpack.c.h.b16 %v3386
        %v3609 = vunpack.c.l.b16 %v3387
        %v3610 = vunpack.c.h.b16 %v3387
        %v3611 = vunpack.c.l.b16 %v3388
        %v3612 = vunpack.c.h.b16 %v3388
        %v3613 = vunpack.c.l.b16 %v3389
        %v3614 = vunpack.c.h.b16 %v3389
        %v3615 = vunpack.c.l.b16 %v3390
        %v3616 = vunpack.c.h.b16 %v3390
        %v3617 = vunpack.c.l.b16 %v3391
        %v3618 = vunpack.c.h.b16 %v3391
        %v3619 = vunpack.c.l.b16 %v3392
        %v3620 = vunpack.c.h.b16 %v3392
        %v3621 = vunpack.c.l.b16 %v3393
        %v3622 = vunpack.c.h.b16 %v3393
        %v3623 = vunpack.c.l.b16 %v3394
        %v3624 = vunpack.c.h.b16 %v3394
        %v3625 = vunpack.c.l.b16 %v3395
        %v3626 = vunpack.c.h.b16 %v3395
        %v3627 = vunpack.c.l.b16 %v3396
        %v3628 = vunpack.c.h.b16 %v3396
        %v3629 = vunpack.c.l.b16 %v3397
        %v3630 = vunpack.c.h.b16 %v3397
        %v3631 = vunpack.c.l.b16 %v3398
        %v3632 = vunpack.c.h.b16 %v3398
        %v3633 = vunpack.c.l.b16 %v3399
        %v3634 = vunpack.c.h.b16 %v3399
        %v3635 = vunpack.c.l.b16 %v3400
        %v3636 = vunpack.c.h.b16 %v3400
        %v3637 = vunpack.c.l.b16 %v3401
        %v3638 = vunpack.c.h.b16 %v3401
        %v3639 = vunpack.c.l.b16 %v3402
        %v3640 = vunpack.c.h.b16 %v3402
        %v3641 = vunpack.c.l.b16 %v3403
        %v3642 = vunpack.c.h.b16 %v3403
        %v3643 = vunpack.c.l.b16 %v3404
        %v3644 = vunpack.c.h.b16 %v3404
        %v3645 = vunpack.c.l.b16 %v3405
        %v3646 = vunpack.c.h.b16 %v3405
        %v3647 = vunpack.c.l.b16 %v3406
        %v3648 = vunpack.c.h.b16 %v3406
        %v3649 = vunpack.c.l.b16 %v3407
        %v3650 = vunpack.c.h.b16 %v3407
        %v3651 = vunpack.c.l.b16 %v3408
        %v3652 = vunpack.c.h.b16 %v3408
        %v3653 = vunpack.c.l.b16 %v3409
        %v3654 = vunpack.c.h.b16 %v3409
        %v3655 = vunpack.c.l.b16 %v3410
        %v3656 = vunpack.c.h.b16 %v3410
        %v3657 = vunpack.c.l.b16 %v3411
        %v3658 = vunpack.c.h.b16 %v3411
        %v3659 = vunpack.c.l.b16 %v3412
        %v3660 = vunpack.c.h.b16 %v3412
        %v3661 = vunpack.c.l.b16 %v3413
        %v3662 = vunpack.c.h.b16 %v3413
        %v3663 = vunpack.c.l.b16 %v3414
        %v3664 = vunpack.c.h.b16 %v3414
        %v3665 = vunpack.c.l.b16 %v3415
        %v3666 = vunpack.c.h.b16 %v3415
        %v3667 = vunpack.c.l.b16 %v3416
        %v3668 = vunpack.c.h.b16 %v3416
        %v3669 = vunpack.c.l.b16 %v3417
        %v3670 = vunpack.c.h.b16 %v3417
        %v3671 = vunpack.c.l.b16 %v3418
        %v3672 = vunpack.c.h.b16 %v3418
        %v3673 = vunpack.c.l.b16 %v3419
        %v3674 = vunpack.c.h.b16 %v3419
        %v3675 = vunpack.c.l.b16 %v3420
        %v3676 = vunpack.c.h.b16 %v3420
        %v3677 = vunpack.c.l.b16 %v3421
        %v3678 = vunpack.c.h.b16 %v3421
        %v3679 = vunpack.c.l.b16 %v3422
        %v3680 = vunpack.c.h.b16 %v3422
        %v3681 = vunpack.c.l.b16 %v3423
        %v3682 = vunpack.c.h.b16 %v3423
        %v3683 = vunpack.c.l.b16 %v3424
        %v3684 = vunpack.c.h.b16 %v3424
        %v3685 = vunpack.c.l.b16 %v3425
        %v3686 = vunpack.c.h.b16 %v3425
        %v3687 = vunpack.c.l.b16 %v3426
        %v3688 = vunpack.c.h.b16 %v3426
        %v3689 = vunpack.c.l.b16 %v3427
        %v3690 = vunpack.c.h.b16 %v3427
        %v3691 = vunpack.c.l.b16 %v3428
        %v3692 = vunpack.c.h.b16 %v3428
        %v3693 = vunpack.c.l.b16 %v3429
        %v3694 = vunpack.c.h.b16 %v3429
        %v3695 = vunpack.c.l.b16 %v3430
        %v3696 = vunpack.c.h.b16 %v3430
        %v3697 = vunpack.c.l.b16 %v3431
        %v3698 = vunpack.c.h.b16 %v3431
        %v3699 = vunpack.c.l.b16 %v3432
        %v3700 = vunpack.c.h.b16 %v3432
        %v3701 = vunpack.c.l.b16 %v3433
        %v3702 = vunpack.c.h.b16 %v3433
        %v3703 = vunpack.c.l.b16 %v3434
        %v3704 = vunpack.c.h.b16 %v3434
        %v3705 = vunpack.c.l.b16 %v3435
        %v3706 = vunpack.c.h.b16 %v3435
        %v3707 = vunpack.c.l.b16 %v3436
        %v3708 = vunpack.c.h.b16 %v3436
        %v3709 = vunpack.c.l.b16 %v3437
        %v3710 = vunpack.c.h.b16 %v3437
        %v3711 = vunpack.c.l.b16 %v3438
        %v3712 = vunpack.c.h.b16 %v3438
        %v3713 = vunpack.c.l.b16 %v3439
        %v3714 = vunpack.c.h.b16 %v3439
        %v3715 = vunpack.c.l.b16 %v3440
        %v3716 = vunpack.c.h.b16 %v3440
        %v3717 = vunpack.c.l.b16 %v3441
        %v3718 = vunpack.c.h.b16 %v3441
        %v3719 = vunpack.c.l.b16 %v3442
        %v3720 = vunpack.c.h.b16 %v3442
        %v3721 = vunpack.c.l.b16 %v3443
        %v3722 = vunpack.c.h.b16 %v3443
        %v3723 = vunpack.c.l.b16 %v3444
        %v3724 = vunpack.c.h.b16 %v3444
        %v3725 = vunpack.c.l.b16 %v3445
        %v3726 = vunpack.c.h.b16 %v3445
        %v3727 = vunpack.c.l.b16 %v3446
        %v3728 = vunpack.c.h.b16 %v3446
        %v3729 = vunpack.c.l.b16 %v3447
        %v3730 = vunpack.c.h.b16 %v3447
        %v3731 = vunpack.c.l.b16 %v3448
        %v3732 = vunpack.c.h.b16 %v3448
        %v3733 = vunpack.c.l.b16 %v3449
        %v3734 = vunpack.c.h.b16 %v3449
        %v3735 = vunpack.c.l.b16 %v3450
        %v3736 = vunpack.c.h.b16 %v3450
        %v3737 = vunpack.c.l.b16 %v3451
        %v3738 = vunpack.c.h.b16 %v3451
        %v3739 = vunpack.c.l.b16 %v3452
        %v3740 = vunpack.c.h.b16 %v3452
        %v3741 = vpack.c.b16 %v3551, %v3549
        %v3742 = vpack.c.b16 %v3552, %v3550
        %v3743 = vpack.c.b16 %v3555, %v3553
        %v3744 = vpack.c.b16 %v3556, %v3554
        %v3745 = vpack.c.b16 %v3559, %v3557
        %v3746 = vpack.c.b16 %v3560, %v3558
        %v3747 = vpack.c.b16 %v3563, %v3561
        %v3748 = vpack.c.b16 %v3564, %v3562
        %v3749 = vpack.c.b16 %v3567, %v3565
        %v3750 = vpack.c.b16 %v3568, %v3566
        %v3751 = vpack.c.b16 %v3571, %v3569
        %v3752 = vpack.c.b16 %v3572, %v3570
        %v3753 = vpack.c.b16 %v3575, %v3573
        %v3754 = vpack.c.b16 %v3576, %v3574
        %v3755 = vpack.c.b16 %v3579, %v3577
        %v3756 = vpack.c.b16 %v3580, %v3578
        %v3757 = vpack.c.b16 %v3583, %v3581
        %v3758 = vpack.c.b16 %v3584, %v3582
        %v3759 = vpack.c.b16 %v3587, %v3585
        %v3760 = vpack.c.b16 %v3588, %v3586
        %v3761 = vpack.c.b16 %v3591, %v3589
        %v3762 = vpack.c.b16 %v3592, %v3590
        %v3763 = vpack.c.b16 %v3595, %v3593
        %v3764 = vpack.c.b16 %v3596, %v3594
        %v3765 = vpack.c.b16 %v3599, %v3597
        %v3766 = vpack.c.b16 %v3600, %v3598
        %v3767 = vpack.c.b16 %v3603, %v3601
        %v3768 = vpack.c.b16 %v3604, %v3602
        %v3769 = vpack.c.b16 %v3607, %v3605
        %v3770 = vpack.c.b16 %v3608, %v3606
        %v3771 = vpack.c.b16 %v3611, %v3609
        %v3772 = vpack.c.b16 %v3612, %v3610
        %v3773 = vpack.c.b16 %v3615, %v3613
        %v3774 = vpack.c.b16 %v3616, %v3614
        %v3775 = vpack.c.b16 %v3619, %v3617
        %v3776 = vpack.c.b16 %v3620, %v3618
        %v3777 = vpack.c.b16 %v3623, %v3621
        %v3778 = vpack.c.b16 %v3624, %v3622
        %v3779 = vpack.c.b16 %v3627, %v3625
        %v3780 = vpack.c.b16 %v3628, %v3626
        %v3781 = vpack.c.b16 %v3631, %v3629
        %v3782 = vpack.c.b16 %v3632, %v3630
        %v3783 = vpack.c.b16 %v3635, %v3633
        %v3784 = vpack.c.b16 %v3636, %v3634
        %v3785 = vpack.c.b16 %v3639, %v3637
        %v3786 = vpack.c.b16 %v3640, %v3638
        %v3787 = vpack.c.b16 %v3643, %v3641
        %v3788 = vpack.c.b16 %v3644, %v3642
        %v3789 = vpack.c.b16 %v3647, %v3645
        %v3790 = vpack.c.b16 %v3648, %v3646
        %v3791 = vpack.c.b16 %v3651, %v3649
        %v3792 = vpack.c.b16 %v3652, %v3650
        %v3793 = vpack.c.b16 %v3655, %v3653
        %v3794 = vpack.c.b16 %v3656, %v3654
        %v3795 = vpack.c.b16 %v3659, %v3657
        %v3796 = vpack.c.b16 %v3660, %v3658
        %v3797 = vpack.c.b16 %v3663, %v3661
        %v3798 = vpack.c.b16 %v3664, %v3662
        %v3799 = vpack.c.b16 %v3667, %v3665
        %v3800 = vpack.c.b16 %v3668, %v3666
        %v3801 = vpack.c.b16 %v3671, %v3669
        %v3802 = vpack.c.b16 %v3672, %v3670
        %v3803 = vpack.c.b16 %v3675, %v3673
        %v3804 = vpack.c.b16 %v3676, %v3674
        %v3805 = vpack.c.b16 %v3679, %v3677
        %v3806 = vpack.c.b16 %v3680, %v3678
        %v3807 = vpack.c.b16 %v3683, %v3681
        %v3808 = vpack.c.b16 %v3684, %v3682
        %v3809 = vpack.c.b16 %v3687, %v3685
        %v3810 = vpack.c.b16 %v3688, %v3686
        %v3811 = vpack.c.b16 %v3691, %v3689
        %v3812 = vpack.c.b16 %v3692, %v3690
        %v3813 = vpack.c.b16 %v3695, %v3693
        %v3814 = vpack.c.b16 %v3696, %v3694
        %v3815 = vpack.c.b16 %v3699, %v3697
        %v3816 = vpack.c.b16 %v3700, %v3698
        %v3817 = vpack.c.b16 %v3703, %v3701
        %v3818 = vpack.c.b16 %v3704, %v3702
        %v3819 = vpack.c.b16 %v3707, %v3705
        %v3820 = vpack.c.b16 %v3708, %v3706
        %v3821 = vpack.c.b16 %v3711, %v3709
        %v3822 = vpack.c.b16 %v3712, %v3710
        %v3823 = vpack.c.b16 %v3715, %v3713
        %v3824 = vpack.c.b16 %v3716, %v3714
        %v3825 = vpack.c.b16 %v3719, %v3717
        %v3826 = vpack.c.b16 %v3720, %v3718
        %v3827 = vpack.c.b16 %v3723, %v3721
        %v3828 = vpack.c.b16 %v3724, %v3722
        %v3829 = vpack.c.b16 %v3727, %v3725
        %v3830 = vpack.c.b16 %v3728, %v3726
        %v3831 = vpack.c.b16 %v3731, %v3729
        %v3832 = vpack.c.b16 %v3732, %v3730
        %v3833 = vpack.c.b16 %v3735, %v3733
        %v3834 = vpack.c.b16 %v3736, %v3734
        %v3835 = vpack.c.b16 %v3739, %v3737
        %v3836 = vpack.c.b16 %v3740, %v3738
        %3933 = vmatprep.subr.bf16.mxu0 %v3742
        %3934 = vmatpush1.bf16.msra.mxu0 %v3741
        %3935 = vmatprep.subr.bf16.mxu0 %v3744
        %3936 = vmatpush1.bf16.msra.mxu0 %v3743
        %3937 = vmatprep.subr.bf16.mxu0 %v3746
        %3938 = vmatpush1.bf16.msra.mxu0 %v3745
        %3939 = vmatprep.subr.bf16.mxu0 %v3748
        %3940 = vmatpush1.bf16.msra.mxu0 %v3747
        %3941 = vmatprep.subr.bf16.mxu0 %v3750
        %3942 = vmatpush1.bf16.msra.mxu0 %v3749
        %3943 = vmatprep.subr.bf16.mxu0 %v3752
        %3944 = vmatpush1.bf16.msra.mxu0 %v3751
        %3945 = vmatprep.subr.bf16.mxu0 %v3754
        %3946 = vmatpush1.bf16.msra.mxu0 %v3753
        %3947 = vmatprep.subr.bf16.mxu0 %v3756
        %3948 = vmatpush1.bf16.msra.mxu0 %v3755
        %3949 = vmatprep.subr.bf16.mxu0 %v3758
        %3950 = vmatpush1.bf16.msra.mxu0 %v3757
        %3951 = vmatprep.subr.bf16.mxu0 %v3760
        %3952 = vmatpush1.bf16.msra.mxu0 %v3759
        %3953 = vmatprep.subr.bf16.mxu0 %v3762
        %3954 = vmatpush1.bf16.msra.mxu0 %v3761
        %3955 = vmatprep.subr.bf16.mxu0 %v3764
        %3956 = vmatpush1.bf16.msra.mxu0 %v3763
        %3957 = vmatprep.subr.bf16.mxu0 %v3766
        %3958 = vmatpush1.bf16.msra.mxu0 %v3765
        %3959 = vmatprep.subr.bf16.mxu0 %v3768
        %3960 = vmatpush1.bf16.msra.mxu0 %v3767
        %3961 = vmatprep.subr.bf16.mxu0 %v3770
        %3962 = vmatpush1.bf16.msra.mxu0 %v3769
        %3963 = vmatprep.subr.bf16.mxu0 %v3772
        %3964 = vmatpush1.bf16.msra.mxu0 %v3771
        %3965 = vmatprep.mubr.bf16.mxu0 %v3310
        %3966 = vmatmul.mubr.bf16.gmra.mrb[0].mxu0 %v3309
        %v3967 = vpop.f32.mrb[0].mxu0
        %v3968 = vadd.f32 0.0, %v3967
        %v3969 = vpop.f32.mrb[0].mxu0
        %v3970 = vadd.f32 0.0, %v3969
        %v3971 = vpop.f32.mrb[0].mxu0
        %v3972 = vadd.f32 0.0, %v3971
        %v3973 = vpop.f32.mrb[0].mxu0
        %v3974 = vadd.f32 0.0, %v3973
        %3975 = vmatprep.mubr.bf16.mxu0 %v3316
        %3976 = vmatmul.mubr.bf16.gmra.mrb[0].mxu0 %v3315
        %v3977 = vpop.f32.mrb[0].mxu0
        %v3978 = vadd.f32 0.0, %v3977
        %v3979 = vpop.f32.mrb[0].mxu0
        %v3980 = vadd.f32 0.0, %v3979
        %v3981 = vpop.f32.mrb[0].mxu0
        %v3982 = vadd.f32 0.0, %v3981
        %v3983 = vpop.f32.mrb[0].mxu0
        %v3984 = vadd.f32 0.0, %v3983
        %3985 = vmatprep.mubr.bf16.mxu0 %v3322
        %3986 = vmatmul.mubr.bf16.gmra.mrb[0].mxu0 %v3321
        %v3987 = vpop.f32.mrb[0].mxu0
        %v3988 = vadd.f32 0.0, %v3987
        %v3989 = vpop.f32.mrb[0].mxu0
        %v3990 = vadd.f32 0.0, %v3989
        %v3991 = vpop.f32.mrb[0].mxu0
        %v3992 = vadd.f32 0.0, %v3991
        %v3993 = vpop.f32.mrb[0].mxu0
        %v3994 = vadd.f32 0.0, %v3993
        %3995 = vmatprep.mubr.bf16.mxu0 %v3328
        %3996 = vmatmul.mubr.bf16.gmra.mrb[0].mxu0 %v3327
        %v3997 = vpop.f32.mrb[0].mxu0
        %v3998 = vadd.f32 0.0, %v3997
        %v3999 = vpop.f32.mrb[0].mxu0
        %v4000 = vadd.f32 0.0, %v3999
        %v4001 = vpop.f32.mrb[0].mxu0
        %v4002 = vadd.f32 0.0, %v4001
        %v4003 = vpop.f32.mrb[0].mxu0
        %v4004 = vadd.f32 0.0, %v4003
        %4005 = vmatprep.mubr.bf16.mxu0 %v3334
        %4006 = vmatmul.mubr.bf16.gmra.mrb[0].mxu0 %v3333
        %v4007 = vpop.f32.mrb[0].mxu0
        %v4008 = vadd.f32 0.0, %v4007
        %v4009 = vpop.f32.mrb[0].mxu0
        %v4010 = vadd.f32 0.0, %v4009
        %v4011 = vpop.f32.mrb[0].mxu0
        %v4012 = vadd.f32 0.0, %v4011
        %v4013 = vpop.f32.mrb[0].mxu0
        %v4014 = vadd.f32 0.0, %v4013
        %4015 = vmatprep.mubr.bf16.mxu0 %v3340
        %4016 = vmatmul.mubr.bf16.gmra.mrb[0].mxu0 %v3339
        %v4017 = vpop.f32.mrb[0].mxu0
        %v4018 = vadd.f32 0.0, %v4017
        %v4019 = vpop.f32.mrb[0].mxu0
        %v4020 = vadd.f32 0.0, %v4019
        %v4021 = vpop.f32.mrb[0].mxu0
        %v4022 = vadd.f32 0.0, %v4021
        %v4023 = vpop.f32.mrb[0].mxu0
        %v4024 = vadd.f32 0.0, %v4023
        %4025 = vmatprep.mubr.bf16.mxu0 %v3346
        %4026 = vmatmul.mubr.bf16.gmra.mrb[0].mxu0 %v3345
        %v4027 = vpop.f32.mrb[0].mxu0
        %v4028 = vadd.f32 0.0, %v4027
        %v4029 = vpop.f32.mrb[0].mxu0
        %v4030 = vadd.f32 0.0, %v4029
        %v4031 = vpop.f32.mrb[0].mxu0
        %v4032 = vadd.f32 0.0, %v4031
        %v4033 = vpop.f32.mrb[0].mxu0
        %v4034 = vadd.f32 0.0, %v4033
        %4035 = vmatprep.mubr.bf16.mxu0 %v3352
        %4036 = vmatmul.mubr.bf16.gmra.mrb[0].mxu0 %v3351
        %v4037 = vpop.f32.mrb[0].mxu0
        %v4038 = vadd.f32 0.0, %v4037
        %v4039 = vpop.f32.mrb[0].mxu0
        %v4040 = vadd.f32 0.0, %v4039
        %v4041 = vpop.f32.mrb[0].mxu0
        %v4042 = vadd.f32 0.0, %v4041
        %v4043 = vpop.f32.mrb[0].mxu0
        %v4044 = vadd.f32 0.0, %v4043
        %4045 = vdwg.mxu0
        %4046 = vmatprep.subr.bf16.mxu0 %v3774
        %4047 = vmatpush1.bf16.msra.mxu0 %v3773
        %4048 = vmatprep.subr.bf16.mxu0 %v3776
        %4049 = vmatpush1.bf16.msra.mxu0 %v3775
        %4050 = vmatprep.subr.bf16.mxu0 %v3778
        %4051 = vmatpush1.bf16.msra.mxu0 %v3777
        %4052 = vmatprep.subr.bf16.mxu0 %v3780
        %4053 = vmatpush1.bf16.msra.mxu0 %v3779
        %4054 = vmatprep.subr.bf16.mxu0 %v3782
        %4055 = vmatpush1.bf16.msra.mxu0 %v3781
        %4056 = vmatprep.subr.bf16.mxu0 %v3784
        %4057 = vmatpush1.bf16.msra.mxu0 %v3783
        %4058 = vmatprep.subr.bf16.mxu0 %v3786
        %4059 = vmatpush1.bf16.msra.mxu0 %v3785
        %4060 = vmatprep.subr.bf16.mxu0 %v3788
        %4061 = vmatpush1.bf16.msra.mxu0 %v3787
        %4062 = vmatprep.subr.bf16.mxu0 %v3790
        %4063 = vmatpush1.bf16.msra.mxu0 %v3789
        %4064 = vmatprep.subr.bf16.mxu0 %v3792
        %4065 = vmatpush1.bf16.msra.mxu0 %v3791
        %4066 = vmatprep.subr.bf16.mxu0 %v3794
        %4067 = vmatpush1.bf16.msra.mxu0 %v3793
        %4068 = vmatprep.subr.bf16.mxu0 %v3796
        %4069 = vmatpush1.bf16.msra.mxu0 %v3795
        %4070 = vmatprep.subr.bf16.mxu0 %v3798
        %4071 = vmatpush1.bf16.msra.mxu0 %v3797
        %4072 = vmatprep.subr.bf16.mxu0 %v3800
        %4073 = vmatpush1.bf16.msra.mxu0 %v3799
        %4074 = vmatprep.subr.bf16.mxu0 %v3802
        %4075 = vmatpush1.bf16.msra.mxu0 %v3801
        %4076 = vmatprep.subr.bf16.mxu0 %v3804
        %4077 = vmatpush1.bf16.msra.mxu0 %v3803
        %4078 = vmatprep.mubr.bf16.mxu0 %v3312
        %4079 = vmatmul.mubr.bf16.gmra.mrb[0].mxu0 %v3311
        %v4080 = vpop.f32.mrb[0].mxu0
        %v4081 = vadd.f32 %v3968, %v4080
        %v4082 = vpop.f32.mrb[0].mxu0
        %v4083 = vadd.f32 %v3970, %v4082
        %v4084 = vpop.f32.mrb[0].mxu0
        %v4085 = vadd.f32 %v3972, %v4084
        %v4086 = vpop.f32.mrb[0].mxu0
        %v4087 = vadd.f32 %v3974, %v4086
        %4088 = vmatprep.mubr.bf16.mxu0 %v3318
        %4089 = vmatmul.mubr.bf16.gmra.mrb[0].mxu0 %v3317
        %v4090 = vpop.f32.mrb[0].mxu0
        %v4091 = vadd.f32 %v3978, %v4090
        %v4092 = vpop.f32.mrb[0].mxu0
        %v4093 = vadd.f32 %v3980, %v4092
        %v4094 = vpop.f32.mrb[0].mxu0
        %v4095 = vadd.f32 %v3982, %v4094
        %v4096 = vpop.f32.mrb[0].mxu0
        %v4097 = vadd.f32 %v3984, %v4096
        %4098 = vmatprep.mubr.bf16.mxu0 %v3324
        %4099 = vmatmul.mubr.bf16.gmra.mrb[0].mxu0 %v3323
        %v4100 = vpop.f32.mrb[0].mxu0
        %v4101 = vadd.f32 %v3988, %v4100
        %v4102 = vpop.f32.mrb[0].mxu0
        %v4103 = vadd.f32 %v3990, %v4102
        %v4104 = vpop.f32.mrb[0].mxu0
        %v4105 = vadd.f32 %v3992, %v4104
        %v4106 = vpop.f32.mrb[0].mxu0
        %v4107 = vadd.f32 %v3994, %v4106
        %4108 = vmatprep.mubr.bf16.mxu0 %v3330
        %4109 = vmatmul.mubr.bf16.gmra.mrb[0].mxu0 %v3329
        %v4110 = vpop.f32.mrb[0].mxu0
        %v4111 = vadd.f32 %v3998, %v4110
        %v4112 = vpop.f32.mrb[0].mxu0
        %v4113 = vadd.f32 %v4000, %v4112
        %v4114 = vpop.f32.mrb[0].mxu0
        %v4115 = vadd.f32 %v4002, %v4114
        %v4116 = vpop.f32.mrb[0].mxu0
        %v4117 = vadd.f32 %v4004, %v4116
        %4118 = vmatprep.mubr.bf16.mxu0 %v3336
        %4119 = vmatmul.mubr.bf16.gmra.mrb[0].mxu0 %v3335
        %v4120 = vpop.f32.mrb[0].mxu0
        %v4121 = vadd.f32 %v4008, %v4120
        %v4122 = vpop.f32.mrb[0].mxu0
        %v4123 = vadd.f32 %v4010, %v4122
        %v4124 = vpop.f32.mrb[0].mxu0
        %v4125 = vadd.f32 %v4012, %v4124
        %v4126 = vpop.f32.mrb[0].mxu0
        %v4127 = vadd.f32 %v4014, %v4126
        %4128 = vmatprep.mubr.bf16.mxu0 %v3342
        %4129 = vmatmul.mubr.bf16.gmra.mrb[0].mxu0 %v3341
        %v4130 = vpop.f32.mrb[0].mxu0
        %v4131 = vadd.f32 %v4018, %v4130
        %v4132 = vpop.f32.mrb[0].mxu0
        %v4133 = vadd.f32 %v4020, %v4132
        %v4134 = vpop.f32.mrb[0].mxu0
        %v4135 = vadd.f32 %v4022, %v4134
        %v4136 = vpop.f32.mrb[0].mxu0
        %v4137 = vadd.f32 %v4024, %v4136
        %4138 = vmatprep.mubr.bf16.mxu0 %v3348
        %4139 = vmatmul.mubr.bf16.gmra.mrb[0].mxu0 %v3347
        %v4140 = vpop.f32.mrb[0].mxu0
        %v4141 = vadd.f32 %v4028, %v4140
        %v4142 = vpop.f32.mrb[0].mxu0
        %v4143 = vadd.f32 %v4030, %v4142
        %v4144 = vpop.f32.mrb[0].mxu0
        %v4145 = vadd.f32 %v4032, %v4144
        %v4146 = vpop.f32.mrb[0].mxu0
        %v4147 = vadd.f32 %v4034, %v4146
        %4148 = vmatprep.mubr.bf16.mxu0 %v3354
        %4149 = vmatmul.mubr.bf16.gmra.mrb[0].mxu0 %v3353
        %v4150 = vpop.f32.mrb[0].mxu0
        %v4151 = vadd.f32 %v4038, %v4150
        %v4152 = vpop.f32.mrb[0].mxu0
        %v4153 = vadd.f32 %v4040, %v4152
        %v4154 = vpop.f32.mrb[0].mxu0
        %v4155 = vadd.f32 %v4042, %v4154
        %v4156 = vpop.f32.mrb[0].mxu0
        %v4157 = vadd.f32 %v4044, %v4156
        %4158 = vdwg.mxu0
        %4159 = vmatprep.subr.bf16.mxu0 %v3806
        %4160 = vmatpush1.bf16.msra.mxu0 %v3805
        %4161 = vmatprep.subr.bf16.mxu0 %v3808
        %4162 = vmatpush1.bf16.msra.mxu0 %v3807
        %4163 = vmatprep.subr.bf16.mxu0 %v3810
        %4164 = vmatpush1.bf16.msra.mxu0 %v3809
        %4165 = vmatprep.subr.bf16.mxu0 %v3812
        %4166 = vmatpush1.bf16.msra.mxu0 %v3811
        %4167 = vmatprep.subr.bf16.mxu0 %v3814
        %4168 = vmatpush1.bf16.msra.mxu0 %v3813
        %4169 = vmatprep.subr.bf16.mxu0 %v3816
        %4170 = vmatpush1.bf16.msra.mxu0 %v3815
        %4171 = vmatprep.subr.bf16.mxu0 %v3818
        %4172 = vmatpush1.bf16.msra.mxu0 %v3817
        %4173 = vmatprep.subr.bf16.mxu0 %v3820
        %4174 = vmatpush1.bf16.msra.mxu0 %v3819
        %4175 = vmatprep.subr.bf16.mxu0 %v3822
        %4176 = vmatpush1.bf16.msra.mxu0 %v3821
        %4177 = vmatprep.subr.bf16.mxu0 %v3824
        %4178 = vmatpush1.bf16.msra.mxu0 %v3823
        %4179 = vmatprep.subr.bf16.mxu0 %v3826
        %4180 = vmatpush1.bf16.msra.mxu0 %v3825
        %4181 = vmatprep.subr.bf16.mxu0 %v3828
        %4182 = vmatpush1.bf16.msra.mxu0 %v3827
        %4183 = vmatprep.subr.bf16.mxu0 %v3830
        %4184 = vmatpush1.bf16.msra.mxu0 %v3829
        %4185 = vmatprep.subr.bf16.mxu0 %v3832
        %4186 = vmatpush1.bf16.msra.mxu0 %v3831
        %4187 = vmatprep.subr.bf16.mxu0 %v3834
        %4188 = vmatpush1.bf16.msra.mxu0 %v3833
        %4189 = vmatprep.subr.bf16.mxu0 %v3836
        %4190 = vmatpush1.bf16.msra.mxu0 %v3835
        %4191 = vmatprep.mubr.bf16.mxu0 %v3314
        %4192 = vmatmul.mubr.bf16.gmra.mrb[0].mxu0 %v3313
        %v4193 = vpop.f32.mrb[0].mxu0
        %v4194 = vadd.f32 %v4081, %v4193
        %v4195 = vpop.f32.mrb[0].mxu0
        %v4196 = vadd.f32 %v4083, %v4195
        %v4197 = vpop.f32.mrb[0].mxu0
        %v4198 = vadd.f32 %v4085, %v4197
        %v4199 = vpop.f32.mrb[0].mxu0
        %v4200 = vadd.f32 %v4087, %v4199
        %4201 = vmatprep.mubr.bf16.mxu0 %v3320
        %4202 = vmatmul.mubr.bf16.gmra.mrb[0].mxu0 %v3319
        %v4203 = vpop.f32.mrb[0].mxu0
        %v4204 = vadd.f32 %v4091, %v4203
        %v4205 = vpop.f32.mrb[0].mxu0
        %v4206 = vadd.f32 %v4093, %v4205
        %v4207 = vpop.f32.mrb[0].mxu0
        %v4208 = vadd.f32 %v4095, %v4207
        %v4209 = vpop.f32.mrb[0].mxu0
        %v4210 = vadd.f32 %v4097, %v4209
        %4211 = vmatprep.mubr.bf16.mxu0 %v3326
        %4212 = vmatmul.mubr.bf16.gmra.mrb[0].mxu0 %v3325
        %v4213 = vpop.f32.mrb[0].mxu0
        %v4214 = vadd.f32 %v4101, %v4213
        %v4215 = vpop.f32.mrb[0].mxu0
        %v4216 = vadd.f32 %v4103, %v4215
        %v4217 = vpop.f32.mrb[0].mxu0
        %v4218 = vadd.f32 %v4105, %v4217
        %v4219 = vpop.f32.mrb[0].mxu0
        %v4220 = vadd.f32 %v4107, %v4219
        %4221 = vmatprep.mubr.bf16.mxu0 %v3332
        %4222 = vmatmul.mubr.bf16.gmra.mrb[0].mxu0 %v3331
        %v4223 = vpop.f32.mrb[0].mxu0
        %v4224 = vadd.f32 %v4111, %v4223
        %v4225 = vpop.f32.mrb[0].mxu0
        %v4226 = vadd.f32 %v4113, %v4225
        %v4227 = vpop.f32.mrb[0].mxu0
        %v4228 = vadd.f32 %v4115, %v4227
        %v4229 = vpop.f32.mrb[0].mxu0
        %v4230 = vadd.f32 %v4117, %v4229
        %4231 = vmatprep.mubr.bf16.mxu0 %v3338
        %4232 = vmatmul.mubr.bf16.gmra.mrb[0].mxu0 %v3337
        %v4233 = vpop.f32.mrb[0].mxu0
        %v4234 = vadd.f32 %v4121, %v4233
        %v4235 = vpop.f32.mrb[0].mxu0
        %v4236 = vadd.f32 %v4123, %v4235
        %v4237 = vpop.f32.mrb[0].mxu0
        %v4238 = vadd.f32 %v4125, %v4237
        %v4239 = vpop.f32.mrb[0].mxu0
        %v4240 = vadd.f32 %v4127, %v4239
        %4241 = vmatprep.mubr.bf16.mxu0 %v3344
        %4242 = vmatmul.mubr.bf16.gmra.mrb[0].mxu0 %v3343
        %v4243 = vpop.f32.mrb[0].mxu0
        %v4244 = vadd.f32 %v4131, %v4243
        %v4245 = vpop.f32.mrb[0].mxu0
        %v4246 = vadd.f32 %v4133, %v4245
        %v4247 = vpop.f32.mrb[0].mxu0
        %v4248 = vadd.f32 %v4135, %v4247
        %v4249 = vpop.f32.mrb[0].mxu0
        %v4250 = vadd.f32 %v4137, %v4249
        %4251 = vmatprep.mubr.bf16.mxu0 %v3350
        %4252 = vmatmul.mubr.bf16.gmra.mrb[0].mxu0 %v3349
        %v4253 = vpop.f32.mrb[0].mxu0
        %v4254 = vadd.f32 %v4141, %v4253
        %v4255 = vpop.f32.mrb[0].mxu0
        %v4256 = vadd.f32 %v4143, %v4255
        %v4257 = vpop.f32.mrb[0].mxu0
        %v4258 = vadd.f32 %v4145, %v4257
        %v4259 = vpop.f32.mrb[0].mxu0
        %v4260 = vadd.f32 %v4147, %v4259
        %4261 = vmatprep.mubr.bf16.mxu0 %v3356
        %4262 = vmatmul.mubr.bf16.gmra.mrb[0].mxu0 %v3355
        %v4263 = vpop.f32.mrb[0].mxu0
        %v4264 = vadd.f32 %v4151, %v4263
        %v4265 = vpop.f32.mrb[0].mxu0
        %v4266 = vadd.f32 %v4153, %v4265
        %v4267 = vpop.f32.mrb[0].mxu0
        %v4268 = vadd.f32 %v4155, %v4267
        %v4269 = vpop.f32.mrb[0].mxu0
        %v4270 = vadd.f32 %v4157, %v4269
        %4271 = vdwg.mxu0
        %v4272 = vadd.f32 %v3277, %v4194
        %v4273 = vadd.f32 %v3278, %v4196
        %v4274 = vadd.f32 %v3279, %v4198
        %v4275 = vadd.f32 %v3280, %v4200
        %v4276 = vadd.f32 %v3281, %v4204
        %v4277 = vadd.f32 %v3282, %v4206
        %v4278 = vadd.f32 %v3283, %v4208
        %v4279 = vadd.f32 %v3284, %v4210
        %v4280 = vadd.f32 %v3285, %v4214
        %v4281 = vadd.f32 %v3286, %v4216
        %v4282 = vadd.f32 %v3287, %v4218
        %v4283 = vadd.f32 %v3288, %v4220
        %v4284 = vadd.f32 %v3289, %v4224
        %v4285 = vadd.f32 %v3290, %v4226
        %v4286 = vadd.f32 %v3291, %v4228
        %v4287 = vadd.f32 %v3292, %v4230
        %v4288 = vadd.f32 %v3293, %v4234
        %v4289 = vadd.f32 %v3294, %v4236
        %v4290 = vadd.f32 %v3295, %v4238
        %v4291 = vadd.f32 %v3296, %v4240
        %v4292 = vadd.f32 %v3297, %v4244
        %v4293 = vadd.f32 %v3298, %v4246
        %v4294 = vadd.f32 %v3299, %v4248
        %v4295 = vadd.f32 %v3300, %v4250
        %v4296 = vadd.f32 %v3301, %v4254
        %v4297 = vadd.f32 %v3302, %v4256
        %v4298 = vadd.f32 %v3303, %v4258
        %v4299 = vadd.f32 %v3304, %v4260
        %v4300 = vadd.f32 %v3305, %v4264
        %v4301 = vadd.f32 %v3306, %v4266
        %v4302 = vadd.f32 %v3307, %v4268
        %v4303 = vadd.f32 %v3308, %v4270
        %4304 = vst [vmem:[#allocation2] sm:$0xff] %v4272
        %4305 = vst [vmem:[#allocation2 + $0x8] sm:$0xff] %v4273
        %4306 = vst [vmem:[#allocation2 + $0x10] sm:$0xff] %v4274
        %4307 = vst [vmem:[#allocation2 + $0x18] sm:$0xff] %v4275
        %4308 = vst [vmem:[#allocation2 + $0x20] sm:$0xff] %v4276
        %4309 = vst [vmem:[#allocation2 + $0x28] sm:$0xff] %v4277
        %4310 = vst [vmem:[#allocation2 + $0x30] sm:$0xff] %v4278
        %4311 = vst [vmem:[#allocation2 + $0x38] sm:$0xff] %v4279
        %4312 = vst [vmem:[#allocation2 + $0x40] sm:$0xff] %v4280
        %4313 = vst [vmem:[#allocation2 + $0x48] sm:$0xff] %v4281
        %4314 = vst [vmem:[#allocation2 + $0x50] sm:$0xff] %v4282
        %4315 = vst [vmem:[#allocation2 + $0x58] sm:$0xff] %v4283
        %4316 = vst [vmem:[#allocation2 + $0x60] sm:$0xff] %v4284
        %4317 = vst [vmem:[#allocation2 + $0x68] sm:$0xff] %v4285
        %4318 = vst [vmem:[#allocation2 + $0x70] sm:$0xff] %v4286
        %4319 = vst [vmem:[#allocation2 + $0x78] sm:$0xff] %v4287
        %4320 = vst [vmem:[#allocation2 + $0x80] sm:$0xff] %v4288
        %4321 = vst [vmem:[#allocation2 + $0x88] sm:$0xff] %v4289
        %4322 = vst [vmem:[#allocation2 + $0x90] sm:$0xff] %v4290
        %4323 = vst [vmem:[#allocation2 + $0x98] sm:$0xff] %v4291
        %4324 = vst [vmem:[#allocation2 + $0xa0] sm:$0xff] %v4292
        %4325 = vst [vmem:[#allocation2 + $0xa8] sm:$0xff] %v4293
        %4326 = vst [vmem:[#allocation2 + $0xb0] sm:$0xff] %v4294
        %4327 = vst [vmem:[#allocation2 + $0xb8] sm:$0xff] %v4295
        %4328 = vst [vmem:[#allocation2 + $0xc0] sm:$0xff] %v4296
        %4329 = vst [vmem:[#allocation2 + $0xc8] sm:$0xff] %v4297
        %4330 = vst [vmem:[#allocation2 + $0xd0] sm:$0xff] %v4298
        %4331 = vst [vmem:[#allocation2 + $0xd8] sm:$0xff] %v4299
        %4332 = vst [vmem:[#allocation2 + $0xe0] sm:$0xff] %v4300
        %4333 = vst [vmem:[#allocation2 + $0xe8] sm:$0xff] %v4301
        %4334 = vst [vmem:[#allocation2 + $0xf0] sm:$0xff] %v4302
        %4335 = vst [vmem:[#allocation2 + $0xf8] sm:$0xff] %v4303
        // Predicated region
        $region65: #{transformer_forward.12} parent=39 // pred_check
          %p4336 = pneg %p342
        $region66: #{transformer_forward.12} parent=39 // pred_check_branch
          %4338 = sbr.rel (%p4336) target = $region68
        $region67: #{transformer_forward.12} parent=39 // pred_region
          %v4339 = vld [vmem:[#allocation2] sm:$0xff]
          %v4340 = vld [vmem:[#allocation2 + $0x8] sm:$0xff]
          %v4341 = vld [vmem:[#allocation2 + $0x10] sm:$0xff]
          %v4342 = vld [vmem:[#allocation2 + $0x18] sm:$0xff]
          %v4343 = vld [vmem:[#allocation2 + $0x20] sm:$0xff]
          %v4344 = vld [vmem:[#allocation2 + $0x28] sm:$0xff]
          %v4345 = vld [vmem:[#allocation2 + $0x30] sm:$0xff]
          %v4346 = vld [vmem:[#allocation2 + $0x38] sm:$0xff]
          %v4347 = vld [vmem:[#allocation2 + $0x40] sm:$0xff]
          %v4348 = vld [vmem:[#allocation2 + $0x48] sm:$0xff]
          %v4349 = vld [vmem:[#allocation2 + $0x50] sm:$0xff]
          %v4350 = vld [vmem:[#allocation2 + $0x58] sm:$0xff]
          %v4351 = vld [vmem:[#allocation2 + $0x60] sm:$0xff]
          %v4352 = vld [vmem:[#allocation2 + $0x68] sm:$0xff]
          %v4353 = vld [vmem:[#allocation2 + $0x70] sm:$0xff]
          %v4354 = vld [vmem:[#allocation2 + $0x78] sm:$0xff]
          %v4355 = vld [vmem:[#allocation2 + $0x80] sm:$0xff]
          %v4356 = vld [vmem:[#allocation2 + $0x88] sm:$0xff]
          %v4357 = vld [vmem:[#allocation2 + $0x90] sm:$0xff]
          %v4358 = vld [vmem:[#allocation2 + $0x98] sm:$0xff]
          %v4359 = vld [vmem:[#allocation2 + $0xa0] sm:$0xff]
          %v4360 = vld [vmem:[#allocation2 + $0xa8] sm:$0xff]
          %v4361 = vld [vmem:[#allocation2 + $0xb0] sm:$0xff]
          %v4362 = vld [vmem:[#allocation2 + $0xb8] sm:$0xff]
          %v4363 = vld [vmem:[#allocation2 + $0xc0] sm:$0xff]
          %v4364 = vld [vmem:[#allocation2 + $0xc8] sm:$0xff]
          %v4365 = vld [vmem:[#allocation2 + $0xd0] sm:$0xff]
          %v4366 = vld [vmem:[#allocation2 + $0xd8] sm:$0xff]
          %v4367 = vld [vmem:[#allocation2 + $0xe0] sm:$0xff]
          %v4368 = vld [vmem:[#allocation2 + $0xe8] sm:$0xff]
          %v4369 = vld [vmem:[#allocation2 + $0xf0] sm:$0xff]
          %v4370 = vld [vmem:[#allocation2 + $0xf8] sm:$0xff]
          %v4371 = vld [vmem:[%s294] sm:$0xff]
          %v4372 = vld [vmem:[%s294 + $0x8] sm:$0xff]
          %v4373 = vld [vmem:[%s294 + $0x10] sm:$0xff]
          %v4374 = vld [vmem:[%s294 + $0x18] sm:$0xff]
          %v4375 = vld [vmem:[%s294 + $0x20] sm:$0xff]
          %v4376 = vld [vmem:[%s294 + $0x28] sm:$0xff]
          %v4377 = vld [vmem:[%s294 + $0x30] sm:$0xff]
          %v4378 = vld [vmem:[%s294 + $0x38] sm:$0xff]
          %v4379 = vld [vmem:[%s294 + $0x40] sm:$0xff]
          %v4380 = vld [vmem:[%s294 + $0x48] sm:$0xff]
          %v4381 = vld [vmem:[%s294 + $0x50] sm:$0xff]
          %v4382 = vld [vmem:[%s294 + $0x58] sm:$0xff]
          %v4383 = vld [vmem:[%s294 + $0x60] sm:$0xff]
          %v4384 = vld [vmem:[%s294 + $0x68] sm:$0xff]
          %v4385 = vld [vmem:[%s294 + $0x70] sm:$0xff]
          %v4386 = vld [vmem:[%s294 + $0x78] sm:$0xff]
          %v4387 = vunpack.c.l.bf16 %v4371
          %v4388 = vunpack.c.h.bf16 %v4371
          %v4389 = vunpack.c.l.bf16 %v4372
          %v4390 = vunpack.c.h.bf16 %v4372
          %v4391 = vunpack.c.l.bf16 %v4373
          %v4392 = vunpack.c.h.bf16 %v4373
          %v4393 = vunpack.c.l.bf16 %v4374
          %v4394 = vunpack.c.h.bf16 %v4374
          %v4395 = vunpack.c.l.bf16 %v4375
          %v4396 = vunpack.c.h.bf16 %v4375
          %v4397 = vunpack.c.l.bf16 %v4376
          %v4398 = vunpack.c.h.bf16 %v4376
          %v4399 = vunpack.c.l.bf16 %v4377
          %v4400 = vunpack.c.h.bf16 %v4377
          %v4401 = vunpack.c.l.bf16 %v4378
          %v4402 = vunpack.c.h.bf16 %v4378
          %v4403 = vunpack.c.l.bf16 %v4379
          %v4404 = vunpack.c.h.bf16 %v4379
          %v4405 = vunpack.c.l.bf16 %v4380
          %v4406 = vunpack.c.h.bf16 %v4380
          %v4407 = vunpack.c.l.bf16 %v4381
          %v4408 = vunpack.c.h.bf16 %v4381
          %v4409 = vunpack.c.l.bf16 %v4382
          %v4410 = vunpack.c.h.bf16 %v4382
          %v4411 = vunpack.c.l.bf16 %v4383
          %v4412 = vunpack.c.h.bf16 %v4383
          %v4413 = vunpack.c.l.bf16 %v4384
          %v4414 = vunpack.c.h.bf16 %v4384
          %v4415 = vunpack.c.l.bf16 %v4385
          %v4416 = vunpack.c.h.bf16 %v4385
          %v4417 = vunpack.c.l.bf16 %v4386
          %v4418 = vunpack.c.h.bf16 %v4386
          %v4419 = vadd.f32 %v4339, %v4387
          %v4420 = vadd.f32 %v4340, %v4388
          %v4421 = vadd.f32 %v4341, %v4389
          %v4422 = vadd.f32 %v4342, %v4390
          %v4423 = vadd.f32 %v4343, %v4391
          %v4424 = vadd.f32 %v4344, %v4392
          %v4425 = vadd.f32 %v4345, %v4393
          %v4426 = vadd.f32 %v4346, %v4394
          %v4427 = vadd.f32 %v4347, %v4395
          %v4428 = vadd.f32 %v4348, %v4396
          %v4429 = vadd.f32 %v4349, %v4397
          %v4430 = vadd.f32 %v4350, %v4398
          %v4431 = vadd.f32 %v4351, %v4399
          %v4432 = vadd.f32 %v4352, %v4400
          %v4433 = vadd.f32 %v4353, %v4401
          %v4434 = vadd.f32 %v4354, %v4402
          %v4435 = vadd.f32 %v4355, %v4403
          %v4436 = vadd.f32 %v4356, %v4404
          %v4437 = vadd.f32 %v4357, %v4405
          %v4438 = vadd.f32 %v4358, %v4406
          %v4439 = vadd.f32 %v4359, %v4407
          %v4440 = vadd.f32 %v4360, %v4408
          %v4441 = vadd.f32 %v4361, %v4409
          %v4442 = vadd.f32 %v4362, %v4410
          %v4443 = vadd.f32 %v4363, %v4411
          %v4444 = vadd.f32 %v4364, %v4412
          %v4445 = vadd.f32 %v4365, %v4413
          %v4446 = vadd.f32 %v4366, %v4414
          %v4447 = vadd.f32 %v4367, %v4415
          %v4448 = vadd.f32 %v4368, %v4416
          %v4449 = vadd.f32 %v4369, %v4417
          %v4450 = vadd.f32 %v4370, %v4418
          %v4451 = vpack.c.bf16 %v4421, %v4419
          %v4452 = vpack.c.bf16 %v4422, %v4420
          %v4453 = vpack.c.bf16 %v4425, %v4423
          %v4454 = vpack.c.bf16 %v4426, %v4424
          %v4455 = vpack.c.bf16 %v4429, %v4427
          %v4456 = vpack.c.bf16 %v4430, %v4428
          %v4457 = vpack.c.bf16 %v4433, %v4431
          %v4458 = vpack.c.bf16 %v4434, %v4432
          %v4459 = vpack.c.bf16 %v4437, %v4435
          %v4460 = vpack.c.bf16 %v4438, %v4436
          %v4461 = vpack.c.bf16 %v4441, %v4439
          %v4462 = vpack.c.bf16 %v4442, %v4440
          %v4463 = vpack.c.bf16 %v4445, %v4443
          %v4464 = vpack.c.bf16 %v4446, %v4444
          %v4465 = vpack.c.bf16 %v4449, %v4447
          %v4466 = vpack.c.bf16 %v4450, %v4448
          %v4483 = vunpack.c.l.b16 %v4451
          %v4484 = vunpack.c.l.b16 %v4452
          %v4485 = vunpack.c.h.b16 %v4451
          %v4486 = vunpack.c.h.b16 %v4452
          %v4487 = vunpack.c.l.b16 %v4453
          %v4488 = vunpack.c.l.b16 %v4454
          %v4489 = vunpack.c.h.b16 %v4453
          %v4490 = vunpack.c.h.b16 %v4454
          %v4491 = vunpack.c.l.b16 %v4455
          %v4492 = vunpack.c.l.b16 %v4456
          %v4493 = vunpack.c.h.b16 %v4455
          %v4494 = vunpack.c.h.b16 %v4456
          %v4495 = vunpack.c.l.b16 %v4457
          %v4496 = vunpack.c.l.b16 %v4458
          %v4497 = vunpack.c.h.b16 %v4457
          %v4498 = vunpack.c.h.b16 %v4458
          %v4499 = vunpack.c.l.b16 %v4459
          %v4500 = vunpack.c.l.b16 %v4460
          %v4501 = vunpack.c.h.b16 %v4459
          %v4502 = vunpack.c.h.b16 %v4460
          %v4503 = vunpack.c.l.b16 %v4461
          %v4504 = vunpack.c.l.b16 %v4462
          %v4505 = vunpack.c.h.b16 %v4461
          %v4506 = vunpack.c.h.b16 %v4462
          %v4507 = vunpack.c.l.b16 %v4463
          %v4508 = vunpack.c.l.b16 %v4464
          %v4509 = vunpack.c.h.b16 %v4463
          %v4510 = vunpack.c.h.b16 %v4464
          %v4511 = vunpack.c.l.b16 %v4465
          %v4512 = vunpack.c.l.b16 %v4466
          %v4513 = vunpack.c.h.b16 %v4465
          %v4514 = vunpack.c.h.b16 %v4466
          %v4515 = vpack.c.b16 %v4484, %v4483
          %v4516 = vpack.c.b16 %v4486, %v4485
          %v4517 = vpack.c.b16 %v4488, %v4487
          %v4518 = vpack.c.b16 %v4490, %v4489
          %v4519 = vpack.c.b16 %v4492, %v4491
          %v4520 = vpack.c.b16 %v4494, %v4493
          %v4521 = vpack.c.b16 %v4496, %v4495
          %v4522 = vpack.c.b16 %v4498, %v4497
          %v4523 = vpack.c.b16 %v4500, %v4499
          %v4524 = vpack.c.b16 %v4502, %v4501
          %v4525 = vpack.c.b16 %v4504, %v4503
          %v4526 = vpack.c.b16 %v4506, %v4505
          %v4527 = vpack.c.b16 %v4508, %v4507
          %v4528 = vpack.c.b16 %v4510, %v4509
          %v4529 = vpack.c.b16 %v4512, %v4511
          %v4530 = vpack.c.b16 %v4514, %v4513
          %4547 = vst [vmem:[%s336] sm:$0xff] %v4515
          %4548 = vst [vmem:[%s336 + $0x8] sm:$0xff] %v4516
          %4549 = vst [vmem:[%s336 + $0x10] sm:$0xff] %v4517
          %4550 = vst [vmem:[%s336 + $0x18] sm:$0xff] %v4518
          %4551 = vst [vmem:[%s336 + $0x20] sm:$0xff] %v4519
          %4552 = vst [vmem:[%s336 + $0x28] sm:$0xff] %v4520
          %4553 = vst [vmem:[%s336 + $0x30] sm:$0xff] %v4521
          %4554 = vst [vmem:[%s336 + $0x38] sm:$0xff] %v4522
          %4555 = vst [vmem:[%s336 + $0x40] sm:$0xff] %v4523
          %4556 = vst [vmem:[%s336 + $0x48] sm:$0xff] %v4524
          %4557 = vst [vmem:[%s336 + $0x50] sm:$0xff] %v4525
          %4558 = vst [vmem:[%s336 + $0x58] sm:$0xff] %v4526
          %4559 = vst [vmem:[%s336 + $0x60] sm:$0xff] %v4527
          %4560 = vst [vmem:[%s336 + $0x68] sm:$0xff] %v4528
          %4561 = vst [vmem:[%s336 + $0x70] sm:$0xff] %v4529
          %4562 = vst [vmem:[%s336 + $0x78] sm:$0xff] %v4530
        $region68: #{transformer_forward.12} parent=39 // pred_fallthru
          _
        %s4563 = sand.u32 %s169, 1
        %s4564 = scalar_lea.sflag [#allocation6], %s4563
        %s4565 = sand.u32 %s169, 1
        %s4566 = smul.addr %s4565, 128
        %s4567 = scalar_lea.vmem [#allocation13], %s4566
        // Predicated region
        $region69: #{transformer_forward.12} parent=39 // pred_check
          %p4568 = pneg %p179
        $region70: #{transformer_forward.12} parent=39 // pred_check_branch
          %4570 = sbr.rel (%p4568) target = $region72
        $region71: #{transformer_forward.12} parent=39 // pred_region
          %s4571 = smul.u32 16, %s28
          %s4573 = ssub.s32 2048, 2048
          %4574 = vsyncadd %s4564, %s4573
          %s4575 = smul.addr %s4571, 2
          %s4576 = smul.addr %s4575, 64
          %s4577 = scalar_lea.hbm %s5, %s4576
          %s4578 = sshll.u32 %s4567, 4
          %s4579 = int_to_ptr.vmem [resolvable:$true] %s4578
          %4584 = dma.vmem_to_hbm [thread:$0]  %s4579, 2048, %s4577, %s4564, 128, 128, 8
        $region72: #{transformer_forward.12} parent=39 // pred_fallthru
          _
      $region40: #{transformer_forward.12} parent=5 // pred_fallthru
        _
      %p4585 = scmp.le.s32.totalorder 2, %s19
      // Predicated region
      $region73: #{transformer_forward.12} parent=5 // pred_check
        %p4586 = pneg %p4585
      $region74: #{transformer_forward.12} parent=5 // pred_check_branch
        %4588 = sbr.rel (%p4586) target = $region76
      $region75: #{transformer_forward.12} parent=5 // pred_region
        %s4589 = ssub.s32 %s19, 2
        // Predicated region
        $region77: #{transformer_forward.12} parent=75 // pred_check
          %p4590 = pneg %p185
        $region78: #{transformer_forward.12} parent=75 // pred_check_branch
          %4592 = sbr.rel (%p4590) target = $region80
        $region79: #{transformer_forward.12} parent=75 // pred_region
          %s4593 = sand.u32 %s170, 1
          %s4594 = scalar_lea.sflag [#allocation6], %s4593
          %s4595 = sand.u32 %s170, 1
          %s4596 = smul.addr %s4595, 128
          %s4597 = scalar_lea.vmem [#allocation13], %s4596
          %4598 = dma.done %s4594, 2048
        $region80: #{transformer_forward.12} parent=75 // pred_fallthru
          _
      $region76: #{transformer_forward.12} parent=5 // pred_fallthru
        _
    $region6: #{transformer_forward.12} parent=1 // loop_footer
      %s23 = sadd.s32 1, %s19
    $region7: #{transformer_forward.12} parent=1 // loop_footer_branch
      %18 = sbr.rel target = $region3
    $region8: #{transformer_forward.12} parent=1 // loop_exit
      _
    %4599 = vsyncpa [#allocation5], 1
    %s4600 = scalar_lea.sflag [#allocation5], 1
    %4601 = vsyncpa %s4600, 1
    %4602 = vsyncpa [#allocation8], 1
    %4603 = vsyncpa [#allocation11], 1
    %4604 = vsyncpa [#allocation6], 1
    %s4605 = scalar_lea.sflag [#allocation6], 1
    %4606 = vsyncpa %s4605, 1

</llo_original>
